<compile_context>
chip_gen: v5e
topology: v5e:2x2
jax: 0.10.0
libtpu: 0.0.40
codegen_flags: <defaults>
</compile_context>

<pallas_src>
import functools

import jax
import jax.numpy as jnp
from jax.experimental import pallas as pl
from jax.experimental.pallas import tpu as pltpu

_BN_EPS = 1e-5


def _gelu_tanh(x):
    # TODO(synk): nn.GELU() default is the exact erf form; the tanh approximation
    # (max abs dev ~3e-3) is used to stay on guaranteed Mosaic transcendentals.
    c = 0.7978845608028654  # sqrt(2/pi)
    return 0.5 * x * (1.0 + jnp.tanh(c * (x + 0.044715 * x * x * x)))


# ---------------------------------------------------------------------------
# wrapper-side constant builders (folded BN, tap masks, resize matrix)
# ---------------------------------------------------------------------------

def _fold_bn_affine(conv_bias, bn):
    """Fold conv bias + inference-mode BatchNorm into per-channel (scale, shift)."""
    # TODO(synk): training-mode BatchNorm (batch stats + running-stat updates) is
    # not implemented; running stats are folded into the conv epilogue.
    gamma, beta, mean, var = bn
    scale = gamma * jax.lax.rsqrt(var + _BN_EPS)
    shift = (conv_bias - mean) * scale + beta
    return scale, shift


def _taps_first(w):
    """(Cout, Cin, 3, 3) -> (9, Cout, Cin), tap-major (t = ky*3 + kx)."""
    cout, cin = w.shape[0], w.shape[1]
    return jnp.transpose(w, (2, 3, 0, 1)).reshape(9, cout, cin).astype(jnp.float32)


def _tap_masks(H, W, dilation, pad):
    """{0,1} validity masks (9, 1, H*W) for a same-size 3x3 conv on the flat layout."""
    r = jnp.arange(H * W, dtype=jnp.int32) // W
    c = jnp.arange(H * W, dtype=jnp.int32) % W
    rows = []
    for ky in range(3):
        for kx in range(3):
            dy, dx = ky * dilation - pad, kx * dilation - pad
            ok = (r + dy >= 0) & (r + dy < H) & (c + dx >= 0) & (c + dx < W)
            rows.append(ok)
    return jnp.stack(rows).reshape(9, 1, H * W).astype(jnp.float32)


def _interior_mask(H, W, crop):
    r = jnp.arange(H * W, dtype=jnp.int32) // W
    c = jnp.arange(H * W, dtype=jnp.int32) % W
    ok = (r >= crop) & (r < H - crop) & (c >= crop) & (c < W - crop)
    return ok.reshape(1, H * W).astype(jnp.float32)


def _bilinear_matrix(in_size, out_size, dtype=jnp.float32):
    """Interp matrix matching F.interpolate(mode='bilinear', align_corners=False)."""
    scale = in_size / out_size
    src = (jnp.arange(out_size, dtype=jnp.float32) + 0.5) * scale - 0.5
    src = jnp.maximum(src, 0.0)                 # PyTorch clamps negative src to 0
    i0 = jnp.minimum(jnp.floor(src).astype(jnp.int32), in_size - 1)
    i1 = jnp.minimum(i0 + 1, in_size - 1)
    w1 = src - i0.astype(jnp.float32)
    w0 = 1.0 - w1
    return (w0[:, None] * jax.nn.one_hot(i0, in_size, dtype=dtype)
            + w1[:, None] * jax.nn.one_hot(i1, in_size, dtype=dtype))


def _embedded_resize_matrix(H, W, Ho, Wo, crop, dtype=jnp.float32):
    """(H*W, Ho*Wo) matrix: crop `crop` px/side then bilinear-resize to (Ho, Wo).

    Kronecker product of the 1-D interpolation matrices, embedded into the
    uncropped flat layout so crop + resize fuse into one lane-dense matmul.
    """
    Hi, Wi = H - 2 * crop, W - 2 * crop
    Rh = _bilinear_matrix(Hi, Ho, jnp.float32)          # (Ho, Hi)
    Rw = _bilinear_matrix(Wi, Wo, jnp.float32)          # (Wo, Wi)
    K = jnp.kron(Rh, Rw)                                # (Ho*Wo, Hi*Wi)
    R = jnp.zeros((H, W, Ho * Wo), jnp.float32)
    R = R.at[crop:H - crop, crop:W - crop, :].set(K.T.reshape(Hi, Wi, Ho * Wo))
    return R.reshape(H * W, Ho * Wo).astype(dtype)


# ---------------------------------------------------------------------------
# the fused kernel: one grid step = one image
# ---------------------------------------------------------------------------

def _seg_head_kernel(logits_ref, masks_ref, m1_ref, m2_ref, int_ref,
                     w1_ref, s1_ref, t1_ref, w2_ref, s2_ref, t2_ref,
                     w3_ref, s3_ref, t3_ref, rz_ref, o_ref, *, H, W):
    f32 = jnp.float32
    HW = H * W

    # ---- stage 0: softmax over queries (once per image) x sigmoid(masks) ----
    l = logits_ref[0].astype(f32)                          # (C, N)
    l = l - jnp.max(l, axis=-1, keepdims=True)
    e = jnp.exp(l)
    p = e / jnp.sum(e, axis=-1, keepdims=True)
    m = jax.nn.sigmoid(masks_ref[0].astype(f32))           # (N, HW)
    x = jnp.dot(p, m, preferred_element_type=f32)          # (C, HW)

    # ---- same-size 3x3 conv on the flat (Cin, H*W) layout: 9 tap matmuls ----
    def conv3x3(x, w_ref, mask_ref, scale_ref, shift_ref, dilation, pad, gelu):
        cout = w_ref.shape[1]
        acc = jnp.zeros((cout, HW), f32)
        for ky in range(3):
            for kx in range(3):
                t = ky * 3 + kx
                dy, dx = ky * dilation - pad, kx * dilation - pad
                shift = dy * W + dx
                xs = x if shift == 0 else pltpu.roll(x, (-shift) % HW, axis=1)
                if dy != 0 or dx != 0:               # center tap: mask is all-ones
                    xs = xs * mask_ref[t]            # zero wrapped / out-of-bounds lanes
                acc = acc + jnp.dot(w_ref[t].astype(f32), xs,
                                    preferred_element_type=f32)
        acc = acc * scale_ref[...] + shift_ref[...]  # conv bias + BatchNorm folded
        return _gelu_tanh(acc) if gelu else acc

    # conv1: pad=1, dil=1, +BN+GELU
    x = conv3x3(x, w1_ref, m1_ref, s1_ref, t1_ref, dilation=1, pad=1, gelu=True)
    # conv2: module uses pad=1, dil=2 (output shrinks 1px/side). Computed here as a
    # same-size pad=2 conv; interior values equal the true cropped output exactly.
    x = conv3x3(x, w2_ref, m2_ref, s2_ref, t2_ref, dilation=2, pad=2, gelu=True)
    # Zero the 1px border so conv3 sees exactly the zero-padding of the cropped map.
    x = x * int_ref[...]
    # conv3 + final self.norm BatchNorm folded; border outputs are never read.
    x = conv3x3(x, w3_ref, m1_ref, s3_ref, t3_ref, dilation=1, pad=1, gelu=False)

    # ---- crop + bilinear resize folded into one lane-dense matmul ----
    o_ref[0] = jnp.dot(x, rz_ref[...].astype(f32),
                       preferred_element_type=f32).astype(o_ref.dtype)


def segmentation_head_forward(params, pred_logits, pred_masks, target_size):
    B, N, C = pred_logits.shape
    _, _, H, W = pred_masks.shape
    HW = H * W
    Ho, Wo = target_size
    hid = params["w1"].shape[0]

    # conv2 (k=3, padding=1, dilation=2) shrinks the map by `crop` px per side.
    crop = 2 * (3 - 1) // 2 - 1   # dilation*(k-1)/2 - padding = 1

    logits_cn = jnp.transpose(pred_logits, (0, 2, 1)).astype(jnp.float32)   # (B,C,N)
    masks_flat = pred_masks.reshape(B, N, HW).astype(jnp.float32)           # (B,N,HW)

    s1, t1 = _fold_bn_affine(params["b1"], params["bn1"])
    s2, t2 = _fold_bn_affine(params["b2"], params["bn2"])
    s3, t3 = _fold_bn_affine(params["b3"], params["norm"])   # final self.norm BN
    s1 = s1.reshape(hid, 1).astype(jnp.float32)
    t1 = t1.reshape(hid, 1).astype(jnp.float32)
    s2 = s2.reshape(hid, 1).astype(jnp.float32)
    t2 = t2.reshape(hid, 1).astype(jnp.float32)
    s3 = s3.reshape(C, 1).astype(jnp.float32)
    t3 = t3.reshape(C, 1).astype(jnp.float32)

    w1 = _taps_first(params["w1"])   # (9, hid, C)
    w2 = _taps_first(params["w2"])   # (9, hid, hid)
    w3 = _taps_first(params["w3"])   # (9, C, hid)

    m1 = _tap_masks(H, W, dilation=1, pad=1)            # conv1 & conv3
    m2 = _tap_masks(H, W, dilation=2, pad=2)            # conv2 (same-size form)
    inter = _interior_mask(H, W, crop)
    rz = _embedded_resize_matrix(H, W, Ho, Wo, crop)    # (HW, Ho*Wo)

    # TODO(synk): the fused call keeps whole (hid, H*W) activations in VMEM; very
    # large feature maps would need a spatially-tiled (haloed) variant.
    kernel = functools.partial(_seg_head_kernel, H=H, W=W)
    const2 = lambda b: (0, 0)
    const3 = lambda b: (0, 0, 0)
    flops = 2 * B * (C * N * HW + 9 * HW * (hid * C + hid * hid + C * hid)
                     + C * HW * Ho * Wo)
    out = pl.pallas_call(
        kernel,
        out_shape=jax.ShapeDtypeStruct((B, C, Ho * Wo), jnp.float32),
        grid_spec=pltpu.PrefetchScalarGridSpec(
            num_scalar_prefetch=0,
            grid=(B,),                      # B parallel steps -> megacore on v7x
            in_specs=[
                pl.BlockSpec((1, C, N), lambda b: (b, 0, 0)),
                pl.BlockSpec((1, N, HW), lambda b: (b, 0, 0)),
                pl.BlockSpec((9, 1, HW), const3),
                pl.BlockSpec((9, 1, HW), const3),
                pl.BlockSpec((1, HW), const2),
                pl.BlockSpec((9, hid, C), const3),
                pl.BlockSpec((hid, 1), const2),
                pl.BlockSpec((hid, 1), const2),
                pl.BlockSpec((9, hid, hid), const3),
                pl.BlockSpec((hid, 1), const2),
                pl.BlockSpec((hid, 1), const2),
                pl.BlockSpec((9, C, hid), const3),
                pl.BlockSpec((C, 1), const2),
                pl.BlockSpec((C, 1), const2),
                pl.BlockSpec((HW, Ho * Wo), const2),
            ],
            out_specs=pl.BlockSpec((1, C, Ho * Wo), lambda b: (b, 0, 0)),
        ),
        compiler_params=pltpu.CompilerParams(
            dimension_semantics=("parallel",)),
        cost_estimate=pl.CostEstimate(
            flops=flops,
            transcendentals=B * (C * N + N * HW + 2 * hid * HW),
            bytes_accessed=4 * (B * (C * N + N * HW + C * Ho * Wo)
                                + 9 * (hid * C + hid * hid + C * hid)
                                + HW * Ho * Wo + 20 * HW),
        ),
    )(logits_cn, masks_flat, m1, m2, inter,
      w1, s1, t1, w2, s2, t2, w3, s3, t3, rz)
    return out.reshape(B, C, Ho, Wo)


# ---------------------------------------------------------------------------
# params init + pure-JAX reference (independent conv via lax.conv_general_dilated)
# ---------------------------------------------------------------------------

def init_segmentation_head_params(key, n_classes=19, hidden_dim=64, dtype=jnp.float32):
    def conv_init(k, cout, cin):
        kw, kb = jax.random.split(k)
        bound = 1.0 / (cin * 9) ** 0.5
        w = jax.random.uniform(kw, (cout, cin, 3, 3), dtype, -bound, bound)
        b = jax.random.uniform(kb, (cout,), dtype, -bound, bound)
        return w, b

    def bn_init(k, c):
        kg, kb, km, kv = jax.random.split(k, 4)
        return (1.0 + 0.1 * jax.random.normal(kg, (c,), dtype),   # gamma
                0.1 * jax.random.normal(kb, (c,), dtype),          # beta
                0.1 * jax.random.normal(km, (c,), dtype),          # running_mean
                jax.random.uniform(kv, (c,), dtype, 0.5, 1.5))     # running_var

    k1, k2, k3, k4, k5, k6 = jax.random.split(key, 6)
    w1, b1 = conv_init(k1, hidden_dim, n_classes)
    w2, b2 = conv_init(k2, hidden_dim, hidden_dim)
    w3, b3 = conv_init(k3, n_classes, hidden_dim)
    return dict(w1=w1, b1=b1, bn1=bn_init(k4, hidden_dim),
                w2=w2, b2=b2, bn2=bn_init(k5, hidden_dim),
                w3=w3, b3=b3, norm=bn_init(k6, n_classes))


def segmentation_head_reference(params, pred_logits, pred_masks, target_size):
    hi = jax.lax.Precision.HIGHEST
    p = jax.nn.softmax(pred_logits, axis=1)
    m = jax.nn.sigmoid(pred_masks)
    x = jnp.einsum('bnc,bnhw->bchw', p, m, precision=hi)

    def conv_bn(x, w, b, bn, dilation, gelu):
        y = jax.lax.conv_general_dilated(
            x, w, window_strides=(1, 1), padding=((1, 1), (1, 1)),
            rhs_dilation=(dilation, dilation),
            dimension_numbers=('NCHW', 'OIHW', 'NCHW'), precision=hi)
        gamma, beta, mean, var = bn
        y = y + b[None, :, None, None]
        y = (y - mean[None, :, None, None]) / jnp.sqrt(var[None, :, None, None] + _BN_EPS)
        y = y * gamma[None, :, None, None] + beta[None, :, None, None]
        return _gelu_tanh(y) if gelu else y

    x = conv_bn(x, params["w1"], params["b1"], params["bn1"], 1, True)
    x = conv_bn(x, params["w2"], params["b2"], params["bn2"], 2, True)
    x = conv_bn(x, params["w3"], params["b3"], params["norm"], 1, False)

    Ho, Wo = target_size
    Rh = _bilinear_matrix(x.shape[2], Ho, x.dtype)
    Rw = _bilinear_matrix(x.shape[3], Wo, x.dtype)
    return jnp.einsum('oh,bchw,pw->bcop', Rh, x, Rw, precision=hi)


if __name__ == "__main__":
    key = jax.random.PRNGKey(0)
    B, NQ, C, H, W = 2, 8, 19, 16, 16        # n_classes=19 (module default), 8 queries
    hidden_dim = 64
    target_size = (32, 32)

    kp, kl, km = jax.random.split(key, 3)
    params = init_segmentation_head_params(kp, n_classes=C, hidden_dim=hidden_dim)
    pred_logits = jax.random.normal(kl, (B, NQ, C), jnp.float32)
    pred_masks = jax.random.normal(km, (B, NQ, H, W), jnp.float32)

    fwd = jax.jit(segmentation_head_forward, static_argnames=("target_size",))
    out = jax.block_until_ready(
        fwd(params, pred_logits, pred_masks, target_size=target_size))

    ref = jax.block_until_ready(
        segmentation_head_reference(params, pred_logits, pred_masks, target_size))

    assert out.shape == (B, C) + target_size
    max_err = float(jnp.max(jnp.abs(out - ref)))
    assert jnp.allclose(out, ref, atol=2e-3, rtol=2e-3), f"max |err| = {max_err}"
    print("KERNEL_OK")
</pallas_src>

<mosaic_0001>
module attributes {stable_mosaic.version = 11 : i64} {
  func.func @_seg_head_kernel(%arg0: i32, %arg1: memref<1x19x8xf32, #tpu.memory_space<vmem>>, %arg2: memref<1x8x256xf32, #tpu.memory_space<vmem>>, %arg3: memref<9x1x256xf32, #tpu.memory_space<vmem>>, %arg4: memref<9x1x256xf32, #tpu.memory_space<vmem>>, %arg5: memref<1x256xf32, #tpu.memory_space<vmem>>, %arg6: memref<9x64x19xf32, #tpu.memory_space<vmem>>, %arg7: memref<64x1xf32, #tpu.memory_space<vmem>>, %arg8: memref<64x1xf32, #tpu.memory_space<vmem>>, %arg9: memref<9x64x64xf32, #tpu.memory_space<vmem>>, %arg10: memref<64x1xf32, #tpu.memory_space<vmem>>, %arg11: memref<64x1xf32, #tpu.memory_space<vmem>>, %arg12: memref<9x19x64xf32, #tpu.memory_space<vmem>>, %arg13: memref<19x1xf32, #tpu.memory_space<vmem>>, %arg14: memref<19x1xf32, #tpu.memory_space<vmem>>, %arg15: memref<256x1024xf32, #tpu.memory_space<vmem>>, %arg16: memref<1x19x1024xf32, #tpu.memory_space<vmem>>) attributes {dimension_semantics = [#tpu.dimension_semantics<parallel>], iteration_bounds = array<i64: 2>, scalar_prefetch = 0 : i64, scratch_operands = 0 : i64, tpu.core_type = #tpu.core_type<tc>, window_params = [{transform_indices = @transform_0, window_bounds = array<i64: 1, 19, 8>}, {transform_indices = @transform_1, window_bounds = array<i64: 1, 8, 256>}, {pipeline_mode = #tpu.pipeline_mode<synchronous>, transform_indices = @transform_2, window_bounds = array<i64: 9, 1, 256>}, {pipeline_mode = #tpu.pipeline_mode<synchronous>, transform_indices = @transform_3, window_bounds = array<i64: 9, 1, 256>}, {pipeline_mode = #tpu.pipeline_mode<synchronous>, transform_indices = @transform_4, window_bounds = array<i64: 1, 256>}, {pipeline_mode = #tpu.pipeline_mode<synchronous>, transform_indices = @transform_5, window_bounds = array<i64: 9, 64, 19>}, {pipeline_mode = #tpu.pipeline_mode<synchronous>, transform_indices = @transform_6, window_bounds = array<i64: 64, 1>}, {pipeline_mode = #tpu.pipeline_mode<synchronous>, transform_indices = @transform_7, window_bounds = array<i64: 64, 1>}, {pipeline_mode = #tpu.pipeline_mode<synchronous>, transform_indices = @transform_8, window_bounds = array<i64: 9, 64, 64>}, {pipeline_mode = #tpu.pipeline_mode<synchronous>, transform_indices = @transform_9, window_bounds = array<i64: 64, 1>}, {pipeline_mode = #tpu.pipeline_mode<synchronous>, transform_indices = @transform_10, window_bounds = array<i64: 64, 1>}, {pipeline_mode = #tpu.pipeline_mode<synchronous>, transform_indices = @transform_11, window_bounds = array<i64: 9, 19, 64>}, {pipeline_mode = #tpu.pipeline_mode<synchronous>, transform_indices = @transform_12, window_bounds = array<i64: 19, 1>}, {pipeline_mode = #tpu.pipeline_mode<synchronous>, transform_indices = @transform_13, window_bounds = array<i64: 19, 1>}, {pipeline_mode = #tpu.pipeline_mode<synchronous>, transform_indices = @transform_14, window_bounds = array<i64: 256, 1024>}, {transform_indices = @transform_15, window_bounds = array<i64: 1, 19, 1024>}]} {
    %c0 = arith.constant 0 : index
    %c0_0 = arith.constant 0 : index
    %c0_1 = arith.constant 0 : index
    %0 = vector.load %arg1[%c0, %c0_0, %c0_1] : memref<1x19x8xf32, #tpu.memory_space<vmem>>, vector<1x19x8xf32>
    %1 = vector.shape_cast %0 : vector<1x19x8xf32> to vector<19x8xf32>
    %cst = arith.constant dense<0xFF800000> : vector<19xf32>
    %2 = vector.multi_reduction <maximumf>, %1, %cst [1] : vector<19x8xf32> to vector<19xf32>
    %3 = vector.shape_cast %2 : vector<19xf32> to vector<19x1xf32>
    %4 = vector.broadcast %3 : vector<19x1xf32> to vector<19x8xf32>
    %5 = arith.subf %1, %4 : vector<19x8xf32>
    %6 = math.exp %5 : vector<19x8xf32>
    %cst_2 = arith.constant dense<0.000000e+00> : vector<19xf32>
    %7 = vector.multi_reduction <add>, %6, %cst_2 [1] : vector<19x8xf32> to vector<19xf32>
    %8 = vector.shape_cast %7 : vector<19xf32> to vector<19x1xf32>
    %9 = vector.broadcast %8 : vector<19x1xf32> to vector<19x8xf32>
    %10 = arith.divf %6, %9 : vector<19x8xf32>
    %c0_3 = arith.constant 0 : index
    %c0_4 = arith.constant 0 : index
    %c0_5 = arith.constant 0 : index
    %11 = vector.load %arg2[%c0_3, %c0_4, %c0_5] : memref<1x8x256xf32, #tpu.memory_space<vmem>>, vector<1x8x256xf32>
    %12 = vector.shape_cast %11 : vector<1x8x256xf32> to vector<8x256xf32>
    %13 = arith.negf %12 : vector<8x256xf32>
    %14 = math.exp %13 : vector<8x256xf32>
    %cst_6 = arith.constant 1.000000e+00 : f32
    %15 = vector.broadcast %cst_6 : f32 to vector<8x256xf32>
    %16 = arith.addf %15, %14 : vector<8x256xf32>
    %17 = arith.divf %15, %16 : vector<8x256xf32>
    %cst_7 = arith.constant dense<0.000000e+00> : vector<19x256xf32>
    %18 = tpu.matmul %10, %17, %cst_7 {dimension_numbers = #tpu.dot_dimension_numbers<[1], [0], [0], [1], [0, 0, 1, 1], [], []>} : vector<19x8xf32>, vector<8x256xf32>, vector<19x256xf32> -> vector<19x256xf32>
    %cst_8 = arith.constant 0.000000e+00 : f32
    %19 = vector.broadcast %cst_8 : f32 to vector<64x256xf32>
    %c17_i32 = arith.constant 17 : i32
    %20 = tpu.dynamic_rotate %18 by %c17_i32 dim 1 : vector<19x256xf32>, i32 -> vector<19x256xf32>
    %c0_9 = arith.constant 0 : index
    %c0_10 = arith.constant 0 : index
    %c0_11 = arith.constant 0 : index
    %21 = vector.load %arg3[%c0_9, %c0_10, %c0_11] : memref<9x1x256xf32, #tpu.memory_space<vmem>>, vector<1x1x256xf32>
    %22 = vector.shape_cast %21 : vector<1x1x256xf32> to vector<1x256xf32>
    %23 = vector.broadcast %22 : vector<1x256xf32> to vector<19x256xf32>
    %24 = arith.mulf %20, %23 : vector<19x256xf32>
    %c0_12 = arith.constant 0 : index
    %c0_13 = arith.constant 0 : index
    %c0_14 = arith.constant 0 : index
    %25 = vector.load %arg6[%c0_12, %c0_13, %c0_14] : memref<9x64x19xf32, #tpu.memory_space<vmem>>, vector<1x64x19xf32>
    %26 = vector.shape_cast %25 : vector<1x64x19xf32> to vector<64x19xf32>
    %cst_15 = arith.constant dense<0.000000e+00> : vector<64x256xf32>
    %27 = tpu.matmul %26, %24, %cst_15 {dimension_numbers = #tpu.dot_dimension_numbers<[1], [0], [0], [1], [0, 0, 1, 1], [], []>} : vector<64x19xf32>, vector<19x256xf32>, vector<64x256xf32> -> vector<64x256xf32>
    %28 = arith.addf %19, %27 : vector<64x256xf32>
    %c16_i32 = arith.constant 16 : i32
    %29 = tpu.dynamic_rotate %18 by %c16_i32 dim 1 : vector<19x256xf32>, i32 -> vector<19x256xf32>
    %c1 = arith.constant 1 : index
    %c0_16 = arith.constant 0 : index
    %c0_17 = arith.constant 0 : index
    %30 = vector.load %arg3[%c1, %c0_16, %c0_17] : memref<9x1x256xf32, #tpu.memory_space<vmem>>, vector<1x1x256xf32>
    %31 = vector.shape_cast %30 : vector<1x1x256xf32> to vector<1x256xf32>
    %32 = vector.broadcast %31 : vector<1x256xf32> to vector<19x256xf32>
    %33 = arith.mulf %29, %32 : vector<19x256xf32>
    %c1_18 = arith.constant 1 : index
    %c0_19 = arith.constant 0 : index
    %c0_20 = arith.constant 0 : index
    %34 = vector.load %arg6[%c1_18, %c0_19, %c0_20] : memref<9x64x19xf32, #tpu.memory_space<vmem>>, vector<1x64x19xf32>
    %35 = vector.shape_cast %34 : vector<1x64x19xf32> to vector<64x19xf32>
    %cst_21 = arith.constant dense<0.000000e+00> : vector<64x256xf32>
    %36 = tpu.matmul %35, %33, %cst_21 {dimension_numbers = #tpu.dot_dimension_numbers<[1], [0], [0], [1], [0, 0, 1, 1], [], []>} : vector<64x19xf32>, vector<19x256xf32>, vector<64x256xf32> -> vector<64x256xf32>
    %37 = arith.addf %28, %36 : vector<64x256xf32>
    %c15_i32 = arith.constant 15 : i32
    %38 = tpu.dynamic_rotate %18 by %c15_i32 dim 1 : vector<19x256xf32>, i32 -> vector<19x256xf32>
    %c2 = arith.constant 2 : index
    %c0_22 = arith.constant 0 : index
    %c0_23 = arith.constant 0 : index
    %39 = vector.load %arg3[%c2, %c0_22, %c0_23] : memref<9x1x256xf32, #tpu.memory_space<vmem>>, vector<1x1x256xf32>
    %40 = vector.shape_cast %39 : vector<1x1x256xf32> to vector<1x256xf32>
    %41 = vector.broadcast %40 : vector<1x256xf32> to vector<19x256xf32>
    %42 = arith.mulf %38, %41 : vector<19x256xf32>
    %c2_24 = arith.constant 2 : index
    %c0_25 = arith.constant 0 : index
    %c0_26 = arith.constant 0 : index
    %43 = vector.load %arg6[%c2_24, %c0_25, %c0_26] : memref<9x64x19xf32, #tpu.memory_space<vmem>>, vector<1x64x19xf32>
    %44 = vector.shape_cast %43 : vector<1x64x19xf32> to vector<64x19xf32>
    %cst_27 = arith.constant dense<0.000000e+00> : vector<64x256xf32>
    %45 = tpu.matmul %44, %42, %cst_27 {dimension_numbers = #tpu.dot_dimension_numbers<[1], [0], [0], [1], [0, 0, 1, 1], [], []>} : vector<64x19xf32>, vector<19x256xf32>, vector<64x256xf32> -> vector<64x256xf32>
    %46 = arith.addf %37, %45 : vector<64x256xf32>
    %c1_i32 = arith.constant 1 : i32
    %47 = tpu.dynamic_rotate %18 by %c1_i32 dim 1 : vector<19x256xf32>, i32 -> vector<19x256xf32>
    %c3 = arith.constant 3 : index
    %c0_28 = arith.constant 0 : index
    %c0_29 = arith.constant 0 : index
    %48 = vector.load %arg3[%c3, %c0_28, %c0_29] : memref<9x1x256xf32, #tpu.memory_space<vmem>>, vector<1x1x256xf32>
    %49 = vector.shape_cast %48 : vector<1x1x256xf32> to vector<1x256xf32>
    %50 = vector.broadcast %49 : vector<1x256xf32> to vector<19x256xf32>
    %51 = arith.mulf %47, %50 : vector<19x256xf32>
    %c3_30 = arith.constant 3 : index
    %c0_31 = arith.constant 0 : index
    %c0_32 = arith.constant 0 : index
    %52 = vector.load %arg6[%c3_30, %c0_31, %c0_32] : memref<9x64x19xf32, #tpu.memory_space<vmem>>, vector<1x64x19xf32>
    %53 = vector.shape_cast %52 : vector<1x64x19xf32> to vector<64x19xf32>
    %cst_33 = arith.constant dense<0.000000e+00> : vector<64x256xf32>
    %54 = tpu.matmul %53, %51, %cst_33 {dimension_numbers = #tpu.dot_dimension_numbers<[1], [0], [0], [1], [0, 0, 1, 1], [], []>} : vector<64x19xf32>, vector<19x256xf32>, vector<64x256xf32> -> vector<64x256xf32>
    %55 = arith.addf %46, %54 : vector<64x256xf32>
    %c4 = arith.constant 4 : index
    %c0_34 = arith.constant 0 : index
    %c0_35 = arith.constant 0 : index
    %56 = vector.load %arg6[%c4, %c0_34, %c0_35] : memref<9x64x19xf32, #tpu.memory_space<vmem>>, vector<1x64x19xf32>
    %57 = vector.shape_cast %56 : vector<1x64x19xf32> to vector<64x19xf32>
    %cst_36 = arith.constant dense<0.000000e+00> : vector<64x256xf32>
    %58 = tpu.matmul %57, %18, %cst_36 {dimension_numbers = #tpu.dot_dimension_numbers<[1], [0], [0], [1], [0, 0, 1, 1], [], []>} : vector<64x19xf32>, vector<19x256xf32>, vector<64x256xf32> -> vector<64x256xf32>
    %59 = arith.addf %55, %58 : vector<64x256xf32>
    %c255_i32 = arith.constant 255 : i32
    %60 = tpu.dynamic_rotate %18 by %c255_i32 dim 1 : vector<19x256xf32>, i32 -> vector<19x256xf32>
    %c5 = arith.constant 5 : index
    %c0_37 = arith.constant 0 : index
    %c0_38 = arith.constant 0 : index
    %61 = vector.load %arg3[%c5, %c0_37, %c0_38] : memref<9x1x256xf32, #tpu.memory_space<vmem>>, vector<1x1x256xf32>
    %62 = vector.shape_cast %61 : vector<1x1x256xf32> to vector<1x256xf32>
    %63 = vector.broadcast %62 : vector<1x256xf32> to vector<19x256xf32>
    %64 = arith.mulf %60, %63 : vector<19x256xf32>
    %c5_39 = arith.constant 5 : index
    %c0_40 = arith.constant 0 : index
    %c0_41 = arith.constant 0 : index
    %65 = vector.load %arg6[%c5_39, %c0_40, %c0_41] : memref<9x64x19xf32, #tpu.memory_space<vmem>>, vector<1x64x19xf32>
    %66 = vector.shape_cast %65 : vector<1x64x19xf32> to vector<64x19xf32>
    %cst_42 = arith.constant dense<0.000000e+00> : vector<64x256xf32>
    %67 = tpu.matmul %66, %64, %cst_42 {dimension_numbers = #tpu.dot_dimension_numbers<[1], [0], [0], [1], [0, 0, 1, 1], [], []>} : vector<64x19xf32>, vector<19x256xf32>, vector<64x256xf32> -> vector<64x256xf32>
    %68 = arith.addf %59, %67 : vector<64x256xf32>
    %c241_i32 = arith.constant 241 : i32
    %69 = tpu.dynamic_rotate %18 by %c241_i32 dim 1 : vector<19x256xf32>, i32 -> vector<19x256xf32>
    %c6 = arith.constant 6 : index
    %c0_43 = arith.constant 0 : index
    %c0_44 = arith.constant 0 : index
    %70 = vector.load %arg3[%c6, %c0_43, %c0_44] : memref<9x1x256xf32, #tpu.memory_space<vmem>>, vector<1x1x256xf32>
    %71 = vector.shape_cast %70 : vector<1x1x256xf32> to vector<1x256xf32>
    %72 = vector.broadcast %71 : vector<1x256xf32> to vector<19x256xf32>
    %73 = arith.mulf %69, %72 : vector<19x256xf32>
    %c6_45 = arith.constant 6 : index
    %c0_46 = arith.constant 0 : index
    %c0_47 = arith.constant 0 : index
    %74 = vector.load %arg6[%c6_45, %c0_46, %c0_47] : memref<9x64x19xf32, #tpu.memory_space<vmem>>, vector<1x64x19xf32>
    %75 = vector.shape_cast %74 : vector<1x64x19xf32> to vector<64x19xf32>
    %cst_48 = arith.constant dense<0.000000e+00> : vector<64x256xf32>
    %76 = tpu.matmul %75, %73, %cst_48 {dimension_numbers = #tpu.dot_dimension_numbers<[1], [0], [0], [1], [0, 0, 1, 1], [], []>} : vector<64x19xf32>, vector<19x256xf32>, vector<64x256xf32> -> vector<64x256xf32>
    %77 = arith.addf %68, %76 : vector<64x256xf32>
    %c240_i32 = arith.constant 240 : i32
    %78 = tpu.dynamic_rotate %18 by %c240_i32 dim 1 : vector<19x256xf32>, i32 -> vector<19x256xf32>
    %c7 = arith.constant 7 : index
    %c0_49 = arith.constant 0 : index
    %c0_50 = arith.constant 0 : index
    %79 = vector.load %arg3[%c7, %c0_49, %c0_50] : memref<9x1x256xf32, #tpu.memory_space<vmem>>, vector<1x1x256xf32>
    %80 = vector.shape_cast %79 : vector<1x1x256xf32> to vector<1x256xf32>
    %81 = vector.broadcast %80 : vector<1x256xf32> to vector<19x256xf32>
    %82 = arith.mulf %78, %81 : vector<19x256xf32>
    %c7_51 = arith.constant 7 : index
    %c0_52 = arith.constant 0 : index
    %c0_53 = arith.constant 0 : index
    %83 = vector.load %arg6[%c7_51, %c0_52, %c0_53] : memref<9x64x19xf32, #tpu.memory_space<vmem>>, vector<1x64x19xf32>
    %84 = vector.shape_cast %83 : vector<1x64x19xf32> to vector<64x19xf32>
    %cst_54 = arith.constant dense<0.000000e+00> : vector<64x256xf32>
    %85 = tpu.matmul %84, %82, %cst_54 {dimension_numbers = #tpu.dot_dimension_numbers<[1], [0], [0], [1], [0, 0, 1, 1], [], []>} : vector<64x19xf32>, vector<19x256xf32>, vector<64x256xf32> -> vector<64x256xf32>
    %86 = arith.addf %77, %85 : vector<64x256xf32>
    %c239_i32 = arith.constant 239 : i32
    %87 = tpu.dynamic_rotate %18 by %c239_i32 dim 1 : vector<19x256xf32>, i32 -> vector<19x256xf32>
    %c8 = arith.constant 8 : index
    %c0_55 = arith.constant 0 : index
    %c0_56 = arith.constant 0 : index
    %88 = vector.load %arg3[%c8, %c0_55, %c0_56] : memref<9x1x256xf32, #tpu.memory_space<vmem>>, vector<1x1x256xf32>
    %89 = vector.shape_cast %88 : vector<1x1x256xf32> to vector<1x256xf32>
    %90 = vector.broadcast %89 : vector<1x256xf32> to vector<19x256xf32>
    %91 = arith.mulf %87, %90 : vector<19x256xf32>
    %c8_57 = arith.constant 8 : index
    %c0_58 = arith.constant 0 : index
    %c0_59 = arith.constant 0 : index
    %92 = vector.load %arg6[%c8_57, %c0_58, %c0_59] : memref<9x64x19xf32, #tpu.memory_space<vmem>>, vector<1x64x19xf32>
    %93 = vector.shape_cast %92 : vector<1x64x19xf32> to vector<64x19xf32>
    %cst_60 = arith.constant dense<0.000000e+00> : vector<64x256xf32>
    %94 = tpu.matmul %93, %91, %cst_60 {dimension_numbers = #tpu.dot_dimension_numbers<[1], [0], [0], [1], [0, 0, 1, 1], [], []>} : vector<64x19xf32>, vector<19x256xf32>, vector<64x256xf32> -> vector<64x256xf32>
    %95 = arith.addf %86, %94 : vector<64x256xf32>
    %c0_61 = arith.constant 0 : index
    %c0_62 = arith.constant 0 : index
    %96 = vector.load %arg7[%c0_61, %c0_62] : memref<64x1xf32, #tpu.memory_space<vmem>>, vector<64x1xf32>
    %97 = vector.broadcast %96 : vector<64x1xf32> to vector<64x256xf32>
    %98 = arith.mulf %95, %97 : vector<64x256xf32>
    %c0_63 = arith.constant 0 : index
    %c0_64 = arith.constant 0 : index
    %99 = vector.load %arg8[%c0_63, %c0_64] : memref<64x1xf32, #tpu.memory_space<vmem>>, vector<64x1xf32>
    %100 = vector.broadcast %99 : vector<64x1xf32> to vector<64x256xf32>
    %101 = arith.addf %98, %100 : vector<64x256xf32>
    %cst_65 = arith.constant 5.000000e-01 : f32
    %102 = vector.broadcast %cst_65 : f32 to vector<64x256xf32>
    %103 = arith.mulf %102, %101 : vector<64x256xf32>
    %cst_66 = arith.constant 4.471500e-02 : f32
    %104 = vector.broadcast %cst_66 : f32 to vector<64x256xf32>
    %105 = arith.mulf %104, %101 : vector<64x256xf32>
    %106 = arith.mulf %105, %101 : vector<64x256xf32>
    %107 = arith.mulf %106, %101 : vector<64x256xf32>
    %108 = arith.addf %101, %107 : vector<64x256xf32>
    %cst_67 = arith.constant 0.797884583 : f32
    %109 = vector.broadcast %cst_67 : f32 to vector<64x256xf32>
    %110 = arith.mulf %109, %108 : vector<64x256xf32>
    %111 = math.tanh %110 : vector<64x256xf32>
    %cst_68 = arith.constant 1.000000e+00 : f32
    %112 = vector.broadcast %cst_68 : f32 to vector<64x256xf32>
    %113 = arith.addf %112, %111 : vector<64x256xf32>
    %114 = arith.mulf %103, %113 : vector<64x256xf32>
    %cst_69 = arith.constant 0.000000e+00 : f32
    %115 = vector.broadcast %cst_69 : f32 to vector<64x256xf32>
    %c34_i32 = arith.constant 34 : i32
    %116 = tpu.dynamic_rotate %114 by %c34_i32 dim 1 : vector<64x256xf32>, i32 -> vector<64x256xf32>
    %c0_70 = arith.constant 0 : index
    %c0_71 = arith.constant 0 : index
    %c0_72 = arith.constant 0 : index
    %117 = vector.load %arg4[%c0_70, %c0_71, %c0_72] : memref<9x1x256xf32, #tpu.memory_space<vmem>>, vector<1x1x256xf32>
    %118 = vector.shape_cast %117 : vector<1x1x256xf32> to vector<1x256xf32>
    %119 = vector.broadcast %118 : vector<1x256xf32> to vector<64x256xf32>
    %120 = arith.mulf %116, %119 : vector<64x256xf32>
    %c0_73 = arith.constant 0 : index
    %c0_74 = arith.constant 0 : index
    %c0_75 = arith.constant 0 : index
    %121 = vector.load %arg9[%c0_73, %c0_74, %c0_75] : memref<9x64x64xf32, #tpu.memory_space<vmem>>, vector<1x64x64xf32>
    %122 = vector.shape_cast %121 : vector<1x64x64xf32> to vector<64x64xf32>
    %cst_76 = arith.constant dense<0.000000e+00> : vector<64x256xf32>
    %123 = tpu.matmul %122, %120, %cst_76 {dimension_numbers = #tpu.dot_dimension_numbers<[1], [0], [0], [1], [0, 0, 1, 1], [], []>} : vector<64x64xf32>, vector<64x256xf32>, vector<64x256xf32> -> vector<64x256xf32>
    %124 = arith.addf %115, %123 : vector<64x256xf32>
    %c32_i32 = arith.constant 32 : i32
    %125 = tpu.dynamic_rotate %114 by %c32_i32 dim 1 : vector<64x256xf32>, i32 -> vector<64x256xf32>
    %c1_77 = arith.constant 1 : index
    %c0_78 = arith.constant 0 : index
    %c0_79 = arith.constant 0 : index
    %126 = vector.load %arg4[%c1_77, %c0_78, %c0_79] : memref<9x1x256xf32, #tpu.memory_space<vmem>>, vector<1x1x256xf32>
    %127 = vector.shape_cast %126 : vector<1x1x256xf32> to vector<1x256xf32>
    %128 = vector.broadcast %127 : vector<1x256xf32> to vector<64x256xf32>
    %129 = arith.mulf %125, %128 : vector<64x256xf32>
    %c1_80 = arith.constant 1 : index
    %c0_81 = arith.constant 0 : index
    %c0_82 = arith.constant 0 : index
    %130 = vector.load %arg9[%c1_80, %c0_81, %c0_82] : memref<9x64x64xf32, #tpu.memory_space<vmem>>, vector<1x64x64xf32>
    %131 = vector.shape_cast %130 : vector<1x64x64xf32> to vector<64x64xf32>
    %cst_83 = arith.constant dense<0.000000e+00> : vector<64x256xf32>
    %132 = tpu.matmul %131, %129, %cst_83 {dimension_numbers = #tpu.dot_dimension_numbers<[1], [0], [0], [1], [0, 0, 1, 1], [], []>} : vector<64x64xf32>, vector<64x256xf32>, vector<64x256xf32> -> vector<64x256xf32>
    %133 = arith.addf %124, %132 : vector<64x256xf32>
    %c30_i32 = arith.constant 30 : i32
    %134 = tpu.dynamic_rotate %114 by %c30_i32 dim 1 : vector<64x256xf32>, i32 -> vector<64x256xf32>
    %c2_84 = arith.constant 2 : index
    %c0_85 = arith.constant 0 : index
    %c0_86 = arith.constant 0 : index
    %135 = vector.load %arg4[%c2_84, %c0_85, %c0_86] : memref<9x1x256xf32, #tpu.memory_space<vmem>>, vector<1x1x256xf32>
    %136 = vector.shape_cast %135 : vector<1x1x256xf32> to vector<1x256xf32>
    %137 = vector.broadcast %136 : vector<1x256xf32> to vector<64x256xf32>
    %138 = arith.mulf %134, %137 : vector<64x256xf32>
    %c2_87 = arith.constant 2 : index
    %c0_88 = arith.constant 0 : index
    %c0_89 = arith.constant 0 : index
    %139 = vector.load %arg9[%c2_87, %c0_88, %c0_89] : memref<9x64x64xf32, #tpu.memory_space<vmem>>, vector<1x64x64xf32>
    %140 = vector.shape_cast %139 : vector<1x64x64xf32> to vector<64x64xf32>
    %cst_90 = arith.constant dense<0.000000e+00> : vector<64x256xf32>
    %141 = tpu.matmul %140, %138, %cst_90 {dimension_numbers = #tpu.dot_dimension_numbers<[1], [0], [0], [1], [0, 0, 1, 1], [], []>} : vector<64x64xf32>, vector<64x256xf32>, vector<64x256xf32> -> vector<64x256xf32>
    %142 = arith.addf %133, %141 : vector<64x256xf32>
    %c2_i32 = arith.constant 2 : i32
    %143 = tpu.dynamic_rotate %114 by %c2_i32 dim 1 : vector<64x256xf32>, i32 -> vector<64x256xf32>
    %c3_91 = arith.constant 3 : index
    %c0_92 = arith.constant 0 : index
    %c0_93 = arith.constant 0 : index
    %144 = vector.load %arg4[%c3_91, %c0_92, %c0_93] : memref<9x1x256xf32, #tpu.memory_space<vmem>>, vector<1x1x256xf32>
    %145 = vector.shape_cast %144 : vector<1x1x256xf32> to vector<1x256xf32>
    %146 = vector.broadcast %145 : vector<1x256xf32> to vector<64x256xf32>
    %147 = arith.mulf %143, %146 : vector<64x256xf32>
    %c3_94 = arith.constant 3 : index
    %c0_95 = arith.constant 0 : index
    %c0_96 = arith.constant 0 : index
    %148 = vector.load %arg9[%c3_94, %c0_95, %c0_96] : memref<9x64x64xf32, #tpu.memory_space<vmem>>, vector<1x64x64xf32>
    %149 = vector.shape_cast %148 : vector<1x64x64xf32> to vector<64x64xf32>
    %cst_97 = arith.constant dense<0.000000e+00> : vector<64x256xf32>
    %150 = tpu.matmul %149, %147, %cst_97 {dimension_numbers = #tpu.dot_dimension_numbers<[1], [0], [0], [1], [0, 0, 1, 1], [], []>} : vector<64x64xf32>, vector<64x256xf32>, vector<64x256xf32> -> vector<64x256xf32>
    %151 = arith.addf %142, %150 : vector<64x256xf32>
    %c4_98 = arith.constant 4 : index
    %c0_99 = arith.constant 0 : index
    %c0_100 = arith.constant 0 : index
    %152 = vector.load %arg9[%c4_98, %c0_99, %c0_100] : memref<9x64x64xf32, #tpu.memory_space<vmem>>, vector<1x64x64xf32>
    %153 = vector.shape_cast %152 : vector<1x64x64xf32> to vector<64x64xf32>
    %cst_101 = arith.constant dense<0.000000e+00> : vector<64x256xf32>
    %154 = tpu.matmul %153, %114, %cst_101 {dimension_numbers = #tpu.dot_dimension_numbers<[1], [0], [0], [1], [0, 0, 1, 1], [], []>} : vector<64x64xf32>, vector<64x256xf32>, vector<64x256xf32> -> vector<64x256xf32>
    %155 = arith.addf %151, %154 : vector<64x256xf32>
    %c254_i32 = arith.constant 254 : i32
    %156 = tpu.dynamic_rotate %114 by %c254_i32 dim 1 : vector<64x256xf32>, i32 -> vector<64x256xf32>
    %c5_102 = arith.constant 5 : index
    %c0_103 = arith.constant 0 : index
    %c0_104 = arith.constant 0 : index
    %157 = vector.load %arg4[%c5_102, %c0_103, %c0_104] : memref<9x1x256xf32, #tpu.memory_space<vmem>>, vector<1x1x256xf32>
    %158 = vector.shape_cast %157 : vector<1x1x256xf32> to vector<1x256xf32>
    %159 = vector.broadcast %158 : vector<1x256xf32> to vector<64x256xf32>
    %160 = arith.mulf %156, %159 : vector<64x256xf32>
    %c5_105 = arith.constant 5 : index
    %c0_106 = arith.constant 0 : index
    %c0_107 = arith.constant 0 : index
    %161 = vector.load %arg9[%c5_105, %c0_106, %c0_107] : memref<9x64x64xf32, #tpu.memory_space<vmem>>, vector<1x64x64xf32>
    %162 = vector.shape_cast %161 : vector<1x64x64xf32> to vector<64x64xf32>
    %cst_108 = arith.constant dense<0.000000e+00> : vector<64x256xf32>
    %163 = tpu.matmul %162, %160, %cst_108 {dimension_numbers = #tpu.dot_dimension_numbers<[1], [0], [0], [1], [0, 0, 1, 1], [], []>} : vector<64x64xf32>, vector<64x256xf32>, vector<64x256xf32> -> vector<64x256xf32>
    %164 = arith.addf %155, %163 : vector<64x256xf32>
    %c226_i32 = arith.constant 226 : i32
    %165 = tpu.dynamic_rotate %114 by %c226_i32 dim 1 : vector<64x256xf32>, i32 -> vector<64x256xf32>
    %c6_109 = arith.constant 6 : index
    %c0_110 = arith.constant 0 : index
    %c0_111 = arith.constant 0 : index
    %166 = vector.load %arg4[%c6_109, %c0_110, %c0_111] : memref<9x1x256xf32, #tpu.memory_space<vmem>>, vector<1x1x256xf32>
    %167 = vector.shape_cast %166 : vector<1x1x256xf32> to vector<1x256xf32>
    %168 = vector.broadcast %167 : vector<1x256xf32> to vector<64x256xf32>
    %169 = arith.mulf %165, %168 : vector<64x256xf32>
    %c6_112 = arith.constant 6 : index
    %c0_113 = arith.constant 0 : index
    %c0_114 = arith.constant 0 : index
    %170 = vector.load %arg9[%c6_112, %c0_113, %c0_114] : memref<9x64x64xf32, #tpu.memory_space<vmem>>, vector<1x64x64xf32>
    %171 = vector.shape_cast %170 : vector<1x64x64xf32> to vector<64x64xf32>
    %cst_115 = arith.constant dense<0.000000e+00> : vector<64x256xf32>
    %172 = tpu.matmul %171, %169, %cst_115 {dimension_numbers = #tpu.dot_dimension_numbers<[1], [0], [0], [1], [0, 0, 1, 1], [], []>} : vector<64x64xf32>, vector<64x256xf32>, vector<64x256xf32> -> vector<64x256xf32>
    %173 = arith.addf %164, %172 : vector<64x256xf32>
    %c224_i32 = arith.constant 224 : i32
    %174 = tpu.dynamic_rotate %114 by %c224_i32 dim 1 : vector<64x256xf32>, i32 -> vector<64x256xf32>
    %c7_116 = arith.constant 7 : index
    %c0_117 = arith.constant 0 : index
    %c0_118 = arith.constant 0 : index
    %175 = vector.load %arg4[%c7_116, %c0_117, %c0_118] : memref<9x1x256xf32, #tpu.memory_space<vmem>>, vector<1x1x256xf32>
    %176 = vector.shape_cast %175 : vector<1x1x256xf32> to vector<1x256xf32>
    %177 = vector.broadcast %176 : vector<1x256xf32> to vector<64x256xf32>
    %178 = arith.mulf %174, %177 : vector<64x256xf32>
    %c7_119 = arith.constant 7 : index
    %c0_120 = arith.constant 0 : index
    %c0_121 = arith.constant 0 : index
    %179 = vector.load %arg9[%c7_119, %c0_120, %c0_121] : memref<9x64x64xf32, #tpu.memory_space<vmem>>, vector<1x64x64xf32>
    %180 = vector.shape_cast %179 : vector<1x64x64xf32> to vector<64x64xf32>
    %cst_122 = arith.constant dense<0.000000e+00> : vector<64x256xf32>
    %181 = tpu.matmul %180, %178, %cst_122 {dimension_numbers = #tpu.dot_dimension_numbers<[1], [0], [0], [1], [0, 0, 1, 1], [], []>} : vector<64x64xf32>, vector<64x256xf32>, vector<64x256xf32> -> vector<64x256xf32>
    %182 = arith.addf %173, %181 : vector<64x256xf32>
    %c222_i32 = arith.constant 222 : i32
    %183 = tpu.dynamic_rotate %114 by %c222_i32 dim 1 : vector<64x256xf32>, i32 -> vector<64x256xf32>
    %c8_123 = arith.constant 8 : index
    %c0_124 = arith.constant 0 : index
    %c0_125 = arith.constant 0 : index
    %184 = vector.load %arg4[%c8_123, %c0_124, %c0_125] : memref<9x1x256xf32, #tpu.memory_space<vmem>>, vector<1x1x256xf32>
    %185 = vector.shape_cast %184 : vector<1x1x256xf32> to vector<1x256xf32>
    %186 = vector.broadcast %185 : vector<1x256xf32> to vector<64x256xf32>
    %187 = arith.mulf %183, %186 : vector<64x256xf32>
    %c8_126 = arith.constant 8 : index
    %c0_127 = arith.constant 0 : index
    %c0_128 = arith.constant 0 : index
    %188 = vector.load %arg9[%c8_126, %c0_127, %c0_128] : memref<9x64x64xf32, #tpu.memory_space<vmem>>, vector<1x64x64xf32>
    %189 = vector.shape_cast %188 : vector<1x64x64xf32> to vector<64x64xf32>
    %cst_129 = arith.constant dense<0.000000e+00> : vector<64x256xf32>
    %190 = tpu.matmul %189, %187, %cst_129 {dimension_numbers = #tpu.dot_dimension_numbers<[1], [0], [0], [1], [0, 0, 1, 1], [], []>} : vector<64x64xf32>, vector<64x256xf32>, vector<64x256xf32> -> vector<64x256xf32>
    %191 = arith.addf %182, %190 : vector<64x256xf32>
    %c0_130 = arith.constant 0 : index
    %c0_131 = arith.constant 0 : index
    %192 = vector.load %arg10[%c0_130, %c0_131] : memref<64x1xf32, #tpu.memory_space<vmem>>, vector<64x1xf32>
    %193 = vector.broadcast %192 : vector<64x1xf32> to vector<64x256xf32>
    %194 = arith.mulf %191, %193 : vector<64x256xf32>
    %c0_132 = arith.constant 0 : index
    %c0_133 = arith.constant 0 : index
    %195 = vector.load %arg11[%c0_132, %c0_133] : memref<64x1xf32, #tpu.memory_space<vmem>>, vector<64x1xf32>
    %196 = vector.broadcast %195 : vector<64x1xf32> to vector<64x256xf32>
    %197 = arith.addf %194, %196 : vector<64x256xf32>
    %cst_134 = arith.constant 5.000000e-01 : f32
    %198 = vector.broadcast %cst_134 : f32 to vector<64x256xf32>
    %199 = arith.mulf %198, %197 : vector<64x256xf32>
    %cst_135 = arith.constant 4.471500e-02 : f32
    %200 = vector.broadcast %cst_135 : f32 to vector<64x256xf32>
    %201 = arith.mulf %200, %197 : vector<64x256xf32>
    %202 = arith.mulf %201, %197 : vector<64x256xf32>
    %203 = arith.mulf %202, %197 : vector<64x256xf32>
    %204 = arith.addf %197, %203 : vector<64x256xf32>
    %cst_136 = arith.constant 0.797884583 : f32
    %205 = vector.broadcast %cst_136 : f32 to vector<64x256xf32>
    %206 = arith.mulf %205, %204 : vector<64x256xf32>
    %207 = math.tanh %206 : vector<64x256xf32>
    %cst_137 = arith.constant 1.000000e+00 : f32
    %208 = vector.broadcast %cst_137 : f32 to vector<64x256xf32>
    %209 = arith.addf %208, %207 : vector<64x256xf32>
    %210 = arith.mulf %199, %209 : vector<64x256xf32>
    %c0_138 = arith.constant 0 : index
    %c0_139 = arith.constant 0 : index
    %211 = vector.load %arg5[%c0_138, %c0_139] : memref<1x256xf32, #tpu.memory_space<vmem>>, vector<1x256xf32>
    %212 = vector.broadcast %211 : vector<1x256xf32> to vector<64x256xf32>
    %213 = arith.mulf %210, %212 : vector<64x256xf32>
    %cst_140 = arith.constant 0.000000e+00 : f32
    %214 = vector.broadcast %cst_140 : f32 to vector<19x256xf32>
    %c17_i32_141 = arith.constant 17 : i32
    %215 = tpu.dynamic_rotate %213 by %c17_i32_141 dim 1 : vector<64x256xf32>, i32 -> vector<64x256xf32>
    %c0_142 = arith.constant 0 : index
    %c0_143 = arith.constant 0 : index
    %c0_144 = arith.constant 0 : index
    %216 = vector.load %arg3[%c0_142, %c0_143, %c0_144] : memref<9x1x256xf32, #tpu.memory_space<vmem>>, vector<1x1x256xf32>
    %217 = vector.shape_cast %216 : vector<1x1x256xf32> to vector<1x256xf32>
    %218 = vector.broadcast %217 : vector<1x256xf32> to vector<64x256xf32>
    %219 = arith.mulf %215, %218 : vector<64x256xf32>
    %c0_145 = arith.constant 0 : index
    %c0_146 = arith.constant 0 : index
    %c0_147 = arith.constant 0 : index
    %220 = vector.load %arg12[%c0_145, %c0_146, %c0_147] : memref<9x19x64xf32, #tpu.memory_space<vmem>>, vector<1x19x64xf32>
    %221 = vector.shape_cast %220 : vector<1x19x64xf32> to vector<19x64xf32>
    %cst_148 = arith.constant dense<0.000000e+00> : vector<19x256xf32>
    %222 = tpu.matmul %221, %219, %cst_148 {dimension_numbers = #tpu.dot_dimension_numbers<[1], [0], [0], [1], [0, 0, 1, 1], [], []>} : vector<19x64xf32>, vector<64x256xf32>, vector<19x256xf32> -> vector<19x256xf32>
    %223 = arith.addf %214, %222 : vector<19x256xf32>
    %c16_i32_149 = arith.constant 16 : i32
    %224 = tpu.dynamic_rotate %213 by %c16_i32_149 dim 1 : vector<64x256xf32>, i32 -> vector<64x256xf32>
    %c1_150 = arith.constant 1 : index
    %c0_151 = arith.constant 0 : index
    %c0_152 = arith.constant 0 : index
    %225 = vector.load %arg3[%c1_150, %c0_151, %c0_152] : memref<9x1x256xf32, #tpu.memory_space<vmem>>, vector<1x1x256xf32>
    %226 = vector.shape_cast %225 : vector<1x1x256xf32> to vector<1x256xf32>
    %227 = vector.broadcast %226 : vector<1x256xf32> to vector<64x256xf32>
    %228 = arith.mulf %224, %227 : vector<64x256xf32>
    %c1_153 = arith.constant 1 : index
    %c0_154 = arith.constant 0 : index
    %c0_155 = arith.constant 0 : index
    %229 = vector.load %arg12[%c1_153, %c0_154, %c0_155] : memref<9x19x64xf32, #tpu.memory_space<vmem>>, vector<1x19x64xf32>
    %230 = vector.shape_cast %229 : vector<1x19x64xf32> to vector<19x64xf32>
    %cst_156 = arith.constant dense<0.000000e+00> : vector<19x256xf32>
    %231 = tpu.matmul %230, %228, %cst_156 {dimension_numbers = #tpu.dot_dimension_numbers<[1], [0], [0], [1], [0, 0, 1, 1], [], []>} : vector<19x64xf32>, vector<64x256xf32>, vector<19x256xf32> -> vector<19x256xf32>
    %232 = arith.addf %223, %231 : vector<19x256xf32>
    %c15_i32_157 = arith.constant 15 : i32
    %233 = tpu.dynamic_rotate %213 by %c15_i32_157 dim 1 : vector<64x256xf32>, i32 -> vector<64x256xf32>
    %c2_158 = arith.constant 2 : index
    %c0_159 = arith.constant 0 : index
    %c0_160 = arith.constant 0 : index
    %234 = vector.load %arg3[%c2_158, %c0_159, %c0_160] : memref<9x1x256xf32, #tpu.memory_space<vmem>>, vector<1x1x256xf32>
    %235 = vector.shape_cast %234 : vector<1x1x256xf32> to vector<1x256xf32>
    %236 = vector.broadcast %235 : vector<1x256xf32> to vector<64x256xf32>
    %237 = arith.mulf %233, %236 : vector<64x256xf32>
    %c2_161 = arith.constant 2 : index
    %c0_162 = arith.constant 0 : index
    %c0_163 = arith.constant 0 : index
    %238 = vector.load %arg12[%c2_161, %c0_162, %c0_163] : memref<9x19x64xf32, #tpu.memory_space<vmem>>, vector<1x19x64xf32>
    %239 = vector.shape_cast %238 : vector<1x19x64xf32> to vector<19x64xf32>
    %cst_164 = arith.constant dense<0.000000e+00> : vector<19x256xf32>
    %240 = tpu.matmul %239, %237, %cst_164 {dimension_numbers = #tpu.dot_dimension_numbers<[1], [0], [0], [1], [0, 0, 1, 1], [], []>} : vector<19x64xf32>, vector<64x256xf32>, vector<19x256xf32> -> vector<19x256xf32>
    %241 = arith.addf %232, %240 : vector<19x256xf32>
    %c1_i32_165 = arith.constant 1 : i32
    %242 = tpu.dynamic_rotate %213 by %c1_i32_165 dim 1 : vector<64x256xf32>, i32 -> vector<64x256xf32>
    %c3_166 = arith.constant 3 : index
    %c0_167 = arith.constant 0 : index
    %c0_168 = arith.constant 0 : index
    %243 = vector.load %arg3[%c3_166, %c0_167, %c0_168] : memref<9x1x256xf32, #tpu.memory_space<vmem>>, vector<1x1x256xf32>
    %244 = vector.shape_cast %243 : vector<1x1x256xf32> to vector<1x256xf32>
    %245 = vector.broadcast %244 : vector<1x256xf32> to vector<64x256xf32>
    %246 = arith.mulf %242, %245 : vector<64x256xf32>
    %c3_169 = arith.constant 3 : index
    %c0_170 = arith.constant 0 : index
    %c0_171 = arith.constant 0 : index
    %247 = vector.load %arg12[%c3_169, %c0_170, %c0_171] : memref<9x19x64xf32, #tpu.memory_space<vmem>>, vector<1x19x64xf32>
    %248 = vector.shape_cast %247 : vector<1x19x64xf32> to vector<19x64xf32>
    %cst_172 = arith.constant dense<0.000000e+00> : vector<19x256xf32>
    %249 = tpu.matmul %248, %246, %cst_172 {dimension_numbers = #tpu.dot_dimension_numbers<[1], [0], [0], [1], [0, 0, 1, 1], [], []>} : vector<19x64xf32>, vector<64x256xf32>, vector<19x256xf32> -> vector<19x256xf32>
    %250 = arith.addf %241, %249 : vector<19x256xf32>
    %c4_173 = arith.constant 4 : index
    %c0_174 = arith.constant 0 : index
    %c0_175 = arith.constant 0 : index
    %251 = vector.load %arg12[%c4_173, %c0_174, %c0_175] : memref<9x19x64xf32, #tpu.memory_space<vmem>>, vector<1x19x64xf32>
    %252 = vector.shape_cast %251 : vector<1x19x64xf32> to vector<19x64xf32>
    %cst_176 = arith.constant dense<0.000000e+00> : vector<19x256xf32>
    %253 = tpu.matmul %252, %213, %cst_176 {dimension_numbers = #tpu.dot_dimension_numbers<[1], [0], [0], [1], [0, 0, 1, 1], [], []>} : vector<19x64xf32>, vector<64x256xf32>, vector<19x256xf32> -> vector<19x256xf32>
    %254 = arith.addf %250, %253 : vector<19x256xf32>
    %c255_i32_177 = arith.constant 255 : i32
    %255 = tpu.dynamic_rotate %213 by %c255_i32_177 dim 1 : vector<64x256xf32>, i32 -> vector<64x256xf32>
    %c5_178 = arith.constant 5 : index
    %c0_179 = arith.constant 0 : index
    %c0_180 = arith.constant 0 : index
    %256 = vector.load %arg3[%c5_178, %c0_179, %c0_180] : memref<9x1x256xf32, #tpu.memory_space<vmem>>, vector<1x1x256xf32>
    %257 = vector.shape_cast %256 : vector<1x1x256xf32> to vector<1x256xf32>
    %258 = vector.broadcast %257 : vector<1x256xf32> to vector<64x256xf32>
    %259 = arith.mulf %255, %258 : vector<64x256xf32>
    %c5_181 = arith.constant 5 : index
    %c0_182 = arith.constant 0 : index
    %c0_183 = arith.constant 0 : index
    %260 = vector.load %arg12[%c5_181, %c0_182, %c0_183] : memref<9x19x64xf32, #tpu.memory_space<vmem>>, vector<1x19x64xf32>
    %261 = vector.shape_cast %260 : vector<1x19x64xf32> to vector<19x64xf32>
    %cst_184 = arith.constant dense<0.000000e+00> : vector<19x256xf32>
    %262 = tpu.matmul %261, %259, %cst_184 {dimension_numbers = #tpu.dot_dimension_numbers<[1], [0], [0], [1], [0, 0, 1, 1], [], []>} : vector<19x64xf32>, vector<64x256xf32>, vector<19x256xf32> -> vector<19x256xf32>
    %263 = arith.addf %254, %262 : vector<19x256xf32>
    %c241_i32_185 = arith.constant 241 : i32
    %264 = tpu.dynamic_rotate %213 by %c241_i32_185 dim 1 : vector<64x256xf32>, i32 -> vector<64x256xf32>
    %c6_186 = arith.constant 6 : index
    %c0_187 = arith.constant 0 : index
    %c0_188 = arith.constant 0 : index
    %265 = vector.load %arg3[%c6_186, %c0_187, %c0_188] : memref<9x1x256xf32, #tpu.memory_space<vmem>>, vector<1x1x256xf32>
    %266 = vector.shape_cast %265 : vector<1x1x256xf32> to vector<1x256xf32>
    %267 = vector.broadcast %266 : vector<1x256xf32> to vector<64x256xf32>
    %268 = arith.mulf %264, %267 : vector<64x256xf32>
    %c6_189 = arith.constant 6 : index
    %c0_190 = arith.constant 0 : index
    %c0_191 = arith.constant 0 : index
    %269 = vector.load %arg12[%c6_189, %c0_190, %c0_191] : memref<9x19x64xf32, #tpu.memory_space<vmem>>, vector<1x19x64xf32>
    %270 = vector.shape_cast %269 : vector<1x19x64xf32> to vector<19x64xf32>
    %cst_192 = arith.constant dense<0.000000e+00> : vector<19x256xf32>
    %271 = tpu.matmul %270, %268, %cst_192 {dimension_numbers = #tpu.dot_dimension_numbers<[1], [0], [0], [1], [0, 0, 1, 1], [], []>} : vector<19x64xf32>, vector<64x256xf32>, vector<19x256xf32> -> vector<19x256xf32>
    %272 = arith.addf %263, %271 : vector<19x256xf32>
    %c240_i32_193 = arith.constant 240 : i32
    %273 = tpu.dynamic_rotate %213 by %c240_i32_193 dim 1 : vector<64x256xf32>, i32 -> vector<64x256xf32>
    %c7_194 = arith.constant 7 : index
    %c0_195 = arith.constant 0 : index
    %c0_196 = arith.constant 0 : index
    %274 = vector.load %arg3[%c7_194, %c0_195, %c0_196] : memref<9x1x256xf32, #tpu.memory_space<vmem>>, vector<1x1x256xf32>
    %275 = vector.shape_cast %274 : vector<1x1x256xf32> to vector<1x256xf32>
    %276 = vector.broadcast %275 : vector<1x256xf32> to vector<64x256xf32>
    %277 = arith.mulf %273, %276 : vector<64x256xf32>
    %c7_197 = arith.constant 7 : index
    %c0_198 = arith.constant 0 : index
    %c0_199 = arith.constant 0 : index
    %278 = vector.load %arg12[%c7_197, %c0_198, %c0_199] : memref<9x19x64xf32, #tpu.memory_space<vmem>>, vector<1x19x64xf32>
    %279 = vector.shape_cast %278 : vector<1x19x64xf32> to vector<19x64xf32>
    %cst_200 = arith.constant dense<0.000000e+00> : vector<19x256xf32>
    %280 = tpu.matmul %279, %277, %cst_200 {dimension_numbers = #tpu.dot_dimension_numbers<[1], [0], [0], [1], [0, 0, 1, 1], [], []>} : vector<19x64xf32>, vector<64x256xf32>, vector<19x256xf32> -> vector<19x256xf32>
    %281 = arith.addf %272, %280 : vector<19x256xf32>
    %c239_i32_201 = arith.constant 239 : i32
    %282 = tpu.dynamic_rotate %213 by %c239_i32_201 dim 1 : vector<64x256xf32>, i32 -> vector<64x256xf32>
    %c8_202 = arith.constant 8 : index
    %c0_203 = arith.constant 0 : index
    %c0_204 = arith.constant 0 : index
    %283 = vector.load %arg3[%c8_202, %c0_203, %c0_204] : memref<9x1x256xf32, #tpu.memory_space<vmem>>, vector<1x1x256xf32>
    %284 = vector.shape_cast %283 : vector<1x1x256xf32> to vector<1x256xf32>
    %285 = vector.broadcast %284 : vector<1x256xf32> to vector<64x256xf32>
    %286 = arith.mulf %282, %285 : vector<64x256xf32>
    %c8_205 = arith.constant 8 : index
    %c0_206 = arith.constant 0 : index
    %c0_207 = arith.constant 0 : index
    %287 = vector.load %arg12[%c8_205, %c0_206, %c0_207] : memref<9x19x64xf32, #tpu.memory_space<vmem>>, vector<1x19x64xf32>
    %288 = vector.shape_cast %287 : vector<1x19x64xf32> to vector<19x64xf32>
    %cst_208 = arith.constant dense<0.000000e+00> : vector<19x256xf32>
    %289 = tpu.matmul %288, %286, %cst_208 {dimension_numbers = #tpu.dot_dimension_numbers<[1], [0], [0], [1], [0, 0, 1, 1], [], []>} : vector<19x64xf32>, vector<64x256xf32>, vector<19x256xf32> -> vector<19x256xf32>
    %290 = arith.addf %281, %289 : vector<19x256xf32>
    %c0_209 = arith.constant 0 : index
    %c0_210 = arith.constant 0 : index
    %291 = vector.load %arg13[%c0_209, %c0_210] : memref<19x1xf32, #tpu.memory_space<vmem>>, vector<19x1xf32>
    %292 = vector.broadcast %291 : vector<19x1xf32> to vector<19x256xf32>
    %293 = arith.mulf %290, %292 : vector<19x256xf32>
    %c0_211 = arith.constant 0 : index
    %c0_212 = arith.constant 0 : index
    %294 = vector.load %arg14[%c0_211, %c0_212] : memref<19x1xf32, #tpu.memory_space<vmem>>, vector<19x1xf32>
    %295 = vector.broadcast %294 : vector<19x1xf32> to vector<19x256xf32>
    %296 = arith.addf %293, %295 : vector<19x256xf32>
    %c0_213 = arith.constant 0 : index
    %c0_214 = arith.constant 0 : index
    %297 = vector.load %arg15[%c0_213, %c0_214] : memref<256x1024xf32, #tpu.memory_space<vmem>>, vector<256x1024xf32>
    %cst_215 = arith.constant dense<0.000000e+00> : vector<19x1024xf32>
    %298 = tpu.matmul %296, %297, %cst_215 {dimension_numbers = #tpu.dot_dimension_numbers<[1], [0], [0], [1], [0, 0, 1, 1], [], []>} : vector<19x256xf32>, vector<256x1024xf32>, vector<19x1024xf32> -> vector<19x1024xf32>
    %c0_216 = arith.constant 0 : index
    %c0_217 = arith.constant 0 : index
    %c0_218 = arith.constant 0 : index
    %299 = vector.load %arg16[%c0_216, %c0_217, %c0_218] : memref<1x19x1024xf32, #tpu.memory_space<vmem>>, vector<1x19x1024xf32>
    %300 = vector.shape_cast %299 : vector<1x19x1024xf32> to vector<19x1024xf32>
    %301 = vector.shape_cast %298 : vector<19x1024xf32> to vector<1x19x1024xf32>
    tpu.vector_store %arg16[%c0_216, %c0_217, %c0_218], %301 {strides = array<i32>} : memref<1x19x1024xf32, #tpu.memory_space<vmem>>, vector<1x19x1024xf32>,
    return
  }
  func.func @transform_0(%arg0: i32) -> (i32, i32, i32) {
    %c0_i32 = arith.constant 0 : i32
    %c0_i32_0 = arith.constant 0 : i32
    %c0_i32_1 = arith.constant 0 : i32
    return %arg0, %c0_i32, %c0_i32_0 : i32, i32, i32
  }
  func.func @transform_1(%arg0: i32) -> (i32, i32, i32) {
    %c0_i32 = arith.constant 0 : i32
    %c0_i32_0 = arith.constant 0 : i32
    %c0_i32_1 = arith.constant 0 : i32
    return %arg0, %c0_i32, %c0_i32_0 : i32, i32, i32
  }
  func.func @transform_2(%arg0: i32) -> (i32, i32, i32) {
    %c0_i32 = arith.constant 0 : i32
    %c0_i32_0 = arith.constant 0 : i32
    %c0_i32_1 = arith.constant 0 : i32
    %c0_i32_2 = arith.constant 0 : i32
    return %c0_i32, %c0_i32_0, %c0_i32_1 : i32, i32, i32
  }
  func.func @transform_3(%arg0: i32) -> (i32, i32, i32) {
    %c0_i32 = arith.constant 0 : i32
    %c0_i32_0 = arith.constant 0 : i32
    %c0_i32_1 = arith.constant 0 : i32
    %c0_i32_2 = arith.constant 0 : i32
    return %c0_i32, %c0_i32_0, %c0_i32_1 : i32, i32, i32
  }
  func.func @transform_4(%arg0: i32) -> (i32, i32) {
    %c0_i32 = arith.constant 0 : i32
    %c0_i32_0 = arith.constant 0 : i32
    %c0_i32_1 = arith.constant 0 : i32
    return %c0_i32, %c0_i32_0 : i32, i32
  }
  func.func @transform_5(%arg0: i32) -> (i32, i32, i32) {
    %c0_i32 = arith.constant 0 : i32
    %c0_i32_0 = arith.constant 0 : i32
    %c0_i32_1 = arith.constant 0 : i32
    %c0_i32_2 = arith.constant 0 : i32
    return %c0_i32, %c0_i32_0, %c0_i32_1 : i32, i32, i32
  }
  func.func @transform_6(%arg0: i32) -> (i32, i32) {
    %c0_i32 = arith.constant 0 : i32
    %c0_i32_0 = arith.constant 0 : i32
    %c0_i32_1 = arith.constant 0 : i32
    return %c0_i32, %c0_i32_0 : i32, i32
  }
  func.func @transform_7(%arg0: i32) -> (i32, i32) {
    %c0_i32 = arith.constant 0 : i32
    %c0_i32_0 = arith.constant 0 : i32
    %c0_i32_1 = arith.constant 0 : i32
    return %c0_i32, %c0_i32_0 : i32, i32
  }
  func.func @transform_8(%arg0: i32) -> (i32, i32, i32) {
    %c0_i32 = arith.constant 0 : i32
    %c0_i32_0 = arith.constant 0 : i32
    %c0_i32_1 = arith.constant 0 : i32
    %c0_i32_2 = arith.constant 0 : i32
    return %c0_i32, %c0_i32_0, %c0_i32_1 : i32, i32, i32
  }
  func.func @transform_9(%arg0: i32) -> (i32, i32) {
    %c0_i32 = arith.constant 0 : i32
    %c0_i32_0 = arith.constant 0 : i32
    %c0_i32_1 = arith.constant 0 : i32
    return %c0_i32, %c0_i32_0 : i32, i32
  }
  func.func @transform_10(%arg0: i32) -> (i32, i32) {
    %c0_i32 = arith.constant 0 : i32
    %c0_i32_0 = arith.constant 0 : i32
    %c0_i32_1 = arith.constant 0 : i32
    return %c0_i32, %c0_i32_0 : i32, i32
  }
  func.func @transform_11(%arg0: i32) -> (i32, i32, i32) {
    %c0_i32 = arith.constant 0 : i32
    %c0_i32_0 = arith.constant 0 : i32
    %c0_i32_1 = arith.constant 0 : i32
    %c0_i32_2 = arith.constant 0 : i32
    return %c0_i32, %c0_i32_0, %c0_i32_1 : i32, i32, i32
  }
  func.func @transform_12(%arg0: i32) -> (i32, i32) {
    %c0_i32 = arith.constant 0 : i32
    %c0_i32_0 = arith.constant 0 : i32
    %c0_i32_1 = arith.constant 0 : i32
    return %c0_i32, %c0_i32_0 : i32, i32
  }
  func.func @transform_13(%arg0: i32) -> (i32, i32) {
    %c0_i32 = arith.constant 0 : i32
    %c0_i32_0 = arith.constant 0 : i32
    %c0_i32_1 = arith.constant 0 : i32
    return %c0_i32, %c0_i32_0 : i32, i32
  }
  func.func @transform_14(%arg0: i32) -> (i32, i32) {
    %c0_i32 = arith.constant 0 : i32
    %c0_i32_0 = arith.constant 0 : i32
    %c0_i32_1 = arith.constant 0 : i32
    return %c0_i32, %c0_i32_0 : i32, i32
  }
  func.func @transform_15(%arg0: i32) -> (i32, i32, i32) {
    %c0_i32 = arith.constant 0 : i32
    %c0_i32_0 = arith.constant 0 : i32
    %c0_i32_1 = arith.constant 0 : i32
    return %arg0, %c0_i32, %c0_i32_0 : i32, i32, i32
  }
}

</mosaic_0001>

<llo_original>
// kernel: segmentation_head_forward.1
$region0: #{segmentation_head_forward.1}
  #allocation0 [shape = 'u32[]', space=smem, size = 0x4, offset = 0x4, fixed_abs, tag = 'smem constant byte address 0x4 - core index']
  #allocation1 [shape = 'u32[72,128]{1,0:T(1,128)}', space=vmem, size = 0x9000, scoped, tag = 'internal scratch']
  %s0 = inlined_call_operand.vmem [shape: f32[2,19,8], index: 0, kind: input, shape index: {}]
  %s1 = inlined_call_operand.vmem [shape: f32[2,8,256], index: 1, kind: input, shape index: {}]
  %s2 = inlined_call_operand.vmem [shape: f32[9,1,256], index: 2, kind: input, shape index: {}]
  %s3 = inlined_call_operand.vmem [shape: f32[9,1,256], index: 3, kind: input, shape index: {}]
  %s4 = inlined_call_operand.vmem [shape: f32[1,256], index: 4, kind: input, shape index: {}]
  %s5 = inlined_call_operand.vmem [shape: f32[9,64,19], index: 5, kind: input, shape index: {}]
  %s6 = inlined_call_operand.vmem [shape: f32[64,1], index: 6, kind: input, shape index: {}]
  %s7 = inlined_call_operand.vmem [shape: f32[64,1], index: 7, kind: input, shape index: {}]
  %s8 = inlined_call_operand.vmem [shape: f32[9,64,64], index: 8, kind: input, shape index: {}]
  %s9 = inlined_call_operand.vmem [shape: f32[64,1], index: 9, kind: input, shape index: {}]
  %s10 = inlined_call_operand.vmem [shape: f32[64,1], index: 10, kind: input, shape index: {}]
  %s11 = inlined_call_operand.vmem [shape: f32[9,19,64], index: 11, kind: input, shape index: {}]
  %s12 = inlined_call_operand.vmem [shape: f32[19,1], index: 12, kind: input, shape index: {}]
  %s13 = inlined_call_operand.vmem [shape: f32[19,1], index: 13, kind: input, shape index: {}]
  %s14 = inlined_call_operand.vmem [shape: f32[256,1024], index: 14, kind: input, shape index: {}]
  %s15 = inlined_call_operand.vmem [shape: f32[2,19,1024], index: 15, kind: output, shape index: {}]
  %s16 = sld [smem:[#allocation0]]
  $region93: #{segmentation_head_forward.1} parent=0
    _
  %s18 = ssub.s32 1, %s16
  %s19 = scalar_select 0, %s18, %s16
  loop: start=0, step=1, limit=4
  $region2: #{segmentation_head_forward.1} parent=0 // loop_pre_header
    _
  $region3: #{segmentation_head_forward.1} parent=0 // loop_header
    %s21 = sphi 0, %s25
    %p22 = scmp.ge.s32.totalorder %s21, 4
    %s31 = sphi 0, %s33
    %s34 = sphi 0, %s31
    %s35 = sphi 0, %s34
    %s51 = sphi 0, %s35
    %s57 = sphi 0, %s59
    %s60 = sphi 0, %s57
    %s61 = sphi 0, %s60
    %s77 = sphi 0, %s61
    %s81 = sphi 0, %s81
    %s83 = sphi 0, %s81
    %s84 = sphi 0, %s83
    %s98 = sphi 0, %s84
    %s102 = sphi 0, %s102
    %s104 = sphi 0, %s102
    %s105 = sphi 0, %s104
    %s119 = sphi 0, %s105
    %s123 = sphi 0, %s123
    %s125 = sphi 0, %s123
    %s126 = sphi 0, %s125
    %s140 = sphi 0, %s126
    %s144 = sphi 0, %s144
    %s146 = sphi 0, %s144
    %s147 = sphi 0, %s146
    %s161 = sphi 0, %s147
    %s165 = sphi 0, %s165
    %s167 = sphi 0, %s165
    %s168 = sphi 0, %s167
    %s182 = sphi 0, %s168
    %s186 = sphi 0, %s186
    %s188 = sphi 0, %s186
    %s189 = sphi 0, %s188
    %s203 = sphi 0, %s189
    %s207 = sphi 0, %s207
    %s209 = sphi 0, %s207
    %s210 = sphi 0, %s209
    %s224 = sphi 0, %s210
    %s228 = sphi 0, %s228
    %s230 = sphi 0, %s228
    %s231 = sphi 0, %s230
    %s245 = sphi 0, %s231
    %s249 = sphi 0, %s249
    %s251 = sphi 0, %s249
    %s252 = sphi 0, %s251
    %s266 = sphi 0, %s252
    %s270 = sphi 0, %s270
    %s272 = sphi 0, %s270
    %s273 = sphi 0, %s272
    %s287 = sphi 0, %s273
    %s291 = sphi 0, %s291
    %s293 = sphi 0, %s291
    %s294 = sphi 0, %s293
    %s308 = sphi 0, %s294
    %s312 = sphi 0, %s312
    %s314 = sphi 0, %s312
    %s315 = sphi 0, %s314
    %s329 = sphi 0, %s315
    %s333 = sphi 0, %s333
    %s335 = sphi 0, %s333
    %s336 = sphi 0, %s335
    %s350 = sphi 0, %s336
    %s356 = sphi 0, %s358
    %s359 = sphi 0, %s356
    %s360 = sphi 0, %s359
    %s376 = sphi 0, %s360
  $region4: #{segmentation_head_forward.1} parent=0 // loop_header_branch
    %24 = sbr.rel (%p22) target = $region8
  $region5: #{segmentation_head_forward.1} parent=0 // loop_body
    %s26 = ssub.s32 %s21, 1
    %s27 = ssub.s32 %s21, 2
    %s28 = sadd.s32 %s21, 1
    %s29 = ssub.s32 %s21, %s28
    %p30 = scmp.eq.s32.totalorder %s29, 0
    %s32 = sadd.s32 %s31, 1
    %s33 = scalar_select %p30, %s31, %s32
    %p36 = pneg %p30
    %p37 = scmp.eq.s32.totalorder %s21, 1
    %p38 = por %p36, %p37
    %p39 = scmp.ne.s32.totalorder %s31, %s34
    %p40 = scmp.eq.s32.totalorder %s21, 0
    %p41 = por %p39, %p40
    %p42 = scmp.ne.s32.totalorder %s31, %s34
    %p43 = scmp.eq.s32.totalorder %s26, 1
    %p44 = por %p42, %p43
    %p45 = scmp.ne.s32.totalorder %s34, %s35
    %p46 = scmp.eq.s32.totalorder %s26, 0
    %p47 = por %p45, %p46
    %p48 = scmp.ne.s32.totalorder %s34, %s35
    %p49 = scmp.eq.s32.totalorder %s27, 1
    %p50 = por %p48, %p49
    %p52 = scmp.ne.s32.totalorder %s35, %s51
    %p53 = scmp.eq.s32.totalorder %s27, 0
    %p54 = por %p52, %p53
    %s55 = ssub.s32 %s21, %s28
    %p56 = scmp.eq.s32.totalorder %s55, 0
    %s58 = sadd.s32 %s57, 1
    %s59 = scalar_select %p56, %s57, %s58
    %p62 = pneg %p56
    %p63 = scmp.eq.s32.totalorder %s21, 1
    %p64 = por %p62, %p63
    %p65 = scmp.ne.s32.totalorder %s57, %s60
    %p66 = scmp.eq.s32.totalorder %s21, 0
    %p67 = por %p65, %p66
    %p68 = scmp.ne.s32.totalorder %s57, %s60
    %p69 = scmp.eq.s32.totalorder %s26, 1
    %p70 = por %p68, %p69
    %p71 = scmp.ne.s32.totalorder %s60, %s61
    %p72 = scmp.eq.s32.totalorder %s26, 0
    %p73 = por %p71, %p72
    %p74 = scmp.ne.s32.totalorder %s60, %s61
    %p75 = scmp.eq.s32.totalorder %s27, 1
    %p76 = por %p74, %p75
    %p78 = scmp.ne.s32.totalorder %s61, %s77
    %p79 = scmp.eq.s32.totalorder %s27, 0
    %p80 = por %p78, %p79
    %s82 = sadd.s32 %s81, 1
    %p85 = scmp.eq.s32.totalorder %s21, 1
    %p86 = scmp.ne.s32.totalorder %s81, %s83
    %p87 = scmp.eq.s32.totalorder %s21, 0
    %p88 = por %p86, %p87
    %p89 = scmp.ne.s32.totalorder %s81, %s83
    %p90 = scmp.eq.s32.totalorder %s26, 1
    %p91 = por %p89, %p90
    %p92 = scmp.ne.s32.totalorder %s83, %s84
    %p93 = scmp.eq.s32.totalorder %s26, 0
    %p94 = por %p92, %p93
    %p95 = scmp.ne.s32.totalorder %s83, %s84
    %p96 = scmp.eq.s32.totalorder %s27, 1
    %p97 = por %p95, %p96
    %p99 = scmp.ne.s32.totalorder %s84, %s98
    %p100 = scmp.eq.s32.totalorder %s27, 0
    %p101 = por %p99, %p100
    %s103 = sadd.s32 %s102, 1
    %p106 = scmp.eq.s32.totalorder %s21, 1
    %p107 = scmp.ne.s32.totalorder %s102, %s104
    %p108 = scmp.eq.s32.totalorder %s21, 0
    %p109 = por %p107, %p108
    %p110 = scmp.ne.s32.totalorder %s102, %s104
    %p111 = scmp.eq.s32.totalorder %s26, 1
    %p112 = por %p110, %p111
    %p113 = scmp.ne.s32.totalorder %s104, %s105
    %p114 = scmp.eq.s32.totalorder %s26, 0
    %p115 = por %p113, %p114
    %p116 = scmp.ne.s32.totalorder %s104, %s105
    %p117 = scmp.eq.s32.totalorder %s27, 1
    %p118 = por %p116, %p117
    %p120 = scmp.ne.s32.totalorder %s105, %s119
    %p121 = scmp.eq.s32.totalorder %s27, 0
    %p122 = por %p120, %p121
    %s124 = sadd.s32 %s123, 1
    %p127 = scmp.eq.s32.totalorder %s21, 1
    %p128 = scmp.ne.s32.totalorder %s123, %s125
    %p129 = scmp.eq.s32.totalorder %s21, 0
    %p130 = por %p128, %p129
    %p131 = scmp.ne.s32.totalorder %s123, %s125
    %p132 = scmp.eq.s32.totalorder %s26, 1
    %p133 = por %p131, %p132
    %p134 = scmp.ne.s32.totalorder %s125, %s126
    %p135 = scmp.eq.s32.totalorder %s26, 0
    %p136 = por %p134, %p135
    %p137 = scmp.ne.s32.totalorder %s125, %s126
    %p138 = scmp.eq.s32.totalorder %s27, 1
    %p139 = por %p137, %p138
    %p141 = scmp.ne.s32.totalorder %s126, %s140
    %p142 = scmp.eq.s32.totalorder %s27, 0
    %p143 = por %p141, %p142
    %s145 = sadd.s32 %s144, 1
    %p148 = scmp.eq.s32.totalorder %s21, 1
    %p149 = scmp.ne.s32.totalorder %s144, %s146
    %p150 = scmp.eq.s32.totalorder %s21, 0
    %p151 = por %p149, %p150
    %p152 = scmp.ne.s32.totalorder %s144, %s146
    %p153 = scmp.eq.s32.totalorder %s26, 1
    %p154 = por %p152, %p153
    %p155 = scmp.ne.s32.totalorder %s146, %s147
    %p156 = scmp.eq.s32.totalorder %s26, 0
    %p157 = por %p155, %p156
    %p158 = scmp.ne.s32.totalorder %s146, %s147
    %p159 = scmp.eq.s32.totalorder %s27, 1
    %p160 = por %p158, %p159
    %p162 = scmp.ne.s32.totalorder %s147, %s161
    %p163 = scmp.eq.s32.totalorder %s27, 0
    %p164 = por %p162, %p163
    %s166 = sadd.s32 %s165, 1
    %p169 = scmp.eq.s32.totalorder %s21, 1
    %p170 = scmp.ne.s32.totalorder %s165, %s167
    %p171 = scmp.eq.s32.totalorder %s21, 0
    %p172 = por %p170, %p171
    %p173 = scmp.ne.s32.totalorder %s165, %s167
    %p174 = scmp.eq.s32.totalorder %s26, 1
    %p175 = por %p173, %p174
    %p176 = scmp.ne.s32.totalorder %s167, %s168
    %p177 = scmp.eq.s32.totalorder %s26, 0
    %p178 = por %p176, %p177
    %p179 = scmp.ne.s32.totalorder %s167, %s168
    %p180 = scmp.eq.s32.totalorder %s27, 1
    %p181 = por %p179, %p180
    %p183 = scmp.ne.s32.totalorder %s168, %s182
    %p184 = scmp.eq.s32.totalorder %s27, 0
    %p185 = por %p183, %p184
    %s187 = sadd.s32 %s186, 1
    %p190 = scmp.eq.s32.totalorder %s21, 1
    %p191 = scmp.ne.s32.totalorder %s186, %s188
    %p192 = scmp.eq.s32.totalorder %s21, 0
    %p193 = por %p191, %p192
    %p194 = scmp.ne.s32.totalorder %s186, %s188
    %p195 = scmp.eq.s32.totalorder %s26, 1
    %p196 = por %p194, %p195
    %p197 = scmp.ne.s32.totalorder %s188, %s189
    %p198 = scmp.eq.s32.totalorder %s26, 0
    %p199 = por %p197, %p198
    %p200 = scmp.ne.s32.totalorder %s188, %s189
    %p201 = scmp.eq.s32.totalorder %s27, 1
    %p202 = por %p200, %p201
    %p204 = scmp.ne.s32.totalorder %s189, %s203
    %p205 = scmp.eq.s32.totalorder %s27, 0
    %p206 = por %p204, %p205
    %s208 = sadd.s32 %s207, 1
    %p211 = scmp.eq.s32.totalorder %s21, 1
    %p212 = scmp.ne.s32.totalorder %s207, %s209
    %p213 = scmp.eq.s32.totalorder %s21, 0
    %p214 = por %p212, %p213
    %p215 = scmp.ne.s32.totalorder %s207, %s209
    %p216 = scmp.eq.s32.totalorder %s26, 1
    %p217 = por %p215, %p216
    %p218 = scmp.ne.s32.totalorder %s209, %s210
    %p219 = scmp.eq.s32.totalorder %s26, 0
    %p220 = por %p218, %p219
    %p221 = scmp.ne.s32.totalorder %s209, %s210
    %p222 = scmp.eq.s32.totalorder %s27, 1
    %p223 = por %p221, %p222
    %p225 = scmp.ne.s32.totalorder %s210, %s224
    %p226 = scmp.eq.s32.totalorder %s27, 0
    %p227 = por %p225, %p226
    %s229 = sadd.s32 %s228, 1
    %p232 = scmp.eq.s32.totalorder %s21, 1
    %p233 = scmp.ne.s32.totalorder %s228, %s230
    %p234 = scmp.eq.s32.totalorder %s21, 0
    %p235 = por %p233, %p234
    %p236 = scmp.ne.s32.totalorder %s228, %s230
    %p237 = scmp.eq.s32.totalorder %s26, 1
    %p238 = por %p236, %p237
    %p239 = scmp.ne.s32.totalorder %s230, %s231
    %p240 = scmp.eq.s32.totalorder %s26, 0
    %p241 = por %p239, %p240
    %p242 = scmp.ne.s32.totalorder %s230, %s231
    %p243 = scmp.eq.s32.totalorder %s27, 1
    %p244 = por %p242, %p243
    %p246 = scmp.ne.s32.totalorder %s231, %s245
    %p247 = scmp.eq.s32.totalorder %s27, 0
    %p248 = por %p246, %p247
    %s250 = sadd.s32 %s249, 1
    %p253 = scmp.eq.s32.totalorder %s21, 1
    %p254 = scmp.ne.s32.totalorder %s249, %s251
    %p255 = scmp.eq.s32.totalorder %s21, 0
    %p256 = por %p254, %p255
    %p257 = scmp.ne.s32.totalorder %s249, %s251
    %p258 = scmp.eq.s32.totalorder %s26, 1
    %p259 = por %p257, %p258
    %p260 = scmp.ne.s32.totalorder %s251, %s252
    %p261 = scmp.eq.s32.totalorder %s26, 0
    %p262 = por %p260, %p261
    %p263 = scmp.ne.s32.totalorder %s251, %s252
    %p264 = scmp.eq.s32.totalorder %s27, 1
    %p265 = por %p263, %p264
    %p267 = scmp.ne.s32.totalorder %s252, %s266
    %p268 = scmp.eq.s32.totalorder %s27, 0
    %p269 = por %p267, %p268
    %s271 = sadd.s32 %s270, 1
    %p274 = scmp.eq.s32.totalorder %s21, 1
    %p275 = scmp.ne.s32.totalorder %s270, %s272
    %p276 = scmp.eq.s32.totalorder %s21, 0
    %p277 = por %p275, %p276
    %p278 = scmp.ne.s32.totalorder %s270, %s272
    %p279 = scmp.eq.s32.totalorder %s26, 1
    %p280 = por %p278, %p279
    %p281 = scmp.ne.s32.totalorder %s272, %s273
    %p282 = scmp.eq.s32.totalorder %s26, 0
    %p283 = por %p281, %p282
    %p284 = scmp.ne.s32.totalorder %s272, %s273
    %p285 = scmp.eq.s32.totalorder %s27, 1
    %p286 = por %p284, %p285
    %p288 = scmp.ne.s32.totalorder %s273, %s287
    %p289 = scmp.eq.s32.totalorder %s27, 0
    %p290 = por %p288, %p289
    %s292 = sadd.s32 %s291, 1
    %p295 = scmp.eq.s32.totalorder %s21, 1
    %p296 = scmp.ne.s32.totalorder %s291, %s293
    %p297 = scmp.eq.s32.totalorder %s21, 0
    %p298 = por %p296, %p297
    %p299 = scmp.ne.s32.totalorder %s291, %s293
    %p300 = scmp.eq.s32.totalorder %s26, 1
    %p301 = por %p299, %p300
    %p302 = scmp.ne.s32.totalorder %s293, %s294
    %p303 = scmp.eq.s32.totalorder %s26, 0
    %p304 = por %p302, %p303
    %p305 = scmp.ne.s32.totalorder %s293, %s294
    %p306 = scmp.eq.s32.totalorder %s27, 1
    %p307 = por %p305, %p306
    %p309 = scmp.ne.s32.totalorder %s294, %s308
    %p310 = scmp.eq.s32.totalorder %s27, 0
    %p311 = por %p309, %p310
    %s313 = sadd.s32 %s312, 1
    %p316 = scmp.eq.s32.totalorder %s21, 1
    %p317 = scmp.ne.s32.totalorder %s312, %s314
    %p318 = scmp.eq.s32.totalorder %s21, 0
    %p319 = por %p317, %p318
    %p320 = scmp.ne.s32.totalorder %s312, %s314
    %p321 = scmp.eq.s32.totalorder %s26, 1
    %p322 = por %p320, %p321
    %p323 = scmp.ne.s32.totalorder %s314, %s315
    %p324 = scmp.eq.s32.totalorder %s26, 0
    %p325 = por %p323, %p324
    %p326 = scmp.ne.s32.totalorder %s314, %s315
    %p327 = scmp.eq.s32.totalorder %s27, 1
    %p328 = por %p326, %p327
    %p330 = scmp.ne.s32.totalorder %s315, %s329
    %p331 = scmp.eq.s32.totalorder %s27, 0
    %p332 = por %p330, %p331
    %s334 = sadd.s32 %s333, 1
    %p337 = scmp.eq.s32.totalorder %s21, 1
    %p338 = scmp.ne.s32.totalorder %s333, %s335
    %p339 = scmp.eq.s32.totalorder %s21, 0
    %p340 = por %p338, %p339
    %p341 = scmp.ne.s32.totalorder %s333, %s335
    %p342 = scmp.eq.s32.totalorder %s26, 1
    %p343 = por %p341, %p342
    %p344 = scmp.ne.s32.totalorder %s335, %s336
    %p345 = scmp.eq.s32.totalorder %s26, 0
    %p346 = por %p344, %p345
    %p347 = scmp.ne.s32.totalorder %s335, %s336
    %p348 = scmp.eq.s32.totalorder %s27, 1
    %p349 = por %p347, %p348
    %p351 = scmp.ne.s32.totalorder %s336, %s350
    %p352 = scmp.eq.s32.totalorder %s27, 0
    %p353 = por %p351, %p352
    %s354 = ssub.s32 %s21, %s28
    %p355 = scmp.eq.s32.totalorder %s354, 0
    %s357 = sadd.s32 %s356, 1
    %s358 = scalar_select %p355, %s356, %s357
    %p361 = pneg %p355
    %p362 = scmp.eq.s32.totalorder %s21, 1
    %p363 = por %p361, %p362
    %p364 = scmp.ne.s32.totalorder %s356, %s359
    %p365 = scmp.eq.s32.totalorder %s21, 0
    %p366 = por %p364, %p365
    %p367 = scmp.ne.s32.totalorder %s356, %s359
    %p368 = scmp.eq.s32.totalorder %s26, 1
    %p369 = por %p367, %p368
    %p370 = scmp.ne.s32.totalorder %s359, %s360
    %p371 = scmp.eq.s32.totalorder %s26, 0
    %p372 = por %p370, %p371
    %p373 = scmp.ne.s32.totalorder %s359, %s360
    %p374 = scmp.eq.s32.totalorder %s27, 1
    %p375 = por %p373, %p374
    %p377 = scmp.ne.s32.totalorder %s360, %s376
    %p378 = scmp.eq.s32.totalorder %s27, 0
    %p379 = por %p377, %p378
    %p380 = scmp.le.s32.totalorder 1, %s21
    %p381 = scmp.lt.s32.totalorder %s21, 3
    %p382 = pnand %p380, %p381
    %p383 = pneg %p382
    // Predicated region
    $region9: #{segmentation_head_forward.1} parent=5 // pred_check
      _
    $region10: #{segmentation_head_forward.1} parent=5 // pred_check_branch
      %385 = sbr.rel (%p382) target = $region12
    $region11: #{segmentation_head_forward.1} parent=5 // pred_region
      %s386 = ssub.s32 %s21, 1
      // Predicated region
      $region13: #{segmentation_head_forward.1} parent=11 // pred_check
        %p387 = pneg %p94
      $region14: #{segmentation_head_forward.1} parent=11 // pred_check_branch
        %389 = sbr.rel (%p387) target = $region16
      $region15: #{segmentation_head_forward.1} parent=11 // pred_region
        _
      $region16: #{segmentation_head_forward.1} parent=11 // pred_fallthru
        _
      // Predicated region
      $region17: #{segmentation_head_forward.1} parent=11 // pred_check
        %p390 = pneg %p115
      $region18: #{segmentation_head_forward.1} parent=11 // pred_check_branch
        %392 = sbr.rel (%p390) target = $region20
      $region19: #{segmentation_head_forward.1} parent=11 // pred_region
        _
      $region20: #{segmentation_head_forward.1} parent=11 // pred_fallthru
        _
      // Predicated region
      $region21: #{segmentation_head_forward.1} parent=11 // pred_check
        %p393 = pneg %p136
      $region22: #{segmentation_head_forward.1} parent=11 // pred_check_branch
        %395 = sbr.rel (%p393) target = $region24
      $region23: #{segmentation_head_forward.1} parent=11 // pred_region
        _
      $region24: #{segmentation_head_forward.1} parent=11 // pred_fallthru
        _
      // Predicated region
      $region25: #{segmentation_head_forward.1} parent=11 // pred_check
        %p396 = pneg %p157
      $region26: #{segmentation_head_forward.1} parent=11 // pred_check_branch
        %398 = sbr.rel (%p396) target = $region28
      $region27: #{segmentation_head_forward.1} parent=11 // pred_region
        _
      $region28: #{segmentation_head_forward.1} parent=11 // pred_fallthru
        _
      // Predicated region
      $region29: #{segmentation_head_forward.1} parent=11 // pred_check
        %p399 = pneg %p178
      $region30: #{segmentation_head_forward.1} parent=11 // pred_check_branch
        %401 = sbr.rel (%p399) target = $region32
      $region31: #{segmentation_head_forward.1} parent=11 // pred_region
        _
      $region32: #{segmentation_head_forward.1} parent=11 // pred_fallthru
        _
      // Predicated region
      $region33: #{segmentation_head_forward.1} parent=11 // pred_check
        %p402 = pneg %p199
      $region34: #{segmentation_head_forward.1} parent=11 // pred_check_branch
        %404 = sbr.rel (%p402) target = $region36
      $region35: #{segmentation_head_forward.1} parent=11 // pred_region
        _
      $region36: #{segmentation_head_forward.1} parent=11 // pred_fallthru
        _
      // Predicated region
      $region37: #{segmentation_head_forward.1} parent=11 // pred_check
        %p405 = pneg %p220
      $region38: #{segmentation_head_forward.1} parent=11 // pred_check_branch
        %407 = sbr.rel (%p405) target = $region40
      $region39: #{segmentation_head_forward.1} parent=11 // pred_region
        _
      $region40: #{segmentation_head_forward.1} parent=11 // pred_fallthru
        _
      // Predicated region
      $region41: #{segmentation_head_forward.1} parent=11 // pred_check
        %p408 = pneg %p241
      $region42: #{segmentation_head_forward.1} parent=11 // pred_check_branch
        %410 = sbr.rel (%p408) target = $region44
      $region43: #{segmentation_head_forward.1} parent=11 // pred_region
        _
      $region44: #{segmentation_head_forward.1} parent=11 // pred_fallthru
        _
      // Predicated region
      $region45: #{segmentation_head_forward.1} parent=11 // pred_check
        %p411 = pneg %p262
      $region46: #{segmentation_head_forward.1} parent=11 // pred_check_branch
        %413 = sbr.rel (%p411) target = $region48
      $region47: #{segmentation_head_forward.1} parent=11 // pred_region
        _
      $region48: #{segmentation_head_forward.1} parent=11 // pred_fallthru
        _
      // Predicated region
      $region49: #{segmentation_head_forward.1} parent=11 // pred_check
        %p414 = pneg %p283
      $region50: #{segmentation_head_forward.1} parent=11 // pred_check_branch
        %416 = sbr.rel (%p414) target = $region52
      $region51: #{segmentation_head_forward.1} parent=11 // pred_region
        _
      $region52: #{segmentation_head_forward.1} parent=11 // pred_fallthru
        _
      // Predicated region
      $region53: #{segmentation_head_forward.1} parent=11 // pred_check
        %p417 = pneg %p304
      $region54: #{segmentation_head_forward.1} parent=11 // pred_check_branch
        %419 = sbr.rel (%p417) target = $region56
      $region55: #{segmentation_head_forward.1} parent=11 // pred_region
        _
      $region56: #{segmentation_head_forward.1} parent=11 // pred_fallthru
        _
      // Predicated region
      $region57: #{segmentation_head_forward.1} parent=11 // pred_check
        %p420 = pneg %p325
      $region58: #{segmentation_head_forward.1} parent=11 // pred_check_branch
        %422 = sbr.rel (%p420) target = $region60
      $region59: #{segmentation_head_forward.1} parent=11 // pred_region
        _
      $region60: #{segmentation_head_forward.1} parent=11 // pred_fallthru
        _
      // Predicated region
      $region61: #{segmentation_head_forward.1} parent=11 // pred_check
        %p423 = pneg %p346
      $region62: #{segmentation_head_forward.1} parent=11 // pred_check_branch
        %425 = sbr.rel (%p423) target = $region64
      $region63: #{segmentation_head_forward.1} parent=11 // pred_region
        _
      $region64: #{segmentation_head_forward.1} parent=11 // pred_fallthru
        _
    $region12: #{segmentation_head_forward.1} parent=5 // pred_fallthru
      _
    %p426 = scmp.lt.s32.totalorder %s21, 2
    // Predicated region
    $region65: #{segmentation_head_forward.1} parent=5 // pred_check
      %p427 = pneg %p426
    $region66: #{segmentation_head_forward.1} parent=5 // pred_check_branch
      %429 = sbr.rel (%p427) target = $region68
    $region67: #{segmentation_head_forward.1} parent=5 // pred_region
      // Predicated region
      $region69: #{segmentation_head_forward.1} parent=67 // pred_check
        %p430 = pneg %p41
      $region70: #{segmentation_head_forward.1} parent=67 // pred_check_branch
        %432 = sbr.rel (%p430) target = $region72
      $region71: #{segmentation_head_forward.1} parent=67 // pred_region
        %p433 = scmp.lt.s32.totalorder %s21, 1
        %s434 = scalar_select %p433, %s21, 1
        %s435 = smul.addr %s434, 3
        %s436 = smul.addr %s435, 8
        %s437 = scalar_lea.vmem %s0, %s436
      $region72: #{segmentation_head_forward.1} parent=67 // pred_fallthru
        _
      // Predicated region
      $region73: #{segmentation_head_forward.1} parent=67 // pred_check
        %p438 = pneg %p67
      $region74: #{segmentation_head_forward.1} parent=67 // pred_check_branch
        %440 = sbr.rel (%p438) target = $region76
      $region75: #{segmentation_head_forward.1} parent=67 // pred_region
        %p441 = scmp.lt.s32.totalorder %s21, 1
        %s442 = scalar_select %p441, %s21, 1
        %s443 = smul.addr %s442, 2
        %s444 = smul.addr %s443, 8
        %s445 = scalar_lea.vmem %s1, %s444
      $region76: #{segmentation_head_forward.1} parent=67 // pred_fallthru
        _
    $region68: #{segmentation_head_forward.1} parent=5 // pred_fallthru
      _
    %p446 = scmp.le.s32.totalorder 1, %s21
    %p447 = scmp.lt.s32.totalorder %s21, 3
    %p448 = pnand %p446, %p447
    %p449 = pneg %p448
    // Predicated region
    $region77: #{segmentation_head_forward.1} parent=5 // pred_check
      _
    $region78: #{segmentation_head_forward.1} parent=5 // pred_check_branch
      %451 = sbr.rel (%p448) target = $region80
    $region79: #{segmentation_head_forward.1} parent=5 // pred_region
      %s452 = ssub.s32 %s21, 1
      %p453 = scmp.lt.s32.totalorder %s26, 1
      %s454 = scalar_select %p453, %s26, 1
      %s455 = smul.addr %s454, 3
      %s456 = smul.addr %s455, 8
      %s457 = scalar_lea.vmem %s0, %s456
      %p458 = pneg %p47
      %p459 = pneg %p44
      %p460 = scmp.lt.s32.totalorder %s26, 1
      %s461 = scalar_select %p460, %s26, 1
      %s462 = smul.addr %s461, 2
      %s463 = smul.addr %s462, 8
      %s464 = scalar_lea.vmem %s1, %s463
      %p465 = pneg %p73
      %p466 = pneg %p70
      %p467 = pneg %p94
      %p468 = pneg %p91
      %p469 = pneg %p115
      %p470 = pneg %p112
      %p471 = pneg %p136
      %p472 = pneg %p133
      %p473 = pneg %p157
      %p474 = pneg %p154
      %p475 = pneg %p178
      %p476 = pneg %p175
      %p477 = pneg %p199
      %p478 = pneg %p196
      %p479 = pneg %p220
      %p480 = pneg %p217
      %p481 = pneg %p241
      %p482 = pneg %p238
      %p483 = pneg %p262
      %p484 = pneg %p259
      %p485 = pneg %p283
      %p486 = pneg %p280
      %p487 = pneg %p304
      %p488 = pneg %p301
      %p489 = pneg %p325
      %p490 = pneg %p322
      %p491 = pneg %p346
      %p492 = pneg %p343
      %p493 = pneg %p372
      %p494 = pneg %p369
      %p495 = scmp.lt.s32.totalorder %s26, 1
      %s496 = scalar_select %p495, %s26, 1
      %s497 = smul.addr %s496, 24
      %s498 = smul.addr %s497, 8
      %s499 = scalar_lea.vmem %s15, %s498
      %p500 = scmp.lt.s32.totalorder %s26, 1
      %s501 = scalar_select %p500, %s26, 1
      %s502 = smul.addr %s501, 3
      %s503 = smul.addr %s502, 8
      %s504 = scalar_lea.vmem %s0, %s503
      %p505 = scmp.lt.s32.totalorder %s26, 1
      %s506 = scalar_select %p505, %s26, 1
      %s507 = smul.addr %s506, 2
      %s508 = smul.addr %s507, 8
      %s509 = scalar_lea.vmem %s1, %s508
      %p510 = scmp.lt.s32.totalorder %s26, 1
      %s511 = scalar_select %p510, %s26, 1
      %s512 = smul.addr %s511, 24
      %s513 = smul.addr %s512, 8
      %s514 = scalar_lea.vmem %s15, %s513
      %v515 = vld [vmem:[%s504] sm:$0xff]
      %v516 = vld [vmem:[%s504 + $0x8] sm:$0xff]
      %v517 = vld [vmem:[%s504 + $0x10] sm:$0x7]
      %vm518 = vcmask 64512
      %v519 = vsel %vm518, %v515, -inf
      %520 = vmax.xlane.f32.xlu0 %v519
      %v521 = vpop.xlane.xlu0 %520
      %v522 = vsel %vm518, %v516, -inf
      %523 = vmax.xlane.f32.xlu0 %v522
      %v524 = vpop.xlane.xlu0 %523
      %vm525 = vcmask 59392
      %v526 = vsel %vm525, %v517, -inf
      %527 = vmax.xlane.f32.xlu0 %v526
      %v528 = vpop.xlane.xlu0 %527
      %v529 = vsub.f32 %v515, %v521
      %v530 = vsub.f32 %v516, %v524
      %v531 = vsub.f32 %v517, %v528
      %v532 = vmul.f32 %v529, 1.442695
      %v533 = vpow.pop %v532
      %v534 = vmul.f32 %v530, 1.442695
      %v535 = vpow.pop %v534
      %v536 = vmul.f32 %v531, 1.442695
      %v537 = vpow.pop %v536
      %v538 = vsel %vm518, %v533, 0.0
      %539 = vadd.xlane.f32.xlu0 %v538
      %v540 = vpop.xlane.xlu0 %539
      %v541 = vsel %vm518, %v535, 0.0
      %542 = vadd.xlane.f32.xlu0 %v541
      %v543 = vpop.xlane.xlu0 %542
      %v544 = vsel %vm525, %v537, 0.0
      %545 = vadd.xlane.f32.xlu0 %v544
      %v546 = vpop.xlane.xlu0 %545
      %v547 = vrcp.pop %v540
      %v548 = vmul.f32 %v540, %v547
      %v549 = vsub.f32 1.0, %v548
      %v550 = vmul.f32 %v547, %v549
      %v551 = vadd.f32 %v547, %v550
      %vm552 = vweird.f32 %v540
      %vm553 = vweird.f32 %v547
      %vm554 = vmor %vm552, %vm553
      %v555 = vsel %vm554, %v547, %v551
      %v556 = vand.u32 2147483647, %v540
      %vm557 = vcmp.eq.f32.partialorder %v556, 8.507059e+37
      %v558 = vand.u32 %v540, 2147483648
      %v559 = vor.u32 1.1754944e-38, %v558
      %v560 = vsel %vm557, %v559, %v555
      %v561 = vmul.f32 %v533, %v560
      %v562 = vrcp.pop %v543
      %v563 = vmul.f32 %v543, %v562
      %v564 = vsub.f32 1.0, %v563
      %v565 = vmul.f32 %v562, %v564
      %v566 = vadd.f32 %v562, %v565
      %vm567 = vweird.f32 %v543
      %vm568 = vweird.f32 %v562
      %vm569 = vmor %vm567, %vm568
      %v570 = vsel %vm569, %v562, %v566
      %v571 = vand.u32 2147483647, %v543
      %vm572 = vcmp.eq.f32.partialorder %v571, 8.507059e+37
      %v573 = vand.u32 %v543, 2147483648
      %v574 = vor.u32 1.1754944e-38, %v573
      %v575 = vsel %vm572, %v574, %v570
      %v576 = vmul.f32 %v535, %v575
      %v577 = vrcp.pop %v546
      %v578 = vmul.f32 %v546, %v577
      %v579 = vsub.f32 1.0, %v578
      %v580 = vmul.f32 %v577, %v579
      %v581 = vadd.f32 %v577, %v580
      %vm582 = vweird.f32 %v546
      %vm583 = vweird.f32 %v577
      %vm584 = vmor %vm582, %vm583
      %v585 = vsel %vm584, %v577, %v581
      %v586 = vand.u32 2147483647, %v546
      %vm587 = vcmp.eq.f32.partialorder %v586, 8.507059e+37
      %v588 = vand.u32 %v546, 2147483648
      %v589 = vor.u32 1.1754944e-38, %v588
      %v590 = vsel %vm587, %v589, %v585
      %v591 = vmul.f32 %v537, %v590
      %v592 = vld [vmem:[%s509] sm:$0xff]
      %v593 = vld [vmem:[%s509 + $0x8] sm:$0xff]
      %v594 = vxor.u32 %v592, 2147483648
      %v595 = vxor.u32 %v593, 2147483648
      %v596 = vmul.f32 %v594, 1.442695
      %v597 = vpow.pop %v596
      %v598 = vmul.f32 %v595, 1.442695
      %v599 = vpow.pop %v598
      %v600 = vadd.f32 %v597, 1.0
      %v601 = vadd.f32 %v599, 1.0
      %v602 = vrcp.pop %v600
      %v603 = vmul.f32 %v600, %v602
      %v604 = vsub.f32 1.0, %v603
      %v605 = vmul.f32 %v602, %v604
      %v606 = vadd.f32 %v602, %v605
      %vm607 = vweird.f32 %v600
      %vm608 = vweird.f32 %v602
      %vm609 = vmor %vm607, %vm608
      %v610 = vsel %vm609, %v602, %v606
      %v611 = vand.u32 2147483647, %v600
      %vm612 = vcmp.eq.f32.partialorder %v611, 8.507059e+37
      %v613 = vand.u32 %v600, 2147483648
      %v614 = vor.u32 1.1754944e-38, %v613
      %v615 = vsel %vm612, %v614, %v610
      %v616 = vmul.f32 1.0, %v615
      %v617 = vrcp.pop %v601
      %v618 = vmul.f32 %v601, %v617
      %v619 = vsub.f32 1.0, %v618
      %v620 = vmul.f32 %v617, %v619
      %v621 = vadd.f32 %v617, %v620
      %vm622 = vweird.f32 %v601
      %vm623 = vweird.f32 %v617
      %vm624 = vmor %vm622, %vm623
      %v625 = vsel %vm624, %v617, %v621
      %v626 = vand.u32 2147483647, %v601
      %vm627 = vcmp.eq.f32.partialorder %v626, 8.507059e+37
      %v628 = vand.u32 %v601, 2147483648
      %v629 = vor.u32 1.1754944e-38, %v628
      %v630 = vsel %vm627, %v629, %v625
      %v631 = vmul.f32 1.0, %v630
      %v633 = vsel %vm518, %v561, 0
      %v636 = vsel %vm518, %v576, 0
      %v639 = vsel %vm518, %v591, 0
      %641 = vmatpush.msra.mxu0 0.0
      %642 = vmatpush.msra.mxu0 0.0
      %643 = vmatpush.msra.mxu0 0.0
      %644 = vmatpush.msra.mxu0 0.0
      %645 = vmatpush.msra.mxu0 0.0
      %646 = vmatpush.msra.mxu0 0.0
      %647 = vmatpush.msra.mxu0 0.0
      %648 = vmatpush.msra.mxu0 0.0
      %649 = vmatpush.msra.mxu0 0.0
      %650 = vmatpush.msra.mxu0 0.0
      %651 = vmatpush.msra.mxu0 0.0
      %652 = vmatpush.msra.mxu0 0.0
      %653 = vmatpush.msra.mxu0 0.0
      %654 = vmatpush.msra.mxu0 0.0
      %655 = vmatpush.msra.mxu0 0.0
      %656 = vmatpush.msra.mxu0 %v616
      %657 = vmatmul.f32.gmra.mxu0 %v633
      %v658 = vpop.f32.mrf.mxu0
      %v659 = vadd.f32 0.0, %v658
      %660 = vmatmul.f32.gmra.mxu0 %v636
      %v661 = vpop.f32.mrf.mxu0
      %v662 = vadd.f32 0.0, %v661
      %663 = vmatmul.f32.gmra.mxu0 %v639
      %v664 = vpop.f32.mrf.mxu0
      %v665 = vadd.f32 0.0, %v664
      %666 = vdwg.mxu0
      %667 = vmatpush.msra.mxu0 0.0
      %668 = vmatpush.msra.mxu0 0.0
      %669 = vmatpush.msra.mxu0 0.0
      %670 = vmatpush.msra.mxu0 0.0
      %671 = vmatpush.msra.mxu0 0.0
      %672 = vmatpush.msra.mxu0 0.0
      %673 = vmatpush.msra.mxu0 0.0
      %674 = vmatpush.msra.mxu0 0.0
      %675 = vmatpush.msra.mxu0 0.0
      %676 = vmatpush.msra.mxu0 0.0
      %677 = vmatpush.msra.mxu0 0.0
      %678 = vmatpush.msra.mxu0 0.0
      %679 = vmatpush.msra.mxu0 0.0
      %680 = vmatpush.msra.mxu0 0.0
      %681 = vmatpush.msra.mxu0 0.0
      %682 = vmatpush.msra.mxu0 %v631
      %683 = vmatmul.f32.gmra.mxu0 %v633
      %v684 = vpop.f32.mrf.mxu0
      %v685 = vadd.f32 0.0, %v684
      %686 = vmatmul.f32.gmra.mxu0 %v636
      %v687 = vpop.f32.mrf.mxu0
      %v688 = vadd.f32 0.0, %v687
      %689 = vmatmul.f32.gmra.mxu0 %v639
      %v690 = vpop.f32.mrf.mxu0
      %v691 = vadd.f32 0.0, %v690
      %692 = vdwg.mxu0
      %693 = vrot.lane.b32.xlu0 %v659, 17
      %v694 = vpop.permute.xlu0 %693
      %695 = vrot.lane.b32.xlu0 %v662, 17
      %v696 = vpop.permute.xlu0 %695
      %697 = vrot.lane.b32.xlu0 %v665, 17
      %v698 = vpop.permute.xlu0 %697
      %699 = vrot.lane.b32.xlu0 %v685, 17
      %v700 = vpop.permute.xlu0 %699
      %701 = vrot.lane.b32.xlu0 %v688, 17
      %v702 = vpop.permute.xlu0 %701
      %703 = vrot.lane.b32.xlu0 %v691, 17
      %v704 = vpop.permute.xlu0 %703
      %v705 = vlaneseq
      %v706 = vand.u32 %v705, 127
      %vm707 = vcmp.lt.s32.totalorder %v706, 17
      %v708 = vsel %vm707, %v694, %v700
      %v709 = vsel %vm707, %v696, %v702
      %v710 = vsel %vm707, %v698, %v704
      %v711 = vsel %vm707, %v700, %v694
      %v712 = vsel %vm707, %v702, %v696
      %v713 = vsel %vm707, %v704, %v698
      %v714 = vld [vmem:[%s2] sm:$0x3]
      %v716 = vperm.slane %v714, 0
      %v717 = vperm.slane %v714, 1
      %v720 = vmul.f32 %v711, %v716
      %v721 = vmul.f32 %v708, %v717
      %v722 = vmul.f32 %v712, %v716
      %v723 = vmul.f32 %v709, %v717
      %v724 = vmul.f32 %v713, %v716
      %v725 = vmul.f32 %v710, %v717
      %v726 = vld [vmem:[%s5] sm:$0xff]
      %v727 = vld [vmem:[%s5 + $0x8] sm:$0xff]
      %v728 = vld [vmem:[%s5 + $0x10] sm:$0xff]
      %v729 = vld [vmem:[%s5 + $0x18] sm:$0xff]
      %v730 = vld [vmem:[%s5 + $0x20] sm:$0xff]
      %v731 = vld [vmem:[%s5 + $0x28] sm:$0xff]
      %v732 = vld [vmem:[%s5 + $0x30] sm:$0xff]
      %v733 = vld [vmem:[%s5 + $0x38] sm:$0xff]
      %734 = vrot.lane.b32.xlu0 %v659, 16
      %v735 = vpop.permute.xlu0 %734
      %736 = vrot.lane.b32.xlu0 %v662, 16
      %v737 = vpop.permute.xlu0 %736
      %738 = vrot.lane.b32.xlu0 %v665, 16
      %v739 = vpop.permute.xlu0 %738
      %740 = vrot.lane.b32.xlu0 %v685, 16
      %v741 = vpop.permute.xlu0 %740
      %742 = vrot.lane.b32.xlu0 %v688, 16
      %v743 = vpop.permute.xlu0 %742
      %744 = vrot.lane.b32.xlu0 %v691, 16
      %v745 = vpop.permute.xlu0 %744
      %vm746 = vcmp.lt.s32.totalorder %v706, 16
      %v747 = vsel %vm746, %v735, %v741
      %v748 = vsel %vm746, %v737, %v743
      %v749 = vsel %vm746, %v739, %v745
      %v750 = vsel %vm746, %v741, %v735
      %v751 = vsel %vm746, %v743, %v737
      %v752 = vsel %vm746, %v745, %v739
      %s753 = scalar_lea.vmem %s2, 2
      %v754 = vld [vmem:[%s753] sm:$0x3]
      %v756 = vperm.slane %v754, 0
      %v757 = vperm.slane %v754, 1
      %v760 = vmul.f32 %v750, %v756
      %v761 = vmul.f32 %v747, %v757
      %v762 = vmul.f32 %v751, %v756
      %v763 = vmul.f32 %v748, %v757
      %v764 = vmul.f32 %v752, %v756
      %v765 = vmul.f32 %v749, %v757
      %s766 = scalar_lea.vmem %s5, 64
      %v767 = vld [vmem:[%s766] sm:$0xff]
      %v768 = vld [vmem:[%s766 + $0x8] sm:$0xff]
      %v769 = vld [vmem:[%s766 + $0x10] sm:$0xff]
      %v770 = vld [vmem:[%s766 + $0x18] sm:$0xff]
      %v771 = vld [vmem:[%s766 + $0x20] sm:$0xff]
      %v772 = vld [vmem:[%s766 + $0x28] sm:$0xff]
      %v773 = vld [vmem:[%s766 + $0x30] sm:$0xff]
      %v774 = vld [vmem:[%s766 + $0x38] sm:$0xff]
      %vm775 = vcmask 154624
      %v777 = vsel %vm775, %v767, 0
      %v780 = vsel %vm775, %v768, 0
      %v783 = vsel %vm775, %v769, 0
      %v786 = vsel %vm775, %v770, 0
      %v789 = vsel %vm775, %v771, 0
      %v792 = vsel %vm775, %v772, 0
      %v795 = vsel %vm775, %v773, 0
      %v798 = vsel %vm775, %v774, 0
      %vm800 = vcmask 1042432
      %v802 = vsel %vm800, %v764, 0
      %v805 = vsel %vm800, %v765, 0
      %807 = vmatpush.msra.mxu0 0.0
      %808 = vmatpush.msra.mxu0 0.0
      %809 = vmatpush.msra.mxu0 0.0
      %810 = vmatpush.msra.mxu0 0.0
      %811 = vmatpush.msra.mxu0 0.0
      %812 = vmatpush.msra.mxu0 0.0
      %813 = vmatpush.msra.mxu0 0.0
      %814 = vmatpush.msra.mxu0 0.0
      %815 = vmatpush.msra.mxu0 0.0
      %816 = vmatpush.msra.mxu0 0.0
      %817 = vmatpush.msra.mxu0 0.0
      %818 = vmatpush.msra.mxu0 0.0
      %819 = vmatpush.msra.mxu0 0.0
      %820 = vmatpush.msra.mxu0 %v802
      %821 = vmatpush.msra.mxu0 %v762
      %822 = vmatpush.msra.mxu0 %v760
      %823 = vmatmul.f32.gmra.mxu0 %v777
      %v824 = vpop.f32.mrf.mxu0
      %v825 = vadd.f32 0.0, %v824
      %826 = vmatmul.f32.gmra.mxu0 %v780
      %v827 = vpop.f32.mrf.mxu0
      %v828 = vadd.f32 0.0, %v827
      %829 = vmatmul.f32.gmra.mxu0 %v783
      %v830 = vpop.f32.mrf.mxu0
      %v831 = vadd.f32 0.0, %v830
      %832 = vmatmul.f32.gmra.mxu0 %v786
      %v833 = vpop.f32.mrf.mxu0
      %v834 = vadd.f32 0.0, %v833
      %835 = vmatmul.f32.gmra.mxu0 %v789
      %v836 = vpop.f32.mrf.mxu0
      %v837 = vadd.f32 0.0, %v836
      %838 = vmatmul.f32.gmra.mxu0 %v792
      %v839 = vpop.f32.mrf.mxu0
      %v840 = vadd.f32 0.0, %v839
      %841 = vmatmul.f32.gmra.mxu0 %v795
      %v842 = vpop.f32.mrf.mxu0
      %v843 = vadd.f32 0.0, %v842
      %844 = vmatmul.f32.gmra.mxu0 %v798
      %v845 = vpop.f32.mrf.mxu0
      %v846 = vadd.f32 0.0, %v845
      %847 = vdwg.mxu0
      %848 = vmatpush.msra.mxu0 0.0
      %849 = vmatpush.msra.mxu0 0.0
      %850 = vmatpush.msra.mxu0 0.0
      %851 = vmatpush.msra.mxu0 0.0
      %852 = vmatpush.msra.mxu0 0.0
      %853 = vmatpush.msra.mxu0 0.0
      %854 = vmatpush.msra.mxu0 0.0
      %855 = vmatpush.msra.mxu0 0.0
      %856 = vmatpush.msra.mxu0 0.0
      %857 = vmatpush.msra.mxu0 0.0
      %858 = vmatpush.msra.mxu0 0.0
      %859 = vmatpush.msra.mxu0 0.0
      %860 = vmatpush.msra.mxu0 0.0
      %861 = vmatpush.msra.mxu0 %v805
      %862 = vmatpush.msra.mxu0 %v763
      %863 = vmatpush.msra.mxu0 %v761
      %864 = vmatmul.f32.gmra.mxu0 %v777
      %v865 = vpop.f32.mrf.mxu0
      %v866 = vadd.f32 0.0, %v865
      %867 = vmatmul.f32.gmra.mxu0 %v780
      %v868 = vpop.f32.mrf.mxu0
      %v869 = vadd.f32 0.0, %v868
      %870 = vmatmul.f32.gmra.mxu0 %v783
      %v871 = vpop.f32.mrf.mxu0
      %v872 = vadd.f32 0.0, %v871
      %873 = vmatmul.f32.gmra.mxu0 %v786
      %v874 = vpop.f32.mrf.mxu0
      %v875 = vadd.f32 0.0, %v874
      %876 = vmatmul.f32.gmra.mxu0 %v789
      %v877 = vpop.f32.mrf.mxu0
      %v878 = vadd.f32 0.0, %v877
      %879 = vmatmul.f32.gmra.mxu0 %v792
      %v880 = vpop.f32.mrf.mxu0
      %v881 = vadd.f32 0.0, %v880
      %882 = vmatmul.f32.gmra.mxu0 %v795
      %v883 = vpop.f32.mrf.mxu0
      %v884 = vadd.f32 0.0, %v883
      %885 = vmatmul.f32.gmra.mxu0 %v798
      %v886 = vpop.f32.mrf.mxu0
      %v887 = vadd.f32 0.0, %v886
      %888 = vdwg.mxu0
      %v890 = vsel %vm775, %v726, 0
      %v893 = vsel %vm775, %v727, 0
      %v896 = vsel %vm775, %v728, 0
      %v899 = vsel %vm775, %v729, 0
      %v902 = vsel %vm775, %v730, 0
      %v905 = vsel %vm775, %v731, 0
      %v908 = vsel %vm775, %v732, 0
      %v911 = vsel %vm775, %v733, 0
      %v914 = vsel %vm800, %v724, 0
      %v917 = vsel %vm800, %v725, 0
      %919 = vmatpush.msra.mxu0 0.0
      %920 = vmatpush.msra.mxu0 0.0
      %921 = vmatpush.msra.mxu0 0.0
      %922 = vmatpush.msra.mxu0 0.0
      %923 = vmatpush.msra.mxu0 0.0
      %924 = vmatpush.msra.mxu0 0.0
      %925 = vmatpush.msra.mxu0 0.0
      %926 = vmatpush.msra.mxu0 0.0
      %927 = vmatpush.msra.mxu0 0.0
      %928 = vmatpush.msra.mxu0 0.0
      %929 = vmatpush.msra.mxu0 0.0
      %930 = vmatpush.msra.mxu0 0.0
      %931 = vmatpush.msra.mxu0 0.0
      %932 = vmatpush.msra.mxu0 %v914
      %933 = vmatpush.msra.mxu0 %v722
      %934 = vmatpush.msra.mxu0 %v720
      %935 = vmatmul.f32.gmra.mxu0 %v890
      %v936 = vpop.f32.mrf.mxu0
      %v937 = vadd.f32 %v825, %v936
      %938 = vmatmul.f32.gmra.mxu0 %v893
      %v939 = vpop.f32.mrf.mxu0
      %v940 = vadd.f32 %v828, %v939
      %941 = vmatmul.f32.gmra.mxu0 %v896
      %v942 = vpop.f32.mrf.mxu0
      %v943 = vadd.f32 %v831, %v942
      %944 = vmatmul.f32.gmra.mxu0 %v899
      %v945 = vpop.f32.mrf.mxu0
      %v946 = vadd.f32 %v834, %v945
      %947 = vmatmul.f32.gmra.mxu0 %v902
      %v948 = vpop.f32.mrf.mxu0
      %v949 = vadd.f32 %v837, %v948
      %950 = vmatmul.f32.gmra.mxu0 %v905
      %v951 = vpop.f32.mrf.mxu0
      %v952 = vadd.f32 %v840, %v951
      %953 = vmatmul.f32.gmra.mxu0 %v908
      %v954 = vpop.f32.mrf.mxu0
      %v955 = vadd.f32 %v843, %v954
      %956 = vmatmul.f32.gmra.mxu0 %v911
      %v957 = vpop.f32.mrf.mxu0
      %v958 = vadd.f32 %v846, %v957
      %959 = vdwg.mxu0
      %960 = vmatpush.msra.mxu0 0.0
      %961 = vmatpush.msra.mxu0 0.0
      %962 = vmatpush.msra.mxu0 0.0
      %963 = vmatpush.msra.mxu0 0.0
      %964 = vmatpush.msra.mxu0 0.0
      %965 = vmatpush.msra.mxu0 0.0
      %966 = vmatpush.msra.mxu0 0.0
      %967 = vmatpush.msra.mxu0 0.0
      %968 = vmatpush.msra.mxu0 0.0
      %969 = vmatpush.msra.mxu0 0.0
      %970 = vmatpush.msra.mxu0 0.0
      %971 = vmatpush.msra.mxu0 0.0
      %972 = vmatpush.msra.mxu0 0.0
      %973 = vmatpush.msra.mxu0 %v917
      %974 = vmatpush.msra.mxu0 %v723
      %975 = vmatpush.msra.mxu0 %v721
      %976 = vmatmul.f32.gmra.mxu0 %v890
      %v977 = vpop.f32.mrf.mxu0
      %v978 = vadd.f32 %v866, %v977
      %979 = vmatmul.f32.gmra.mxu0 %v893
      %v980 = vpop.f32.mrf.mxu0
      %v981 = vadd.f32 %v869, %v980
      %982 = vmatmul.f32.gmra.mxu0 %v896
      %v983 = vpop.f32.mrf.mxu0
      %v984 = vadd.f32 %v872, %v983
      %985 = vmatmul.f32.gmra.mxu0 %v899
      %v986 = vpop.f32.mrf.mxu0
      %v987 = vadd.f32 %v875, %v986
      %988 = vmatmul.f32.gmra.mxu0 %v902
      %v989 = vpop.f32.mrf.mxu0
      %v990 = vadd.f32 %v878, %v989
      %991 = vmatmul.f32.gmra.mxu0 %v905
      %v992 = vpop.f32.mrf.mxu0
      %v993 = vadd.f32 %v881, %v992
      %994 = vmatmul.f32.gmra.mxu0 %v908
      %v995 = vpop.f32.mrf.mxu0
      %v996 = vadd.f32 %v884, %v995
      %997 = vmatmul.f32.gmra.mxu0 %v911
      %v998 = vpop.f32.mrf.mxu0
      %v999 = vadd.f32 %v887, %v998
      %1000 = vdwg.mxu0
      %1001 = vrot.lane.b32.xlu0 %v659, 15
      %v1002 = vpop.permute.xlu0 %1001
      %1003 = vrot.lane.b32.xlu0 %v662, 15
      %v1004 = vpop.permute.xlu0 %1003
      %1005 = vrot.lane.b32.xlu0 %v665, 15
      %v1006 = vpop.permute.xlu0 %1005
      %1007 = vrot.lane.b32.xlu0 %v685, 15
      %v1008 = vpop.permute.xlu0 %1007
      %1009 = vrot.lane.b32.xlu0 %v688, 15
      %v1010 = vpop.permute.xlu0 %1009
      %1011 = vrot.lane.b32.xlu0 %v691, 15
      %v1012 = vpop.permute.xlu0 %1011
      %vm1013 = vcmp.lt.s32.totalorder %v706, 15
      %v1014 = vsel %vm1013, %v1002, %v1008
      %v1015 = vsel %vm1013, %v1004, %v1010
      %v1016 = vsel %vm1013, %v1006, %v1012
      %v1017 = vsel %vm1013, %v1008, %v1002
      %v1018 = vsel %vm1013, %v1010, %v1004
      %v1019 = vsel %vm1013, %v1012, %v1006
      %s1020 = scalar_lea.vmem %s2, 4
      %v1021 = vld [vmem:[%s1020] sm:$0x3]
      %v1023 = vperm.slane %v1021, 0
      %v1024 = vperm.slane %v1021, 1
      %v1027 = vmul.f32 %v1017, %v1023
      %v1028 = vmul.f32 %v1014, %v1024
      %v1029 = vmul.f32 %v1018, %v1023
      %v1030 = vmul.f32 %v1015, %v1024
      %v1031 = vmul.f32 %v1019, %v1023
      %v1032 = vmul.f32 %v1016, %v1024
      %s1033 = scalar_lea.vmem %s5, 128
      %v1034 = vld [vmem:[%s1033] sm:$0xff]
      %v1035 = vld [vmem:[%s1033 + $0x8] sm:$0xff]
      %v1036 = vld [vmem:[%s1033 + $0x10] sm:$0xff]
      %v1037 = vld [vmem:[%s1033 + $0x18] sm:$0xff]
      %v1038 = vld [vmem:[%s1033 + $0x20] sm:$0xff]
      %v1039 = vld [vmem:[%s1033 + $0x28] sm:$0xff]
      %v1040 = vld [vmem:[%s1033 + $0x30] sm:$0xff]
      %v1041 = vld [vmem:[%s1033 + $0x38] sm:$0xff]
      %v1043 = vsel %vm775, %v1034, 0
      %v1046 = vsel %vm775, %v1035, 0
      %v1049 = vsel %vm775, %v1036, 0
      %v1052 = vsel %vm775, %v1037, 0
      %v1055 = vsel %vm775, %v1038, 0
      %v1058 = vsel %vm775, %v1039, 0
      %v1061 = vsel %vm775, %v1040, 0
      %v1064 = vsel %vm775, %v1041, 0
      %v1067 = vsel %vm800, %v1031, 0
      %v1070 = vsel %vm800, %v1032, 0
      %1072 = vmatpush.msra.mxu0 0.0
      %1073 = vmatpush.msra.mxu0 0.0
      %1074 = vmatpush.msra.mxu0 0.0
      %1075 = vmatpush.msra.mxu0 0.0
      %1076 = vmatpush.msra.mxu0 0.0
      %1077 = vmatpush.msra.mxu0 0.0
      %1078 = vmatpush.msra.mxu0 0.0
      %1079 = vmatpush.msra.mxu0 0.0
      %1080 = vmatpush.msra.mxu0 0.0
      %1081 = vmatpush.msra.mxu0 0.0
      %1082 = vmatpush.msra.mxu0 0.0
      %1083 = vmatpush.msra.mxu0 0.0
      %1084 = vmatpush.msra.mxu0 0.0
      %1085 = vmatpush.msra.mxu0 %v1067
      %1086 = vmatpush.msra.mxu0 %v1029
      %1087 = vmatpush.msra.mxu0 %v1027
      %1088 = vmatmul.f32.gmra.mxu0 %v1043
      %v1089 = vpop.f32.mrf.mxu0
      %v1090 = vadd.f32 0.0, %v1089
      %1091 = vmatmul.f32.gmra.mxu0 %v1046
      %v1092 = vpop.f32.mrf.mxu0
      %v1093 = vadd.f32 0.0, %v1092
      %1094 = vmatmul.f32.gmra.mxu0 %v1049
      %v1095 = vpop.f32.mrf.mxu0
      %v1096 = vadd.f32 0.0, %v1095
      %1097 = vmatmul.f32.gmra.mxu0 %v1052
      %v1098 = vpop.f32.mrf.mxu0
      %v1099 = vadd.f32 0.0, %v1098
      %1100 = vmatmul.f32.gmra.mxu0 %v1055
      %v1101 = vpop.f32.mrf.mxu0
      %v1102 = vadd.f32 0.0, %v1101
      %1103 = vmatmul.f32.gmra.mxu0 %v1058
      %v1104 = vpop.f32.mrf.mxu0
      %v1105 = vadd.f32 0.0, %v1104
      %1106 = vmatmul.f32.gmra.mxu0 %v1061
      %v1107 = vpop.f32.mrf.mxu0
      %v1108 = vadd.f32 0.0, %v1107
      %1109 = vmatmul.f32.gmra.mxu0 %v1064
      %v1110 = vpop.f32.mrf.mxu0
      %v1111 = vadd.f32 0.0, %v1110
      %1112 = vdwg.mxu0
      %1113 = vmatpush.msra.mxu0 0.0
      %1114 = vmatpush.msra.mxu0 0.0
      %1115 = vmatpush.msra.mxu0 0.0
      %1116 = vmatpush.msra.mxu0 0.0
      %1117 = vmatpush.msra.mxu0 0.0
      %1118 = vmatpush.msra.mxu0 0.0
      %1119 = vmatpush.msra.mxu0 0.0
      %1120 = vmatpush.msra.mxu0 0.0
      %1121 = vmatpush.msra.mxu0 0.0
      %1122 = vmatpush.msra.mxu0 0.0
      %1123 = vmatpush.msra.mxu0 0.0
      %1124 = vmatpush.msra.mxu0 0.0
      %1125 = vmatpush.msra.mxu0 0.0
      %1126 = vmatpush.msra.mxu0 %v1070
      %1127 = vmatpush.msra.mxu0 %v1030
      %1128 = vmatpush.msra.mxu0 %v1028
      %1129 = vmatmul.f32.gmra.mxu0 %v1043
      %v1130 = vpop.f32.mrf.mxu0
      %v1131 = vadd.f32 0.0, %v1130
      %1132 = vmatmul.f32.gmra.mxu0 %v1046
      %v1133 = vpop.f32.mrf.mxu0
      %v1134 = vadd.f32 0.0, %v1133
      %1135 = vmatmul.f32.gmra.mxu0 %v1049
      %v1136 = vpop.f32.mrf.mxu0
      %v1137 = vadd.f32 0.0, %v1136
      %1138 = vmatmul.f32.gmra.mxu0 %v1052
      %v1139 = vpop.f32.mrf.mxu0
      %v1140 = vadd.f32 0.0, %v1139
      %1141 = vmatmul.f32.gmra.mxu0 %v1055
      %v1142 = vpop.f32.mrf.mxu0
      %v1143 = vadd.f32 0.0, %v1142
      %1144 = vmatmul.f32.gmra.mxu0 %v1058
      %v1145 = vpop.f32.mrf.mxu0
      %v1146 = vadd.f32 0.0, %v1145
      %1147 = vmatmul.f32.gmra.mxu0 %v1061
      %v1148 = vpop.f32.mrf.mxu0
      %v1149 = vadd.f32 0.0, %v1148
      %1150 = vmatmul.f32.gmra.mxu0 %v1064
      %v1151 = vpop.f32.mrf.mxu0
      %v1152 = vadd.f32 0.0, %v1151
      %1153 = vdwg.mxu0
      %v1154 = vadd.f32 %v937, %v1090
      %v1155 = vadd.f32 %v978, %v1131
      %v1156 = vadd.f32 %v940, %v1093
      %v1157 = vadd.f32 %v981, %v1134
      %v1158 = vadd.f32 %v943, %v1096
      %v1159 = vadd.f32 %v984, %v1137
      %v1160 = vadd.f32 %v946, %v1099
      %v1161 = vadd.f32 %v987, %v1140
      %v1162 = vadd.f32 %v949, %v1102
      %v1163 = vadd.f32 %v990, %v1143
      %v1164 = vadd.f32 %v952, %v1105
      %v1165 = vadd.f32 %v993, %v1146
      %v1166 = vadd.f32 %v955, %v1108
      %v1167 = vadd.f32 %v996, %v1149
      %v1168 = vadd.f32 %v958, %v1111
      %v1169 = vadd.f32 %v999, %v1152
      %1170 = vrot.lane.b32.xlu0 %v659, 1
      %v1171 = vpop.permute.xlu0 %1170
      %1172 = vrot.lane.b32.xlu0 %v662, 1
      %v1173 = vpop.permute.xlu0 %1172
      %1174 = vrot.lane.b32.xlu0 %v665, 1
      %v1175 = vpop.permute.xlu0 %1174
      %1176 = vrot.lane.b32.xlu0 %v685, 1
      %v1177 = vpop.permute.xlu0 %1176
      %1178 = vrot.lane.b32.xlu0 %v688, 1
      %v1179 = vpop.permute.xlu0 %1178
      %1180 = vrot.lane.b32.xlu0 %v691, 1
      %v1181 = vpop.permute.xlu0 %1180
      %vm1182 = vcmp.lt.s32.totalorder %v706, 1
      %v1183 = vsel %vm1182, %v1171, %v1177
      %v1184 = vsel %vm1182, %v1173, %v1179
      %v1185 = vsel %vm1182, %v1175, %v1181
      %v1186 = vsel %vm1182, %v1177, %v1171
      %v1187 = vsel %vm1182, %v1179, %v1173
      %v1188 = vsel %vm1182, %v1181, %v1175
      %s1189 = scalar_lea.vmem %s2, 6
      %v1190 = vld [vmem:[%s1189] sm:$0x3]
      %v1192 = vperm.slane %v1190, 0
      %v1193 = vperm.slane %v1190, 1
      %v1196 = vmul.f32 %v1186, %v1192
      %v1197 = vmul.f32 %v1183, %v1193
      %v1198 = vmul.f32 %v1187, %v1192
      %v1199 = vmul.f32 %v1184, %v1193
      %v1200 = vmul.f32 %v1188, %v1192
      %v1201 = vmul.f32 %v1185, %v1193
      %s1202 = scalar_lea.vmem %s5, 192
      %v1203 = vld [vmem:[%s1202] sm:$0xff]
      %v1204 = vld [vmem:[%s1202 + $0x8] sm:$0xff]
      %v1205 = vld [vmem:[%s1202 + $0x10] sm:$0xff]
      %v1206 = vld [vmem:[%s1202 + $0x18] sm:$0xff]
      %v1207 = vld [vmem:[%s1202 + $0x20] sm:$0xff]
      %v1208 = vld [vmem:[%s1202 + $0x28] sm:$0xff]
      %v1209 = vld [vmem:[%s1202 + $0x30] sm:$0xff]
      %v1210 = vld [vmem:[%s1202 + $0x38] sm:$0xff]
      %v1212 = vsel %vm775, %v1203, 0
      %v1215 = vsel %vm775, %v1204, 0
      %v1218 = vsel %vm775, %v1205, 0
      %v1221 = vsel %vm775, %v1206, 0
      %v1224 = vsel %vm775, %v1207, 0
      %v1227 = vsel %vm775, %v1208, 0
      %v1230 = vsel %vm775, %v1209, 0
      %v1233 = vsel %vm775, %v1210, 0
      %v1236 = vsel %vm800, %v1200, 0
      %v1239 = vsel %vm800, %v1201, 0
      %1241 = vmatpush.msra.mxu0 0.0
      %1242 = vmatpush.msra.mxu0 0.0
      %1243 = vmatpush.msra.mxu0 0.0
      %1244 = vmatpush.msra.mxu0 0.0
      %1245 = vmatpush.msra.mxu0 0.0
      %1246 = vmatpush.msra.mxu0 0.0
      %1247 = vmatpush.msra.mxu0 0.0
      %1248 = vmatpush.msra.mxu0 0.0
      %1249 = vmatpush.msra.mxu0 0.0
      %1250 = vmatpush.msra.mxu0 0.0
      %1251 = vmatpush.msra.mxu0 0.0
      %1252 = vmatpush.msra.mxu0 0.0
      %1253 = vmatpush.msra.mxu0 0.0
      %1254 = vmatpush.msra.mxu0 %v1236
      %1255 = vmatpush.msra.mxu0 %v1198
      %1256 = vmatpush.msra.mxu0 %v1196
      %1257 = vmatmul.f32.gmra.mxu0 %v1212
      %v1258 = vpop.f32.mrf.mxu0
      %v1259 = vadd.f32 0.0, %v1258
      %1260 = vmatmul.f32.gmra.mxu0 %v1215
      %v1261 = vpop.f32.mrf.mxu0
      %v1262 = vadd.f32 0.0, %v1261
      %1263 = vmatmul.f32.gmra.mxu0 %v1218
      %v1264 = vpop.f32.mrf.mxu0
      %v1265 = vadd.f32 0.0, %v1264
      %1266 = vmatmul.f32.gmra.mxu0 %v1221
      %v1267 = vpop.f32.mrf.mxu0
      %v1268 = vadd.f32 0.0, %v1267
      %1269 = vmatmul.f32.gmra.mxu0 %v1224
      %v1270 = vpop.f32.mrf.mxu0
      %v1271 = vadd.f32 0.0, %v1270
      %1272 = vmatmul.f32.gmra.mxu0 %v1227
      %v1273 = vpop.f32.mrf.mxu0
      %v1274 = vadd.f32 0.0, %v1273
      %1275 = vmatmul.f32.gmra.mxu0 %v1230
      %v1276 = vpop.f32.mrf.mxu0
      %v1277 = vadd.f32 0.0, %v1276
      %1278 = vmatmul.f32.gmra.mxu0 %v1233
      %v1279 = vpop.f32.mrf.mxu0
      %v1280 = vadd.f32 0.0, %v1279
      %1281 = vdwg.mxu0
      %1282 = vmatpush.msra.mxu0 0.0
      %1283 = vmatpush.msra.mxu0 0.0
      %1284 = vmatpush.msra.mxu0 0.0
      %1285 = vmatpush.msra.mxu0 0.0
      %1286 = vmatpush.msra.mxu0 0.0
      %1287 = vmatpush.msra.mxu0 0.0
      %1288 = vmatpush.msra.mxu0 0.0
      %1289 = vmatpush.msra.mxu0 0.0
      %1290 = vmatpush.msra.mxu0 0.0
      %1291 = vmatpush.msra.mxu0 0.0
      %1292 = vmatpush.msra.mxu0 0.0
      %1293 = vmatpush.msra.mxu0 0.0
      %1294 = vmatpush.msra.mxu0 0.0
      %1295 = vmatpush.msra.mxu0 %v1239
      %1296 = vmatpush.msra.mxu0 %v1199
      %1297 = vmatpush.msra.mxu0 %v1197
      %1298 = vmatmul.f32.gmra.mxu0 %v1212
      %v1299 = vpop.f32.mrf.mxu0
      %v1300 = vadd.f32 0.0, %v1299
      %1301 = vmatmul.f32.gmra.mxu0 %v1215
      %v1302 = vpop.f32.mrf.mxu0
      %v1303 = vadd.f32 0.0, %v1302
      %1304 = vmatmul.f32.gmra.mxu0 %v1218
      %v1305 = vpop.f32.mrf.mxu0
      %v1306 = vadd.f32 0.0, %v1305
      %1307 = vmatmul.f32.gmra.mxu0 %v1221
      %v1308 = vpop.f32.mrf.mxu0
      %v1309 = vadd.f32 0.0, %v1308
      %1310 = vmatmul.f32.gmra.mxu0 %v1224
      %v1311 = vpop.f32.mrf.mxu0
      %v1312 = vadd.f32 0.0, %v1311
      %1313 = vmatmul.f32.gmra.mxu0 %v1227
      %v1314 = vpop.f32.mrf.mxu0
      %v1315 = vadd.f32 0.0, %v1314
      %1316 = vmatmul.f32.gmra.mxu0 %v1230
      %v1317 = vpop.f32.mrf.mxu0
      %v1318 = vadd.f32 0.0, %v1317
      %1319 = vmatmul.f32.gmra.mxu0 %v1233
      %v1320 = vpop.f32.mrf.mxu0
      %v1321 = vadd.f32 0.0, %v1320
      %1322 = vdwg.mxu0
      %v1323 = vadd.f32 %v1154, %v1259
      %v1324 = vadd.f32 %v1155, %v1300
      %v1325 = vadd.f32 %v1156, %v1262
      %v1326 = vadd.f32 %v1157, %v1303
      %v1327 = vadd.f32 %v1158, %v1265
      %v1328 = vadd.f32 %v1159, %v1306
      %v1329 = vadd.f32 %v1160, %v1268
      %v1330 = vadd.f32 %v1161, %v1309
      %v1331 = vadd.f32 %v1162, %v1271
      %v1332 = vadd.f32 %v1163, %v1312
      %v1333 = vadd.f32 %v1164, %v1274
      %v1334 = vadd.f32 %v1165, %v1315
      %v1335 = vadd.f32 %v1166, %v1277
      %v1336 = vadd.f32 %v1167, %v1318
      %v1337 = vadd.f32 %v1168, %v1280
      %v1338 = vadd.f32 %v1169, %v1321
      %s1339 = scalar_lea.vmem %s5, 256
      %v1340 = vld [vmem:[%s1339] sm:$0xff]
      %v1341 = vld [vmem:[%s1339 + $0x8] sm:$0xff]
      %v1342 = vld [vmem:[%s1339 + $0x10] sm:$0xff]
      %v1343 = vld [vmem:[%s1339 + $0x18] sm:$0xff]
      %v1344 = vld [vmem:[%s1339 + $0x20] sm:$0xff]
      %v1345 = vld [vmem:[%s1339 + $0x28] sm:$0xff]
      %v1346 = vld [vmem:[%s1339 + $0x30] sm:$0xff]
      %v1347 = vld [vmem:[%s1339 + $0x38] sm:$0xff]
      %v1349 = vsel %vm775, %v1340, 0
      %v1352 = vsel %vm775, %v1341, 0
      %v1355 = vsel %vm775, %v1342, 0
      %v1358 = vsel %vm775, %v1343, 0
      %v1361 = vsel %vm775, %v1344, 0
      %v1364 = vsel %vm775, %v1345, 0
      %v1367 = vsel %vm775, %v1346, 0
      %v1370 = vsel %vm775, %v1347, 0
      %v1373 = vsel %vm800, %v665, 0
      %v1376 = vsel %vm800, %v691, 0
      %1378 = vmatpush.msra.mxu0 0.0
      %1379 = vmatpush.msra.mxu0 0.0
      %1380 = vmatpush.msra.mxu0 0.0
      %1381 = vmatpush.msra.mxu0 0.0
      %1382 = vmatpush.msra.mxu0 0.0
      %1383 = vmatpush.msra.mxu0 0.0
      %1384 = vmatpush.msra.mxu0 0.0
      %1385 = vmatpush.msra.mxu0 0.0
      %1386 = vmatpush.msra.mxu0 0.0
      %1387 = vmatpush.msra.mxu0 0.0
      %1388 = vmatpush.msra.mxu0 0.0
      %1389 = vmatpush.msra.mxu0 0.0
      %1390 = vmatpush.msra.mxu0 0.0
      %1391 = vmatpush.msra.mxu0 %v1373
      %1392 = vmatpush.msra.mxu0 %v662
      %1393 = vmatpush.msra.mxu0 %v659
      %1394 = vmatmul.f32.gmra.mxu0 %v1349
      %v1395 = vpop.f32.mrf.mxu0
      %v1396 = vadd.f32 0.0, %v1395
      %1397 = vmatmul.f32.gmra.mxu0 %v1352
      %v1398 = vpop.f32.mrf.mxu0
      %v1399 = vadd.f32 0.0, %v1398
      %1400 = vmatmul.f32.gmra.mxu0 %v1355
      %v1401 = vpop.f32.mrf.mxu0
      %v1402 = vadd.f32 0.0, %v1401
      %1403 = vmatmul.f32.gmra.mxu0 %v1358
      %v1404 = vpop.f32.mrf.mxu0
      %v1405 = vadd.f32 0.0, %v1404
      %1406 = vmatmul.f32.gmra.mxu0 %v1361
      %v1407 = vpop.f32.mrf.mxu0
      %v1408 = vadd.f32 0.0, %v1407
      %1409 = vmatmul.f32.gmra.mxu0 %v1364
      %v1410 = vpop.f32.mrf.mxu0
      %v1411 = vadd.f32 0.0, %v1410
      %1412 = vmatmul.f32.gmra.mxu0 %v1367
      %v1413 = vpop.f32.mrf.mxu0
      %v1414 = vadd.f32 0.0, %v1413
      %1415 = vmatmul.f32.gmra.mxu0 %v1370
      %v1416 = vpop.f32.mrf.mxu0
      %v1417 = vadd.f32 0.0, %v1416
      %1418 = vdwg.mxu0
      %1419 = vmatpush.msra.mxu0 0.0
      %1420 = vmatpush.msra.mxu0 0.0
      %1421 = vmatpush.msra.mxu0 0.0
      %1422 = vmatpush.msra.mxu0 0.0
      %1423 = vmatpush.msra.mxu0 0.0
      %1424 = vmatpush.msra.mxu0 0.0
      %1425 = vmatpush.msra.mxu0 0.0
      %1426 = vmatpush.msra.mxu0 0.0
      %1427 = vmatpush.msra.mxu0 0.0
      %1428 = vmatpush.msra.mxu0 0.0
      %1429 = vmatpush.msra.mxu0 0.0
      %1430 = vmatpush.msra.mxu0 0.0
      %1431 = vmatpush.msra.mxu0 0.0
      %1432 = vmatpush.msra.mxu0 %v1376
      %1433 = vmatpush.msra.mxu0 %v688
      %1434 = vmatpush.msra.mxu0 %v685
      %1435 = vmatmul.f32.gmra.mxu0 %v1349
      %v1436 = vpop.f32.mrf.mxu0
      %v1437 = vadd.f32 0.0, %v1436
      %1438 = vmatmul.f32.gmra.mxu0 %v1352
      %v1439 = vpop.f32.mrf.mxu0
      %v1440 = vadd.f32 0.0, %v1439
      %1441 = vmatmul.f32.gmra.mxu0 %v1355
      %v1442 = vpop.f32.mrf.mxu0
      %v1443 = vadd.f32 0.0, %v1442
      %1444 = vmatmul.f32.gmra.mxu0 %v1358
      %v1445 = vpop.f32.mrf.mxu0
      %v1446 = vadd.f32 0.0, %v1445
      %1447 = vmatmul.f32.gmra.mxu0 %v1361
      %v1448 = vpop.f32.mrf.mxu0
      %v1449 = vadd.f32 0.0, %v1448
      %1450 = vmatmul.f32.gmra.mxu0 %v1364
      %v1451 = vpop.f32.mrf.mxu0
      %v1452 = vadd.f32 0.0, %v1451
      %1453 = vmatmul.f32.gmra.mxu0 %v1367
      %v1454 = vpop.f32.mrf.mxu0
      %v1455 = vadd.f32 0.0, %v1454
      %1456 = vmatmul.f32.gmra.mxu0 %v1370
      %v1457 = vpop.f32.mrf.mxu0
      %v1458 = vadd.f32 0.0, %v1457
      %1459 = vdwg.mxu0
      %v1460 = vadd.f32 %v1323, %v1396
      %v1461 = vadd.f32 %v1324, %v1437
      %v1462 = vadd.f32 %v1325, %v1399
      %v1463 = vadd.f32 %v1326, %v1440
      %v1464 = vadd.f32 %v1327, %v1402
      %v1465 = vadd.f32 %v1328, %v1443
      %v1466 = vadd.f32 %v1329, %v1405
      %v1467 = vadd.f32 %v1330, %v1446
      %v1468 = vadd.f32 %v1331, %v1408
      %v1469 = vadd.f32 %v1332, %v1449
      %v1470 = vadd.f32 %v1333, %v1411
      %v1471 = vadd.f32 %v1334, %v1452
      %v1472 = vadd.f32 %v1335, %v1414
      %v1473 = vadd.f32 %v1336, %v1455
      %v1474 = vadd.f32 %v1337, %v1417
      %v1475 = vadd.f32 %v1338, %v1458
      %1476 = vrot.lane.b32.xlu0 %v659, 127
      %v1477 = vpop.permute.xlu0 %1476
      %1478 = vrot.lane.b32.xlu0 %v662, 127
      %v1479 = vpop.permute.xlu0 %1478
      %1480 = vrot.lane.b32.xlu0 %v665, 127
      %v1481 = vpop.permute.xlu0 %1480
      %1482 = vrot.lane.b32.xlu0 %v685, 127
      %v1483 = vpop.permute.xlu0 %1482
      %1484 = vrot.lane.b32.xlu0 %v688, 127
      %v1485 = vpop.permute.xlu0 %1484
      %1486 = vrot.lane.b32.xlu0 %v691, 127
      %v1487 = vpop.permute.xlu0 %1486
      %vm1488 = vcmp.lt.s32.totalorder %v706, 127
      %v1489 = vsel %vm1488, %v1477, %v1483
      %v1490 = vsel %vm1488, %v1479, %v1485
      %v1491 = vsel %vm1488, %v1481, %v1487
      %v1492 = vsel %vm1488, %v1483, %v1477
      %v1493 = vsel %vm1488, %v1485, %v1479
      %v1494 = vsel %vm1488, %v1487, %v1481
      %s1495 = scalar_lea.vmem %s2, 10
      %v1496 = vld [vmem:[%s1495] sm:$0x3]
      %v1498 = vperm.slane %v1496, 0
      %v1499 = vperm.slane %v1496, 1
      %v1502 = vmul.f32 %v1489, %v1498
      %v1503 = vmul.f32 %v1492, %v1499
      %v1504 = vmul.f32 %v1490, %v1498
      %v1505 = vmul.f32 %v1493, %v1499
      %v1506 = vmul.f32 %v1491, %v1498
      %v1507 = vmul.f32 %v1494, %v1499
      %s1508 = scalar_lea.vmem %s5, 320
      %v1509 = vld [vmem:[%s1508] sm:$0xff]
      %v1510 = vld [vmem:[%s1508 + $0x8] sm:$0xff]
      %v1511 = vld [vmem:[%s1508 + $0x10] sm:$0xff]
      %v1512 = vld [vmem:[%s1508 + $0x18] sm:$0xff]
      %v1513 = vld [vmem:[%s1508 + $0x20] sm:$0xff]
      %v1514 = vld [vmem:[%s1508 + $0x28] sm:$0xff]
      %v1515 = vld [vmem:[%s1508 + $0x30] sm:$0xff]
      %v1516 = vld [vmem:[%s1508 + $0x38] sm:$0xff]
      %v1518 = vsel %vm775, %v1509, 0
      %v1521 = vsel %vm775, %v1510, 0
      %v1524 = vsel %vm775, %v1511, 0
      %v1527 = vsel %vm775, %v1512, 0
      %v1530 = vsel %vm775, %v1513, 0
      %v1533 = vsel %vm775, %v1514, 0
      %v1536 = vsel %vm775, %v1515, 0
      %v1539 = vsel %vm775, %v1516, 0
      %v1542 = vsel %vm800, %v1506, 0
      %v1545 = vsel %vm800, %v1507, 0
      %1547 = vmatpush.msra.mxu0 0.0
      %1548 = vmatpush.msra.mxu0 0.0
      %1549 = vmatpush.msra.mxu0 0.0
      %1550 = vmatpush.msra.mxu0 0.0
      %1551 = vmatpush.msra.mxu0 0.0
      %1552 = vmatpush.msra.mxu0 0.0
      %1553 = vmatpush.msra.mxu0 0.0
      %1554 = vmatpush.msra.mxu0 0.0
      %1555 = vmatpush.msra.mxu0 0.0
      %1556 = vmatpush.msra.mxu0 0.0
      %1557 = vmatpush.msra.mxu0 0.0
      %1558 = vmatpush.msra.mxu0 0.0
      %1559 = vmatpush.msra.mxu0 0.0
      %1560 = vmatpush.msra.mxu0 %v1542
      %1561 = vmatpush.msra.mxu0 %v1504
      %1562 = vmatpush.msra.mxu0 %v1502
      %1563 = vmatmul.f32.gmra.mxu0 %v1518
      %v1564 = vpop.f32.mrf.mxu0
      %v1565 = vadd.f32 0.0, %v1564
      %1566 = vmatmul.f32.gmra.mxu0 %v1521
      %v1567 = vpop.f32.mrf.mxu0
      %v1568 = vadd.f32 0.0, %v1567
      %1569 = vmatmul.f32.gmra.mxu0 %v1524
      %v1570 = vpop.f32.mrf.mxu0
      %v1571 = vadd.f32 0.0, %v1570
      %1572 = vmatmul.f32.gmra.mxu0 %v1527
      %v1573 = vpop.f32.mrf.mxu0
      %v1574 = vadd.f32 0.0, %v1573
      %1575 = vmatmul.f32.gmra.mxu0 %v1530
      %v1576 = vpop.f32.mrf.mxu0
      %v1577 = vadd.f32 0.0, %v1576
      %1578 = vmatmul.f32.gmra.mxu0 %v1533
      %v1579 = vpop.f32.mrf.mxu0
      %v1580 = vadd.f32 0.0, %v1579
      %1581 = vmatmul.f32.gmra.mxu0 %v1536
      %v1582 = vpop.f32.mrf.mxu0
      %v1583 = vadd.f32 0.0, %v1582
      %1584 = vmatmul.f32.gmra.mxu0 %v1539
      %v1585 = vpop.f32.mrf.mxu0
      %v1586 = vadd.f32 0.0, %v1585
      %1587 = vdwg.mxu0
      %1588 = vmatpush.msra.mxu0 0.0
      %1589 = vmatpush.msra.mxu0 0.0
      %1590 = vmatpush.msra.mxu0 0.0
      %1591 = vmatpush.msra.mxu0 0.0
      %1592 = vmatpush.msra.mxu0 0.0
      %1593 = vmatpush.msra.mxu0 0.0
      %1594 = vmatpush.msra.mxu0 0.0
      %1595 = vmatpush.msra.mxu0 0.0
      %1596 = vmatpush.msra.mxu0 0.0
      %1597 = vmatpush.msra.mxu0 0.0
      %1598 = vmatpush.msra.mxu0 0.0
      %1599 = vmatpush.msra.mxu0 0.0
      %1600 = vmatpush.msra.mxu0 0.0
      %1601 = vmatpush.msra.mxu0 %v1545
      %1602 = vmatpush.msra.mxu0 %v1505
      %1603 = vmatpush.msra.mxu0 %v1503
      %1604 = vmatmul.f32.gmra.mxu0 %v1518
      %v1605 = vpop.f32.mrf.mxu0
      %v1606 = vadd.f32 0.0, %v1605
      %1607 = vmatmul.f32.gmra.mxu0 %v1521
      %v1608 = vpop.f32.mrf.mxu0
      %v1609 = vadd.f32 0.0, %v1608
      %1610 = vmatmul.f32.gmra.mxu0 %v1524
      %v1611 = vpop.f32.mrf.mxu0
      %v1612 = vadd.f32 0.0, %v1611
      %1613 = vmatmul.f32.gmra.mxu0 %v1527
      %v1614 = vpop.f32.mrf.mxu0
      %v1615 = vadd.f32 0.0, %v1614
      %1616 = vmatmul.f32.gmra.mxu0 %v1530
      %v1617 = vpop.f32.mrf.mxu0
      %v1618 = vadd.f32 0.0, %v1617
      %1619 = vmatmul.f32.gmra.mxu0 %v1533
      %v1620 = vpop.f32.mrf.mxu0
      %v1621 = vadd.f32 0.0, %v1620
      %1622 = vmatmul.f32.gmra.mxu0 %v1536
      %v1623 = vpop.f32.mrf.mxu0
      %v1624 = vadd.f32 0.0, %v1623
      %1625 = vmatmul.f32.gmra.mxu0 %v1539
      %v1626 = vpop.f32.mrf.mxu0
      %v1627 = vadd.f32 0.0, %v1626
      %1628 = vdwg.mxu0
      %v1629 = vadd.f32 %v1460, %v1565
      %v1630 = vadd.f32 %v1461, %v1606
      %v1631 = vadd.f32 %v1462, %v1568
      %v1632 = vadd.f32 %v1463, %v1609
      %v1633 = vadd.f32 %v1464, %v1571
      %v1634 = vadd.f32 %v1465, %v1612
      %v1635 = vadd.f32 %v1466, %v1574
      %v1636 = vadd.f32 %v1467, %v1615
      %v1637 = vadd.f32 %v1468, %v1577
      %v1638 = vadd.f32 %v1469, %v1618
      %v1639 = vadd.f32 %v1470, %v1580
      %v1640 = vadd.f32 %v1471, %v1621
      %v1641 = vadd.f32 %v1472, %v1583
      %v1642 = vadd.f32 %v1473, %v1624
      %v1643 = vadd.f32 %v1474, %v1586
      %v1644 = vadd.f32 %v1475, %v1627
      %1645 = vrot.lane.b32.xlu0 %v659, 113
      %v1646 = vpop.permute.xlu0 %1645
      %1647 = vrot.lane.b32.xlu0 %v662, 113
      %v1648 = vpop.permute.xlu0 %1647
      %1649 = vrot.lane.b32.xlu0 %v665, 113
      %v1650 = vpop.permute.xlu0 %1649
      %1651 = vrot.lane.b32.xlu0 %v685, 113
      %v1652 = vpop.permute.xlu0 %1651
      %1653 = vrot.lane.b32.xlu0 %v688, 113
      %v1654 = vpop.permute.xlu0 %1653
      %1655 = vrot.lane.b32.xlu0 %v691, 113
      %v1656 = vpop.permute.xlu0 %1655
      %vm1657 = vcmp.lt.s32.totalorder %v706, 113
      %v1658 = vsel %vm1657, %v1646, %v1652
      %v1659 = vsel %vm1657, %v1648, %v1654
      %v1660 = vsel %vm1657, %v1650, %v1656
      %v1661 = vsel %vm1657, %v1652, %v1646
      %v1662 = vsel %vm1657, %v1654, %v1648
      %v1663 = vsel %vm1657, %v1656, %v1650
      %s1664 = scalar_lea.vmem %s2, 12
      %v1665 = vld [vmem:[%s1664] sm:$0x3]
      %v1667 = vperm.slane %v1665, 0
      %v1668 = vperm.slane %v1665, 1
      %v1671 = vmul.f32 %v1658, %v1667
      %v1672 = vmul.f32 %v1661, %v1668
      %v1673 = vmul.f32 %v1659, %v1667
      %v1674 = vmul.f32 %v1662, %v1668
      %v1675 = vmul.f32 %v1660, %v1667
      %v1676 = vmul.f32 %v1663, %v1668
      %s1677 = scalar_lea.vmem %s5, 384
      %v1678 = vld [vmem:[%s1677] sm:$0xff]
      %v1679 = vld [vmem:[%s1677 + $0x8] sm:$0xff]
      %v1680 = vld [vmem:[%s1677 + $0x10] sm:$0xff]
      %v1681 = vld [vmem:[%s1677 + $0x18] sm:$0xff]
      %v1682 = vld [vmem:[%s1677 + $0x20] sm:$0xff]
      %v1683 = vld [vmem:[%s1677 + $0x28] sm:$0xff]
      %v1684 = vld [vmem:[%s1677 + $0x30] sm:$0xff]
      %v1685 = vld [vmem:[%s1677 + $0x38] sm:$0xff]
      %v1687 = vsel %vm775, %v1678, 0
      %v1690 = vsel %vm775, %v1679, 0
      %v1693 = vsel %vm775, %v1680, 0
      %v1696 = vsel %vm775, %v1681, 0
      %v1699 = vsel %vm775, %v1682, 0
      %v1702 = vsel %vm775, %v1683, 0
      %v1705 = vsel %vm775, %v1684, 0
      %v1708 = vsel %vm775, %v1685, 0
      %v1711 = vsel %vm800, %v1675, 0
      %v1714 = vsel %vm800, %v1676, 0
      %1716 = vmatpush.msra.mxu0 0.0
      %1717 = vmatpush.msra.mxu0 0.0
      %1718 = vmatpush.msra.mxu0 0.0
      %1719 = vmatpush.msra.mxu0 0.0
      %1720 = vmatpush.msra.mxu0 0.0
      %1721 = vmatpush.msra.mxu0 0.0
      %1722 = vmatpush.msra.mxu0 0.0
      %1723 = vmatpush.msra.mxu0 0.0
      %1724 = vmatpush.msra.mxu0 0.0
      %1725 = vmatpush.msra.mxu0 0.0
      %1726 = vmatpush.msra.mxu0 0.0
      %1727 = vmatpush.msra.mxu0 0.0
      %1728 = vmatpush.msra.mxu0 0.0
      %1729 = vmatpush.msra.mxu0 %v1711
      %1730 = vmatpush.msra.mxu0 %v1673
      %1731 = vmatpush.msra.mxu0 %v1671
      %1732 = vmatmul.f32.gmra.mxu0 %v1687
      %v1733 = vpop.f32.mrf.mxu0
      %v1734 = vadd.f32 0.0, %v1733
      %1735 = vmatmul.f32.gmra.mxu0 %v1690
      %v1736 = vpop.f32.mrf.mxu0
      %v1737 = vadd.f32 0.0, %v1736
      %1738 = vmatmul.f32.gmra.mxu0 %v1693
      %v1739 = vpop.f32.mrf.mxu0
      %v1740 = vadd.f32 0.0, %v1739
      %1741 = vmatmul.f32.gmra.mxu0 %v1696
      %v1742 = vpop.f32.mrf.mxu0
      %v1743 = vadd.f32 0.0, %v1742
      %1744 = vmatmul.f32.gmra.mxu0 %v1699
      %v1745 = vpop.f32.mrf.mxu0
      %v1746 = vadd.f32 0.0, %v1745
      %1747 = vmatmul.f32.gmra.mxu0 %v1702
      %v1748 = vpop.f32.mrf.mxu0
      %v1749 = vadd.f32 0.0, %v1748
      %1750 = vmatmul.f32.gmra.mxu0 %v1705
      %v1751 = vpop.f32.mrf.mxu0
      %v1752 = vadd.f32 0.0, %v1751
      %1753 = vmatmul.f32.gmra.mxu0 %v1708
      %v1754 = vpop.f32.mrf.mxu0
      %v1755 = vadd.f32 0.0, %v1754
      %1756 = vdwg.mxu0
      %1757 = vmatpush.msra.mxu0 0.0
      %1758 = vmatpush.msra.mxu0 0.0
      %1759 = vmatpush.msra.mxu0 0.0
      %1760 = vmatpush.msra.mxu0 0.0
      %1761 = vmatpush.msra.mxu0 0.0
      %1762 = vmatpush.msra.mxu0 0.0
      %1763 = vmatpush.msra.mxu0 0.0
      %1764 = vmatpush.msra.mxu0 0.0
      %1765 = vmatpush.msra.mxu0 0.0
      %1766 = vmatpush.msra.mxu0 0.0
      %1767 = vmatpush.msra.mxu0 0.0
      %1768 = vmatpush.msra.mxu0 0.0
      %1769 = vmatpush.msra.mxu0 0.0
      %1770 = vmatpush.msra.mxu0 %v1714
      %1771 = vmatpush.msra.mxu0 %v1674
      %1772 = vmatpush.msra.mxu0 %v1672
      %1773 = vmatmul.f32.gmra.mxu0 %v1687
      %v1774 = vpop.f32.mrf.mxu0
      %v1775 = vadd.f32 0.0, %v1774
      %1776 = vmatmul.f32.gmra.mxu0 %v1690
      %v1777 = vpop.f32.mrf.mxu0
      %v1778 = vadd.f32 0.0, %v1777
      %1779 = vmatmul.f32.gmra.mxu0 %v1693
      %v1780 = vpop.f32.mrf.mxu0
      %v1781 = vadd.f32 0.0, %v1780
      %1782 = vmatmul.f32.gmra.mxu0 %v1696
      %v1783 = vpop.f32.mrf.mxu0
      %v1784 = vadd.f32 0.0, %v1783
      %1785 = vmatmul.f32.gmra.mxu0 %v1699
      %v1786 = vpop.f32.mrf.mxu0
      %v1787 = vadd.f32 0.0, %v1786
      %1788 = vmatmul.f32.gmra.mxu0 %v1702
      %v1789 = vpop.f32.mrf.mxu0
      %v1790 = vadd.f32 0.0, %v1789
      %1791 = vmatmul.f32.gmra.mxu0 %v1705
      %v1792 = vpop.f32.mrf.mxu0
      %v1793 = vadd.f32 0.0, %v1792
      %1794 = vmatmul.f32.gmra.mxu0 %v1708
      %v1795 = vpop.f32.mrf.mxu0
      %v1796 = vadd.f32 0.0, %v1795
      %1797 = vdwg.mxu0
      %v1798 = vadd.f32 %v1629, %v1734
      %v1799 = vadd.f32 %v1630, %v1775
      %v1800 = vadd.f32 %v1631, %v1737
      %v1801 = vadd.f32 %v1632, %v1778
      %v1802 = vadd.f32 %v1633, %v1740
      %v1803 = vadd.f32 %v1634, %v1781
      %v1804 = vadd.f32 %v1635, %v1743
      %v1805 = vadd.f32 %v1636, %v1784
      %v1806 = vadd.f32 %v1637, %v1746
      %v1807 = vadd.f32 %v1638, %v1787
      %v1808 = vadd.f32 %v1639, %v1749
      %v1809 = vadd.f32 %v1640, %v1790
      %v1810 = vadd.f32 %v1641, %v1752
      %v1811 = vadd.f32 %v1642, %v1793
      %v1812 = vadd.f32 %v1643, %v1755
      %v1813 = vadd.f32 %v1644, %v1796
      %1814 = vrot.lane.b32.xlu0 %v659, 112
      %v1815 = vpop.permute.xlu0 %1814
      %1816 = vrot.lane.b32.xlu0 %v662, 112
      %v1817 = vpop.permute.xlu0 %1816
      %1818 = vrot.lane.b32.xlu0 %v665, 112
      %v1819 = vpop.permute.xlu0 %1818
      %1820 = vrot.lane.b32.xlu0 %v685, 112
      %v1821 = vpop.permute.xlu0 %1820
      %1822 = vrot.lane.b32.xlu0 %v688, 112
      %v1823 = vpop.permute.xlu0 %1822
      %1824 = vrot.lane.b32.xlu0 %v691, 112
      %v1825 = vpop.permute.xlu0 %1824
      %vm1826 = vcmp.lt.s32.totalorder %v706, 112
      %v1827 = vsel %vm1826, %v1815, %v1821
      %v1828 = vsel %vm1826, %v1817, %v1823
      %v1829 = vsel %vm1826, %v1819, %v1825
      %v1830 = vsel %vm1826, %v1821, %v1815
      %v1831 = vsel %vm1826, %v1823, %v1817
      %v1832 = vsel %vm1826, %v1825, %v1819
      %s1833 = scalar_lea.vmem %s2, 14
      %v1834 = vld [vmem:[%s1833] sm:$0x3]
      %v1836 = vperm.slane %v1834, 0
      %v1837 = vperm.slane %v1834, 1
      %v1840 = vmul.f32 %v1827, %v1836
      %v1841 = vmul.f32 %v1830, %v1837
      %v1842 = vmul.f32 %v1828, %v1836
      %v1843 = vmul.f32 %v1831, %v1837
      %v1844 = vmul.f32 %v1829, %v1836
      %v1845 = vmul.f32 %v1832, %v1837
      %s1846 = scalar_lea.vmem %s5, 448
      %v1847 = vld [vmem:[%s1846] sm:$0xff]
      %v1848 = vld [vmem:[%s1846 + $0x8] sm:$0xff]
      %v1849 = vld [vmem:[%s1846 + $0x10] sm:$0xff]
      %v1850 = vld [vmem:[%s1846 + $0x18] sm:$0xff]
      %v1851 = vld [vmem:[%s1846 + $0x20] sm:$0xff]
      %v1852 = vld [vmem:[%s1846 + $0x28] sm:$0xff]
      %v1853 = vld [vmem:[%s1846 + $0x30] sm:$0xff]
      %v1854 = vld [vmem:[%s1846 + $0x38] sm:$0xff]
      %v1856 = vsel %vm775, %v1847, 0
      %v1859 = vsel %vm775, %v1848, 0
      %v1862 = vsel %vm775, %v1849, 0
      %v1865 = vsel %vm775, %v1850, 0
      %v1868 = vsel %vm775, %v1851, 0
      %v1871 = vsel %vm775, %v1852, 0
      %v1874 = vsel %vm775, %v1853, 0
      %v1877 = vsel %vm775, %v1854, 0
      %v1880 = vsel %vm800, %v1844, 0
      %v1883 = vsel %vm800, %v1845, 0
      %1885 = vmatpush.msra.mxu0 0.0
      %1886 = vmatpush.msra.mxu0 0.0
      %1887 = vmatpush.msra.mxu0 0.0
      %1888 = vmatpush.msra.mxu0 0.0
      %1889 = vmatpush.msra.mxu0 0.0
      %1890 = vmatpush.msra.mxu0 0.0
      %1891 = vmatpush.msra.mxu0 0.0
      %1892 = vmatpush.msra.mxu0 0.0
      %1893 = vmatpush.msra.mxu0 0.0
      %1894 = vmatpush.msra.mxu0 0.0
      %1895 = vmatpush.msra.mxu0 0.0
      %1896 = vmatpush.msra.mxu0 0.0
      %1897 = vmatpush.msra.mxu0 0.0
      %1898 = vmatpush.msra.mxu0 %v1880
      %1899 = vmatpush.msra.mxu0 %v1842
      %1900 = vmatpush.msra.mxu0 %v1840
      %1901 = vmatmul.f32.gmra.mxu0 %v1856
      %v1902 = vpop.f32.mrf.mxu0
      %v1903 = vadd.f32 0.0, %v1902
      %1904 = vmatmul.f32.gmra.mxu0 %v1859
      %v1905 = vpop.f32.mrf.mxu0
      %v1906 = vadd.f32 0.0, %v1905
      %1907 = vmatmul.f32.gmra.mxu0 %v1862
      %v1908 = vpop.f32.mrf.mxu0
      %v1909 = vadd.f32 0.0, %v1908
      %1910 = vmatmul.f32.gmra.mxu0 %v1865
      %v1911 = vpop.f32.mrf.mxu0
      %v1912 = vadd.f32 0.0, %v1911
      %1913 = vmatmul.f32.gmra.mxu0 %v1868
      %v1914 = vpop.f32.mrf.mxu0
      %v1915 = vadd.f32 0.0, %v1914
      %1916 = vmatmul.f32.gmra.mxu0 %v1871
      %v1917 = vpop.f32.mrf.mxu0
      %v1918 = vadd.f32 0.0, %v1917
      %1919 = vmatmul.f32.gmra.mxu0 %v1874
      %v1920 = vpop.f32.mrf.mxu0
      %v1921 = vadd.f32 0.0, %v1920
      %1922 = vmatmul.f32.gmra.mxu0 %v1877
      %v1923 = vpop.f32.mrf.mxu0
      %v1924 = vadd.f32 0.0, %v1923
      %1925 = vdwg.mxu0
      %1926 = vmatpush.msra.mxu0 0.0
      %1927 = vmatpush.msra.mxu0 0.0
      %1928 = vmatpush.msra.mxu0 0.0
      %1929 = vmatpush.msra.mxu0 0.0
      %1930 = vmatpush.msra.mxu0 0.0
      %1931 = vmatpush.msra.mxu0 0.0
      %1932 = vmatpush.msra.mxu0 0.0
      %1933 = vmatpush.msra.mxu0 0.0
      %1934 = vmatpush.msra.mxu0 0.0
      %1935 = vmatpush.msra.mxu0 0.0
      %1936 = vmatpush.msra.mxu0 0.0
      %1937 = vmatpush.msra.mxu0 0.0
      %1938 = vmatpush.msra.mxu0 0.0
      %1939 = vmatpush.msra.mxu0 %v1883
      %1940 = vmatpush.msra.mxu0 %v1843
      %1941 = vmatpush.msra.mxu0 %v1841
      %1942 = vmatmul.f32.gmra.mxu0 %v1856
      %v1943 = vpop.f32.mrf.mxu0
      %v1944 = vadd.f32 0.0, %v1943
      %1945 = vmatmul.f32.gmra.mxu0 %v1859
      %v1946 = vpop.f32.mrf.mxu0
      %v1947 = vadd.f32 0.0, %v1946
      %1948 = vmatmul.f32.gmra.mxu0 %v1862
      %v1949 = vpop.f32.mrf.mxu0
      %v1950 = vadd.f32 0.0, %v1949
      %1951 = vmatmul.f32.gmra.mxu0 %v1865
      %v1952 = vpop.f32.mrf.mxu0
      %v1953 = vadd.f32 0.0, %v1952
      %1954 = vmatmul.f32.gmra.mxu0 %v1868
      %v1955 = vpop.f32.mrf.mxu0
      %v1956 = vadd.f32 0.0, %v1955
      %1957 = vmatmul.f32.gmra.mxu0 %v1871
      %v1958 = vpop.f32.mrf.mxu0
      %v1959 = vadd.f32 0.0, %v1958
      %1960 = vmatmul.f32.gmra.mxu0 %v1874
      %v1961 = vpop.f32.mrf.mxu0
      %v1962 = vadd.f32 0.0, %v1961
      %1963 = vmatmul.f32.gmra.mxu0 %v1877
      %v1964 = vpop.f32.mrf.mxu0
      %v1965 = vadd.f32 0.0, %v1964
      %1966 = vdwg.mxu0
      %v1967 = vadd.f32 %v1798, %v1903
      %v1968 = vadd.f32 %v1799, %v1944
      %v1969 = vadd.f32 %v1800, %v1906
      %v1970 = vadd.f32 %v1801, %v1947
      %v1971 = vadd.f32 %v1802, %v1909
      %v1972 = vadd.f32 %v1803, %v1950
      %v1973 = vadd.f32 %v1804, %v1912
      %v1974 = vadd.f32 %v1805, %v1953
      %v1975 = vadd.f32 %v1806, %v1915
      %v1976 = vadd.f32 %v1807, %v1956
      %v1977 = vadd.f32 %v1808, %v1918
      %v1978 = vadd.f32 %v1809, %v1959
      %v1979 = vadd.f32 %v1810, %v1921
      %v1980 = vadd.f32 %v1811, %v1962
      %v1981 = vadd.f32 %v1812, %v1924
      %v1982 = vadd.f32 %v1813, %v1965
      %1983 = vrot.lane.b32.xlu0 %v659, 111
      %v1984 = vpop.permute.xlu0 %1983
      %1985 = vrot.lane.b32.xlu0 %v662, 111
      %v1986 = vpop.permute.xlu0 %1985
      %1987 = vrot.lane.b32.xlu0 %v665, 111
      %v1988 = vpop.permute.xlu0 %1987
      %1989 = vrot.lane.b32.xlu0 %v685, 111
      %v1990 = vpop.permute.xlu0 %1989
      %1991 = vrot.lane.b32.xlu0 %v688, 111
      %v1992 = vpop.permute.xlu0 %1991
      %1993 = vrot.lane.b32.xlu0 %v691, 111
      %v1994 = vpop.permute.xlu0 %1993
      %vm1995 = vcmp.lt.s32.totalorder %v706, 111
      %v1996 = vsel %vm1995, %v1984, %v1990
      %v1997 = vsel %vm1995, %v1986, %v1992
      %v1998 = vsel %vm1995, %v1988, %v1994
      %v1999 = vsel %vm1995, %v1990, %v1984
      %v2000 = vsel %vm1995, %v1992, %v1986
      %v2001 = vsel %vm1995, %v1994, %v1988
      %s2002 = scalar_lea.vmem %s2, 16
      %v2003 = vld [vmem:[%s2002] sm:$0x3]
      %v2005 = vperm.slane %v2003, 0
      %v2006 = vperm.slane %v2003, 1
      %v2009 = vmul.f32 %v1996, %v2005
      %v2010 = vmul.f32 %v1999, %v2006
      %v2011 = vmul.f32 %v1997, %v2005
      %v2012 = vmul.f32 %v2000, %v2006
      %v2013 = vmul.f32 %v1998, %v2005
      %v2014 = vmul.f32 %v2001, %v2006
      %s2015 = scalar_lea.vmem %s5, 512
      %v2016 = vld [vmem:[%s2015] sm:$0xff]
      %v2017 = vld [vmem:[%s2015 + $0x8] sm:$0xff]
      %v2018 = vld [vmem:[%s2015 + $0x10] sm:$0xff]
      %v2019 = vld [vmem:[%s2015 + $0x18] sm:$0xff]
      %v2020 = vld [vmem:[%s2015 + $0x20] sm:$0xff]
      %v2021 = vld [vmem:[%s2015 + $0x28] sm:$0xff]
      %v2022 = vld [vmem:[%s2015 + $0x30] sm:$0xff]
      %v2023 = vld [vmem:[%s2015 + $0x38] sm:$0xff]
      %v2025 = vsel %vm775, %v2016, 0
      %v2028 = vsel %vm775, %v2017, 0
      %v2031 = vsel %vm775, %v2018, 0
      %v2034 = vsel %vm775, %v2019, 0
      %v2037 = vsel %vm775, %v2020, 0
      %v2040 = vsel %vm775, %v2021, 0
      %v2043 = vsel %vm775, %v2022, 0
      %v2046 = vsel %vm775, %v2023, 0
      %v2049 = vsel %vm800, %v2013, 0
      %v2052 = vsel %vm800, %v2014, 0
      %2054 = vmatpush.msra.mxu0 0.0
      %2055 = vmatpush.msra.mxu0 0.0
      %2056 = vmatpush.msra.mxu0 0.0
      %2057 = vmatpush.msra.mxu0 0.0
      %2058 = vmatpush.msra.mxu0 0.0
      %2059 = vmatpush.msra.mxu0 0.0
      %2060 = vmatpush.msra.mxu0 0.0
      %2061 = vmatpush.msra.mxu0 0.0
      %2062 = vmatpush.msra.mxu0 0.0
      %2063 = vmatpush.msra.mxu0 0.0
      %2064 = vmatpush.msra.mxu0 0.0
      %2065 = vmatpush.msra.mxu0 0.0
      %2066 = vmatpush.msra.mxu0 0.0
      %2067 = vmatpush.msra.mxu0 %v2049
      %2068 = vmatpush.msra.mxu0 %v2011
      %2069 = vmatpush.msra.mxu0 %v2009
      %2070 = vmatmul.f32.gmra.mxu0 %v2025
      %v2071 = vpop.f32.mrf.mxu0
      %v2072 = vadd.f32 0.0, %v2071
      %2073 = vmatmul.f32.gmra.mxu0 %v2028
      %v2074 = vpop.f32.mrf.mxu0
      %v2075 = vadd.f32 0.0, %v2074
      %2076 = vmatmul.f32.gmra.mxu0 %v2031
      %v2077 = vpop.f32.mrf.mxu0
      %v2078 = vadd.f32 0.0, %v2077
      %2079 = vmatmul.f32.gmra.mxu0 %v2034
      %v2080 = vpop.f32.mrf.mxu0
      %v2081 = vadd.f32 0.0, %v2080
      %2082 = vmatmul.f32.gmra.mxu0 %v2037
      %v2083 = vpop.f32.mrf.mxu0
      %v2084 = vadd.f32 0.0, %v2083
      %2085 = vmatmul.f32.gmra.mxu0 %v2040
      %v2086 = vpop.f32.mrf.mxu0
      %v2087 = vadd.f32 0.0, %v2086
      %2088 = vmatmul.f32.gmra.mxu0 %v2043
      %v2089 = vpop.f32.mrf.mxu0
      %v2090 = vadd.f32 0.0, %v2089
      %2091 = vmatmul.f32.gmra.mxu0 %v2046
      %v2092 = vpop.f32.mrf.mxu0
      %v2093 = vadd.f32 0.0, %v2092
      %2094 = vdwg.mxu0
      %2095 = vmatpush.msra.mxu0 0.0
      %2096 = vmatpush.msra.mxu0 0.0
      %2097 = vmatpush.msra.mxu0 0.0
      %2098 = vmatpush.msra.mxu0 0.0
      %2099 = vmatpush.msra.mxu0 0.0
      %2100 = vmatpush.msra.mxu0 0.0
      %2101 = vmatpush.msra.mxu0 0.0
      %2102 = vmatpush.msra.mxu0 0.0
      %2103 = vmatpush.msra.mxu0 0.0
      %2104 = vmatpush.msra.mxu0 0.0
      %2105 = vmatpush.msra.mxu0 0.0
      %2106 = vmatpush.msra.mxu0 0.0
      %2107 = vmatpush.msra.mxu0 0.0
      %2108 = vmatpush.msra.mxu0 %v2052
      %2109 = vmatpush.msra.mxu0 %v2012
      %2110 = vmatpush.msra.mxu0 %v2010
      %2111 = vmatmul.f32.gmra.mxu0 %v2025
      %v2112 = vpop.f32.mrf.mxu0
      %v2113 = vadd.f32 0.0, %v2112
      %2114 = vmatmul.f32.gmra.mxu0 %v2028
      %v2115 = vpop.f32.mrf.mxu0
      %v2116 = vadd.f32 0.0, %v2115
      %2117 = vmatmul.f32.gmra.mxu0 %v2031
      %v2118 = vpop.f32.mrf.mxu0
      %v2119 = vadd.f32 0.0, %v2118
      %2120 = vmatmul.f32.gmra.mxu0 %v2034
      %v2121 = vpop.f32.mrf.mxu0
      %v2122 = vadd.f32 0.0, %v2121
      %2123 = vmatmul.f32.gmra.mxu0 %v2037
      %v2124 = vpop.f32.mrf.mxu0
      %v2125 = vadd.f32 0.0, %v2124
      %2126 = vmatmul.f32.gmra.mxu0 %v2040
      %v2127 = vpop.f32.mrf.mxu0
      %v2128 = vadd.f32 0.0, %v2127
      %2129 = vmatmul.f32.gmra.mxu0 %v2043
      %v2130 = vpop.f32.mrf.mxu0
      %v2131 = vadd.f32 0.0, %v2130
      %2132 = vmatmul.f32.gmra.mxu0 %v2046
      %v2133 = vpop.f32.mrf.mxu0
      %v2134 = vadd.f32 0.0, %v2133
      %2135 = vdwg.mxu0
      %v2136 = vadd.f32 %v1967, %v2072
      %v2137 = vadd.f32 %v1968, %v2113
      %v2138 = vadd.f32 %v1969, %v2075
      %v2139 = vadd.f32 %v1970, %v2116
      %v2140 = vadd.f32 %v1971, %v2078
      %v2141 = vadd.f32 %v1972, %v2119
      %v2142 = vadd.f32 %v1973, %v2081
      %v2143 = vadd.f32 %v1974, %v2122
      %v2144 = vadd.f32 %v1975, %v2084
      %v2145 = vadd.f32 %v1976, %v2125
      %v2146 = vadd.f32 %v1977, %v2087
      %v2147 = vadd.f32 %v1978, %v2128
      %v2148 = vadd.f32 %v1979, %v2090
      %v2149 = vadd.f32 %v1980, %v2131
      %v2150 = vadd.f32 %v1981, %v2093
      %v2151 = vadd.f32 %v1982, %v2134
      %v2152 = vld [vmem:[%s6] sm:$0xff]
      %v2153 = vld [vmem:[%s6 + $0x8] sm:$0xff]
      %v2154 = vld [vmem:[%s6 + $0x10] sm:$0xff]
      %v2155 = vld [vmem:[%s6 + $0x18] sm:$0xff]
      %v2156 = vld [vmem:[%s6 + $0x20] sm:$0xff]
      %v2157 = vld [vmem:[%s6 + $0x28] sm:$0xff]
      %v2158 = vld [vmem:[%s6 + $0x30] sm:$0xff]
      %v2159 = vld [vmem:[%s6 + $0x38] sm:$0xff]
      %2161 = vset.pattern.permute.xlu0 0
      %2162 = vperm.xlu0 %2161, %v2152
      %v2163 = vpop.permute.xlu0 %2162
      %2166 = vset.pattern.permute.xlu0 0
      %2167 = vperm.xlu0 %2166, %v2153
      %v2168 = vpop.permute.xlu0 %2167
      %2171 = vset.pattern.permute.xlu0 0
      %2172 = vperm.xlu0 %2171, %v2154
      %v2173 = vpop.permute.xlu0 %2172
      %2176 = vset.pattern.permute.xlu0 0
      %2177 = vperm.xlu0 %2176, %v2155
      %v2178 = vpop.permute.xlu0 %2177
      %2181 = vset.pattern.permute.xlu0 0
      %2182 = vperm.xlu0 %2181, %v2156
      %v2183 = vpop.permute.xlu0 %2182
      %2186 = vset.pattern.permute.xlu0 0
      %2187 = vperm.xlu0 %2186, %v2157
      %v2188 = vpop.permute.xlu0 %2187
      %2191 = vset.pattern.permute.xlu0 0
      %2192 = vperm.xlu0 %2191, %v2158
      %v2193 = vpop.permute.xlu0 %2192
      %2196 = vset.pattern.permute.xlu0 0
      %2197 = vperm.xlu0 %2196, %v2159
      %v2198 = vpop.permute.xlu0 %2197
      %v2200 = vmul.f32 %v2136, %v2163
      %v2201 = vmul.f32 %v2137, %v2163
      %v2202 = vmul.f32 %v2138, %v2168
      %v2203 = vmul.f32 %v2139, %v2168
      %v2204 = vmul.f32 %v2140, %v2173
      %v2205 = vmul.f32 %v2141, %v2173
      %v2206 = vmul.f32 %v2142, %v2178
      %v2207 = vmul.f32 %v2143, %v2178
      %v2208 = vmul.f32 %v2144, %v2183
      %v2209 = vmul.f32 %v2145, %v2183
      %v2210 = vmul.f32 %v2146, %v2188
      %v2211 = vmul.f32 %v2147, %v2188
      %v2212 = vmul.f32 %v2148, %v2193
      %v2213 = vmul.f32 %v2149, %v2193
      %v2214 = vmul.f32 %v2150, %v2198
      %v2215 = vmul.f32 %v2151, %v2198
      %v2216 = vld [vmem:[%s7] sm:$0xff]
      %v2217 = vld [vmem:[%s7 + $0x8] sm:$0xff]
      %v2218 = vld [vmem:[%s7 + $0x10] sm:$0xff]
      %v2219 = vld [vmem:[%s7 + $0x18] sm:$0xff]
      %v2220 = vld [vmem:[%s7 + $0x20] sm:$0xff]
      %v2221 = vld [vmem:[%s7 + $0x28] sm:$0xff]
      %v2222 = vld [vmem:[%s7 + $0x30] sm:$0xff]
      %v2223 = vld [vmem:[%s7 + $0x38] sm:$0xff]
      %2225 = vset.pattern.permute.xlu0 0
      %2226 = vperm.xlu0 %2225, %v2216
      %v2227 = vpop.permute.xlu0 %2226
      %2230 = vset.pattern.permute.xlu0 0
      %2231 = vperm.xlu0 %2230, %v2217
      %v2232 = vpop.permute.xlu0 %2231
      %2235 = vset.pattern.permute.xlu0 0
      %2236 = vperm.xlu0 %2235, %v2218
      %v2237 = vpop.permute.xlu0 %2236
      %2240 = vset.pattern.permute.xlu0 0
      %2241 = vperm.xlu0 %2240, %v2219
      %v2242 = vpop.permute.xlu0 %2241
      %2245 = vset.pattern.permute.xlu0 0
      %2246 = vperm.xlu0 %2245, %v2220
      %v2247 = vpop.permute.xlu0 %2246
      %2250 = vset.pattern.permute.xlu0 0
      %2251 = vperm.xlu0 %2250, %v2221
      %v2252 = vpop.permute.xlu0 %2251
      %2255 = vset.pattern.permute.xlu0 0
      %2256 = vperm.xlu0 %2255, %v2222
      %v2257 = vpop.permute.xlu0 %2256
      %2260 = vset.pattern.permute.xlu0 0
      %2261 = vperm.xlu0 %2260, %v2223
      %v2262 = vpop.permute.xlu0 %2261
      %v2264 = vadd.f32 %v2200, %v2227
      %v2265 = vadd.f32 %v2201, %v2227
      %v2266 = vadd.f32 %v2202, %v2232
      %v2267 = vadd.f32 %v2203, %v2232
      %v2268 = vadd.f32 %v2204, %v2237
      %v2269 = vadd.f32 %v2205, %v2237
      %v2270 = vadd.f32 %v2206, %v2242
      %v2271 = vadd.f32 %v2207, %v2242
      %v2272 = vadd.f32 %v2208, %v2247
      %v2273 = vadd.f32 %v2209, %v2247
      %v2274 = vadd.f32 %v2210, %v2252
      %v2275 = vadd.f32 %v2211, %v2252
      %v2276 = vadd.f32 %v2212, %v2257
      %v2277 = vadd.f32 %v2213, %v2257
      %v2278 = vadd.f32 %v2214, %v2262
      %v2279 = vadd.f32 %v2215, %v2262
      %v2280 = vmul.f32 %v2264, 0.5
      %v2281 = vmul.f32 %v2265, 0.5
      %v2282 = vmul.f32 %v2266, 0.5
      %v2283 = vmul.f32 %v2267, 0.5
      %v2284 = vmul.f32 %v2268, 0.5
      %v2285 = vmul.f32 %v2269, 0.5
      %v2286 = vmul.f32 %v2270, 0.5
      %v2287 = vmul.f32 %v2271, 0.5
      %v2288 = vmul.f32 %v2272, 0.5
      %v2289 = vmul.f32 %v2273, 0.5
      %v2290 = vmul.f32 %v2274, 0.5
      %v2291 = vmul.f32 %v2275, 0.5
      %v2292 = vmul.f32 %v2276, 0.5
      %v2293 = vmul.f32 %v2277, 0.5
      %v2294 = vmul.f32 %v2278, 0.5
      %v2295 = vmul.f32 %v2279, 0.5
      %v2296 = vmul.f32 %v2264, 0.044715
      %v2297 = vmul.f32 %v2265, 0.044715
      %v2298 = vmul.f32 %v2266, 0.044715
      %v2299 = vmul.f32 %v2267, 0.044715
      %v2300 = vmul.f32 %v2268, 0.044715
      %v2301 = vmul.f32 %v2269, 0.044715
      %v2302 = vmul.f32 %v2270, 0.044715
      %v2303 = vmul.f32 %v2271, 0.044715
      %v2304 = vmul.f32 %v2272, 0.044715
      %v2305 = vmul.f32 %v2273, 0.044715
      %v2306 = vmul.f32 %v2274, 0.044715
      %v2307 = vmul.f32 %v2275, 0.044715
      %v2308 = vmul.f32 %v2276, 0.044715
      %v2309 = vmul.f32 %v2277, 0.044715
      %v2310 = vmul.f32 %v2278, 0.044715
      %v2311 = vmul.f32 %v2279, 0.044715
      %v2312 = vmul.f32 %v2296, %v2264
      %v2313 = vmul.f32 %v2297, %v2265
      %v2314 = vmul.f32 %v2298, %v2266
      %v2315 = vmul.f32 %v2299, %v2267
      %v2316 = vmul.f32 %v2300, %v2268
      %v2317 = vmul.f32 %v2301, %v2269
      %v2318 = vmul.f32 %v2302, %v2270
      %v2319 = vmul.f32 %v2303, %v2271
      %v2320 = vmul.f32 %v2304, %v2272
      %v2321 = vmul.f32 %v2305, %v2273
      %v2322 = vmul.f32 %v2306, %v2274
      %v2323 = vmul.f32 %v2307, %v2275
      %v2324 = vmul.f32 %v2308, %v2276
      %v2325 = vmul.f32 %v2309, %v2277
      %v2326 = vmul.f32 %v2310, %v2278
      %v2327 = vmul.f32 %v2311, %v2279
      %v2328 = vmul.f32 %v2312, %v2264
      %v2329 = vmul.f32 %v2313, %v2265
      %v2330 = vmul.f32 %v2314, %v2266
      %v2331 = vmul.f32 %v2315, %v2267
      %v2332 = vmul.f32 %v2316, %v2268
      %v2333 = vmul.f32 %v2317, %v2269
      %v2334 = vmul.f32 %v2318, %v2270
      %v2335 = vmul.f32 %v2319, %v2271
      %v2336 = vmul.f32 %v2320, %v2272
      %v2337 = vmul.f32 %v2321, %v2273
      %v2338 = vmul.f32 %v2322, %v2274
      %v2339 = vmul.f32 %v2323, %v2275
      %v2340 = vmul.f32 %v2324, %v2276
      %v2341 = vmul.f32 %v2325, %v2277
      %v2342 = vmul.f32 %v2326, %v2278
      %v2343 = vmul.f32 %v2327, %v2279
      %v2344 = vadd.f32 %v2264, %v2328
      %v2345 = vadd.f32 %v2265, %v2329
      %v2346 = vadd.f32 %v2266, %v2330
      %v2347 = vadd.f32 %v2267, %v2331
      %v2348 = vadd.f32 %v2268, %v2332
      %v2349 = vadd.f32 %v2269, %v2333
      %v2350 = vadd.f32 %v2270, %v2334
      %v2351 = vadd.f32 %v2271, %v2335
      %v2352 = vadd.f32 %v2272, %v2336
      %v2353 = vadd.f32 %v2273, %v2337
      %v2354 = vadd.f32 %v2274, %v2338
      %v2355 = vadd.f32 %v2275, %v2339
      %v2356 = vadd.f32 %v2276, %v2340
      %v2357 = vadd.f32 %v2277, %v2341
      %v2358 = vadd.f32 %v2278, %v2342
      %v2359 = vadd.f32 %v2279, %v2343
      %v2360 = vmul.f32 %v2344, 0.7978846
      %v2361 = vmul.f32 %v2345, 0.7978846
      %v2362 = vmul.f32 %v2346, 0.7978846
      %v2363 = vmul.f32 %v2347, 0.7978846
      %v2364 = vmul.f32 %v2348, 0.7978846
      %v2365 = vmul.f32 %v2349, 0.7978846
      %v2366 = vmul.f32 %v2350, 0.7978846
      %v2367 = vmul.f32 %v2351, 0.7978846
      %v2368 = vmul.f32 %v2352, 0.7978846
      %v2369 = vmul.f32 %v2353, 0.7978846
      %v2370 = vmul.f32 %v2354, 0.7978846
      %v2371 = vmul.f32 %v2355, 0.7978846
      %v2372 = vmul.f32 %v2356, 0.7978846
      %v2373 = vmul.f32 %v2357, 0.7978846
      %v2374 = vmul.f32 %v2358, 0.7978846
      %v2375 = vmul.f32 %v2359, 0.7978846
      %v2376 = vtanh.pop %v2360
      %v2377 = vtanh.pop %v2361
      %v2378 = vtanh.pop %v2362
      %v2379 = vtanh.pop %v2363
      %v2380 = vtanh.pop %v2364
      %v2381 = vtanh.pop %v2365
      %v2382 = vtanh.pop %v2366
      %v2383 = vtanh.pop %v2367
      %v2384 = vtanh.pop %v2368
      %v2385 = vtanh.pop %v2369
      %v2386 = vtanh.pop %v2370
      %v2387 = vtanh.pop %v2371
      %v2388 = vtanh.pop %v2372
      %v2389 = vtanh.pop %v2373
      %v2390 = vtanh.pop %v2374
      %v2391 = vtanh.pop %v2375
      %v2392 = vadd.f32 %v2376, 1.0
      %v2393 = vadd.f32 %v2377, 1.0
      %v2394 = vadd.f32 %v2378, 1.0
      %v2395 = vadd.f32 %v2379, 1.0
      %v2396 = vadd.f32 %v2380, 1.0
      %v2397 = vadd.f32 %v2381, 1.0
      %v2398 = vadd.f32 %v2382, 1.0
      %v2399 = vadd.f32 %v2383, 1.0
      %v2400 = vadd.f32 %v2384, 1.0
      %v2401 = vadd.f32 %v2385, 1.0
      %v2402 = vadd.f32 %v2386, 1.0
      %v2403 = vadd.f32 %v2387, 1.0
      %v2404 = vadd.f32 %v2388, 1.0
      %v2405 = vadd.f32 %v2389, 1.0
      %v2406 = vadd.f32 %v2390, 1.0
      %v2407 = vadd.f32 %v2391, 1.0
      %v2408 = vmul.f32 %v2280, %v2392
      %v2409 = vmul.f32 %v2281, %v2393
      %v2410 = vmul.f32 %v2282, %v2394
      %v2411 = vmul.f32 %v2283, %v2395
      %v2412 = vmul.f32 %v2284, %v2396
      %v2413 = vmul.f32 %v2285, %v2397
      %v2414 = vmul.f32 %v2286, %v2398
      %v2415 = vmul.f32 %v2287, %v2399
      %v2416 = vmul.f32 %v2288, %v2400
      %v2417 = vmul.f32 %v2289, %v2401
      %v2418 = vmul.f32 %v2290, %v2402
      %v2419 = vmul.f32 %v2291, %v2403
      %v2420 = vmul.f32 %v2292, %v2404
      %v2421 = vmul.f32 %v2293, %v2405
      %v2422 = vmul.f32 %v2294, %v2406
      %v2423 = vmul.f32 %v2295, %v2407
      %2424 = vrot.lane.b32.xlu0 %v2408, 34
      %v2425 = vpop.permute.xlu0 %2424
      %2426 = vrot.lane.b32.xlu0 %v2410, 34
      %v2427 = vpop.permute.xlu0 %2426
      %2428 = vrot.lane.b32.xlu0 %v2412, 34
      %v2429 = vpop.permute.xlu0 %2428
      %2430 = vrot.lane.b32.xlu0 %v2414, 34
      %v2431 = vpop.permute.xlu0 %2430
      %2432 = vrot.lane.b32.xlu0 %v2416, 34
      %v2433 = vpop.permute.xlu0 %2432
      %2434 = vrot.lane.b32.xlu0 %v2418, 34
      %v2435 = vpop.permute.xlu0 %2434
      %2436 = vrot.lane.b32.xlu0 %v2420, 34
      %v2437 = vpop.permute.xlu0 %2436
      %2438 = vrot.lane.b32.xlu0 %v2422, 34
      %v2439 = vpop.permute.xlu0 %2438
      %2440 = vrot.lane.b32.xlu0 %v2409, 34
      %v2441 = vpop.permute.xlu0 %2440
      %2442 = vrot.lane.b32.xlu0 %v2411, 34
      %v2443 = vpop.permute.xlu0 %2442
      %2444 = vrot.lane.b32.xlu0 %v2413, 34
      %v2445 = vpop.permute.xlu0 %2444
      %2446 = vrot.lane.b32.xlu0 %v2415, 34
      %v2447 = vpop.permute.xlu0 %2446
      %2448 = vrot.lane.b32.xlu0 %v2417, 34
      %v2449 = vpop.permute.xlu0 %2448
      %2450 = vrot.lane.b32.xlu0 %v2419, 34
      %v2451 = vpop.permute.xlu0 %2450
      %2452 = vrot.lane.b32.xlu0 %v2421, 34
      %v2453 = vpop.permute.xlu0 %2452
      %2454 = vrot.lane.b32.xlu0 %v2423, 34
      %v2455 = vpop.permute.xlu0 %2454
      %vm2456 = vcmp.lt.s32.totalorder %v706, 34
      %v2457 = vsel %vm2456, %v2425, %v2441
      %v2458 = vsel %vm2456, %v2427, %v2443
      %v2459 = vsel %vm2456, %v2429, %v2445
      %v2460 = vsel %vm2456, %v2431, %v2447
      %v2461 = vsel %vm2456, %v2433, %v2449
      %v2462 = vsel %vm2456, %v2435, %v2451
      %v2463 = vsel %vm2456, %v2437, %v2453
      %v2464 = vsel %vm2456, %v2439, %v2455
      %v2465 = vsel %vm2456, %v2441, %v2425
      %v2466 = vsel %vm2456, %v2443, %v2427
      %v2467 = vsel %vm2456, %v2445, %v2429
      %v2468 = vsel %vm2456, %v2447, %v2431
      %v2469 = vsel %vm2456, %v2449, %v2433
      %v2470 = vsel %vm2456, %v2451, %v2435
      %v2471 = vsel %vm2456, %v2453, %v2437
      %v2472 = vsel %vm2456, %v2455, %v2439
      %v2473 = vld [vmem:[%s3] sm:$0x3]
      %v2475 = vperm.slane %v2473, 0
      %v2476 = vperm.slane %v2473, 1
      %v2479 = vmul.f32 %v2465, %v2475
      %v2480 = vmul.f32 %v2457, %v2476
      %v2481 = vmul.f32 %v2466, %v2475
      %v2482 = vmul.f32 %v2458, %v2476
      %v2483 = vmul.f32 %v2467, %v2475
      %v2484 = vmul.f32 %v2459, %v2476
      %v2485 = vmul.f32 %v2468, %v2475
      %v2486 = vmul.f32 %v2460, %v2476
      %v2487 = vmul.f32 %v2469, %v2475
      %v2488 = vmul.f32 %v2461, %v2476
      %v2489 = vmul.f32 %v2470, %v2475
      %v2490 = vmul.f32 %v2462, %v2476
      %v2491 = vmul.f32 %v2471, %v2475
      %v2492 = vmul.f32 %v2463, %v2476
      %v2493 = vmul.f32 %v2472, %v2475
      %v2494 = vmul.f32 %v2464, %v2476
      %v2495 = vld [vmem:[%s8] sm:$0xff]
      %v2496 = vld [vmem:[%s8 + $0x8] sm:$0xff]
      %v2497 = vld [vmem:[%s8 + $0x10] sm:$0xff]
      %v2498 = vld [vmem:[%s8 + $0x18] sm:$0xff]
      %v2499 = vld [vmem:[%s8 + $0x20] sm:$0xff]
      %v2500 = vld [vmem:[%s8 + $0x28] sm:$0xff]
      %v2501 = vld [vmem:[%s8 + $0x30] sm:$0xff]
      %v2502 = vld [vmem:[%s8 + $0x38] sm:$0xff]
      %2503 = vrot.lane.b32.xlu0 %v2408, 32
      %v2504 = vpop.permute.xlu0 %2503
      %2505 = vrot.lane.b32.xlu0 %v2410, 32
      %v2506 = vpop.permute.xlu0 %2505
      %2507 = vrot.lane.b32.xlu0 %v2412, 32
      %v2508 = vpop.permute.xlu0 %2507
      %2509 = vrot.lane.b32.xlu0 %v2414, 32
      %v2510 = vpop.permute.xlu0 %2509
      %2511 = vrot.lane.b32.xlu0 %v2416, 32
      %v2512 = vpop.permute.xlu0 %2511
      %2513 = vrot.lane.b32.xlu0 %v2418, 32
      %v2514 = vpop.permute.xlu0 %2513
      %2515 = vrot.lane.b32.xlu0 %v2420, 32
      %v2516 = vpop.permute.xlu0 %2515
      %2517 = vrot.lane.b32.xlu0 %v2422, 32
      %v2518 = vpop.permute.xlu0 %2517
      %2519 = vrot.lane.b32.xlu0 %v2409, 32
      %v2520 = vpop.permute.xlu0 %2519
      %2521 = vrot.lane.b32.xlu0 %v2411, 32
      %v2522 = vpop.permute.xlu0 %2521
      %2523 = vrot.lane.b32.xlu0 %v2413, 32
      %v2524 = vpop.permute.xlu0 %2523
      %2525 = vrot.lane.b32.xlu0 %v2415, 32
      %v2526 = vpop.permute.xlu0 %2525
      %2527 = vrot.lane.b32.xlu0 %v2417, 32
      %v2528 = vpop.permute.xlu0 %2527
      %2529 = vrot.lane.b32.xlu0 %v2419, 32
      %v2530 = vpop.permute.xlu0 %2529
      %2531 = vrot.lane.b32.xlu0 %v2421, 32
      %v2532 = vpop.permute.xlu0 %2531
      %2533 = vrot.lane.b32.xlu0 %v2423, 32
      %v2534 = vpop.permute.xlu0 %2533
      %vm2535 = vcmp.lt.s32.totalorder %v706, 32
      %v2536 = vsel %vm2535, %v2504, %v2520
      %v2537 = vsel %vm2535, %v2506, %v2522
      %v2538 = vsel %vm2535, %v2508, %v2524
      %v2539 = vsel %vm2535, %v2510, %v2526
      %v2540 = vsel %vm2535, %v2512, %v2528
      %v2541 = vsel %vm2535, %v2514, %v2530
      %v2542 = vsel %vm2535, %v2516, %v2532
      %v2543 = vsel %vm2535, %v2518, %v2534
      %v2544 = vsel %vm2535, %v2520, %v2504
      %v2545 = vsel %vm2535, %v2522, %v2506
      %v2546 = vsel %vm2535, %v2524, %v2508
      %v2547 = vsel %vm2535, %v2526, %v2510
      %v2548 = vsel %vm2535, %v2528, %v2512
      %v2549 = vsel %vm2535, %v2530, %v2514
      %v2550 = vsel %vm2535, %v2532, %v2516
      %v2551 = vsel %vm2535, %v2534, %v2518
      %s2552 = scalar_lea.vmem %s3, 2
      %v2553 = vld [vmem:[%s2552] sm:$0x3]
      %v2555 = vperm.slane %v2553, 0
      %v2556 = vperm.slane %v2553, 1
      %v2559 = vmul.f32 %v2544, %v2555
      %v2560 = vmul.f32 %v2536, %v2556
      %v2561 = vmul.f32 %v2545, %v2555
      %v2562 = vmul.f32 %v2537, %v2556
      %v2563 = vmul.f32 %v2546, %v2555
      %v2564 = vmul.f32 %v2538, %v2556
      %v2565 = vmul.f32 %v2547, %v2555
      %v2566 = vmul.f32 %v2539, %v2556
      %v2567 = vmul.f32 %v2548, %v2555
      %v2568 = vmul.f32 %v2540, %v2556
      %v2569 = vmul.f32 %v2549, %v2555
      %v2570 = vmul.f32 %v2541, %v2556
      %v2571 = vmul.f32 %v2550, %v2555
      %v2572 = vmul.f32 %v2542, %v2556
      %v2573 = vmul.f32 %v2551, %v2555
      %v2574 = vmul.f32 %v2543, %v2556
      %s2575 = scalar_lea.vmem %s8, 64
      %v2576 = vld [vmem:[%s2575] sm:$0xff]
      %v2577 = vld [vmem:[%s2575 + $0x8] sm:$0xff]
      %v2578 = vld [vmem:[%s2575 + $0x10] sm:$0xff]
      %v2579 = vld [vmem:[%s2575 + $0x18] sm:$0xff]
      %v2580 = vld [vmem:[%s2575 + $0x20] sm:$0xff]
      %v2581 = vld [vmem:[%s2575 + $0x28] sm:$0xff]
      %v2582 = vld [vmem:[%s2575 + $0x30] sm:$0xff]
      %v2583 = vld [vmem:[%s2575 + $0x38] sm:$0xff]
      %vm2584 = vcmask 523264
      %v2586 = vsel %vm2584, %v2576, 0
      %v2589 = vsel %vm2584, %v2577, 0
      %v2592 = vsel %vm2584, %v2578, 0
      %v2595 = vsel %vm2584, %v2579, 0
      %v2598 = vsel %vm2584, %v2580, 0
      %v2601 = vsel %vm2584, %v2581, 0
      %v2604 = vsel %vm2584, %v2582, 0
      %v2607 = vsel %vm2584, %v2583, 0
      %2609 = vmatpush.msra.mxu0 0.0
      %2610 = vmatpush.msra.mxu0 0.0
      %2611 = vmatpush.msra.mxu0 0.0
      %2612 = vmatpush.msra.mxu0 0.0
      %2613 = vmatpush.msra.mxu0 0.0
      %2614 = vmatpush.msra.mxu0 0.0
      %2615 = vmatpush.msra.mxu0 0.0
      %2616 = vmatpush.msra.mxu0 0.0
      %2617 = vmatpush.msra.mxu0 %v2573
      %2618 = vmatpush.msra.mxu0 %v2571
      %2619 = vmatpush.msra.mxu0 %v2569
      %2620 = vmatpush.msra.mxu0 %v2567
      %2621 = vmatpush.msra.mxu0 %v2565
      %2622 = vmatpush.msra.mxu0 %v2563
      %2623 = vmatpush.msra.mxu0 %v2561
      %2624 = vmatpush.msra.mxu0 %v2559
      %2625 = vmatmul.f32.gmra.mxu0 %v2586
      %v2626 = vpop.f32.mrf.mxu0
      %v2627 = vadd.f32 0.0, %v2626
      %2628 = vmatmul.f32.gmra.mxu0 %v2589
      %v2629 = vpop.f32.mrf.mxu0
      %v2630 = vadd.f32 0.0, %v2629
      %2631 = vmatmul.f32.gmra.mxu0 %v2592
      %v2632 = vpop.f32.mrf.mxu0
      %v2633 = vadd.f32 0.0, %v2632
      %2634 = vmatmul.f32.gmra.mxu0 %v2595
      %v2635 = vpop.f32.mrf.mxu0
      %v2636 = vadd.f32 0.0, %v2635
      %2637 = vmatmul.f32.gmra.mxu0 %v2598
      %v2638 = vpop.f32.mrf.mxu0
      %v2639 = vadd.f32 0.0, %v2638
      %2640 = vmatmul.f32.gmra.mxu0 %v2601
      %v2641 = vpop.f32.mrf.mxu0
      %v2642 = vadd.f32 0.0, %v2641
      %2643 = vmatmul.f32.gmra.mxu0 %v2604
      %v2644 = vpop.f32.mrf.mxu0
      %v2645 = vadd.f32 0.0, %v2644
      %2646 = vmatmul.f32.gmra.mxu0 %v2607
      %v2647 = vpop.f32.mrf.mxu0
      %v2648 = vadd.f32 0.0, %v2647
      %2649 = vdwg.mxu0
      %2650 = vmatpush.msra.mxu0 0.0
      %2651 = vmatpush.msra.mxu0 0.0
      %2652 = vmatpush.msra.mxu0 0.0
      %2653 = vmatpush.msra.mxu0 0.0
      %2654 = vmatpush.msra.mxu0 0.0
      %2655 = vmatpush.msra.mxu0 0.0
      %2656 = vmatpush.msra.mxu0 0.0
      %2657 = vmatpush.msra.mxu0 0.0
      %2658 = vmatpush.msra.mxu0 %v2574
      %2659 = vmatpush.msra.mxu0 %v2572
      %2660 = vmatpush.msra.mxu0 %v2570
      %2661 = vmatpush.msra.mxu0 %v2568
      %2662 = vmatpush.msra.mxu0 %v2566
      %2663 = vmatpush.msra.mxu0 %v2564
      %2664 = vmatpush.msra.mxu0 %v2562
      %2665 = vmatpush.msra.mxu0 %v2560
      %2666 = vmatmul.f32.gmra.mxu0 %v2586
      %v2667 = vpop.f32.mrf.mxu0
      %v2668 = vadd.f32 0.0, %v2667
      %2669 = vmatmul.f32.gmra.mxu0 %v2589
      %v2670 = vpop.f32.mrf.mxu0
      %v2671 = vadd.f32 0.0, %v2670
      %2672 = vmatmul.f32.gmra.mxu0 %v2592
      %v2673 = vpop.f32.mrf.mxu0
      %v2674 = vadd.f32 0.0, %v2673
      %2675 = vmatmul.f32.gmra.mxu0 %v2595
      %v2676 = vpop.f32.mrf.mxu0
      %v2677 = vadd.f32 0.0, %v2676
      %2678 = vmatmul.f32.gmra.mxu0 %v2598
      %v2679 = vpop.f32.mrf.mxu0
      %v2680 = vadd.f32 0.0, %v2679
      %2681 = vmatmul.f32.gmra.mxu0 %v2601
      %v2682 = vpop.f32.mrf.mxu0
      %v2683 = vadd.f32 0.0, %v2682
      %2684 = vmatmul.f32.gmra.mxu0 %v2604
      %v2685 = vpop.f32.mrf.mxu0
      %v2686 = vadd.f32 0.0, %v2685
      %2687 = vmatmul.f32.gmra.mxu0 %v2607
      %v2688 = vpop.f32.mrf.mxu0
      %v2689 = vadd.f32 0.0, %v2688
      %2690 = vdwg.mxu0
      %v2692 = vsel %vm2584, %v2495, 0
      %v2695 = vsel %vm2584, %v2496, 0
      %v2698 = vsel %vm2584, %v2497, 0
      %v2701 = vsel %vm2584, %v2498, 0
      %v2704 = vsel %vm2584, %v2499, 0
      %v2707 = vsel %vm2584, %v2500, 0
      %v2710 = vsel %vm2584, %v2501, 0
      %v2713 = vsel %vm2584, %v2502, 0
      %2715 = vmatpush.msra.mxu0 0.0
      %2716 = vmatpush.msra.mxu0 0.0
      %2717 = vmatpush.msra.mxu0 0.0
      %2718 = vmatpush.msra.mxu0 0.0
      %2719 = vmatpush.msra.mxu0 0.0
      %2720 = vmatpush.msra.mxu0 0.0
      %2721 = vmatpush.msra.mxu0 0.0
      %2722 = vmatpush.msra.mxu0 0.0
      %2723 = vmatpush.msra.mxu0 %v2493
      %2724 = vmatpush.msra.mxu0 %v2491
      %2725 = vmatpush.msra.mxu0 %v2489
      %2726 = vmatpush.msra.mxu0 %v2487
      %2727 = vmatpush.msra.mxu0 %v2485
      %2728 = vmatpush.msra.mxu0 %v2483
      %2729 = vmatpush.msra.mxu0 %v2481
      %2730 = vmatpush.msra.mxu0 %v2479
      %2731 = vmatmul.f32.gmra.mxu0 %v2692
      %v2732 = vpop.f32.mrf.mxu0
      %v2733 = vadd.f32 %v2627, %v2732
      %2734 = vmatmul.f32.gmra.mxu0 %v2695
      %v2735 = vpop.f32.mrf.mxu0
      %v2736 = vadd.f32 %v2630, %v2735
      %2737 = vmatmul.f32.gmra.mxu0 %v2698
      %v2738 = vpop.f32.mrf.mxu0
      %v2739 = vadd.f32 %v2633, %v2738
      %2740 = vmatmul.f32.gmra.mxu0 %v2701
      %v2741 = vpop.f32.mrf.mxu0
      %v2742 = vadd.f32 %v2636, %v2741
      %2743 = vmatmul.f32.gmra.mxu0 %v2704
      %v2744 = vpop.f32.mrf.mxu0
      %v2745 = vadd.f32 %v2639, %v2744
      %2746 = vmatmul.f32.gmra.mxu0 %v2707
      %v2747 = vpop.f32.mrf.mxu0
      %v2748 = vadd.f32 %v2642, %v2747
      %2749 = vmatmul.f32.gmra.mxu0 %v2710
      %v2750 = vpop.f32.mrf.mxu0
      %v2751 = vadd.f32 %v2645, %v2750
      %2752 = vmatmul.f32.gmra.mxu0 %v2713
      %v2753 = vpop.f32.mrf.mxu0
      %v2754 = vadd.f32 %v2648, %v2753
      %2755 = vdwg.mxu0
      %2756 = vmatpush.msra.mxu0 0.0
      %2757 = vmatpush.msra.mxu0 0.0
      %2758 = vmatpush.msra.mxu0 0.0
      %2759 = vmatpush.msra.mxu0 0.0
      %2760 = vmatpush.msra.mxu0 0.0
      %2761 = vmatpush.msra.mxu0 0.0
      %2762 = vmatpush.msra.mxu0 0.0
      %2763 = vmatpush.msra.mxu0 0.0
      %2764 = vmatpush.msra.mxu0 %v2494
      %2765 = vmatpush.msra.mxu0 %v2492
      %2766 = vmatpush.msra.mxu0 %v2490
      %2767 = vmatpush.msra.mxu0 %v2488
      %2768 = vmatpush.msra.mxu0 %v2486
      %2769 = vmatpush.msra.mxu0 %v2484
      %2770 = vmatpush.msra.mxu0 %v2482
      %2771 = vmatpush.msra.mxu0 %v2480
      %2772 = vmatmul.f32.gmra.mxu0 %v2692
      %v2773 = vpop.f32.mrf.mxu0
      %v2774 = vadd.f32 %v2668, %v2773
      %2775 = vmatmul.f32.gmra.mxu0 %v2695
      %v2776 = vpop.f32.mrf.mxu0
      %v2777 = vadd.f32 %v2671, %v2776
      %2778 = vmatmul.f32.gmra.mxu0 %v2698
      %v2779 = vpop.f32.mrf.mxu0
      %v2780 = vadd.f32 %v2674, %v2779
      %2781 = vmatmul.f32.gmra.mxu0 %v2701
      %v2782 = vpop.f32.mrf.mxu0
      %v2783 = vadd.f32 %v2677, %v2782
      %2784 = vmatmul.f32.gmra.mxu0 %v2704
      %v2785 = vpop.f32.mrf.mxu0
      %v2786 = vadd.f32 %v2680, %v2785
      %2787 = vmatmul.f32.gmra.mxu0 %v2707
      %v2788 = vpop.f32.mrf.mxu0
      %v2789 = vadd.f32 %v2683, %v2788
      %2790 = vmatmul.f32.gmra.mxu0 %v2710
      %v2791 = vpop.f32.mrf.mxu0
      %v2792 = vadd.f32 %v2686, %v2791
      %2793 = vmatmul.f32.gmra.mxu0 %v2713
      %v2794 = vpop.f32.mrf.mxu0
      %v2795 = vadd.f32 %v2689, %v2794
      %2796 = vdwg.mxu0
      %2797 = vrot.lane.b32.xlu0 %v2408, 30
      %v2798 = vpop.permute.xlu0 %2797
      %2799 = vrot.lane.b32.xlu0 %v2410, 30
      %v2800 = vpop.permute.xlu0 %2799
      %2801 = vrot.lane.b32.xlu0 %v2412, 30
      %v2802 = vpop.permute.xlu0 %2801
      %2803 = vrot.lane.b32.xlu0 %v2414, 30
      %v2804 = vpop.permute.xlu0 %2803
      %2805 = vrot.lane.b32.xlu0 %v2416, 30
      %v2806 = vpop.permute.xlu0 %2805
      %2807 = vrot.lane.b32.xlu0 %v2418, 30
      %v2808 = vpop.permute.xlu0 %2807
      %2809 = vrot.lane.b32.xlu0 %v2420, 30
      %v2810 = vpop.permute.xlu0 %2809
      %2811 = vrot.lane.b32.xlu0 %v2422, 30
      %v2812 = vpop.permute.xlu0 %2811
      %2813 = vrot.lane.b32.xlu0 %v2409, 30
      %v2814 = vpop.permute.xlu0 %2813
      %2815 = vrot.lane.b32.xlu0 %v2411, 30
      %v2816 = vpop.permute.xlu0 %2815
      %2817 = vrot.lane.b32.xlu0 %v2413, 30
      %v2818 = vpop.permute.xlu0 %2817
      %2819 = vrot.lane.b32.xlu0 %v2415, 30
      %v2820 = vpop.permute.xlu0 %2819
      %2821 = vrot.lane.b32.xlu0 %v2417, 30
      %v2822 = vpop.permute.xlu0 %2821
      %2823 = vrot.lane.b32.xlu0 %v2419, 30
      %v2824 = vpop.permute.xlu0 %2823
      %2825 = vrot.lane.b32.xlu0 %v2421, 30
      %v2826 = vpop.permute.xlu0 %2825
      %2827 = vrot.lane.b32.xlu0 %v2423, 30
      %v2828 = vpop.permute.xlu0 %2827
      %vm2829 = vcmp.lt.s32.totalorder %v706, 30
      %v2830 = vsel %vm2829, %v2798, %v2814
      %v2831 = vsel %vm2829, %v2800, %v2816
      %v2832 = vsel %vm2829, %v2802, %v2818
      %v2833 = vsel %vm2829, %v2804, %v2820
      %v2834 = vsel %vm2829, %v2806, %v2822
      %v2835 = vsel %vm2829, %v2808, %v2824
      %v2836 = vsel %vm2829, %v2810, %v2826
      %v2837 = vsel %vm2829, %v2812, %v2828
      %v2838 = vsel %vm2829, %v2814, %v2798
      %v2839 = vsel %vm2829, %v2816, %v2800
      %v2840 = vsel %vm2829, %v2818, %v2802
      %v2841 = vsel %vm2829, %v2820, %v2804
      %v2842 = vsel %vm2829, %v2822, %v2806
      %v2843 = vsel %vm2829, %v2824, %v2808
      %v2844 = vsel %vm2829, %v2826, %v2810
      %v2845 = vsel %vm2829, %v2828, %v2812
      %s2846 = scalar_lea.vmem %s3, 4
      %v2847 = vld [vmem:[%s2846] sm:$0x3]
      %v2849 = vperm.slane %v2847, 0
      %v2850 = vperm.slane %v2847, 1
      %v2853 = vmul.f32 %v2838, %v2849
      %v2854 = vmul.f32 %v2830, %v2850
      %v2855 = vmul.f32 %v2839, %v2849
      %v2856 = vmul.f32 %v2831, %v2850
      %v2857 = vmul.f32 %v2840, %v2849
      %v2858 = vmul.f32 %v2832, %v2850
      %v2859 = vmul.f32 %v2841, %v2849
      %v2860 = vmul.f32 %v2833, %v2850
      %v2861 = vmul.f32 %v2842, %v2849
      %v2862 = vmul.f32 %v2834, %v2850
      %v2863 = vmul.f32 %v2843, %v2849
      %v2864 = vmul.f32 %v2835, %v2850
      %v2865 = vmul.f32 %v2844, %v2849
      %v2866 = vmul.f32 %v2836, %v2850
      %v2867 = vmul.f32 %v2845, %v2849
      %v2868 = vmul.f32 %v2837, %v2850
      %s2869 = scalar_lea.vmem %s8, 128
      %v2870 = vld [vmem:[%s2869] sm:$0xff]
      %v2871 = vld [vmem:[%s2869 + $0x8] sm:$0xff]
      %v2872 = vld [vmem:[%s2869 + $0x10] sm:$0xff]
      %v2873 = vld [vmem:[%s2869 + $0x18] sm:$0xff]
      %v2874 = vld [vmem:[%s2869 + $0x20] sm:$0xff]
      %v2875 = vld [vmem:[%s2869 + $0x28] sm:$0xff]
      %v2876 = vld [vmem:[%s2869 + $0x30] sm:$0xff]
      %v2877 = vld [vmem:[%s2869 + $0x38] sm:$0xff]
      %v2879 = vsel %vm2584, %v2870, 0
      %v2882 = vsel %vm2584, %v2871, 0
      %v2885 = vsel %vm2584, %v2872, 0
      %v2888 = vsel %vm2584, %v2873, 0
      %v2891 = vsel %vm2584, %v2874, 0
      %v2894 = vsel %vm2584, %v2875, 0
      %v2897 = vsel %vm2584, %v2876, 0
      %v2900 = vsel %vm2584, %v2877, 0
      %2902 = vmatpush.msra.mxu0 0.0
      %2903 = vmatpush.msra.mxu0 0.0
      %2904 = vmatpush.msra.mxu0 0.0
      %2905 = vmatpush.msra.mxu0 0.0
      %2906 = vmatpush.msra.mxu0 0.0
      %2907 = vmatpush.msra.mxu0 0.0
      %2908 = vmatpush.msra.mxu0 0.0
      %2909 = vmatpush.msra.mxu0 0.0
      %2910 = vmatpush.msra.mxu0 %v2867
      %2911 = vmatpush.msra.mxu0 %v2865
      %2912 = vmatpush.msra.mxu0 %v2863
      %2913 = vmatpush.msra.mxu0 %v2861
      %2914 = vmatpush.msra.mxu0 %v2859
      %2915 = vmatpush.msra.mxu0 %v2857
      %2916 = vmatpush.msra.mxu0 %v2855
      %2917 = vmatpush.msra.mxu0 %v2853
      %2918 = vmatmul.f32.gmra.mxu0 %v2879
      %v2919 = vpop.f32.mrf.mxu0
      %v2920 = vadd.f32 0.0, %v2919
      %2921 = vmatmul.f32.gmra.mxu0 %v2882
      %v2922 = vpop.f32.mrf.mxu0
      %v2923 = vadd.f32 0.0, %v2922
      %2924 = vmatmul.f32.gmra.mxu0 %v2885
      %v2925 = vpop.f32.mrf.mxu0
      %v2926 = vadd.f32 0.0, %v2925
      %2927 = vmatmul.f32.gmra.mxu0 %v2888
      %v2928 = vpop.f32.mrf.mxu0
      %v2929 = vadd.f32 0.0, %v2928
      %2930 = vmatmul.f32.gmra.mxu0 %v2891
      %v2931 = vpop.f32.mrf.mxu0
      %v2932 = vadd.f32 0.0, %v2931
      %2933 = vmatmul.f32.gmra.mxu0 %v2894
      %v2934 = vpop.f32.mrf.mxu0
      %v2935 = vadd.f32 0.0, %v2934
      %2936 = vmatmul.f32.gmra.mxu0 %v2897
      %v2937 = vpop.f32.mrf.mxu0
      %v2938 = vadd.f32 0.0, %v2937
      %2939 = vmatmul.f32.gmra.mxu0 %v2900
      %v2940 = vpop.f32.mrf.mxu0
      %v2941 = vadd.f32 0.0, %v2940
      %2942 = vdwg.mxu0
      %2943 = vmatpush.msra.mxu0 0.0
      %2944 = vmatpush.msra.mxu0 0.0
      %2945 = vmatpush.msra.mxu0 0.0
      %2946 = vmatpush.msra.mxu0 0.0
      %2947 = vmatpush.msra.mxu0 0.0
      %2948 = vmatpush.msra.mxu0 0.0
      %2949 = vmatpush.msra.mxu0 0.0
      %2950 = vmatpush.msra.mxu0 0.0
      %2951 = vmatpush.msra.mxu0 %v2868
      %2952 = vmatpush.msra.mxu0 %v2866
      %2953 = vmatpush.msra.mxu0 %v2864
      %2954 = vmatpush.msra.mxu0 %v2862
      %2955 = vmatpush.msra.mxu0 %v2860
      %2956 = vmatpush.msra.mxu0 %v2858
      %2957 = vmatpush.msra.mxu0 %v2856
      %2958 = vmatpush.msra.mxu0 %v2854
      %2959 = vmatmul.f32.gmra.mxu0 %v2879
      %v2960 = vpop.f32.mrf.mxu0
      %v2961 = vadd.f32 0.0, %v2960
      %2962 = vmatmul.f32.gmra.mxu0 %v2882
      %v2963 = vpop.f32.mrf.mxu0
      %v2964 = vadd.f32 0.0, %v2963
      %2965 = vmatmul.f32.gmra.mxu0 %v2885
      %v2966 = vpop.f32.mrf.mxu0
      %v2967 = vadd.f32 0.0, %v2966
      %2968 = vmatmul.f32.gmra.mxu0 %v2888
      %v2969 = vpop.f32.mrf.mxu0
      %v2970 = vadd.f32 0.0, %v2969
      %2971 = vmatmul.f32.gmra.mxu0 %v2891
      %v2972 = vpop.f32.mrf.mxu0
      %v2973 = vadd.f32 0.0, %v2972
      %2974 = vmatmul.f32.gmra.mxu0 %v2894
      %v2975 = vpop.f32.mrf.mxu0
      %v2976 = vadd.f32 0.0, %v2975
      %2977 = vmatmul.f32.gmra.mxu0 %v2897
      %v2978 = vpop.f32.mrf.mxu0
      %v2979 = vadd.f32 0.0, %v2978
      %2980 = vmatmul.f32.gmra.mxu0 %v2900
      %v2981 = vpop.f32.mrf.mxu0
      %v2982 = vadd.f32 0.0, %v2981
      %2983 = vdwg.mxu0
      %v2984 = vadd.f32 %v2733, %v2920
      %v2985 = vadd.f32 %v2774, %v2961
      %v2986 = vadd.f32 %v2736, %v2923
      %v2987 = vadd.f32 %v2777, %v2964
      %v2988 = vadd.f32 %v2739, %v2926
      %v2989 = vadd.f32 %v2780, %v2967
      %v2990 = vadd.f32 %v2742, %v2929
      %v2991 = vadd.f32 %v2783, %v2970
      %v2992 = vadd.f32 %v2745, %v2932
      %v2993 = vadd.f32 %v2786, %v2973
      %v2994 = vadd.f32 %v2748, %v2935
      %v2995 = vadd.f32 %v2789, %v2976
      %v2996 = vadd.f32 %v2751, %v2938
      %v2997 = vadd.f32 %v2792, %v2979
      %v2998 = vadd.f32 %v2754, %v2941
      %v2999 = vadd.f32 %v2795, %v2982
      %3000 = vrot.lane.b32.xlu0 %v2408, 2
      %v3001 = vpop.permute.xlu0 %3000
      %3002 = vrot.lane.b32.xlu0 %v2410, 2
      %v3003 = vpop.permute.xlu0 %3002
      %3004 = vrot.lane.b32.xlu0 %v2412, 2
      %v3005 = vpop.permute.xlu0 %3004
      %3006 = vrot.lane.b32.xlu0 %v2414, 2
      %v3007 = vpop.permute.xlu0 %3006
      %3008 = vrot.lane.b32.xlu0 %v2416, 2
      %v3009 = vpop.permute.xlu0 %3008
      %3010 = vrot.lane.b32.xlu0 %v2418, 2
      %v3011 = vpop.permute.xlu0 %3010
      %3012 = vrot.lane.b32.xlu0 %v2420, 2
      %v3013 = vpop.permute.xlu0 %3012
      %3014 = vrot.lane.b32.xlu0 %v2422, 2
      %v3015 = vpop.permute.xlu0 %3014
      %3016 = vrot.lane.b32.xlu0 %v2409, 2
      %v3017 = vpop.permute.xlu0 %3016
      %3018 = vrot.lane.b32.xlu0 %v2411, 2
      %v3019 = vpop.permute.xlu0 %3018
      %3020 = vrot.lane.b32.xlu0 %v2413, 2
      %v3021 = vpop.permute.xlu0 %3020
      %3022 = vrot.lane.b32.xlu0 %v2415, 2
      %v3023 = vpop.permute.xlu0 %3022
      %3024 = vrot.lane.b32.xlu0 %v2417, 2
      %v3025 = vpop.permute.xlu0 %3024
      %3026 = vrot.lane.b32.xlu0 %v2419, 2
      %v3027 = vpop.permute.xlu0 %3026
      %3028 = vrot.lane.b32.xlu0 %v2421, 2
      %v3029 = vpop.permute.xlu0 %3028
      %3030 = vrot.lane.b32.xlu0 %v2423, 2
      %v3031 = vpop.permute.xlu0 %3030
      %vm3032 = vcmp.lt.s32.totalorder %v706, 2
      %v3033 = vsel %vm3032, %v3001, %v3017
      %v3034 = vsel %vm3032, %v3003, %v3019
      %v3035 = vsel %vm3032, %v3005, %v3021
      %v3036 = vsel %vm3032, %v3007, %v3023
      %v3037 = vsel %vm3032, %v3009, %v3025
      %v3038 = vsel %vm3032, %v3011, %v3027
      %v3039 = vsel %vm3032, %v3013, %v3029
      %v3040 = vsel %vm3032, %v3015, %v3031
      %v3041 = vsel %vm3032, %v3017, %v3001
      %v3042 = vsel %vm3032, %v3019, %v3003
      %v3043 = vsel %vm3032, %v3021, %v3005
      %v3044 = vsel %vm3032, %v3023, %v3007
      %v3045 = vsel %vm3032, %v3025, %v3009
      %v3046 = vsel %vm3032, %v3027, %v3011
      %v3047 = vsel %vm3032, %v3029, %v3013
      %v3048 = vsel %vm3032, %v3031, %v3015
      %s3049 = scalar_lea.vmem %s3, 6
      %v3050 = vld [vmem:[%s3049] sm:$0x3]
      %v3052 = vperm.slane %v3050, 0
      %v3053 = vperm.slane %v3050, 1
      %v3056 = vmul.f32 %v3041, %v3052
      %v3057 = vmul.f32 %v3033, %v3053
      %v3058 = vmul.f32 %v3042, %v3052
      %v3059 = vmul.f32 %v3034, %v3053
      %v3060 = vmul.f32 %v3043, %v3052
      %v3061 = vmul.f32 %v3035, %v3053
      %v3062 = vmul.f32 %v3044, %v3052
      %v3063 = vmul.f32 %v3036, %v3053
      %v3064 = vmul.f32 %v3045, %v3052
      %v3065 = vmul.f32 %v3037, %v3053
      %v3066 = vmul.f32 %v3046, %v3052
      %v3067 = vmul.f32 %v3038, %v3053
      %v3068 = vmul.f32 %v3047, %v3052
      %v3069 = vmul.f32 %v3039, %v3053
      %v3070 = vmul.f32 %v3048, %v3052
      %v3071 = vmul.f32 %v3040, %v3053
      %s3072 = scalar_lea.vmem %s8, 192
      %v3073 = vld [vmem:[%s3072] sm:$0xff]
      %v3074 = vld [vmem:[%s3072 + $0x8] sm:$0xff]
      %v3075 = vld [vmem:[%s3072 + $0x10] sm:$0xff]
      %v3076 = vld [vmem:[%s3072 + $0x18] sm:$0xff]
      %v3077 = vld [vmem:[%s3072 + $0x20] sm:$0xff]
      %v3078 = vld [vmem:[%s3072 + $0x28] sm:$0xff]
      %v3079 = vld [vmem:[%s3072 + $0x30] sm:$0xff]
      %v3080 = vld [vmem:[%s3072 + $0x38] sm:$0xff]
      %v3082 = vsel %vm2584, %v3073, 0
      %v3085 = vsel %vm2584, %v3074, 0
      %v3088 = vsel %vm2584, %v3075, 0
      %v3091 = vsel %vm2584, %v3076, 0
      %v3094 = vsel %vm2584, %v3077, 0
      %v3097 = vsel %vm2584, %v3078, 0
      %v3100 = vsel %vm2584, %v3079, 0
      %v3103 = vsel %vm2584, %v3080, 0
      %3105 = vmatpush.msra.mxu0 0.0
      %3106 = vmatpush.msra.mxu0 0.0
      %3107 = vmatpush.msra.mxu0 0.0
      %3108 = vmatpush.msra.mxu0 0.0
      %3109 = vmatpush.msra.mxu0 0.0
      %3110 = vmatpush.msra.mxu0 0.0
      %3111 = vmatpush.msra.mxu0 0.0
      %3112 = vmatpush.msra.mxu0 0.0
      %3113 = vmatpush.msra.mxu0 %v3070
      %3114 = vmatpush.msra.mxu0 %v3068
      %3115 = vmatpush.msra.mxu0 %v3066
      %3116 = vmatpush.msra.mxu0 %v3064
      %3117 = vmatpush.msra.mxu0 %v3062
      %3118 = vmatpush.msra.mxu0 %v3060
      %3119 = vmatpush.msra.mxu0 %v3058
      %3120 = vmatpush.msra.mxu0 %v3056
      %3121 = vmatmul.f32.gmra.mxu0 %v3082
      %v3122 = vpop.f32.mrf.mxu0
      %v3123 = vadd.f32 0.0, %v3122
      %3124 = vmatmul.f32.gmra.mxu0 %v3085
      %v3125 = vpop.f32.mrf.mxu0
      %v3126 = vadd.f32 0.0, %v3125
      %3127 = vmatmul.f32.gmra.mxu0 %v3088
      %v3128 = vpop.f32.mrf.mxu0
      %v3129 = vadd.f32 0.0, %v3128
      %3130 = vmatmul.f32.gmra.mxu0 %v3091
      %v3131 = vpop.f32.mrf.mxu0
      %v3132 = vadd.f32 0.0, %v3131
      %3133 = vmatmul.f32.gmra.mxu0 %v3094
      %v3134 = vpop.f32.mrf.mxu0
      %v3135 = vadd.f32 0.0, %v3134
      %3136 = vmatmul.f32.gmra.mxu0 %v3097
      %v3137 = vpop.f32.mrf.mxu0
      %v3138 = vadd.f32 0.0, %v3137
      %3139 = vmatmul.f32.gmra.mxu0 %v3100
      %v3140 = vpop.f32.mrf.mxu0
      %v3141 = vadd.f32 0.0, %v3140
      %3142 = vmatmul.f32.gmra.mxu0 %v3103
      %v3143 = vpop.f32.mrf.mxu0
      %v3144 = vadd.f32 0.0, %v3143
      %3145 = vdwg.mxu0
      %3146 = vmatpush.msra.mxu0 0.0
      %3147 = vmatpush.msra.mxu0 0.0
      %3148 = vmatpush.msra.mxu0 0.0
      %3149 = vmatpush.msra.mxu0 0.0
      %3150 = vmatpush.msra.mxu0 0.0
      %3151 = vmatpush.msra.mxu0 0.0
      %3152 = vmatpush.msra.mxu0 0.0
      %3153 = vmatpush.msra.mxu0 0.0
      %3154 = vmatpush.msra.mxu0 %v3071
      %3155 = vmatpush.msra.mxu0 %v3069
      %3156 = vmatpush.msra.mxu0 %v3067
      %3157 = vmatpush.msra.mxu0 %v3065
      %3158 = vmatpush.msra.mxu0 %v3063
      %3159 = vmatpush.msra.mxu0 %v3061
      %3160 = vmatpush.msra.mxu0 %v3059
      %3161 = vmatpush.msra.mxu0 %v3057
      %3162 = vmatmul.f32.gmra.mxu0 %v3082
      %v3163 = vpop.f32.mrf.mxu0
      %v3164 = vadd.f32 0.0, %v3163
      %3165 = vmatmul.f32.gmra.mxu0 %v3085
      %v3166 = vpop.f32.mrf.mxu0
      %v3167 = vadd.f32 0.0, %v3166
      %3168 = vmatmul.f32.gmra.mxu0 %v3088
      %v3169 = vpop.f32.mrf.mxu0
      %v3170 = vadd.f32 0.0, %v3169
      %3171 = vmatmul.f32.gmra.mxu0 %v3091
      %v3172 = vpop.f32.mrf.mxu0
      %v3173 = vadd.f32 0.0, %v3172
      %3174 = vmatmul.f32.gmra.mxu0 %v3094
      %v3175 = vpop.f32.mrf.mxu0
      %v3176 = vadd.f32 0.0, %v3175
      %3177 = vmatmul.f32.gmra.mxu0 %v3097
      %v3178 = vpop.f32.mrf.mxu0
      %v3179 = vadd.f32 0.0, %v3178
      %3180 = vmatmul.f32.gmra.mxu0 %v3100
      %v3181 = vpop.f32.mrf.mxu0
      %v3182 = vadd.f32 0.0, %v3181
      %3183 = vmatmul.f32.gmra.mxu0 %v3103
      %v3184 = vpop.f32.mrf.mxu0
      %v3185 = vadd.f32 0.0, %v3184
      %3186 = vdwg.mxu0
      %v3187 = vadd.f32 %v2984, %v3123
      %v3188 = vadd.f32 %v2985, %v3164
      %v3189 = vadd.f32 %v2986, %v3126
      %v3190 = vadd.f32 %v2987, %v3167
      %v3191 = vadd.f32 %v2988, %v3129
      %v3192 = vadd.f32 %v2989, %v3170
      %v3193 = vadd.f32 %v2990, %v3132
      %v3194 = vadd.f32 %v2991, %v3173
      %v3195 = vadd.f32 %v2992, %v3135
      %v3196 = vadd.f32 %v2993, %v3176
      %v3197 = vadd.f32 %v2994, %v3138
      %v3198 = vadd.f32 %v2995, %v3179
      %v3199 = vadd.f32 %v2996, %v3141
      %v3200 = vadd.f32 %v2997, %v3182
      %v3201 = vadd.f32 %v2998, %v3144
      %v3202 = vadd.f32 %v2999, %v3185
      %s3203 = scalar_lea.vmem %s8, 256
      %v3204 = vld [vmem:[%s3203] sm:$0xff]
      %v3205 = vld [vmem:[%s3203 + $0x8] sm:$0xff]
      %v3206 = vld [vmem:[%s3203 + $0x10] sm:$0xff]
      %v3207 = vld [vmem:[%s3203 + $0x18] sm:$0xff]
      %v3208 = vld [vmem:[%s3203 + $0x20] sm:$0xff]
      %v3209 = vld [vmem:[%s3203 + $0x28] sm:$0xff]
      %v3210 = vld [vmem:[%s3203 + $0x30] sm:$0xff]
      %v3211 = vld [vmem:[%s3203 + $0x38] sm:$0xff]
      %v3213 = vsel %vm2584, %v3204, 0
      %v3216 = vsel %vm2584, %v3205, 0
      %v3219 = vsel %vm2584, %v3206, 0
      %v3222 = vsel %vm2584, %v3207, 0
      %v3225 = vsel %vm2584, %v3208, 0
      %v3228 = vsel %vm2584, %v3209, 0
      %v3231 = vsel %vm2584, %v3210, 0
      %v3234 = vsel %vm2584, %v3211, 0
      %3236 = vmatpush.msra.mxu0 0.0
      %3237 = vmatpush.msra.mxu0 0.0
      %3238 = vmatpush.msra.mxu0 0.0
      %3239 = vmatpush.msra.mxu0 0.0
      %3240 = vmatpush.msra.mxu0 0.0
      %3241 = vmatpush.msra.mxu0 0.0
      %3242 = vmatpush.msra.mxu0 0.0
      %3243 = vmatpush.msra.mxu0 0.0
      %3244 = vmatpush.msra.mxu0 %v2422
      %3245 = vmatpush.msra.mxu0 %v2420
      %3246 = vmatpush.msra.mxu0 %v2418
      %3247 = vmatpush.msra.mxu0 %v2416
      %3248 = vmatpush.msra.mxu0 %v2414
      %3249 = vmatpush.msra.mxu0 %v2412
      %3250 = vmatpush.msra.mxu0 %v2410
      %3251 = vmatpush.msra.mxu0 %v2408
      %3252 = vmatmul.f32.gmra.mxu0 %v3213
      %v3253 = vpop.f32.mrf.mxu0
      %v3254 = vadd.f32 0.0, %v3253
      %3255 = vmatmul.f32.gmra.mxu0 %v3216
      %v3256 = vpop.f32.mrf.mxu0
      %v3257 = vadd.f32 0.0, %v3256
      %3258 = vmatmul.f32.gmra.mxu0 %v3219
      %v3259 = vpop.f32.mrf.mxu0
      %v3260 = vadd.f32 0.0, %v3259
      %3261 = vmatmul.f32.gmra.mxu0 %v3222
      %v3262 = vpop.f32.mrf.mxu0
      %v3263 = vadd.f32 0.0, %v3262
      %3264 = vmatmul.f32.gmra.mxu0 %v3225
      %v3265 = vpop.f32.mrf.mxu0
      %v3266 = vadd.f32 0.0, %v3265
      %3267 = vmatmul.f32.gmra.mxu0 %v3228
      %v3268 = vpop.f32.mrf.mxu0
      %v3269 = vadd.f32 0.0, %v3268
      %3270 = vmatmul.f32.gmra.mxu0 %v3231
      %v3271 = vpop.f32.mrf.mxu0
      %v3272 = vadd.f32 0.0, %v3271
      %3273 = vmatmul.f32.gmra.mxu0 %v3234
      %v3274 = vpop.f32.mrf.mxu0
      %v3275 = vadd.f32 0.0, %v3274
      %3276 = vdwg.mxu0
      %3277 = vmatpush.msra.mxu0 0.0
      %3278 = vmatpush.msra.mxu0 0.0
      %3279 = vmatpush.msra.mxu0 0.0
      %3280 = vmatpush.msra.mxu0 0.0
      %3281 = vmatpush.msra.mxu0 0.0
      %3282 = vmatpush.msra.mxu0 0.0
      %3283 = vmatpush.msra.mxu0 0.0
      %3284 = vmatpush.msra.mxu0 0.0
      %3285 = vmatpush.msra.mxu0 %v2423
      %3286 = vmatpush.msra.mxu0 %v2421
      %3287 = vmatpush.msra.mxu0 %v2419
      %3288 = vmatpush.msra.mxu0 %v2417
      %3289 = vmatpush.msra.mxu0 %v2415
      %3290 = vmatpush.msra.mxu0 %v2413
      %3291 = vmatpush.msra.mxu0 %v2411
      %3292 = vmatpush.msra.mxu0 %v2409
      %3293 = vmatmul.f32.gmra.mxu0 %v3213
      %v3294 = vpop.f32.mrf.mxu0
      %v3295 = vadd.f32 0.0, %v3294
      %3296 = vmatmul.f32.gmra.mxu0 %v3216
      %v3297 = vpop.f32.mrf.mxu0
      %v3298 = vadd.f32 0.0, %v3297
      %3299 = vmatmul.f32.gmra.mxu0 %v3219
      %v3300 = vpop.f32.mrf.mxu0
      %v3301 = vadd.f32 0.0, %v3300
      %3302 = vmatmul.f32.gmra.mxu0 %v3222
      %v3303 = vpop.f32.mrf.mxu0
      %v3304 = vadd.f32 0.0, %v3303
      %3305 = vmatmul.f32.gmra.mxu0 %v3225
      %v3306 = vpop.f32.mrf.mxu0
      %v3307 = vadd.f32 0.0, %v3306
      %3308 = vmatmul.f32.gmra.mxu0 %v3228
      %v3309 = vpop.f32.mrf.mxu0
      %v3310 = vadd.f32 0.0, %v3309
      %3311 = vmatmul.f32.gmra.mxu0 %v3231
      %v3312 = vpop.f32.mrf.mxu0
      %v3313 = vadd.f32 0.0, %v3312
      %3314 = vmatmul.f32.gmra.mxu0 %v3234
      %v3315 = vpop.f32.mrf.mxu0
      %v3316 = vadd.f32 0.0, %v3315
      %3317 = vdwg.mxu0
      %v3318 = vadd.f32 %v3187, %v3254
      %v3319 = vadd.f32 %v3188, %v3295
      %v3320 = vadd.f32 %v3189, %v3257
      %v3321 = vadd.f32 %v3190, %v3298
      %v3322 = vadd.f32 %v3191, %v3260
      %v3323 = vadd.f32 %v3192, %v3301
      %v3324 = vadd.f32 %v3193, %v3263
      %v3325 = vadd.f32 %v3194, %v3304
      %v3326 = vadd.f32 %v3195, %v3266
      %v3327 = vadd.f32 %v3196, %v3307
      %v3328 = vadd.f32 %v3197, %v3269
      %v3329 = vadd.f32 %v3198, %v3310
      %v3330 = vadd.f32 %v3199, %v3272
      %v3331 = vadd.f32 %v3200, %v3313
      %v3332 = vadd.f32 %v3201, %v3275
      %v3333 = vadd.f32 %v3202, %v3316
      %3334 = vrot.lane.b32.xlu0 %v2408, 126
      %v3335 = vpop.permute.xlu0 %3334
      %3336 = vrot.lane.b32.xlu0 %v2410, 126
      %v3337 = vpop.permute.xlu0 %3336
      %3338 = vrot.lane.b32.xlu0 %v2412, 126
      %v3339 = vpop.permute.xlu0 %3338
      %3340 = vrot.lane.b32.xlu0 %v2414, 126
      %v3341 = vpop.permute.xlu0 %3340
      %3342 = vrot.lane.b32.xlu0 %v2416, 126
      %v3343 = vpop.permute.xlu0 %3342
      %3344 = vrot.lane.b32.xlu0 %v2418, 126
      %v3345 = vpop.permute.xlu0 %3344
      %3346 = vrot.lane.b32.xlu0 %v2420, 126
      %v3347 = vpop.permute.xlu0 %3346
      %3348 = vrot.lane.b32.xlu0 %v2422, 126
      %v3349 = vpop.permute.xlu0 %3348
      %3350 = vrot.lane.b32.xlu0 %v2409, 126
      %v3351 = vpop.permute.xlu0 %3350
      %3352 = vrot.lane.b32.xlu0 %v2411, 126
      %v3353 = vpop.permute.xlu0 %3352
      %3354 = vrot.lane.b32.xlu0 %v2413, 126
      %v3355 = vpop.permute.xlu0 %3354
      %3356 = vrot.lane.b32.xlu0 %v2415, 126
      %v3357 = vpop.permute.xlu0 %3356
      %3358 = vrot.lane.b32.xlu0 %v2417, 126
      %v3359 = vpop.permute.xlu0 %3358
      %3360 = vrot.lane.b32.xlu0 %v2419, 126
      %v3361 = vpop.permute.xlu0 %3360
      %3362 = vrot.lane.b32.xlu0 %v2421, 126
      %v3363 = vpop.permute.xlu0 %3362
      %3364 = vrot.lane.b32.xlu0 %v2423, 126
      %v3365 = vpop.permute.xlu0 %3364
      %vm3366 = vcmp.lt.s32.totalorder %v706, 126
      %v3367 = vsel %vm3366, %v3335, %v3351
      %v3368 = vsel %vm3366, %v3337, %v3353
      %v3369 = vsel %vm3366, %v3339, %v3355
      %v3370 = vsel %vm3366, %v3341, %v3357
      %v3371 = vsel %vm3366, %v3343, %v3359
      %v3372 = vsel %vm3366, %v3345, %v3361
      %v3373 = vsel %vm3366, %v3347, %v3363
      %v3374 = vsel %vm3366, %v3349, %v3365
      %v3375 = vsel %vm3366, %v3351, %v3335
      %v3376 = vsel %vm3366, %v3353, %v3337
      %v3377 = vsel %vm3366, %v3355, %v3339
      %v3378 = vsel %vm3366, %v3357, %v3341
      %v3379 = vsel %vm3366, %v3359, %v3343
      %v3380 = vsel %vm3366, %v3361, %v3345
      %v3381 = vsel %vm3366, %v3363, %v3347
      %v3382 = vsel %vm3366, %v3365, %v3349
      %s3383 = scalar_lea.vmem %s3, 10
      %v3384 = vld [vmem:[%s3383] sm:$0x3]
      %v3386 = vperm.slane %v3384, 0
      %v3387 = vperm.slane %v3384, 1
      %v3390 = vmul.f32 %v3367, %v3386
      %v3391 = vmul.f32 %v3375, %v3387
      %v3392 = vmul.f32 %v3368, %v3386
      %v3393 = vmul.f32 %v3376, %v3387
      %v3394 = vmul.f32 %v3369, %v3386
      %v3395 = vmul.f32 %v3377, %v3387
      %v3396 = vmul.f32 %v3370, %v3386
      %v3397 = vmul.f32 %v3378, %v3387
      %v3398 = vmul.f32 %v3371, %v3386
      %v3399 = vmul.f32 %v3379, %v3387
      %v3400 = vmul.f32 %v3372, %v3386
      %v3401 = vmul.f32 %v3380, %v3387
      %v3402 = vmul.f32 %v3373, %v3386
      %v3403 = vmul.f32 %v3381, %v3387
      %v3404 = vmul.f32 %v3374, %v3386
      %v3405 = vmul.f32 %v3382, %v3387
      %s3406 = scalar_lea.vmem %s8, 320
      %v3407 = vld [vmem:[%s3406] sm:$0xff]
      %v3408 = vld [vmem:[%s3406 + $0x8] sm:$0xff]
      %v3409 = vld [vmem:[%s3406 + $0x10] sm:$0xff]
      %v3410 = vld [vmem:[%s3406 + $0x18] sm:$0xff]
      %v3411 = vld [vmem:[%s3406 + $0x20] sm:$0xff]
      %v3412 = vld [vmem:[%s3406 + $0x28] sm:$0xff]
      %v3413 = vld [vmem:[%s3406 + $0x30] sm:$0xff]
      %v3414 = vld [vmem:[%s3406 + $0x38] sm:$0xff]
      %v3416 = vsel %vm2584, %v3407, 0
      %v3419 = vsel %vm2584, %v3408, 0
      %v3422 = vsel %vm2584, %v3409, 0
      %v3425 = vsel %vm2584, %v3410, 0
      %v3428 = vsel %vm2584, %v3411, 0
      %v3431 = vsel %vm2584, %v3412, 0
      %v3434 = vsel %vm2584, %v3413, 0
      %v3437 = vsel %vm2584, %v3414, 0
      %3439 = vmatpush.msra.mxu0 0.0
      %3440 = vmatpush.msra.mxu0 0.0
      %3441 = vmatpush.msra.mxu0 0.0
      %3442 = vmatpush.msra.mxu0 0.0
      %3443 = vmatpush.msra.mxu0 0.0
      %3444 = vmatpush.msra.mxu0 0.0
      %3445 = vmatpush.msra.mxu0 0.0
      %3446 = vmatpush.msra.mxu0 0.0
      %3447 = vmatpush.msra.mxu0 %v3404
      %3448 = vmatpush.msra.mxu0 %v3402
      %3449 = vmatpush.msra.mxu0 %v3400
      %3450 = vmatpush.msra.mxu0 %v3398
      %3451 = vmatpush.msra.mxu0 %v3396
      %3452 = vmatpush.msra.mxu0 %v3394
      %3453 = vmatpush.msra.mxu0 %v3392
      %3454 = vmatpush.msra.mxu0 %v3390
      %3455 = vmatmul.f32.gmra.mxu0 %v3416
      %v3456 = vpop.f32.mrf.mxu0
      %v3457 = vadd.f32 0.0, %v3456
      %3458 = vmatmul.f32.gmra.mxu0 %v3419
      %v3459 = vpop.f32.mrf.mxu0
      %v3460 = vadd.f32 0.0, %v3459
      %3461 = vmatmul.f32.gmra.mxu0 %v3422
      %v3462 = vpop.f32.mrf.mxu0
      %v3463 = vadd.f32 0.0, %v3462
      %3464 = vmatmul.f32.gmra.mxu0 %v3425
      %v3465 = vpop.f32.mrf.mxu0
      %v3466 = vadd.f32 0.0, %v3465
      %3467 = vmatmul.f32.gmra.mxu0 %v3428
      %v3468 = vpop.f32.mrf.mxu0
      %v3469 = vadd.f32 0.0, %v3468
      %3470 = vmatmul.f32.gmra.mxu0 %v3431
      %v3471 = vpop.f32.mrf.mxu0
      %v3472 = vadd.f32 0.0, %v3471
      %3473 = vmatmul.f32.gmra.mxu0 %v3434
      %v3474 = vpop.f32.mrf.mxu0
      %v3475 = vadd.f32 0.0, %v3474
      %3476 = vmatmul.f32.gmra.mxu0 %v3437
      %v3477 = vpop.f32.mrf.mxu0
      %v3478 = vadd.f32 0.0, %v3477
      %3479 = vdwg.mxu0
      %3480 = vmatpush.msra.mxu0 0.0
      %3481 = vmatpush.msra.mxu0 0.0
      %3482 = vmatpush.msra.mxu0 0.0
      %3483 = vmatpush.msra.mxu0 0.0
      %3484 = vmatpush.msra.mxu0 0.0
      %3485 = vmatpush.msra.mxu0 0.0
      %3486 = vmatpush.msra.mxu0 0.0
      %3487 = vmatpush.msra.mxu0 0.0
      %3488 = vmatpush.msra.mxu0 %v3405
      %3489 = vmatpush.msra.mxu0 %v3403
      %3490 = vmatpush.msra.mxu0 %v3401
      %3491 = vmatpush.msra.mxu0 %v3399
      %3492 = vmatpush.msra.mxu0 %v3397
      %3493 = vmatpush.msra.mxu0 %v3395
      %3494 = vmatpush.msra.mxu0 %v3393
      %3495 = vmatpush.msra.mxu0 %v3391
      %3496 = vmatmul.f32.gmra.mxu0 %v3416
      %v3497 = vpop.f32.mrf.mxu0
      %v3498 = vadd.f32 0.0, %v3497
      %3499 = vmatmul.f32.gmra.mxu0 %v3419
      %v3500 = vpop.f32.mrf.mxu0
      %v3501 = vadd.f32 0.0, %v3500
      %3502 = vmatmul.f32.gmra.mxu0 %v3422
      %v3503 = vpop.f32.mrf.mxu0
      %v3504 = vadd.f32 0.0, %v3503
      %3505 = vmatmul.f32.gmra.mxu0 %v3425
      %v3506 = vpop.f32.mrf.mxu0
      %v3507 = vadd.f32 0.0, %v3506
      %3508 = vmatmul.f32.gmra.mxu0 %v3428
      %v3509 = vpop.f32.mrf.mxu0
      %v3510 = vadd.f32 0.0, %v3509
      %3511 = vmatmul.f32.gmra.mxu0 %v3431
      %v3512 = vpop.f32.mrf.mxu0
      %v3513 = vadd.f32 0.0, %v3512
      %3514 = vmatmul.f32.gmra.mxu0 %v3434
      %v3515 = vpop.f32.mrf.mxu0
      %v3516 = vadd.f32 0.0, %v3515
      %3517 = vmatmul.f32.gmra.mxu0 %v3437
      %v3518 = vpop.f32.mrf.mxu0
      %v3519 = vadd.f32 0.0, %v3518
      %3520 = vdwg.mxu0
      %v3521 = vadd.f32 %v3318, %v3457
      %v3522 = vadd.f32 %v3319, %v3498
      %v3523 = vadd.f32 %v3320, %v3460
      %v3524 = vadd.f32 %v3321, %v3501
      %v3525 = vadd.f32 %v3322, %v3463
      %v3526 = vadd.f32 %v3323, %v3504
      %v3527 = vadd.f32 %v3324, %v3466
      %v3528 = vadd.f32 %v3325, %v3507
      %v3529 = vadd.f32 %v3326, %v3469
      %v3530 = vadd.f32 %v3327, %v3510
      %v3531 = vadd.f32 %v3328, %v3472
      %v3532 = vadd.f32 %v3329, %v3513
      %v3533 = vadd.f32 %v3330, %v3475
      %v3534 = vadd.f32 %v3331, %v3516
      %v3535 = vadd.f32 %v3332, %v3478
      %v3536 = vadd.f32 %v3333, %v3519
      %3537 = vrot.lane.b32.xlu0 %v2408, 98
      %v3538 = vpop.permute.xlu0 %3537
      %3539 = vrot.lane.b32.xlu0 %v2410, 98
      %v3540 = vpop.permute.xlu0 %3539
      %3541 = vrot.lane.b32.xlu0 %v2412, 98
      %v3542 = vpop.permute.xlu0 %3541
      %3543 = vrot.lane.b32.xlu0 %v2414, 98
      %v3544 = vpop.permute.xlu0 %3543
      %3545 = vrot.lane.b32.xlu0 %v2416, 98
      %v3546 = vpop.permute.xlu0 %3545
      %3547 = vrot.lane.b32.xlu0 %v2418, 98
      %v3548 = vpop.permute.xlu0 %3547
      %3549 = vrot.lane.b32.xlu0 %v2420, 98
      %v3550 = vpop.permute.xlu0 %3549
      %3551 = vrot.lane.b32.xlu0 %v2422, 98
      %v3552 = vpop.permute.xlu0 %3551
      %3553 = vrot.lane.b32.xlu0 %v2409, 98
      %v3554 = vpop.permute.xlu0 %3553
      %3555 = vrot.lane.b32.xlu0 %v2411, 98
      %v3556 = vpop.permute.xlu0 %3555
      %3557 = vrot.lane.b32.xlu0 %v2413, 98
      %v3558 = vpop.permute.xlu0 %3557
      %3559 = vrot.lane.b32.xlu0 %v2415, 98
      %v3560 = vpop.permute.xlu0 %3559
      %3561 = vrot.lane.b32.xlu0 %v2417, 98
      %v3562 = vpop.permute.xlu0 %3561
      %3563 = vrot.lane.b32.xlu0 %v2419, 98
      %v3564 = vpop.permute.xlu0 %3563
      %3565 = vrot.lane.b32.xlu0 %v2421, 98
      %v3566 = vpop.permute.xlu0 %3565
      %3567 = vrot.lane.b32.xlu0 %v2423, 98
      %v3568 = vpop.permute.xlu0 %3567
      %vm3569 = vcmp.lt.s32.totalorder %v706, 98
      %v3570 = vsel %vm3569, %v3538, %v3554
      %v3571 = vsel %vm3569, %v3540, %v3556
      %v3572 = vsel %vm3569, %v3542, %v3558
      %v3573 = vsel %vm3569, %v3544, %v3560
      %v3574 = vsel %vm3569, %v3546, %v3562
      %v3575 = vsel %vm3569, %v3548, %v3564
      %v3576 = vsel %vm3569, %v3550, %v3566
      %v3577 = vsel %vm3569, %v3552, %v3568
      %v3578 = vsel %vm3569, %v3554, %v3538
      %v3579 = vsel %vm3569, %v3556, %v3540
      %v3580 = vsel %vm3569, %v3558, %v3542
      %v3581 = vsel %vm3569, %v3560, %v3544
      %v3582 = vsel %vm3569, %v3562, %v3546
      %v3583 = vsel %vm3569, %v3564, %v3548
      %v3584 = vsel %vm3569, %v3566, %v3550
      %v3585 = vsel %vm3569, %v3568, %v3552
      %s3586 = scalar_lea.vmem %s3, 12
      %v3587 = vld [vmem:[%s3586] sm:$0x3]
      %v3589 = vperm.slane %v3587, 0
      %v3590 = vperm.slane %v3587, 1
      %v3593 = vmul.f32 %v3570, %v3589
      %v3594 = vmul.f32 %v3578, %v3590
      %v3595 = vmul.f32 %v3571, %v3589
      %v3596 = vmul.f32 %v3579, %v3590
      %v3597 = vmul.f32 %v3572, %v3589
      %v3598 = vmul.f32 %v3580, %v3590
      %v3599 = vmul.f32 %v3573, %v3589
      %v3600 = vmul.f32 %v3581, %v3590
      %v3601 = vmul.f32 %v3574, %v3589
      %v3602 = vmul.f32 %v3582, %v3590
      %v3603 = vmul.f32 %v3575, %v3589
      %v3604 = vmul.f32 %v3583, %v3590
      %v3605 = vmul.f32 %v3576, %v3589
      %v3606 = vmul.f32 %v3584, %v3590
      %v3607 = vmul.f32 %v3577, %v3589
      %v3608 = vmul.f32 %v3585, %v3590
      %s3609 = scalar_lea.vmem %s8, 384
      %v3610 = vld [vmem:[%s3609] sm:$0xff]
      %v3611 = vld [vmem:[%s3609 + $0x8] sm:$0xff]
      %v3612 = vld [vmem:[%s3609 + $0x10] sm:$0xff]
      %v3613 = vld [vmem:[%s3609 + $0x18] sm:$0xff]
      %v3614 = vld [vmem:[%s3609 + $0x20] sm:$0xff]
      %v3615 = vld [vmem:[%s3609 + $0x28] sm:$0xff]
      %v3616 = vld [vmem:[%s3609 + $0x30] sm:$0xff]
      %v3617 = vld [vmem:[%s3609 + $0x38] sm:$0xff]
      %v3619 = vsel %vm2584, %v3610, 0
      %v3622 = vsel %vm2584, %v3611, 0
      %v3625 = vsel %vm2584, %v3612, 0
      %v3628 = vsel %vm2584, %v3613, 0
      %v3631 = vsel %vm2584, %v3614, 0
      %v3634 = vsel %vm2584, %v3615, 0
      %v3637 = vsel %vm2584, %v3616, 0
      %v3640 = vsel %vm2584, %v3617, 0
      %3642 = vmatpush.msra.mxu0 0.0
      %3643 = vmatpush.msra.mxu0 0.0
      %3644 = vmatpush.msra.mxu0 0.0
      %3645 = vmatpush.msra.mxu0 0.0
      %3646 = vmatpush.msra.mxu0 0.0
      %3647 = vmatpush.msra.mxu0 0.0
      %3648 = vmatpush.msra.mxu0 0.0
      %3649 = vmatpush.msra.mxu0 0.0
      %3650 = vmatpush.msra.mxu0 %v3607
      %3651 = vmatpush.msra.mxu0 %v3605
      %3652 = vmatpush.msra.mxu0 %v3603
      %3653 = vmatpush.msra.mxu0 %v3601
      %3654 = vmatpush.msra.mxu0 %v3599
      %3655 = vmatpush.msra.mxu0 %v3597
      %3656 = vmatpush.msra.mxu0 %v3595
      %3657 = vmatpush.msra.mxu0 %v3593
      %3658 = vmatmul.f32.gmra.mxu0 %v3619
      %v3659 = vpop.f32.mrf.mxu0
      %v3660 = vadd.f32 0.0, %v3659
      %3661 = vmatmul.f32.gmra.mxu0 %v3622
      %v3662 = vpop.f32.mrf.mxu0
      %v3663 = vadd.f32 0.0, %v3662
      %3664 = vmatmul.f32.gmra.mxu0 %v3625
      %v3665 = vpop.f32.mrf.mxu0
      %v3666 = vadd.f32 0.0, %v3665
      %3667 = vmatmul.f32.gmra.mxu0 %v3628
      %v3668 = vpop.f32.mrf.mxu0
      %v3669 = vadd.f32 0.0, %v3668
      %3670 = vmatmul.f32.gmra.mxu0 %v3631
      %v3671 = vpop.f32.mrf.mxu0
      %v3672 = vadd.f32 0.0, %v3671
      %3673 = vmatmul.f32.gmra.mxu0 %v3634
      %v3674 = vpop.f32.mrf.mxu0
      %v3675 = vadd.f32 0.0, %v3674
      %3676 = vmatmul.f32.gmra.mxu0 %v3637
      %v3677 = vpop.f32.mrf.mxu0
      %v3678 = vadd.f32 0.0, %v3677
      %3679 = vmatmul.f32.gmra.mxu0 %v3640
      %v3680 = vpop.f32.mrf.mxu0
      %v3681 = vadd.f32 0.0, %v3680
      %3682 = vdwg.mxu0
      %3683 = vmatpush.msra.mxu0 0.0
      %3684 = vmatpush.msra.mxu0 0.0
      %3685 = vmatpush.msra.mxu0 0.0
      %3686 = vmatpush.msra.mxu0 0.0
      %3687 = vmatpush.msra.mxu0 0.0
      %3688 = vmatpush.msra.mxu0 0.0
      %3689 = vmatpush.msra.mxu0 0.0
      %3690 = vmatpush.msra.mxu0 0.0
      %3691 = vmatpush.msra.mxu0 %v3608
      %3692 = vmatpush.msra.mxu0 %v3606
      %3693 = vmatpush.msra.mxu0 %v3604
      %3694 = vmatpush.msra.mxu0 %v3602
      %3695 = vmatpush.msra.mxu0 %v3600
      %3696 = vmatpush.msra.mxu0 %v3598
      %3697 = vmatpush.msra.mxu0 %v3596
      %3698 = vmatpush.msra.mxu0 %v3594
      %3699 = vmatmul.f32.gmra.mxu0 %v3619
      %v3700 = vpop.f32.mrf.mxu0
      %v3701 = vadd.f32 0.0, %v3700
      %3702 = vmatmul.f32.gmra.mxu0 %v3622
      %v3703 = vpop.f32.mrf.mxu0
      %v3704 = vadd.f32 0.0, %v3703
      %3705 = vmatmul.f32.gmra.mxu0 %v3625
      %v3706 = vpop.f32.mrf.mxu0
      %v3707 = vadd.f32 0.0, %v3706
      %3708 = vmatmul.f32.gmra.mxu0 %v3628
      %v3709 = vpop.f32.mrf.mxu0
      %v3710 = vadd.f32 0.0, %v3709
      %3711 = vmatmul.f32.gmra.mxu0 %v3631
      %v3712 = vpop.f32.mrf.mxu0
      %v3713 = vadd.f32 0.0, %v3712
      %3714 = vmatmul.f32.gmra.mxu0 %v3634
      %v3715 = vpop.f32.mrf.mxu0
      %v3716 = vadd.f32 0.0, %v3715
      %3717 = vmatmul.f32.gmra.mxu0 %v3637
      %v3718 = vpop.f32.mrf.mxu0
      %v3719 = vadd.f32 0.0, %v3718
      %3720 = vmatmul.f32.gmra.mxu0 %v3640
      %v3721 = vpop.f32.mrf.mxu0
      %v3722 = vadd.f32 0.0, %v3721
      %3723 = vdwg.mxu0
      %v3724 = vadd.f32 %v3521, %v3660
      %v3725 = vadd.f32 %v3522, %v3701
      %v3726 = vadd.f32 %v3523, %v3663
      %v3727 = vadd.f32 %v3524, %v3704
      %v3728 = vadd.f32 %v3525, %v3666
      %v3729 = vadd.f32 %v3526, %v3707
      %v3730 = vadd.f32 %v3527, %v3669
      %v3731 = vadd.f32 %v3528, %v3710
      %v3732 = vadd.f32 %v3529, %v3672
      %v3733 = vadd.f32 %v3530, %v3713
      %v3734 = vadd.f32 %v3531, %v3675
      %v3735 = vadd.f32 %v3532, %v3716
      %v3736 = vadd.f32 %v3533, %v3678
      %v3737 = vadd.f32 %v3534, %v3719
      %v3738 = vadd.f32 %v3535, %v3681
      %v3739 = vadd.f32 %v3536, %v3722
      %3740 = vrot.lane.b32.xlu0 %v2408, 96
      %v3741 = vpop.permute.xlu0 %3740
      %3742 = vrot.lane.b32.xlu0 %v2410, 96
      %v3743 = vpop.permute.xlu0 %3742
      %3744 = vrot.lane.b32.xlu0 %v2412, 96
      %v3745 = vpop.permute.xlu0 %3744
      %3746 = vrot.lane.b32.xlu0 %v2414, 96
      %v3747 = vpop.permute.xlu0 %3746
      %3748 = vrot.lane.b32.xlu0 %v2416, 96
      %v3749 = vpop.permute.xlu0 %3748
      %3750 = vrot.lane.b32.xlu0 %v2418, 96
      %v3751 = vpop.permute.xlu0 %3750
      %3752 = vrot.lane.b32.xlu0 %v2420, 96
      %v3753 = vpop.permute.xlu0 %3752
      %3754 = vrot.lane.b32.xlu0 %v2422, 96
      %v3755 = vpop.permute.xlu0 %3754
      %3756 = vrot.lane.b32.xlu0 %v2409, 96
      %v3757 = vpop.permute.xlu0 %3756
      %3758 = vrot.lane.b32.xlu0 %v2411, 96
      %v3759 = vpop.permute.xlu0 %3758
      %3760 = vrot.lane.b32.xlu0 %v2413, 96
      %v3761 = vpop.permute.xlu0 %3760
      %3762 = vrot.lane.b32.xlu0 %v2415, 96
      %v3763 = vpop.permute.xlu0 %3762
      %3764 = vrot.lane.b32.xlu0 %v2417, 96
      %v3765 = vpop.permute.xlu0 %3764
      %3766 = vrot.lane.b32.xlu0 %v2419, 96
      %v3767 = vpop.permute.xlu0 %3766
      %3768 = vrot.lane.b32.xlu0 %v2421, 96
      %v3769 = vpop.permute.xlu0 %3768
      %3770 = vrot.lane.b32.xlu0 %v2423, 96
      %v3771 = vpop.permute.xlu0 %3770
      %vm3772 = vcmp.lt.s32.totalorder %v706, 96
      %v3773 = vsel %vm3772, %v3741, %v3757
      %v3774 = vsel %vm3772, %v3743, %v3759
      %v3775 = vsel %vm3772, %v3745, %v3761
      %v3776 = vsel %vm3772, %v3747, %v3763
      %v3777 = vsel %vm3772, %v3749, %v3765
      %v3778 = vsel %vm3772, %v3751, %v3767
      %v3779 = vsel %vm3772, %v3753, %v3769
      %v3780 = vsel %vm3772, %v3755, %v3771
      %v3781 = vsel %vm3772, %v3757, %v3741
      %v3782 = vsel %vm3772, %v3759, %v3743
      %v3783 = vsel %vm3772, %v3761, %v3745
      %v3784 = vsel %vm3772, %v3763, %v3747
      %v3785 = vsel %vm3772, %v3765, %v3749
      %v3786 = vsel %vm3772, %v3767, %v3751
      %v3787 = vsel %vm3772, %v3769, %v3753
      %v3788 = vsel %vm3772, %v3771, %v3755
      %s3789 = scalar_lea.vmem %s3, 14
      %v3790 = vld [vmem:[%s3789] sm:$0x3]
      %v3792 = vperm.slane %v3790, 0
      %v3793 = vperm.slane %v3790, 1
      %v3796 = vmul.f32 %v3773, %v3792
      %v3797 = vmul.f32 %v3781, %v3793
      %v3798 = vmul.f32 %v3774, %v3792
      %v3799 = vmul.f32 %v3782, %v3793
      %v3800 = vmul.f32 %v3775, %v3792
      %v3801 = vmul.f32 %v3783, %v3793
      %v3802 = vmul.f32 %v3776, %v3792
      %v3803 = vmul.f32 %v3784, %v3793
      %v3804 = vmul.f32 %v3777, %v3792
      %v3805 = vmul.f32 %v3785, %v3793
      %v3806 = vmul.f32 %v3778, %v3792
      %v3807 = vmul.f32 %v3786, %v3793
      %v3808 = vmul.f32 %v3779, %v3792
      %v3809 = vmul.f32 %v3787, %v3793
      %v3810 = vmul.f32 %v3780, %v3792
      %v3811 = vmul.f32 %v3788, %v3793
      %s3812 = scalar_lea.vmem %s8, 448
      %v3813 = vld [vmem:[%s3812] sm:$0xff]
      %v3814 = vld [vmem:[%s3812 + $0x8] sm:$0xff]
      %v3815 = vld [vmem:[%s3812 + $0x10] sm:$0xff]
      %v3816 = vld [vmem:[%s3812 + $0x18] sm:$0xff]
      %v3817 = vld [vmem:[%s3812 + $0x20] sm:$0xff]
      %v3818 = vld [vmem:[%s3812 + $0x28] sm:$0xff]
      %v3819 = vld [vmem:[%s3812 + $0x30] sm:$0xff]
      %v3820 = vld [vmem:[%s3812 + $0x38] sm:$0xff]
      %v3822 = vsel %vm2584, %v3813, 0
      %v3825 = vsel %vm2584, %v3814, 0
      %v3828 = vsel %vm2584, %v3815, 0
      %v3831 = vsel %vm2584, %v3816, 0
      %v3834 = vsel %vm2584, %v3817, 0
      %v3837 = vsel %vm2584, %v3818, 0
      %v3840 = vsel %vm2584, %v3819, 0
      %v3843 = vsel %vm2584, %v3820, 0
      %3845 = vmatpush.msra.mxu0 0.0
      %3846 = vmatpush.msra.mxu0 0.0
      %3847 = vmatpush.msra.mxu0 0.0
      %3848 = vmatpush.msra.mxu0 0.0
      %3849 = vmatpush.msra.mxu0 0.0
      %3850 = vmatpush.msra.mxu0 0.0
      %3851 = vmatpush.msra.mxu0 0.0
      %3852 = vmatpush.msra.mxu0 0.0
      %3853 = vmatpush.msra.mxu0 %v3810
      %3854 = vmatpush.msra.mxu0 %v3808
      %3855 = vmatpush.msra.mxu0 %v3806
      %3856 = vmatpush.msra.mxu0 %v3804
      %3857 = vmatpush.msra.mxu0 %v3802
      %3858 = vmatpush.msra.mxu0 %v3800
      %3859 = vmatpush.msra.mxu0 %v3798
      %3860 = vmatpush.msra.mxu0 %v3796
      %3861 = vmatmul.f32.gmra.mxu0 %v3822
      %v3862 = vpop.f32.mrf.mxu0
      %v3863 = vadd.f32 0.0, %v3862
      %3864 = vmatmul.f32.gmra.mxu0 %v3825
      %v3865 = vpop.f32.mrf.mxu0
      %v3866 = vadd.f32 0.0, %v3865
      %3867 = vmatmul.f32.gmra.mxu0 %v3828
      %v3868 = vpop.f32.mrf.mxu0
      %v3869 = vadd.f32 0.0, %v3868
      %3870 = vmatmul.f32.gmra.mxu0 %v3831
      %v3871 = vpop.f32.mrf.mxu0
      %v3872 = vadd.f32 0.0, %v3871
      %3873 = vmatmul.f32.gmra.mxu0 %v3834
      %v3874 = vpop.f32.mrf.mxu0
      %v3875 = vadd.f32 0.0, %v3874
      %3876 = vmatmul.f32.gmra.mxu0 %v3837
      %v3877 = vpop.f32.mrf.mxu0
      %v3878 = vadd.f32 0.0, %v3877
      %3879 = vmatmul.f32.gmra.mxu0 %v3840
      %v3880 = vpop.f32.mrf.mxu0
      %v3881 = vadd.f32 0.0, %v3880
      %3882 = vmatmul.f32.gmra.mxu0 %v3843
      %v3883 = vpop.f32.mrf.mxu0
      %v3884 = vadd.f32 0.0, %v3883
      %3885 = vdwg.mxu0
      %3886 = vmatpush.msra.mxu0 0.0
      %3887 = vmatpush.msra.mxu0 0.0
      %3888 = vmatpush.msra.mxu0 0.0
      %3889 = vmatpush.msra.mxu0 0.0
      %3890 = vmatpush.msra.mxu0 0.0
      %3891 = vmatpush.msra.mxu0 0.0
      %3892 = vmatpush.msra.mxu0 0.0
      %3893 = vmatpush.msra.mxu0 0.0
      %3894 = vmatpush.msra.mxu0 %v3811
      %3895 = vmatpush.msra.mxu0 %v3809
      %3896 = vmatpush.msra.mxu0 %v3807
      %3897 = vmatpush.msra.mxu0 %v3805
      %3898 = vmatpush.msra.mxu0 %v3803
      %3899 = vmatpush.msra.mxu0 %v3801
      %3900 = vmatpush.msra.mxu0 %v3799
      %3901 = vmatpush.msra.mxu0 %v3797
      %3902 = vmatmul.f32.gmra.mxu0 %v3822
      %v3903 = vpop.f32.mrf.mxu0
      %v3904 = vadd.f32 0.0, %v3903
      %3905 = vmatmul.f32.gmra.mxu0 %v3825
      %v3906 = vpop.f32.mrf.mxu0
      %v3907 = vadd.f32 0.0, %v3906
      %3908 = vmatmul.f32.gmra.mxu0 %v3828
      %v3909 = vpop.f32.mrf.mxu0
      %v3910 = vadd.f32 0.0, %v3909
      %3911 = vmatmul.f32.gmra.mxu0 %v3831
      %v3912 = vpop.f32.mrf.mxu0
      %v3913 = vadd.f32 0.0, %v3912
      %3914 = vmatmul.f32.gmra.mxu0 %v3834
      %v3915 = vpop.f32.mrf.mxu0
      %v3916 = vadd.f32 0.0, %v3915
      %3917 = vmatmul.f32.gmra.mxu0 %v3837
      %v3918 = vpop.f32.mrf.mxu0
      %v3919 = vadd.f32 0.0, %v3918
      %3920 = vmatmul.f32.gmra.mxu0 %v3840
      %v3921 = vpop.f32.mrf.mxu0
      %v3922 = vadd.f32 0.0, %v3921
      %3923 = vmatmul.f32.gmra.mxu0 %v3843
      %v3924 = vpop.f32.mrf.mxu0
      %v3925 = vadd.f32 0.0, %v3924
      %3926 = vdwg.mxu0
      %v3927 = vadd.f32 %v3724, %v3863
      %v3928 = vadd.f32 %v3725, %v3904
      %v3929 = vadd.f32 %v3726, %v3866
      %v3930 = vadd.f32 %v3727, %v3907
      %v3931 = vadd.f32 %v3728, %v3869
      %v3932 = vadd.f32 %v3729, %v3910
      %v3933 = vadd.f32 %v3730, %v3872
      %v3934 = vadd.f32 %v3731, %v3913
      %v3935 = vadd.f32 %v3732, %v3875
      %v3936 = vadd.f32 %v3733, %v3916
      %v3937 = vadd.f32 %v3734, %v3878
      %v3938 = vadd.f32 %v3735, %v3919
      %v3939 = vadd.f32 %v3736, %v3881
      %v3940 = vadd.f32 %v3737, %v3922
      %v3941 = vadd.f32 %v3738, %v3884
      %v3942 = vadd.f32 %v3739, %v3925
      %3943 = vrot.lane.b32.xlu0 %v2408, 94
      %v3944 = vpop.permute.xlu0 %3943
      %3945 = vrot.lane.b32.xlu0 %v2410, 94
      %v3946 = vpop.permute.xlu0 %3945
      %3947 = vrot.lane.b32.xlu0 %v2412, 94
      %v3948 = vpop.permute.xlu0 %3947
      %3949 = vrot.lane.b32.xlu0 %v2414, 94
      %v3950 = vpop.permute.xlu0 %3949
      %3951 = vrot.lane.b32.xlu0 %v2416, 94
      %v3952 = vpop.permute.xlu0 %3951
      %3953 = vrot.lane.b32.xlu0 %v2418, 94
      %v3954 = vpop.permute.xlu0 %3953
      %3955 = vrot.lane.b32.xlu0 %v2420, 94
      %v3956 = vpop.permute.xlu0 %3955
      %3957 = vrot.lane.b32.xlu0 %v2422, 94
      %v3958 = vpop.permute.xlu0 %3957
      %3959 = vrot.lane.b32.xlu0 %v2409, 94
      %v3960 = vpop.permute.xlu0 %3959
      %3961 = vrot.lane.b32.xlu0 %v2411, 94
      %v3962 = vpop.permute.xlu0 %3961
      %3963 = vrot.lane.b32.xlu0 %v2413, 94
      %v3964 = vpop.permute.xlu0 %3963
      %3965 = vrot.lane.b32.xlu0 %v2415, 94
      %v3966 = vpop.permute.xlu0 %3965
      %3967 = vrot.lane.b32.xlu0 %v2417, 94
      %v3968 = vpop.permute.xlu0 %3967
      %3969 = vrot.lane.b32.xlu0 %v2419, 94
      %v3970 = vpop.permute.xlu0 %3969
      %3971 = vrot.lane.b32.xlu0 %v2421, 94
      %v3972 = vpop.permute.xlu0 %3971
      %3973 = vrot.lane.b32.xlu0 %v2423, 94
      %v3974 = vpop.permute.xlu0 %3973
      %vm3975 = vcmp.lt.s32.totalorder %v706, 94
      %v3976 = vsel %vm3975, %v3944, %v3960
      %v3977 = vsel %vm3975, %v3946, %v3962
      %v3978 = vsel %vm3975, %v3948, %v3964
      %v3979 = vsel %vm3975, %v3950, %v3966
      %v3980 = vsel %vm3975, %v3952, %v3968
      %v3981 = vsel %vm3975, %v3954, %v3970
      %v3982 = vsel %vm3975, %v3956, %v3972
      %v3983 = vsel %vm3975, %v3958, %v3974
      %v3984 = vsel %vm3975, %v3960, %v3944
      %v3985 = vsel %vm3975, %v3962, %v3946
      %v3986 = vsel %vm3975, %v3964, %v3948
      %v3987 = vsel %vm3975, %v3966, %v3950
      %v3988 = vsel %vm3975, %v3968, %v3952
      %v3989 = vsel %vm3975, %v3970, %v3954
      %v3990 = vsel %vm3975, %v3972, %v3956
      %v3991 = vsel %vm3975, %v3974, %v3958
      %s3992 = scalar_lea.vmem %s3, 16
      %v3993 = vld [vmem:[%s3992] sm:$0x3]
      %v3995 = vperm.slane %v3993, 0
      %v3996 = vperm.slane %v3993, 1
      %v3999 = vmul.f32 %v3976, %v3995
      %v4000 = vmul.f32 %v3984, %v3996
      %v4001 = vmul.f32 %v3977, %v3995
      %v4002 = vmul.f32 %v3985, %v3996
      %v4003 = vmul.f32 %v3978, %v3995
      %v4004 = vmul.f32 %v3986, %v3996
      %v4005 = vmul.f32 %v3979, %v3995
      %v4006 = vmul.f32 %v3987, %v3996
      %v4007 = vmul.f32 %v3980, %v3995
      %v4008 = vmul.f32 %v3988, %v3996
      %v4009 = vmul.f32 %v3981, %v3995
      %v4010 = vmul.f32 %v3989, %v3996
      %v4011 = vmul.f32 %v3982, %v3995
      %v4012 = vmul.f32 %v3990, %v3996
      %v4013 = vmul.f32 %v3983, %v3995
      %v4014 = vmul.f32 %v3991, %v3996
      %s4015 = scalar_lea.vmem %s8, 512
      %v4016 = vld [vmem:[%s4015] sm:$0xff]
      %v4017 = vld [vmem:[%s4015 + $0x8] sm:$0xff]
      %v4018 = vld [vmem:[%s4015 + $0x10] sm:$0xff]
      %v4019 = vld [vmem:[%s4015 + $0x18] sm:$0xff]
      %v4020 = vld [vmem:[%s4015 + $0x20] sm:$0xff]
      %v4021 = vld [vmem:[%s4015 + $0x28] sm:$0xff]
      %v4022 = vld [vmem:[%s4015 + $0x30] sm:$0xff]
      %v4023 = vld [vmem:[%s4015 + $0x38] sm:$0xff]
      %v4025 = vsel %vm2584, %v4016, 0
      %v4028 = vsel %vm2584, %v4017, 0
      %v4031 = vsel %vm2584, %v4018, 0
      %v4034 = vsel %vm2584, %v4019, 0
      %v4037 = vsel %vm2584, %v4020, 0
      %v4040 = vsel %vm2584, %v4021, 0
      %v4043 = vsel %vm2584, %v4022, 0
      %v4046 = vsel %vm2584, %v4023, 0
      %4048 = vmatpush.msra.mxu0 0.0
      %4049 = vmatpush.msra.mxu0 0.0
      %4050 = vmatpush.msra.mxu0 0.0
      %4051 = vmatpush.msra.mxu0 0.0
      %4052 = vmatpush.msra.mxu0 0.0
      %4053 = vmatpush.msra.mxu0 0.0
      %4054 = vmatpush.msra.mxu0 0.0
      %4055 = vmatpush.msra.mxu0 0.0
      %4056 = vmatpush.msra.mxu0 %v4013
      %4057 = vmatpush.msra.mxu0 %v4011
      %4058 = vmatpush.msra.mxu0 %v4009
      %4059 = vmatpush.msra.mxu0 %v4007
      %4060 = vmatpush.msra.mxu0 %v4005
      %4061 = vmatpush.msra.mxu0 %v4003
      %4062 = vmatpush.msra.mxu0 %v4001
      %4063 = vmatpush.msra.mxu0 %v3999
      %4064 = vmatmul.f32.gmra.mxu0 %v4025
      %v4065 = vpop.f32.mrf.mxu0
      %v4066 = vadd.f32 0.0, %v4065
      %4067 = vmatmul.f32.gmra.mxu0 %v4028
      %v4068 = vpop.f32.mrf.mxu0
      %v4069 = vadd.f32 0.0, %v4068
      %4070 = vmatmul.f32.gmra.mxu0 %v4031
      %v4071 = vpop.f32.mrf.mxu0
      %v4072 = vadd.f32 0.0, %v4071
      %4073 = vmatmul.f32.gmra.mxu0 %v4034
      %v4074 = vpop.f32.mrf.mxu0
      %v4075 = vadd.f32 0.0, %v4074
      %4076 = vmatmul.f32.gmra.mxu0 %v4037
      %v4077 = vpop.f32.mrf.mxu0
      %v4078 = vadd.f32 0.0, %v4077
      %4079 = vmatmul.f32.gmra.mxu0 %v4040
      %v4080 = vpop.f32.mrf.mxu0
      %v4081 = vadd.f32 0.0, %v4080
      %4082 = vmatmul.f32.gmra.mxu0 %v4043
      %v4083 = vpop.f32.mrf.mxu0
      %v4084 = vadd.f32 0.0, %v4083
      %4085 = vmatmul.f32.gmra.mxu0 %v4046
      %v4086 = vpop.f32.mrf.mxu0
      %v4087 = vadd.f32 0.0, %v4086
      %4088 = vdwg.mxu0
      %4089 = vmatpush.msra.mxu0 0.0
      %4090 = vmatpush.msra.mxu0 0.0
      %4091 = vmatpush.msra.mxu0 0.0
      %4092 = vmatpush.msra.mxu0 0.0
      %4093 = vmatpush.msra.mxu0 0.0
      %4094 = vmatpush.msra.mxu0 0.0
      %4095 = vmatpush.msra.mxu0 0.0
      %4096 = vmatpush.msra.mxu0 0.0
      %4097 = vmatpush.msra.mxu0 %v4014
      %4098 = vmatpush.msra.mxu0 %v4012
      %4099 = vmatpush.msra.mxu0 %v4010
      %4100 = vmatpush.msra.mxu0 %v4008
      %4101 = vmatpush.msra.mxu0 %v4006
      %4102 = vmatpush.msra.mxu0 %v4004
      %4103 = vmatpush.msra.mxu0 %v4002
      %4104 = vmatpush.msra.mxu0 %v4000
      %4105 = vmatmul.f32.gmra.mxu0 %v4025
      %v4106 = vpop.f32.mrf.mxu0
      %v4107 = vadd.f32 0.0, %v4106
      %4108 = vmatmul.f32.gmra.mxu0 %v4028
      %v4109 = vpop.f32.mrf.mxu0
      %v4110 = vadd.f32 0.0, %v4109
      %4111 = vmatmul.f32.gmra.mxu0 %v4031
      %v4112 = vpop.f32.mrf.mxu0
      %v4113 = vadd.f32 0.0, %v4112
      %4114 = vmatmul.f32.gmra.mxu0 %v4034
      %v4115 = vpop.f32.mrf.mxu0
      %v4116 = vadd.f32 0.0, %v4115
      %4117 = vmatmul.f32.gmra.mxu0 %v4037
      %v4118 = vpop.f32.mrf.mxu0
      %v4119 = vadd.f32 0.0, %v4118
      %4120 = vmatmul.f32.gmra.mxu0 %v4040
      %v4121 = vpop.f32.mrf.mxu0
      %v4122 = vadd.f32 0.0, %v4121
      %4123 = vmatmul.f32.gmra.mxu0 %v4043
      %v4124 = vpop.f32.mrf.mxu0
      %v4125 = vadd.f32 0.0, %v4124
      %4126 = vmatmul.f32.gmra.mxu0 %v4046
      %v4127 = vpop.f32.mrf.mxu0
      %v4128 = vadd.f32 0.0, %v4127
      %4129 = vdwg.mxu0
      %v4130 = vadd.f32 %v3927, %v4066
      %v4131 = vadd.f32 %v3928, %v4107
      %v4132 = vadd.f32 %v3929, %v4069
      %v4133 = vadd.f32 %v3930, %v4110
      %v4134 = vadd.f32 %v3931, %v4072
      %v4135 = vadd.f32 %v3932, %v4113
      %v4136 = vadd.f32 %v3933, %v4075
      %v4137 = vadd.f32 %v3934, %v4116
      %v4138 = vadd.f32 %v3935, %v4078
      %v4139 = vadd.f32 %v3936, %v4119
      %v4140 = vadd.f32 %v3937, %v4081
      %v4141 = vadd.f32 %v3938, %v4122
      %v4142 = vadd.f32 %v3939, %v4084
      %v4143 = vadd.f32 %v3940, %v4125
      %v4144 = vadd.f32 %v3941, %v4087
      %v4145 = vadd.f32 %v3942, %v4128
      %v4146 = vld [vmem:[%s9] sm:$0xff]
      %v4147 = vld [vmem:[%s9 + $0x8] sm:$0xff]
      %v4148 = vld [vmem:[%s9 + $0x10] sm:$0xff]
      %v4149 = vld [vmem:[%s9 + $0x18] sm:$0xff]
      %v4150 = vld [vmem:[%s9 + $0x20] sm:$0xff]
      %v4151 = vld [vmem:[%s9 + $0x28] sm:$0xff]
      %v4152 = vld [vmem:[%s9 + $0x30] sm:$0xff]
      %v4153 = vld [vmem:[%s9 + $0x38] sm:$0xff]
      %4155 = vset.pattern.permute.xlu0 0
      %4156 = vperm.xlu0 %4155, %v4146
      %v4157 = vpop.permute.xlu0 %4156
      %4160 = vset.pattern.permute.xlu0 0
      %4161 = vperm.xlu0 %4160, %v4147
      %v4162 = vpop.permute.xlu0 %4161
      %4165 = vset.pattern.permute.xlu0 0
      %4166 = vperm.xlu0 %4165, %v4148
      %v4167 = vpop.permute.xlu0 %4166
      %4170 = vset.pattern.permute.xlu0 0
      %4171 = vperm.xlu0 %4170, %v4149
      %v4172 = vpop.permute.xlu0 %4171
      %4175 = vset.pattern.permute.xlu0 0
      %4176 = vperm.xlu0 %4175, %v4150
      %v4177 = vpop.permute.xlu0 %4176
      %4180 = vset.pattern.permute.xlu0 0
      %4181 = vperm.xlu0 %4180, %v4151
      %v4182 = vpop.permute.xlu0 %4181
      %4185 = vset.pattern.permute.xlu0 0
      %4186 = vperm.xlu0 %4185, %v4152
      %v4187 = vpop.permute.xlu0 %4186
      %4190 = vset.pattern.permute.xlu0 0
      %4191 = vperm.xlu0 %4190, %v4153
      %v4192 = vpop.permute.xlu0 %4191
      %v4194 = vmul.f32 %v4130, %v4157
      %v4195 = vmul.f32 %v4131, %v4157
      %v4196 = vmul.f32 %v4132, %v4162
      %v4197 = vmul.f32 %v4133, %v4162
      %v4198 = vmul.f32 %v4134, %v4167
      %v4199 = vmul.f32 %v4135, %v4167
      %v4200 = vmul.f32 %v4136, %v4172
      %v4201 = vmul.f32 %v4137, %v4172
      %v4202 = vmul.f32 %v4138, %v4177
      %v4203 = vmul.f32 %v4139, %v4177
      %v4204 = vmul.f32 %v4140, %v4182
      %v4205 = vmul.f32 %v4141, %v4182
      %v4206 = vmul.f32 %v4142, %v4187
      %v4207 = vmul.f32 %v4143, %v4187
      %v4208 = vmul.f32 %v4144, %v4192
      %v4209 = vmul.f32 %v4145, %v4192
      %v4210 = vld [vmem:[%s10] sm:$0xff]
      %v4211 = vld [vmem:[%s10 + $0x8] sm:$0xff]
      %v4212 = vld [vmem:[%s10 + $0x10] sm:$0xff]
      %v4213 = vld [vmem:[%s10 + $0x18] sm:$0xff]
      %v4214 = vld [vmem:[%s10 + $0x20] sm:$0xff]
      %v4215 = vld [vmem:[%s10 + $0x28] sm:$0xff]
      %v4216 = vld [vmem:[%s10 + $0x30] sm:$0xff]
      %v4217 = vld [vmem:[%s10 + $0x38] sm:$0xff]
      %4219 = vset.pattern.permute.xlu0 0
      %4220 = vperm.xlu0 %4219, %v4210
      %v4221 = vpop.permute.xlu0 %4220
      %4224 = vset.pattern.permute.xlu0 0
      %4225 = vperm.xlu0 %4224, %v4211
      %v4226 = vpop.permute.xlu0 %4225
      %4229 = vset.pattern.permute.xlu0 0
      %4230 = vperm.xlu0 %4229, %v4212
      %v4231 = vpop.permute.xlu0 %4230
      %4234 = vset.pattern.permute.xlu0 0
      %4235 = vperm.xlu0 %4234, %v4213
      %v4236 = vpop.permute.xlu0 %4235
      %4239 = vset.pattern.permute.xlu0 0
      %4240 = vperm.xlu0 %4239, %v4214
      %v4241 = vpop.permute.xlu0 %4240
      %4244 = vset.pattern.permute.xlu0 0
      %4245 = vperm.xlu0 %4244, %v4215
      %v4246 = vpop.permute.xlu0 %4245
      %4249 = vset.pattern.permute.xlu0 0
      %4250 = vperm.xlu0 %4249, %v4216
      %v4251 = vpop.permute.xlu0 %4250
      %4254 = vset.pattern.permute.xlu0 0
      %4255 = vperm.xlu0 %4254, %v4217
      %v4256 = vpop.permute.xlu0 %4255
      %v4258 = vadd.f32 %v4194, %v4221
      %v4259 = vadd.f32 %v4195, %v4221
      %v4260 = vadd.f32 %v4196, %v4226
      %v4261 = vadd.f32 %v4197, %v4226
      %v4262 = vadd.f32 %v4198, %v4231
      %v4263 = vadd.f32 %v4199, %v4231
      %v4264 = vadd.f32 %v4200, %v4236
      %v4265 = vadd.f32 %v4201, %v4236
      %v4266 = vadd.f32 %v4202, %v4241
      %v4267 = vadd.f32 %v4203, %v4241
      %v4268 = vadd.f32 %v4204, %v4246
      %v4269 = vadd.f32 %v4205, %v4246
      %v4270 = vadd.f32 %v4206, %v4251
      %v4271 = vadd.f32 %v4207, %v4251
      %v4272 = vadd.f32 %v4208, %v4256
      %v4273 = vadd.f32 %v4209, %v4256
      %v4274 = vmul.f32 %v4258, 0.5
      %v4275 = vmul.f32 %v4259, 0.5
      %v4276 = vmul.f32 %v4260, 0.5
      %v4277 = vmul.f32 %v4261, 0.5
      %v4278 = vmul.f32 %v4262, 0.5
      %v4279 = vmul.f32 %v4263, 0.5
      %v4280 = vmul.f32 %v4264, 0.5
      %v4281 = vmul.f32 %v4265, 0.5
      %v4282 = vmul.f32 %v4266, 0.5
      %v4283 = vmul.f32 %v4267, 0.5
      %v4284 = vmul.f32 %v4268, 0.5
      %v4285 = vmul.f32 %v4269, 0.5
      %v4286 = vmul.f32 %v4270, 0.5
      %v4287 = vmul.f32 %v4271, 0.5
      %v4288 = vmul.f32 %v4272, 0.5
      %v4289 = vmul.f32 %v4273, 0.5
      %v4290 = vmul.f32 %v4258, 0.044715
      %v4291 = vmul.f32 %v4259, 0.044715
      %v4292 = vmul.f32 %v4260, 0.044715
      %v4293 = vmul.f32 %v4261, 0.044715
      %v4294 = vmul.f32 %v4262, 0.044715
      %v4295 = vmul.f32 %v4263, 0.044715
      %v4296 = vmul.f32 %v4264, 0.044715
      %v4297 = vmul.f32 %v4265, 0.044715
      %v4298 = vmul.f32 %v4266, 0.044715
      %v4299 = vmul.f32 %v4267, 0.044715
      %v4300 = vmul.f32 %v4268, 0.044715
      %v4301 = vmul.f32 %v4269, 0.044715
      %v4302 = vmul.f32 %v4270, 0.044715
      %v4303 = vmul.f32 %v4271, 0.044715
      %v4304 = vmul.f32 %v4272, 0.044715
      %v4305 = vmul.f32 %v4273, 0.044715
      %v4306 = vmul.f32 %v4290, %v4258
      %v4307 = vmul.f32 %v4291, %v4259
      %v4308 = vmul.f32 %v4292, %v4260
      %v4309 = vmul.f32 %v4293, %v4261
      %v4310 = vmul.f32 %v4294, %v4262
      %v4311 = vmul.f32 %v4295, %v4263
      %v4312 = vmul.f32 %v4296, %v4264
      %v4313 = vmul.f32 %v4297, %v4265
      %v4314 = vmul.f32 %v4298, %v4266
      %v4315 = vmul.f32 %v4299, %v4267
      %v4316 = vmul.f32 %v4300, %v4268
      %v4317 = vmul.f32 %v4301, %v4269
      %v4318 = vmul.f32 %v4302, %v4270
      %v4319 = vmul.f32 %v4303, %v4271
      %v4320 = vmul.f32 %v4304, %v4272
      %v4321 = vmul.f32 %v4305, %v4273
      %v4322 = vmul.f32 %v4306, %v4258
      %v4323 = vmul.f32 %v4307, %v4259
      %v4324 = vmul.f32 %v4308, %v4260
      %v4325 = vmul.f32 %v4309, %v4261
      %v4326 = vmul.f32 %v4310, %v4262
      %v4327 = vmul.f32 %v4311, %v4263
      %v4328 = vmul.f32 %v4312, %v4264
      %v4329 = vmul.f32 %v4313, %v4265
      %v4330 = vmul.f32 %v4314, %v4266
      %v4331 = vmul.f32 %v4315, %v4267
      %v4332 = vmul.f32 %v4316, %v4268
      %v4333 = vmul.f32 %v4317, %v4269
      %v4334 = vmul.f32 %v4318, %v4270
      %v4335 = vmul.f32 %v4319, %v4271
      %v4336 = vmul.f32 %v4320, %v4272
      %v4337 = vmul.f32 %v4321, %v4273
      %v4338 = vadd.f32 %v4258, %v4322
      %v4339 = vadd.f32 %v4259, %v4323
      %v4340 = vadd.f32 %v4260, %v4324
      %v4341 = vadd.f32 %v4261, %v4325
      %v4342 = vadd.f32 %v4262, %v4326
      %v4343 = vadd.f32 %v4263, %v4327
      %v4344 = vadd.f32 %v4264, %v4328
      %v4345 = vadd.f32 %v4265, %v4329
      %v4346 = vadd.f32 %v4266, %v4330
      %v4347 = vadd.f32 %v4267, %v4331
      %v4348 = vadd.f32 %v4268, %v4332
      %v4349 = vadd.f32 %v4269, %v4333
      %v4350 = vadd.f32 %v4270, %v4334
      %v4351 = vadd.f32 %v4271, %v4335
      %v4352 = vadd.f32 %v4272, %v4336
      %v4353 = vadd.f32 %v4273, %v4337
      %v4354 = vmul.f32 %v4338, 0.7978846
      %v4355 = vmul.f32 %v4339, 0.7978846
      %v4356 = vmul.f32 %v4340, 0.7978846
      %v4357 = vmul.f32 %v4341, 0.7978846
      %v4358 = vmul.f32 %v4342, 0.7978846
      %v4359 = vmul.f32 %v4343, 0.7978846
      %v4360 = vmul.f32 %v4344, 0.7978846
      %v4361 = vmul.f32 %v4345, 0.7978846
      %v4362 = vmul.f32 %v4346, 0.7978846
      %v4363 = vmul.f32 %v4347, 0.7978846
      %v4364 = vmul.f32 %v4348, 0.7978846
      %v4365 = vmul.f32 %v4349, 0.7978846
      %v4366 = vmul.f32 %v4350, 0.7978846
      %v4367 = vmul.f32 %v4351, 0.7978846
      %v4368 = vmul.f32 %v4352, 0.7978846
      %v4369 = vmul.f32 %v4353, 0.7978846
      %v4370 = vtanh.pop %v4354
      %v4371 = vtanh.pop %v4355
      %v4372 = vtanh.pop %v4356
      %v4373 = vtanh.pop %v4357
      %v4374 = vtanh.pop %v4358
      %v4375 = vtanh.pop %v4359
      %v4376 = vtanh.pop %v4360
      %v4377 = vtanh.pop %v4361
      %v4378 = vtanh.pop %v4362
      %v4379 = vtanh.pop %v4363
      %v4380 = vtanh.pop %v4364
      %v4381 = vtanh.pop %v4365
      %v4382 = vtanh.pop %v4366
      %v4383 = vtanh.pop %v4367
      %v4384 = vtanh.pop %v4368
      %v4385 = vtanh.pop %v4369
      %v4386 = vadd.f32 %v4370, 1.0
      %v4387 = vadd.f32 %v4371, 1.0
      %v4388 = vadd.f32 %v4372, 1.0
      %v4389 = vadd.f32 %v4373, 1.0
      %v4390 = vadd.f32 %v4374, 1.0
      %v4391 = vadd.f32 %v4375, 1.0
      %v4392 = vadd.f32 %v4376, 1.0
      %v4393 = vadd.f32 %v4377, 1.0
      %v4394 = vadd.f32 %v4378, 1.0
      %v4395 = vadd.f32 %v4379, 1.0
      %v4396 = vadd.f32 %v4380, 1.0
      %v4397 = vadd.f32 %v4381, 1.0
      %v4398 = vadd.f32 %v4382, 1.0
      %v4399 = vadd.f32 %v4383, 1.0
      %v4400 = vadd.f32 %v4384, 1.0
      %v4401 = vadd.f32 %v4385, 1.0
      %v4402 = vmul.f32 %v4274, %v4386
      %v4403 = vmul.f32 %v4275, %v4387
      %v4404 = vmul.f32 %v4276, %v4388
      %v4405 = vmul.f32 %v4277, %v4389
      %v4406 = vmul.f32 %v4278, %v4390
      %v4407 = vmul.f32 %v4279, %v4391
      %v4408 = vmul.f32 %v4280, %v4392
      %v4409 = vmul.f32 %v4281, %v4393
      %v4410 = vmul.f32 %v4282, %v4394
      %v4411 = vmul.f32 %v4283, %v4395
      %v4412 = vmul.f32 %v4284, %v4396
      %v4413 = vmul.f32 %v4285, %v4397
      %v4414 = vmul.f32 %v4286, %v4398
      %v4415 = vmul.f32 %v4287, %v4399
      %v4416 = vmul.f32 %v4288, %v4400
      %v4417 = vmul.f32 %v4289, %v4401
      %v4418 = vld [vmem:[%s4] sm:$0x3]
      %v4420 = vperm.slane %v4418, 0
      %v4421 = vperm.slane %v4418, 1
      %v4424 = vmul.f32 %v4402, %v4420
      %v4425 = vmul.f32 %v4403, %v4421
      %v4426 = vmul.f32 %v4404, %v4420
      %v4427 = vmul.f32 %v4405, %v4421
      %v4428 = vmul.f32 %v4406, %v4420
      %v4429 = vmul.f32 %v4407, %v4421
      %v4430 = vmul.f32 %v4408, %v4420
      %v4431 = vmul.f32 %v4409, %v4421
      %v4432 = vmul.f32 %v4410, %v4420
      %v4433 = vmul.f32 %v4411, %v4421
      %v4434 = vmul.f32 %v4412, %v4420
      %v4435 = vmul.f32 %v4413, %v4421
      %v4436 = vmul.f32 %v4414, %v4420
      %v4437 = vmul.f32 %v4415, %v4421
      %v4438 = vmul.f32 %v4416, %v4420
      %v4439 = vmul.f32 %v4417, %v4421
      %4440 = vrot.lane.b32.xlu0 %v4424, 17
      %v4441 = vpop.permute.xlu0 %4440
      %4442 = vrot.lane.b32.xlu0 %v4426, 17
      %v4443 = vpop.permute.xlu0 %4442
      %4444 = vrot.lane.b32.xlu0 %v4428, 17
      %v4445 = vpop.permute.xlu0 %4444
      %4446 = vrot.lane.b32.xlu0 %v4430, 17
      %v4447 = vpop.permute.xlu0 %4446
      %4448 = vrot.lane.b32.xlu0 %v4432, 17
      %v4449 = vpop.permute.xlu0 %4448
      %4450 = vrot.lane.b32.xlu0 %v4434, 17
      %v4451 = vpop.permute.xlu0 %4450
      %4452 = vrot.lane.b32.xlu0 %v4436, 17
      %v4453 = vpop.permute.xlu0 %4452
      %4454 = vrot.lane.b32.xlu0 %v4438, 17
      %v4455 = vpop.permute.xlu0 %4454
      %4456 = vrot.lane.b32.xlu0 %v4425, 17
      %v4457 = vpop.permute.xlu0 %4456
      %4458 = vrot.lane.b32.xlu0 %v4427, 17
      %v4459 = vpop.permute.xlu0 %4458
      %4460 = vrot.lane.b32.xlu0 %v4429, 17
      %v4461 = vpop.permute.xlu0 %4460
      %4462 = vrot.lane.b32.xlu0 %v4431, 17
      %v4463 = vpop.permute.xlu0 %4462
      %4464 = vrot.lane.b32.xlu0 %v4433, 17
      %v4465 = vpop.permute.xlu0 %4464
      %4466 = vrot.lane.b32.xlu0 %v4435, 17
      %v4467 = vpop.permute.xlu0 %4466
      %4468 = vrot.lane.b32.xlu0 %v4437, 17
      %v4469 = vpop.permute.xlu0 %4468
      %4470 = vrot.lane.b32.xlu0 %v4439, 17
      %v4471 = vpop.permute.xlu0 %4470
      %v4472 = vsel %vm707, %v4441, %v4457
      %v4473 = vsel %vm707, %v4443, %v4459
      %v4474 = vsel %vm707, %v4445, %v4461
      %v4475 = vsel %vm707, %v4447, %v4463
      %v4476 = vsel %vm707, %v4449, %v4465
      %v4477 = vsel %vm707, %v4451, %v4467
      %v4478 = vsel %vm707, %v4453, %v4469
      %v4479 = vsel %vm707, %v4455, %v4471
      %v4480 = vsel %vm707, %v4457, %v4441
      %v4481 = vsel %vm707, %v4459, %v4443
      %v4482 = vsel %vm707, %v4461, %v4445
      %v4483 = vsel %vm707, %v4463, %v4447
      %v4484 = vsel %vm707, %v4465, %v4449
      %v4485 = vsel %vm707, %v4467, %v4451
      %v4486 = vsel %vm707, %v4469, %v4453
      %v4487 = vsel %vm707, %v4471, %v4455
      %v4488 = vmul.f32 %v4480, %v716
      %v4489 = vmul.f32 %v4472, %v717
      %v4490 = vmul.f32 %v4481, %v716
      %v4491 = vmul.f32 %v4473, %v717
      %v4492 = vmul.f32 %v4482, %v716
      %v4493 = vmul.f32 %v4474, %v717
      %v4494 = vmul.f32 %v4483, %v716
      %v4495 = vmul.f32 %v4475, %v717
      %v4496 = vmul.f32 %v4484, %v716
      %v4497 = vmul.f32 %v4476, %v717
      %v4498 = vmul.f32 %v4485, %v716
      %v4499 = vmul.f32 %v4477, %v717
      %v4500 = vmul.f32 %v4486, %v716
      %v4501 = vmul.f32 %v4478, %v717
      %v4502 = vmul.f32 %v4487, %v716
      %v4503 = vmul.f32 %v4479, %v717
      %v4504 = vld [vmem:[%s11] sm:$0xff]
      %v4505 = vld [vmem:[%s11 + $0x8] sm:$0xff]
      %v4506 = vld [vmem:[%s11 + $0x10] sm:$0x7]
      %4507 = vrot.lane.b32.xlu0 %v4424, 16
      %v4508 = vpop.permute.xlu0 %4507
      %4509 = vrot.lane.b32.xlu0 %v4426, 16
      %v4510 = vpop.permute.xlu0 %4509
      %4511 = vrot.lane.b32.xlu0 %v4428, 16
      %v4512 = vpop.permute.xlu0 %4511
      %4513 = vrot.lane.b32.xlu0 %v4430, 16
      %v4514 = vpop.permute.xlu0 %4513
      %4515 = vrot.lane.b32.xlu0 %v4432, 16
      %v4516 = vpop.permute.xlu0 %4515
      %4517 = vrot.lane.b32.xlu0 %v4434, 16
      %v4518 = vpop.permute.xlu0 %4517
      %4519 = vrot.lane.b32.xlu0 %v4436, 16
      %v4520 = vpop.permute.xlu0 %4519
      %4521 = vrot.lane.b32.xlu0 %v4438, 16
      %v4522 = vpop.permute.xlu0 %4521
      %4523 = vrot.lane.b32.xlu0 %v4425, 16
      %v4524 = vpop.permute.xlu0 %4523
      %4525 = vrot.lane.b32.xlu0 %v4427, 16
      %v4526 = vpop.permute.xlu0 %4525
      %4527 = vrot.lane.b32.xlu0 %v4429, 16
      %v4528 = vpop.permute.xlu0 %4527
      %4529 = vrot.lane.b32.xlu0 %v4431, 16
      %v4530 = vpop.permute.xlu0 %4529
      %4531 = vrot.lane.b32.xlu0 %v4433, 16
      %v4532 = vpop.permute.xlu0 %4531
      %4533 = vrot.lane.b32.xlu0 %v4435, 16
      %v4534 = vpop.permute.xlu0 %4533
      %4535 = vrot.lane.b32.xlu0 %v4437, 16
      %v4536 = vpop.permute.xlu0 %4535
      %4537 = vrot.lane.b32.xlu0 %v4439, 16
      %v4538 = vpop.permute.xlu0 %4537
      %v4539 = vsel %vm746, %v4508, %v4524
      %v4540 = vsel %vm746, %v4510, %v4526
      %v4541 = vsel %vm746, %v4512, %v4528
      %v4542 = vsel %vm746, %v4514, %v4530
      %v4543 = vsel %vm746, %v4516, %v4532
      %v4544 = vsel %vm746, %v4518, %v4534
      %v4545 = vsel %vm746, %v4520, %v4536
      %v4546 = vsel %vm746, %v4522, %v4538
      %v4547 = vsel %vm746, %v4524, %v4508
      %v4548 = vsel %vm746, %v4526, %v4510
      %v4549 = vsel %vm746, %v4528, %v4512
      %v4550 = vsel %vm746, %v4530, %v4514
      %v4551 = vsel %vm746, %v4532, %v4516
      %v4552 = vsel %vm746, %v4534, %v4518
      %v4553 = vsel %vm746, %v4536, %v4520
      %v4554 = vsel %vm746, %v4538, %v4522
      %v4555 = vmul.f32 %v4547, %v756
      %v4556 = vmul.f32 %v4539, %v757
      %v4557 = vmul.f32 %v4548, %v756
      %v4558 = vmul.f32 %v4540, %v757
      %v4559 = vmul.f32 %v4549, %v756
      %v4560 = vmul.f32 %v4541, %v757
      %v4561 = vmul.f32 %v4550, %v756
      %v4562 = vmul.f32 %v4542, %v757
      %v4563 = vmul.f32 %v4551, %v756
      %v4564 = vmul.f32 %v4543, %v757
      %v4565 = vmul.f32 %v4552, %v756
      %v4566 = vmul.f32 %v4544, %v757
      %v4567 = vmul.f32 %v4553, %v756
      %v4568 = vmul.f32 %v4545, %v757
      %v4569 = vmul.f32 %v4554, %v756
      %v4570 = vmul.f32 %v4546, %v757
      %s4571 = scalar_lea.vmem %s11, 24
      %v4572 = vld [vmem:[%s4571] sm:$0xff]
      %v4573 = vld [vmem:[%s4571 + $0x8] sm:$0xff]
      %v4574 = vld [vmem:[%s4571 + $0x10] sm:$0x7]
      %v4576 = vsel %vm2584, %v4572, 0
      %v4579 = vsel %vm2584, %v4573, 0
      %v4582 = vsel %vm2584, %v4574, 0
      %4584 = vmatpush.msra.mxu0 0.0
      %4585 = vmatpush.msra.mxu0 0.0
      %4586 = vmatpush.msra.mxu0 0.0
      %4587 = vmatpush.msra.mxu0 0.0
      %4588 = vmatpush.msra.mxu0 0.0
      %4589 = vmatpush.msra.mxu0 0.0
      %4590 = vmatpush.msra.mxu0 0.0
      %4591 = vmatpush.msra.mxu0 0.0
      %4592 = vmatpush.msra.mxu0 %v4569
      %4593 = vmatpush.msra.mxu0 %v4567
      %4594 = vmatpush.msra.mxu0 %v4565
      %4595 = vmatpush.msra.mxu0 %v4563
      %4596 = vmatpush.msra.mxu0 %v4561
      %4597 = vmatpush.msra.mxu0 %v4559
      %4598 = vmatpush.msra.mxu0 %v4557
      %4599 = vmatpush.msra.mxu0 %v4555
      %4600 = vmatmul.f32.gmra.mxu0 %v4576
      %v4601 = vpop.f32.mrf.mxu0
      %v4602 = vadd.f32 0.0, %v4601
      %4603 = vmatmul.f32.gmra.mxu0 %v4579
      %v4604 = vpop.f32.mrf.mxu0
      %v4605 = vadd.f32 0.0, %v4604
      %4606 = vmatmul.f32.gmra.mxu0 %v4582
      %v4607 = vpop.f32.mrf.mxu0
      %v4608 = vadd.f32 0.0, %v4607
      %4609 = vdwg.mxu0
      %4610 = vmatpush.msra.mxu0 0.0
      %4611 = vmatpush.msra.mxu0 0.0
      %4612 = vmatpush.msra.mxu0 0.0
      %4613 = vmatpush.msra.mxu0 0.0
      %4614 = vmatpush.msra.mxu0 0.0
      %4615 = vmatpush.msra.mxu0 0.0
      %4616 = vmatpush.msra.mxu0 0.0
      %4617 = vmatpush.msra.mxu0 0.0
      %4618 = vmatpush.msra.mxu0 %v4570
      %4619 = vmatpush.msra.mxu0 %v4568
      %4620 = vmatpush.msra.mxu0 %v4566
      %4621 = vmatpush.msra.mxu0 %v4564
      %4622 = vmatpush.msra.mxu0 %v4562
      %4623 = vmatpush.msra.mxu0 %v4560
      %4624 = vmatpush.msra.mxu0 %v4558
      %4625 = vmatpush.msra.mxu0 %v4556
      %4626 = vmatmul.f32.gmra.mxu0 %v4576
      %v4627 = vpop.f32.mrf.mxu0
      %v4628 = vadd.f32 0.0, %v4627
      %4629 = vmatmul.f32.gmra.mxu0 %v4579
      %v4630 = vpop.f32.mrf.mxu0
      %v4631 = vadd.f32 0.0, %v4630
      %4632 = vmatmul.f32.gmra.mxu0 %v4582
      %v4633 = vpop.f32.mrf.mxu0
      %v4634 = vadd.f32 0.0, %v4633
      %4635 = vdwg.mxu0
      %v4637 = vsel %vm2584, %v4504, 0
      %v4640 = vsel %vm2584, %v4505, 0
      %v4643 = vsel %vm2584, %v4506, 0
      %4645 = vmatpush.msra.mxu0 0.0
      %4646 = vmatpush.msra.mxu0 0.0
      %4647 = vmatpush.msra.mxu0 0.0
      %4648 = vmatpush.msra.mxu0 0.0
      %4649 = vmatpush.msra.mxu0 0.0
      %4650 = vmatpush.msra.mxu0 0.0
      %4651 = vmatpush.msra.mxu0 0.0
      %4652 = vmatpush.msra.mxu0 0.0
      %4653 = vmatpush.msra.mxu0 %v4502
      %4654 = vmatpush.msra.mxu0 %v4500
      %4655 = vmatpush.msra.mxu0 %v4498
      %4656 = vmatpush.msra.mxu0 %v4496
      %4657 = vmatpush.msra.mxu0 %v4494
      %4658 = vmatpush.msra.mxu0 %v4492
      %4659 = vmatpush.msra.mxu0 %v4490
      %4660 = vmatpush.msra.mxu0 %v4488
      %4661 = vmatmul.f32.gmra.mxu0 %v4637
      %v4662 = vpop.f32.mrf.mxu0
      %v4663 = vadd.f32 %v4602, %v4662
      %4664 = vmatmul.f32.gmra.mxu0 %v4640
      %v4665 = vpop.f32.mrf.mxu0
      %v4666 = vadd.f32 %v4605, %v4665
      %4667 = vmatmul.f32.gmra.mxu0 %v4643
      %v4668 = vpop.f32.mrf.mxu0
      %v4669 = vadd.f32 %v4608, %v4668
      %4670 = vdwg.mxu0
      %4671 = vmatpush.msra.mxu0 0.0
      %4672 = vmatpush.msra.mxu0 0.0
      %4673 = vmatpush.msra.mxu0 0.0
      %4674 = vmatpush.msra.mxu0 0.0
      %4675 = vmatpush.msra.mxu0 0.0
      %4676 = vmatpush.msra.mxu0 0.0
      %4677 = vmatpush.msra.mxu0 0.0
      %4678 = vmatpush.msra.mxu0 0.0
      %4679 = vmatpush.msra.mxu0 %v4503
      %4680 = vmatpush.msra.mxu0 %v4501
      %4681 = vmatpush.msra.mxu0 %v4499
      %4682 = vmatpush.msra.mxu0 %v4497
      %4683 = vmatpush.msra.mxu0 %v4495
      %4684 = vmatpush.msra.mxu0 %v4493
      %4685 = vmatpush.msra.mxu0 %v4491
      %4686 = vmatpush.msra.mxu0 %v4489
      %4687 = vmatmul.f32.gmra.mxu0 %v4637
      %v4688 = vpop.f32.mrf.mxu0
      %v4689 = vadd.f32 %v4628, %v4688
      %4690 = vmatmul.f32.gmra.mxu0 %v4640
      %v4691 = vpop.f32.mrf.mxu0
      %v4692 = vadd.f32 %v4631, %v4691
      %4693 = vmatmul.f32.gmra.mxu0 %v4643
      %v4694 = vpop.f32.mrf.mxu0
      %v4695 = vadd.f32 %v4634, %v4694
      %4696 = vdwg.mxu0
      %4697 = vrot.lane.b32.xlu0 %v4424, 15
      %v4698 = vpop.permute.xlu0 %4697
      %4699 = vrot.lane.b32.xlu0 %v4426, 15
      %v4700 = vpop.permute.xlu0 %4699
      %4701 = vrot.lane.b32.xlu0 %v4428, 15
      %v4702 = vpop.permute.xlu0 %4701
      %4703 = vrot.lane.b32.xlu0 %v4430, 15
      %v4704 = vpop.permute.xlu0 %4703
      %4705 = vrot.lane.b32.xlu0 %v4432, 15
      %v4706 = vpop.permute.xlu0 %4705
      %4707 = vrot.lane.b32.xlu0 %v4434, 15
      %v4708 = vpop.permute.xlu0 %4707
      %4709 = vrot.lane.b32.xlu0 %v4436, 15
      %v4710 = vpop.permute.xlu0 %4709
      %4711 = vrot.lane.b32.xlu0 %v4438, 15
      %v4712 = vpop.permute.xlu0 %4711
      %4713 = vrot.lane.b32.xlu0 %v4425, 15
      %v4714 = vpop.permute.xlu0 %4713
      %4715 = vrot.lane.b32.xlu0 %v4427, 15
      %v4716 = vpop.permute.xlu0 %4715
      %4717 = vrot.lane.b32.xlu0 %v4429, 15
      %v4718 = vpop.permute.xlu0 %4717
      %4719 = vrot.lane.b32.xlu0 %v4431, 15
      %v4720 = vpop.permute.xlu0 %4719
      %4721 = vrot.lane.b32.xlu0 %v4433, 15
      %v4722 = vpop.permute.xlu0 %4721
      %4723 = vrot.lane.b32.xlu0 %v4435, 15
      %v4724 = vpop.permute.xlu0 %4723
      %4725 = vrot.lane.b32.xlu0 %v4437, 15
      %v4726 = vpop.permute.xlu0 %4725
      %4727 = vrot.lane.b32.xlu0 %v4439, 15
      %v4728 = vpop.permute.xlu0 %4727
      %v4729 = vsel %vm1013, %v4698, %v4714
      %v4730 = vsel %vm1013, %v4700, %v4716
      %v4731 = vsel %vm1013, %v4702, %v4718
      %v4732 = vsel %vm1013, %v4704, %v4720
      %v4733 = vsel %vm1013, %v4706, %v4722
      %v4734 = vsel %vm1013, %v4708, %v4724
      %v4735 = vsel %vm1013, %v4710, %v4726
      %v4736 = vsel %vm1013, %v4712, %v4728
      %v4737 = vsel %vm1013, %v4714, %v4698
      %v4738 = vsel %vm1013, %v4716, %v4700
      %v4739 = vsel %vm1013, %v4718, %v4702
      %v4740 = vsel %vm1013, %v4720, %v4704
      %v4741 = vsel %vm1013, %v4722, %v4706
      %v4742 = vsel %vm1013, %v4724, %v4708
      %v4743 = vsel %vm1013, %v4726, %v4710
      %v4744 = vsel %vm1013, %v4728, %v4712
      %v4745 = vmul.f32 %v4737, %v1023
      %v4746 = vmul.f32 %v4729, %v1024
      %v4747 = vmul.f32 %v4738, %v1023
      %v4748 = vmul.f32 %v4730, %v1024
      %v4749 = vmul.f32 %v4739, %v1023
      %v4750 = vmul.f32 %v4731, %v1024
      %v4751 = vmul.f32 %v4740, %v1023
      %v4752 = vmul.f32 %v4732, %v1024
      %v4753 = vmul.f32 %v4741, %v1023
      %v4754 = vmul.f32 %v4733, %v1024
      %v4755 = vmul.f32 %v4742, %v1023
      %v4756 = vmul.f32 %v4734, %v1024
      %v4757 = vmul.f32 %v4743, %v1023
      %v4758 = vmul.f32 %v4735, %v1024
      %v4759 = vmul.f32 %v4744, %v1023
      %v4760 = vmul.f32 %v4736, %v1024
      %s4761 = scalar_lea.vmem %s11, 48
      %v4762 = vld [vmem:[%s4761] sm:$0xff]
      %v4763 = vld [vmem:[%s4761 + $0x8] sm:$0xff]
      %v4764 = vld [vmem:[%s4761 + $0x10] sm:$0x7]
      %v4766 = vsel %vm2584, %v4762, 0
      %v4769 = vsel %vm2584, %v4763, 0
      %v4772 = vsel %vm2584, %v4764, 0
      %4774 = vmatpush.msra.mxu0 0.0
      %4775 = vmatpush.msra.mxu0 0.0
      %4776 = vmatpush.msra.mxu0 0.0
      %4777 = vmatpush.msra.mxu0 0.0
      %4778 = vmatpush.msra.mxu0 0.0
      %4779 = vmatpush.msra.mxu0 0.0
      %4780 = vmatpush.msra.mxu0 0.0
      %4781 = vmatpush.msra.mxu0 0.0
      %4782 = vmatpush.msra.mxu0 %v4759
      %4783 = vmatpush.msra.mxu0 %v4757
      %4784 = vmatpush.msra.mxu0 %v4755
      %4785 = vmatpush.msra.mxu0 %v4753
      %4786 = vmatpush.msra.mxu0 %v4751
      %4787 = vmatpush.msra.mxu0 %v4749
      %4788 = vmatpush.msra.mxu0 %v4747
      %4789 = vmatpush.msra.mxu0 %v4745
      %4790 = vmatmul.f32.gmra.mxu0 %v4766
      %v4791 = vpop.f32.mrf.mxu0
      %v4792 = vadd.f32 0.0, %v4791
      %4793 = vmatmul.f32.gmra.mxu0 %v4769
      %v4794 = vpop.f32.mrf.mxu0
      %v4795 = vadd.f32 0.0, %v4794
      %4796 = vmatmul.f32.gmra.mxu0 %v4772
      %v4797 = vpop.f32.mrf.mxu0
      %v4798 = vadd.f32 0.0, %v4797
      %4799 = vdwg.mxu0
      %4800 = vmatpush.msra.mxu0 0.0
      %4801 = vmatpush.msra.mxu0 0.0
      %4802 = vmatpush.msra.mxu0 0.0
      %4803 = vmatpush.msra.mxu0 0.0
      %4804 = vmatpush.msra.mxu0 0.0
      %4805 = vmatpush.msra.mxu0 0.0
      %4806 = vmatpush.msra.mxu0 0.0
      %4807 = vmatpush.msra.mxu0 0.0
      %4808 = vmatpush.msra.mxu0 %v4760
      %4809 = vmatpush.msra.mxu0 %v4758
      %4810 = vmatpush.msra.mxu0 %v4756
      %4811 = vmatpush.msra.mxu0 %v4754
      %4812 = vmatpush.msra.mxu0 %v4752
      %4813 = vmatpush.msra.mxu0 %v4750
      %4814 = vmatpush.msra.mxu0 %v4748
      %4815 = vmatpush.msra.mxu0 %v4746
      %4816 = vmatmul.f32.gmra.mxu0 %v4766
      %v4817 = vpop.f32.mrf.mxu0
      %v4818 = vadd.f32 0.0, %v4817
      %4819 = vmatmul.f32.gmra.mxu0 %v4769
      %v4820 = vpop.f32.mrf.mxu0
      %v4821 = vadd.f32 0.0, %v4820
      %4822 = vmatmul.f32.gmra.mxu0 %v4772
      %v4823 = vpop.f32.mrf.mxu0
      %v4824 = vadd.f32 0.0, %v4823
      %4825 = vdwg.mxu0
      %v4826 = vadd.f32 %v4663, %v4792
      %v4827 = vadd.f32 %v4689, %v4818
      %v4828 = vadd.f32 %v4666, %v4795
      %v4829 = vadd.f32 %v4692, %v4821
      %v4830 = vadd.f32 %v4669, %v4798
      %v4831 = vadd.f32 %v4695, %v4824
      %4832 = vrot.lane.b32.xlu0 %v4424, 1
      %v4833 = vpop.permute.xlu0 %4832
      %4834 = vrot.lane.b32.xlu0 %v4426, 1
      %v4835 = vpop.permute.xlu0 %4834
      %4836 = vrot.lane.b32.xlu0 %v4428, 1
      %v4837 = vpop.permute.xlu0 %4836
      %4838 = vrot.lane.b32.xlu0 %v4430, 1
      %v4839 = vpop.permute.xlu0 %4838
      %4840 = vrot.lane.b32.xlu0 %v4432, 1
      %v4841 = vpop.permute.xlu0 %4840
      %4842 = vrot.lane.b32.xlu0 %v4434, 1
      %v4843 = vpop.permute.xlu0 %4842
      %4844 = vrot.lane.b32.xlu0 %v4436, 1
      %v4845 = vpop.permute.xlu0 %4844
      %4846 = vrot.lane.b32.xlu0 %v4438, 1
      %v4847 = vpop.permute.xlu0 %4846
      %4848 = vrot.lane.b32.xlu0 %v4425, 1
      %v4849 = vpop.permute.xlu0 %4848
      %4850 = vrot.lane.b32.xlu0 %v4427, 1
      %v4851 = vpop.permute.xlu0 %4850
      %4852 = vrot.lane.b32.xlu0 %v4429, 1
      %v4853 = vpop.permute.xlu0 %4852
      %4854 = vrot.lane.b32.xlu0 %v4431, 1
      %v4855 = vpop.permute.xlu0 %4854
      %4856 = vrot.lane.b32.xlu0 %v4433, 1
      %v4857 = vpop.permute.xlu0 %4856
      %4858 = vrot.lane.b32.xlu0 %v4435, 1
      %v4859 = vpop.permute.xlu0 %4858
      %4860 = vrot.lane.b32.xlu0 %v4437, 1
      %v4861 = vpop.permute.xlu0 %4860
      %4862 = vrot.lane.b32.xlu0 %v4439, 1
      %v4863 = vpop.permute.xlu0 %4862
      %v4864 = vsel %vm1182, %v4833, %v4849
      %v4865 = vsel %vm1182, %v4835, %v4851
      %v4866 = vsel %vm1182, %v4837, %v4853
      %v4867 = vsel %vm1182, %v4839, %v4855
      %v4868 = vsel %vm1182, %v4841, %v4857
      %v4869 = vsel %vm1182, %v4843, %v4859
      %v4870 = vsel %vm1182, %v4845, %v4861
      %v4871 = vsel %vm1182, %v4847, %v4863
      %v4872 = vsel %vm1182, %v4849, %v4833
      %v4873 = vsel %vm1182, %v4851, %v4835
      %v4874 = vsel %vm1182, %v4853, %v4837
      %v4875 = vsel %vm1182, %v4855, %v4839
      %v4876 = vsel %vm1182, %v4857, %v4841
      %v4877 = vsel %vm1182, %v4859, %v4843
      %v4878 = vsel %vm1182, %v4861, %v4845
      %v4879 = vsel %vm1182, %v4863, %v4847
      %v4880 = vmul.f32 %v4872, %v1192
      %v4881 = vmul.f32 %v4864, %v1193
      %v4882 = vmul.f32 %v4873, %v1192
      %v4883 = vmul.f32 %v4865, %v1193
      %v4884 = vmul.f32 %v4874, %v1192
      %v4885 = vmul.f32 %v4866, %v1193
      %v4886 = vmul.f32 %v4875, %v1192
      %v4887 = vmul.f32 %v4867, %v1193
      %v4888 = vmul.f32 %v4876, %v1192
      %v4889 = vmul.f32 %v4868, %v1193
      %v4890 = vmul.f32 %v4877, %v1192
      %v4891 = vmul.f32 %v4869, %v1193
      %v4892 = vmul.f32 %v4878, %v1192
      %v4893 = vmul.f32 %v4870, %v1193
      %v4894 = vmul.f32 %v4879, %v1192
      %v4895 = vmul.f32 %v4871, %v1193
      %s4896 = scalar_lea.vmem %s11, 72
      %v4897 = vld [vmem:[%s4896] sm:$0xff]
      %v4898 = vld [vmem:[%s4896 + $0x8] sm:$0xff]
      %v4899 = vld [vmem:[%s4896 + $0x10] sm:$0x7]
      %v4901 = vsel %vm2584, %v4897, 0
      %v4904 = vsel %vm2584, %v4898, 0
      %v4907 = vsel %vm2584, %v4899, 0
      %4909 = vmatpush.msra.mxu0 0.0
      %4910 = vmatpush.msra.mxu0 0.0
      %4911 = vmatpush.msra.mxu0 0.0
      %4912 = vmatpush.msra.mxu0 0.0
      %4913 = vmatpush.msra.mxu0 0.0
      %4914 = vmatpush.msra.mxu0 0.0
      %4915 = vmatpush.msra.mxu0 0.0
      %4916 = vmatpush.msra.mxu0 0.0
      %4917 = vmatpush.msra.mxu0 %v4894
      %4918 = vmatpush.msra.mxu0 %v4892
      %4919 = vmatpush.msra.mxu0 %v4890
      %4920 = vmatpush.msra.mxu0 %v4888
      %4921 = vmatpush.msra.mxu0 %v4886
      %4922 = vmatpush.msra.mxu0 %v4884
      %4923 = vmatpush.msra.mxu0 %v4882
      %4924 = vmatpush.msra.mxu0 %v4880
      %4925 = vmatmul.f32.gmra.mxu0 %v4901
      %v4926 = vpop.f32.mrf.mxu0
      %v4927 = vadd.f32 0.0, %v4926
      %4928 = vmatmul.f32.gmra.mxu0 %v4904
      %v4929 = vpop.f32.mrf.mxu0
      %v4930 = vadd.f32 0.0, %v4929
      %4931 = vmatmul.f32.gmra.mxu0 %v4907
      %v4932 = vpop.f32.mrf.mxu0
      %v4933 = vadd.f32 0.0, %v4932
      %4934 = vdwg.mxu0
      %4935 = vmatpush.msra.mxu0 0.0
      %4936 = vmatpush.msra.mxu0 0.0
      %4937 = vmatpush.msra.mxu0 0.0
      %4938 = vmatpush.msra.mxu0 0.0
      %4939 = vmatpush.msra.mxu0 0.0
      %4940 = vmatpush.msra.mxu0 0.0
      %4941 = vmatpush.msra.mxu0 0.0
      %4942 = vmatpush.msra.mxu0 0.0
      %4943 = vmatpush.msra.mxu0 %v4895
      %4944 = vmatpush.msra.mxu0 %v4893
      %4945 = vmatpush.msra.mxu0 %v4891
      %4946 = vmatpush.msra.mxu0 %v4889
      %4947 = vmatpush.msra.mxu0 %v4887
      %4948 = vmatpush.msra.mxu0 %v4885
      %4949 = vmatpush.msra.mxu0 %v4883
      %4950 = vmatpush.msra.mxu0 %v4881
      %4951 = vmatmul.f32.gmra.mxu0 %v4901
      %v4952 = vpop.f32.mrf.mxu0
      %v4953 = vadd.f32 0.0, %v4952
      %4954 = vmatmul.f32.gmra.mxu0 %v4904
      %v4955 = vpop.f32.mrf.mxu0
      %v4956 = vadd.f32 0.0, %v4955
      %4957 = vmatmul.f32.gmra.mxu0 %v4907
      %v4958 = vpop.f32.mrf.mxu0
      %v4959 = vadd.f32 0.0, %v4958
      %4960 = vdwg.mxu0
      %v4961 = vadd.f32 %v4826, %v4927
      %v4962 = vadd.f32 %v4827, %v4953
      %v4963 = vadd.f32 %v4828, %v4930
      %v4964 = vadd.f32 %v4829, %v4956
      %v4965 = vadd.f32 %v4830, %v4933
      %v4966 = vadd.f32 %v4831, %v4959
      %s4967 = scalar_lea.vmem %s11, 96
      %v4968 = vld [vmem:[%s4967] sm:$0xff]
      %v4969 = vld [vmem:[%s4967 + $0x8] sm:$0xff]
      %v4970 = vld [vmem:[%s4967 + $0x10] sm:$0x7]
      %v4972 = vsel %vm2584, %v4968, 0
      %v4975 = vsel %vm2584, %v4969, 0
      %v4978 = vsel %vm2584, %v4970, 0
      %4980 = vmatpush.msra.mxu0 0.0
      %4981 = vmatpush.msra.mxu0 0.0
      %4982 = vmatpush.msra.mxu0 0.0
      %4983 = vmatpush.msra.mxu0 0.0
      %4984 = vmatpush.msra.mxu0 0.0
      %4985 = vmatpush.msra.mxu0 0.0
      %4986 = vmatpush.msra.mxu0 0.0
      %4987 = vmatpush.msra.mxu0 0.0
      %4988 = vmatpush.msra.mxu0 %v4438
      %4989 = vmatpush.msra.mxu0 %v4436
      %4990 = vmatpush.msra.mxu0 %v4434
      %4991 = vmatpush.msra.mxu0 %v4432
      %4992 = vmatpush.msra.mxu0 %v4430
      %4993 = vmatpush.msra.mxu0 %v4428
      %4994 = vmatpush.msra.mxu0 %v4426
      %4995 = vmatpush.msra.mxu0 %v4424
      %4996 = vmatmul.f32.gmra.mxu0 %v4972
      %v4997 = vpop.f32.mrf.mxu0
      %v4998 = vadd.f32 0.0, %v4997
      %4999 = vmatmul.f32.gmra.mxu0 %v4975
      %v5000 = vpop.f32.mrf.mxu0
      %v5001 = vadd.f32 0.0, %v5000
      %5002 = vmatmul.f32.gmra.mxu0 %v4978
      %v5003 = vpop.f32.mrf.mxu0
      %v5004 = vadd.f32 0.0, %v5003
      %5005 = vdwg.mxu0
      %5006 = vmatpush.msra.mxu0 0.0
      %5007 = vmatpush.msra.mxu0 0.0
      %5008 = vmatpush.msra.mxu0 0.0
      %5009 = vmatpush.msra.mxu0 0.0
      %5010 = vmatpush.msra.mxu0 0.0
      %5011 = vmatpush.msra.mxu0 0.0
      %5012 = vmatpush.msra.mxu0 0.0
      %5013 = vmatpush.msra.mxu0 0.0
      %5014 = vmatpush.msra.mxu0 %v4439
      %5015 = vmatpush.msra.mxu0 %v4437
      %5016 = vmatpush.msra.mxu0 %v4435
      %5017 = vmatpush.msra.mxu0 %v4433
      %5018 = vmatpush.msra.mxu0 %v4431
      %5019 = vmatpush.msra.mxu0 %v4429
      %5020 = vmatpush.msra.mxu0 %v4427
      %5021 = vmatpush.msra.mxu0 %v4425
      %5022 = vmatmul.f32.gmra.mxu0 %v4972
      %v5023 = vpop.f32.mrf.mxu0
      %v5024 = vadd.f32 0.0, %v5023
      %5025 = vmatmul.f32.gmra.mxu0 %v4975
      %v5026 = vpop.f32.mrf.mxu0
      %v5027 = vadd.f32 0.0, %v5026
      %5028 = vmatmul.f32.gmra.mxu0 %v4978
      %v5029 = vpop.f32.mrf.mxu0
      %v5030 = vadd.f32 0.0, %v5029
      %5031 = vdwg.mxu0
      %v5032 = vadd.f32 %v4961, %v4998
      %v5033 = vadd.f32 %v4962, %v5024
      %v5034 = vadd.f32 %v4963, %v5001
      %v5035 = vadd.f32 %v4964, %v5027
      %v5036 = vadd.f32 %v4965, %v5004
      %v5037 = vadd.f32 %v4966, %v5030
      %5038 = vrot.lane.b32.xlu0 %v4424, 127
      %v5039 = vpop.permute.xlu0 %5038
      %5040 = vrot.lane.b32.xlu0 %v4426, 127
      %v5041 = vpop.permute.xlu0 %5040
      %5042 = vrot.lane.b32.xlu0 %v4428, 127
      %v5043 = vpop.permute.xlu0 %5042
      %5044 = vrot.lane.b32.xlu0 %v4430, 127
      %v5045 = vpop.permute.xlu0 %5044
      %5046 = vrot.lane.b32.xlu0 %v4432, 127
      %v5047 = vpop.permute.xlu0 %5046
      %5048 = vrot.lane.b32.xlu0 %v4434, 127
      %v5049 = vpop.permute.xlu0 %5048
      %5050 = vrot.lane.b32.xlu0 %v4436, 127
      %v5051 = vpop.permute.xlu0 %5050
      %5052 = vrot.lane.b32.xlu0 %v4438, 127
      %v5053 = vpop.permute.xlu0 %5052
      %5054 = vrot.lane.b32.xlu0 %v4425, 127
      %v5055 = vpop.permute.xlu0 %5054
      %5056 = vrot.lane.b32.xlu0 %v4427, 127
      %v5057 = vpop.permute.xlu0 %5056
      %5058 = vrot.lane.b32.xlu0 %v4429, 127
      %v5059 = vpop.permute.xlu0 %5058
      %5060 = vrot.lane.b32.xlu0 %v4431, 127
      %v5061 = vpop.permute.xlu0 %5060
      %5062 = vrot.lane.b32.xlu0 %v4433, 127
      %v5063 = vpop.permute.xlu0 %5062
      %5064 = vrot.lane.b32.xlu0 %v4435, 127
      %v5065 = vpop.permute.xlu0 %5064
      %5066 = vrot.lane.b32.xlu0 %v4437, 127
      %v5067 = vpop.permute.xlu0 %5066
      %5068 = vrot.lane.b32.xlu0 %v4439, 127
      %v5069 = vpop.permute.xlu0 %5068
      %v5070 = vsel %vm1488, %v5039, %v5055
      %v5071 = vsel %vm1488, %v5041, %v5057
      %v5072 = vsel %vm1488, %v5043, %v5059
      %v5073 = vsel %vm1488, %v5045, %v5061
      %v5074 = vsel %vm1488, %v5047, %v5063
      %v5075 = vsel %vm1488, %v5049, %v5065
      %v5076 = vsel %vm1488, %v5051, %v5067
      %v5077 = vsel %vm1488, %v5053, %v5069
      %v5078 = vsel %vm1488, %v5055, %v5039
      %v5079 = vsel %vm1488, %v5057, %v5041
      %v5080 = vsel %vm1488, %v5059, %v5043
      %v5081 = vsel %vm1488, %v5061, %v5045
      %v5082 = vsel %vm1488, %v5063, %v5047
      %v5083 = vsel %vm1488, %v5065, %v5049
      %v5084 = vsel %vm1488, %v5067, %v5051
      %v5085 = vsel %vm1488, %v5069, %v5053
      %v5086 = vmul.f32 %v5070, %v1498
      %v5087 = vmul.f32 %v5078, %v1499
      %v5088 = vmul.f32 %v5071, %v1498
      %v5089 = vmul.f32 %v5079, %v1499
      %v5090 = vmul.f32 %v5072, %v1498
      %v5091 = vmul.f32 %v5080, %v1499
      %v5092 = vmul.f32 %v5073, %v1498
      %v5093 = vmul.f32 %v5081, %v1499
      %v5094 = vmul.f32 %v5074, %v1498
      %v5095 = vmul.f32 %v5082, %v1499
      %v5096 = vmul.f32 %v5075, %v1498
      %v5097 = vmul.f32 %v5083, %v1499
      %v5098 = vmul.f32 %v5076, %v1498
      %v5099 = vmul.f32 %v5084, %v1499
      %v5100 = vmul.f32 %v5077, %v1498
      %v5101 = vmul.f32 %v5085, %v1499
      %s5102 = scalar_lea.vmem %s11, 120
      %v5103 = vld [vmem:[%s5102] sm:$0xff]
      %v5104 = vld [vmem:[%s5102 + $0x8] sm:$0xff]
      %v5105 = vld [vmem:[%s5102 + $0x10] sm:$0x7]
      %v5107 = vsel %vm2584, %v5103, 0
      %v5110 = vsel %vm2584, %v5104, 0
      %v5113 = vsel %vm2584, %v5105, 0
      %5115 = vmatpush.msra.mxu0 0.0
      %5116 = vmatpush.msra.mxu0 0.0
      %5117 = vmatpush.msra.mxu0 0.0
      %5118 = vmatpush.msra.mxu0 0.0
      %5119 = vmatpush.msra.mxu0 0.0
      %5120 = vmatpush.msra.mxu0 0.0
      %5121 = vmatpush.msra.mxu0 0.0
      %5122 = vmatpush.msra.mxu0 0.0
      %5123 = vmatpush.msra.mxu0 %v5100
      %5124 = vmatpush.msra.mxu0 %v5098
      %5125 = vmatpush.msra.mxu0 %v5096
      %5126 = vmatpush.msra.mxu0 %v5094
      %5127 = vmatpush.msra.mxu0 %v5092
      %5128 = vmatpush.msra.mxu0 %v5090
      %5129 = vmatpush.msra.mxu0 %v5088
      %5130 = vmatpush.msra.mxu0 %v5086
      %5131 = vmatmul.f32.gmra.mxu0 %v5107
      %v5132 = vpop.f32.mrf.mxu0
      %v5133 = vadd.f32 0.0, %v5132
      %5134 = vmatmul.f32.gmra.mxu0 %v5110
      %v5135 = vpop.f32.mrf.mxu0
      %v5136 = vadd.f32 0.0, %v5135
      %5137 = vmatmul.f32.gmra.mxu0 %v5113
      %v5138 = vpop.f32.mrf.mxu0
      %v5139 = vadd.f32 0.0, %v5138
      %5140 = vdwg.mxu0
      %5141 = vmatpush.msra.mxu0 0.0
      %5142 = vmatpush.msra.mxu0 0.0
      %5143 = vmatpush.msra.mxu0 0.0
      %5144 = vmatpush.msra.mxu0 0.0
      %5145 = vmatpush.msra.mxu0 0.0
      %5146 = vmatpush.msra.mxu0 0.0
      %5147 = vmatpush.msra.mxu0 0.0
      %5148 = vmatpush.msra.mxu0 0.0
      %5149 = vmatpush.msra.mxu0 %v5101
      %5150 = vmatpush.msra.mxu0 %v5099
      %5151 = vmatpush.msra.mxu0 %v5097
      %5152 = vmatpush.msra.mxu0 %v5095
      %5153 = vmatpush.msra.mxu0 %v5093
      %5154 = vmatpush.msra.mxu0 %v5091
      %5155 = vmatpush.msra.mxu0 %v5089
      %5156 = vmatpush.msra.mxu0 %v5087
      %5157 = vmatmul.f32.gmra.mxu0 %v5107
      %v5158 = vpop.f32.mrf.mxu0
      %v5159 = vadd.f32 0.0, %v5158
      %5160 = vmatmul.f32.gmra.mxu0 %v5110
      %v5161 = vpop.f32.mrf.mxu0
      %v5162 = vadd.f32 0.0, %v5161
      %5163 = vmatmul.f32.gmra.mxu0 %v5113
      %v5164 = vpop.f32.mrf.mxu0
      %v5165 = vadd.f32 0.0, %v5164
      %5166 = vdwg.mxu0
      %v5167 = vadd.f32 %v5032, %v5133
      %v5168 = vadd.f32 %v5033, %v5159
      %v5169 = vadd.f32 %v5034, %v5136
      %v5170 = vadd.f32 %v5035, %v5162
      %v5171 = vadd.f32 %v5036, %v5139
      %v5172 = vadd.f32 %v5037, %v5165
      %5173 = vrot.lane.b32.xlu0 %v4424, 113
      %v5174 = vpop.permute.xlu0 %5173
      %5175 = vrot.lane.b32.xlu0 %v4426, 113
      %v5176 = vpop.permute.xlu0 %5175
      %5177 = vrot.lane.b32.xlu0 %v4428, 113
      %v5178 = vpop.permute.xlu0 %5177
      %5179 = vrot.lane.b32.xlu0 %v4430, 113
      %v5180 = vpop.permute.xlu0 %5179
      %5181 = vrot.lane.b32.xlu0 %v4432, 113
      %v5182 = vpop.permute.xlu0 %5181
      %5183 = vrot.lane.b32.xlu0 %v4434, 113
      %v5184 = vpop.permute.xlu0 %5183
      %5185 = vrot.lane.b32.xlu0 %v4436, 113
      %v5186 = vpop.permute.xlu0 %5185
      %5187 = vrot.lane.b32.xlu0 %v4438, 113
      %v5188 = vpop.permute.xlu0 %5187
      %5189 = vrot.lane.b32.xlu0 %v4425, 113
      %v5190 = vpop.permute.xlu0 %5189
      %5191 = vrot.lane.b32.xlu0 %v4427, 113
      %v5192 = vpop.permute.xlu0 %5191
      %5193 = vrot.lane.b32.xlu0 %v4429, 113
      %v5194 = vpop.permute.xlu0 %5193
      %5195 = vrot.lane.b32.xlu0 %v4431, 113
      %v5196 = vpop.permute.xlu0 %5195
      %5197 = vrot.lane.b32.xlu0 %v4433, 113
      %v5198 = vpop.permute.xlu0 %5197
      %5199 = vrot.lane.b32.xlu0 %v4435, 113
      %v5200 = vpop.permute.xlu0 %5199
      %5201 = vrot.lane.b32.xlu0 %v4437, 113
      %v5202 = vpop.permute.xlu0 %5201
      %5203 = vrot.lane.b32.xlu0 %v4439, 113
      %v5204 = vpop.permute.xlu0 %5203
      %v5205 = vsel %vm1657, %v5174, %v5190
      %v5206 = vsel %vm1657, %v5176, %v5192
      %v5207 = vsel %vm1657, %v5178, %v5194
      %v5208 = vsel %vm1657, %v5180, %v5196
      %v5209 = vsel %vm1657, %v5182, %v5198
      %v5210 = vsel %vm1657, %v5184, %v5200
      %v5211 = vsel %vm1657, %v5186, %v5202
      %v5212 = vsel %vm1657, %v5188, %v5204
      %v5213 = vsel %vm1657, %v5190, %v5174
      %v5214 = vsel %vm1657, %v5192, %v5176
      %v5215 = vsel %vm1657, %v5194, %v5178
      %v5216 = vsel %vm1657, %v5196, %v5180
      %v5217 = vsel %vm1657, %v5198, %v5182
      %v5218 = vsel %vm1657, %v5200, %v5184
      %v5219 = vsel %vm1657, %v5202, %v5186
      %v5220 = vsel %vm1657, %v5204, %v5188
      %v5221 = vmul.f32 %v5205, %v1667
      %v5222 = vmul.f32 %v5213, %v1668
      %v5223 = vmul.f32 %v5206, %v1667
      %v5224 = vmul.f32 %v5214, %v1668
      %v5225 = vmul.f32 %v5207, %v1667
      %v5226 = vmul.f32 %v5215, %v1668
      %v5227 = vmul.f32 %v5208, %v1667
      %v5228 = vmul.f32 %v5216, %v1668
      %v5229 = vmul.f32 %v5209, %v1667
      %v5230 = vmul.f32 %v5217, %v1668
      %v5231 = vmul.f32 %v5210, %v1667
      %v5232 = vmul.f32 %v5218, %v1668
      %v5233 = vmul.f32 %v5211, %v1667
      %v5234 = vmul.f32 %v5219, %v1668
      %v5235 = vmul.f32 %v5212, %v1667
      %v5236 = vmul.f32 %v5220, %v1668
      %s5237 = scalar_lea.vmem %s11, 144
      %v5238 = vld [vmem:[%s5237] sm:$0xff]
      %v5239 = vld [vmem:[%s5237 + $0x8] sm:$0xff]
      %v5240 = vld [vmem:[%s5237 + $0x10] sm:$0x7]
      %v5242 = vsel %vm2584, %v5238, 0
      %v5245 = vsel %vm2584, %v5239, 0
      %v5248 = vsel %vm2584, %v5240, 0
      %5250 = vmatpush.msra.mxu0 0.0
      %5251 = vmatpush.msra.mxu0 0.0
      %5252 = vmatpush.msra.mxu0 0.0
      %5253 = vmatpush.msra.mxu0 0.0
      %5254 = vmatpush.msra.mxu0 0.0
      %5255 = vmatpush.msra.mxu0 0.0
      %5256 = vmatpush.msra.mxu0 0.0
      %5257 = vmatpush.msra.mxu0 0.0
      %5258 = vmatpush.msra.mxu0 %v5235
      %5259 = vmatpush.msra.mxu0 %v5233
      %5260 = vmatpush.msra.mxu0 %v5231
      %5261 = vmatpush.msra.mxu0 %v5229
      %5262 = vmatpush.msra.mxu0 %v5227
      %5263 = vmatpush.msra.mxu0 %v5225
      %5264 = vmatpush.msra.mxu0 %v5223
      %5265 = vmatpush.msra.mxu0 %v5221
      %5266 = vmatmul.f32.gmra.mxu0 %v5242
      %v5267 = vpop.f32.mrf.mxu0
      %v5268 = vadd.f32 0.0, %v5267
      %5269 = vmatmul.f32.gmra.mxu0 %v5245
      %v5270 = vpop.f32.mrf.mxu0
      %v5271 = vadd.f32 0.0, %v5270
      %5272 = vmatmul.f32.gmra.mxu0 %v5248
      %v5273 = vpop.f32.mrf.mxu0
      %v5274 = vadd.f32 0.0, %v5273
      %5275 = vdwg.mxu0
      %5276 = vmatpush.msra.mxu0 0.0
      %5277 = vmatpush.msra.mxu0 0.0
      %5278 = vmatpush.msra.mxu0 0.0
      %5279 = vmatpush.msra.mxu0 0.0
      %5280 = vmatpush.msra.mxu0 0.0
      %5281 = vmatpush.msra.mxu0 0.0
      %5282 = vmatpush.msra.mxu0 0.0
      %5283 = vmatpush.msra.mxu0 0.0
      %5284 = vmatpush.msra.mxu0 %v5236
      %5285 = vmatpush.msra.mxu0 %v5234
      %5286 = vmatpush.msra.mxu0 %v5232
      %5287 = vmatpush.msra.mxu0 %v5230
      %5288 = vmatpush.msra.mxu0 %v5228
      %5289 = vmatpush.msra.mxu0 %v5226
      %5290 = vmatpush.msra.mxu0 %v5224
      %5291 = vmatpush.msra.mxu0 %v5222
      %5292 = vmatmul.f32.gmra.mxu0 %v5242
      %v5293 = vpop.f32.mrf.mxu0
      %v5294 = vadd.f32 0.0, %v5293
      %5295 = vmatmul.f32.gmra.mxu0 %v5245
      %v5296 = vpop.f32.mrf.mxu0
      %v5297 = vadd.f32 0.0, %v5296
      %5298 = vmatmul.f32.gmra.mxu0 %v5248
      %v5299 = vpop.f32.mrf.mxu0
      %v5300 = vadd.f32 0.0, %v5299
      %5301 = vdwg.mxu0
      %v5302 = vadd.f32 %v5167, %v5268
      %v5303 = vadd.f32 %v5168, %v5294
      %v5304 = vadd.f32 %v5169, %v5271
      %v5305 = vadd.f32 %v5170, %v5297
      %v5306 = vadd.f32 %v5171, %v5274
      %v5307 = vadd.f32 %v5172, %v5300
      %5308 = vrot.lane.b32.xlu0 %v4424, 112
      %v5309 = vpop.permute.xlu0 %5308
      %5310 = vrot.lane.b32.xlu0 %v4426, 112
      %v5311 = vpop.permute.xlu0 %5310
      %5312 = vrot.lane.b32.xlu0 %v4428, 112
      %v5313 = vpop.permute.xlu0 %5312
      %5314 = vrot.lane.b32.xlu0 %v4430, 112
      %v5315 = vpop.permute.xlu0 %5314
      %5316 = vrot.lane.b32.xlu0 %v4432, 112
      %v5317 = vpop.permute.xlu0 %5316
      %5318 = vrot.lane.b32.xlu0 %v4434, 112
      %v5319 = vpop.permute.xlu0 %5318
      %5320 = vrot.lane.b32.xlu0 %v4436, 112
      %v5321 = vpop.permute.xlu0 %5320
      %5322 = vrot.lane.b32.xlu0 %v4438, 112
      %v5323 = vpop.permute.xlu0 %5322
      %5324 = vrot.lane.b32.xlu0 %v4425, 112
      %v5325 = vpop.permute.xlu0 %5324
      %5326 = vrot.lane.b32.xlu0 %v4427, 112
      %v5327 = vpop.permute.xlu0 %5326
      %5328 = vrot.lane.b32.xlu0 %v4429, 112
      %v5329 = vpop.permute.xlu0 %5328
      %5330 = vrot.lane.b32.xlu0 %v4431, 112
      %v5331 = vpop.permute.xlu0 %5330
      %5332 = vrot.lane.b32.xlu0 %v4433, 112
      %v5333 = vpop.permute.xlu0 %5332
      %5334 = vrot.lane.b32.xlu0 %v4435, 112
      %v5335 = vpop.permute.xlu0 %5334
      %5336 = vrot.lane.b32.xlu0 %v4437, 112
      %v5337 = vpop.permute.xlu0 %5336
      %5338 = vrot.lane.b32.xlu0 %v4439, 112
      %v5339 = vpop.permute.xlu0 %5338
      %v5340 = vsel %vm1826, %v5309, %v5325
      %v5341 = vsel %vm1826, %v5311, %v5327
      %v5342 = vsel %vm1826, %v5313, %v5329
      %v5343 = vsel %vm1826, %v5315, %v5331
      %v5344 = vsel %vm1826, %v5317, %v5333
      %v5345 = vsel %vm1826, %v5319, %v5335
      %v5346 = vsel %vm1826, %v5321, %v5337
      %v5347 = vsel %vm1826, %v5323, %v5339
      %v5348 = vsel %vm1826, %v5325, %v5309
      %v5349 = vsel %vm1826, %v5327, %v5311
      %v5350 = vsel %vm1826, %v5329, %v5313
      %v5351 = vsel %vm1826, %v5331, %v5315
      %v5352 = vsel %vm1826, %v5333, %v5317
      %v5353 = vsel %vm1826, %v5335, %v5319
      %v5354 = vsel %vm1826, %v5337, %v5321
      %v5355 = vsel %vm1826, %v5339, %v5323
      %v5356 = vmul.f32 %v5340, %v1836
      %v5357 = vmul.f32 %v5348, %v1837
      %v5358 = vmul.f32 %v5341, %v1836
      %v5359 = vmul.f32 %v5349, %v1837
      %v5360 = vmul.f32 %v5342, %v1836
      %v5361 = vmul.f32 %v5350, %v1837
      %v5362 = vmul.f32 %v5343, %v1836
      %v5363 = vmul.f32 %v5351, %v1837
      %v5364 = vmul.f32 %v5344, %v1836
      %v5365 = vmul.f32 %v5352, %v1837
      %v5366 = vmul.f32 %v5345, %v1836
      %v5367 = vmul.f32 %v5353, %v1837
      %v5368 = vmul.f32 %v5346, %v1836
      %v5369 = vmul.f32 %v5354, %v1837
      %v5370 = vmul.f32 %v5347, %v1836
      %v5371 = vmul.f32 %v5355, %v1837
      %s5372 = scalar_lea.vmem %s11, 168
      %v5373 = vld [vmem:[%s5372] sm:$0xff]
      %v5374 = vld [vmem:[%s5372 + $0x8] sm:$0xff]
      %v5375 = vld [vmem:[%s5372 + $0x10] sm:$0x7]
      %v5377 = vsel %vm2584, %v5373, 0
      %v5380 = vsel %vm2584, %v5374, 0
      %v5383 = vsel %vm2584, %v5375, 0
      %5385 = vmatpush.msra.mxu0 0.0
      %5386 = vmatpush.msra.mxu0 0.0
      %5387 = vmatpush.msra.mxu0 0.0
      %5388 = vmatpush.msra.mxu0 0.0
      %5389 = vmatpush.msra.mxu0 0.0
      %5390 = vmatpush.msra.mxu0 0.0
      %5391 = vmatpush.msra.mxu0 0.0
      %5392 = vmatpush.msra.mxu0 0.0
      %5393 = vmatpush.msra.mxu0 %v5370
      %5394 = vmatpush.msra.mxu0 %v5368
      %5395 = vmatpush.msra.mxu0 %v5366
      %5396 = vmatpush.msra.mxu0 %v5364
      %5397 = vmatpush.msra.mxu0 %v5362
      %5398 = vmatpush.msra.mxu0 %v5360
      %5399 = vmatpush.msra.mxu0 %v5358
      %5400 = vmatpush.msra.mxu0 %v5356
      %5401 = vmatmul.f32.gmra.mxu0 %v5377
      %v5402 = vpop.f32.mrf.mxu0
      %v5403 = vadd.f32 0.0, %v5402
      %5404 = vmatmul.f32.gmra.mxu0 %v5380
      %v5405 = vpop.f32.mrf.mxu0
      %v5406 = vadd.f32 0.0, %v5405
      %5407 = vmatmul.f32.gmra.mxu0 %v5383
      %v5408 = vpop.f32.mrf.mxu0
      %v5409 = vadd.f32 0.0, %v5408
      %5410 = vdwg.mxu0
      %5411 = vmatpush.msra.mxu0 0.0
      %5412 = vmatpush.msra.mxu0 0.0
      %5413 = vmatpush.msra.mxu0 0.0
      %5414 = vmatpush.msra.mxu0 0.0
      %5415 = vmatpush.msra.mxu0 0.0
      %5416 = vmatpush.msra.mxu0 0.0
      %5417 = vmatpush.msra.mxu0 0.0
      %5418 = vmatpush.msra.mxu0 0.0
      %5419 = vmatpush.msra.mxu0 %v5371
      %5420 = vmatpush.msra.mxu0 %v5369
      %5421 = vmatpush.msra.mxu0 %v5367
      %5422 = vmatpush.msra.mxu0 %v5365
      %5423 = vmatpush.msra.mxu0 %v5363
      %5424 = vmatpush.msra.mxu0 %v5361
      %5425 = vmatpush.msra.mxu0 %v5359
      %5426 = vmatpush.msra.mxu0 %v5357
      %5427 = vmatmul.f32.gmra.mxu0 %v5377
      %v5428 = vpop.f32.mrf.mxu0
      %v5429 = vadd.f32 0.0, %v5428
      %5430 = vmatmul.f32.gmra.mxu0 %v5380
      %v5431 = vpop.f32.mrf.mxu0
      %v5432 = vadd.f32 0.0, %v5431
      %5433 = vmatmul.f32.gmra.mxu0 %v5383
      %v5434 = vpop.f32.mrf.mxu0
      %v5435 = vadd.f32 0.0, %v5434
      %5436 = vdwg.mxu0
      %v5437 = vadd.f32 %v5302, %v5403
      %v5438 = vadd.f32 %v5303, %v5429
      %v5439 = vadd.f32 %v5304, %v5406
      %v5440 = vadd.f32 %v5305, %v5432
      %v5441 = vadd.f32 %v5306, %v5409
      %v5442 = vadd.f32 %v5307, %v5435
      %5443 = vrot.lane.b32.xlu0 %v4424, 111
      %v5444 = vpop.permute.xlu0 %5443
      %5445 = vrot.lane.b32.xlu0 %v4426, 111
      %v5446 = vpop.permute.xlu0 %5445
      %5447 = vrot.lane.b32.xlu0 %v4428, 111
      %v5448 = vpop.permute.xlu0 %5447
      %5449 = vrot.lane.b32.xlu0 %v4430, 111
      %v5450 = vpop.permute.xlu0 %5449
      %5451 = vrot.lane.b32.xlu0 %v4432, 111
      %v5452 = vpop.permute.xlu0 %5451
      %5453 = vrot.lane.b32.xlu0 %v4434, 111
      %v5454 = vpop.permute.xlu0 %5453
      %5455 = vrot.lane.b32.xlu0 %v4436, 111
      %v5456 = vpop.permute.xlu0 %5455
      %5457 = vrot.lane.b32.xlu0 %v4438, 111
      %v5458 = vpop.permute.xlu0 %5457
      %5459 = vrot.lane.b32.xlu0 %v4425, 111
      %v5460 = vpop.permute.xlu0 %5459
      %5461 = vrot.lane.b32.xlu0 %v4427, 111
      %v5462 = vpop.permute.xlu0 %5461
      %5463 = vrot.lane.b32.xlu0 %v4429, 111
      %v5464 = vpop.permute.xlu0 %5463
      %5465 = vrot.lane.b32.xlu0 %v4431, 111
      %v5466 = vpop.permute.xlu0 %5465
      %5467 = vrot.lane.b32.xlu0 %v4433, 111
      %v5468 = vpop.permute.xlu0 %5467
      %5469 = vrot.lane.b32.xlu0 %v4435, 111
      %v5470 = vpop.permute.xlu0 %5469
      %5471 = vrot.lane.b32.xlu0 %v4437, 111
      %v5472 = vpop.permute.xlu0 %5471
      %5473 = vrot.lane.b32.xlu0 %v4439, 111
      %v5474 = vpop.permute.xlu0 %5473
      %v5475 = vsel %vm1995, %v5444, %v5460
      %v5476 = vsel %vm1995, %v5446, %v5462
      %v5477 = vsel %vm1995, %v5448, %v5464
      %v5478 = vsel %vm1995, %v5450, %v5466
      %v5479 = vsel %vm1995, %v5452, %v5468
      %v5480 = vsel %vm1995, %v5454, %v5470
      %v5481 = vsel %vm1995, %v5456, %v5472
      %v5482 = vsel %vm1995, %v5458, %v5474
      %v5483 = vsel %vm1995, %v5460, %v5444
      %v5484 = vsel %vm1995, %v5462, %v5446
      %v5485 = vsel %vm1995, %v5464, %v5448
      %v5486 = vsel %vm1995, %v5466, %v5450
      %v5487 = vsel %vm1995, %v5468, %v5452
      %v5488 = vsel %vm1995, %v5470, %v5454
      %v5489 = vsel %vm1995, %v5472, %v5456
      %v5490 = vsel %vm1995, %v5474, %v5458
      %v5491 = vmul.f32 %v5475, %v2005
      %v5492 = vmul.f32 %v5483, %v2006
      %v5493 = vmul.f32 %v5476, %v2005
      %v5494 = vmul.f32 %v5484, %v2006
      %v5495 = vmul.f32 %v5477, %v2005
      %v5496 = vmul.f32 %v5485, %v2006
      %v5497 = vmul.f32 %v5478, %v2005
      %v5498 = vmul.f32 %v5486, %v2006
      %v5499 = vmul.f32 %v5479, %v2005
      %v5500 = vmul.f32 %v5487, %v2006
      %v5501 = vmul.f32 %v5480, %v2005
      %v5502 = vmul.f32 %v5488, %v2006
      %v5503 = vmul.f32 %v5481, %v2005
      %v5504 = vmul.f32 %v5489, %v2006
      %v5505 = vmul.f32 %v5482, %v2005
      %v5506 = vmul.f32 %v5490, %v2006
      %s5507 = scalar_lea.vmem %s11, 192
      %v5508 = vld [vmem:[%s5507] sm:$0xff]
      %v5509 = vld [vmem:[%s5507 + $0x8] sm:$0xff]
      %v5510 = vld [vmem:[%s5507 + $0x10] sm:$0x7]
      %v5512 = vsel %vm2584, %v5508, 0
      %v5515 = vsel %vm2584, %v5509, 0
      %v5518 = vsel %vm2584, %v5510, 0
      %5520 = vmatpush.msra.mxu0 0.0
      %5521 = vmatpush.msra.mxu0 0.0
      %5522 = vmatpush.msra.mxu0 0.0
      %5523 = vmatpush.msra.mxu0 0.0
      %5524 = vmatpush.msra.mxu0 0.0
      %5525 = vmatpush.msra.mxu0 0.0
      %5526 = vmatpush.msra.mxu0 0.0
      %5527 = vmatpush.msra.mxu0 0.0
      %5528 = vmatpush.msra.mxu0 %v5505
      %5529 = vmatpush.msra.mxu0 %v5503
      %5530 = vmatpush.msra.mxu0 %v5501
      %5531 = vmatpush.msra.mxu0 %v5499
      %5532 = vmatpush.msra.mxu0 %v5497
      %5533 = vmatpush.msra.mxu0 %v5495
      %5534 = vmatpush.msra.mxu0 %v5493
      %5535 = vmatpush.msra.mxu0 %v5491
      %5536 = vmatmul.f32.gmra.mxu0 %v5512
      %v5537 = vpop.f32.mrf.mxu0
      %v5538 = vadd.f32 0.0, %v5537
      %5539 = vmatmul.f32.gmra.mxu0 %v5515
      %v5540 = vpop.f32.mrf.mxu0
      %v5541 = vadd.f32 0.0, %v5540
      %5542 = vmatmul.f32.gmra.mxu0 %v5518
      %v5543 = vpop.f32.mrf.mxu0
      %v5544 = vadd.f32 0.0, %v5543
      %5545 = vdwg.mxu0
      %5546 = vmatpush.msra.mxu0 0.0
      %5547 = vmatpush.msra.mxu0 0.0
      %5548 = vmatpush.msra.mxu0 0.0
      %5549 = vmatpush.msra.mxu0 0.0
      %5550 = vmatpush.msra.mxu0 0.0
      %5551 = vmatpush.msra.mxu0 0.0
      %5552 = vmatpush.msra.mxu0 0.0
      %5553 = vmatpush.msra.mxu0 0.0
      %5554 = vmatpush.msra.mxu0 %v5506
      %5555 = vmatpush.msra.mxu0 %v5504
      %5556 = vmatpush.msra.mxu0 %v5502
      %5557 = vmatpush.msra.mxu0 %v5500
      %5558 = vmatpush.msra.mxu0 %v5498
      %5559 = vmatpush.msra.mxu0 %v5496
      %5560 = vmatpush.msra.mxu0 %v5494
      %5561 = vmatpush.msra.mxu0 %v5492
      %5562 = vmatmul.f32.gmra.mxu0 %v5512
      %v5563 = vpop.f32.mrf.mxu0
      %v5564 = vadd.f32 0.0, %v5563
      %5565 = vmatmul.f32.gmra.mxu0 %v5515
      %v5566 = vpop.f32.mrf.mxu0
      %v5567 = vadd.f32 0.0, %v5566
      %5568 = vmatmul.f32.gmra.mxu0 %v5518
      %v5569 = vpop.f32.mrf.mxu0
      %v5570 = vadd.f32 0.0, %v5569
      %5571 = vdwg.mxu0
      %v5572 = vadd.f32 %v5437, %v5538
      %v5573 = vadd.f32 %v5438, %v5564
      %v5574 = vadd.f32 %v5439, %v5541
      %v5575 = vadd.f32 %v5440, %v5567
      %v5576 = vadd.f32 %v5441, %v5544
      %v5577 = vadd.f32 %v5442, %v5570
      %v5578 = vld [vmem:[%s12] sm:$0xff]
      %v5579 = vld [vmem:[%s12 + $0x8] sm:$0xff]
      %v5580 = vld [vmem:[%s12 + $0x10] sm:$0x7]
      %5582 = vset.pattern.permute.xlu0 0
      %5583 = vperm.xlu0 %5582, %v5578
      %v5584 = vpop.permute.xlu0 %5583
      %5587 = vset.pattern.permute.xlu0 0
      %5588 = vperm.xlu0 %5587, %v5579
      %v5589 = vpop.permute.xlu0 %5588
      %5592 = vset.pattern.permute.xlu0 0
      %5593 = vperm.xlu0 %5592, %v5580
      %v5594 = vpop.permute.xlu0 %5593
      %v5596 = vmul.f32 %v5572, %v5584
      %v5597 = vmul.f32 %v5573, %v5584
      %v5598 = vmul.f32 %v5574, %v5589
      %v5599 = vmul.f32 %v5575, %v5589
      %v5600 = vmul.f32 %v5576, %v5594
      %v5601 = vmul.f32 %v5577, %v5594
      %v5602 = vld [vmem:[%s13] sm:$0xff]
      %v5603 = vld [vmem:[%s13 + $0x8] sm:$0xff]
      %v5604 = vld [vmem:[%s13 + $0x10] sm:$0x7]
      %5606 = vset.pattern.permute.xlu0 0
      %5607 = vperm.xlu0 %5606, %v5602
      %v5608 = vpop.permute.xlu0 %5607
      %5611 = vset.pattern.permute.xlu0 0
      %5612 = vperm.xlu0 %5611, %v5603
      %v5613 = vpop.permute.xlu0 %5612
      %5616 = vset.pattern.permute.xlu0 0
      %5617 = vperm.xlu0 %5616, %v5604
      %v5618 = vpop.permute.xlu0 %5617
      %v5620 = vadd.f32 %v5596, %v5608
      %v5621 = vadd.f32 %v5597, %v5608
      %v5622 = vadd.f32 %v5598, %v5613
      %v5623 = vadd.f32 %v5599, %v5613
      %v5624 = vadd.f32 %v5600, %v5618
      %v5625 = vadd.f32 %v5601, %v5618
      %v5626 = vld [vmem:[%s14] sm:$0xff]
      %v5627 = vld [vmem:[%s14 + $0x8] sm:$0xff]
      %v5628 = vld [vmem:[%s14 + $0x10] sm:$0xff]
      %v5629 = vld [vmem:[%s14 + $0x18] sm:$0xff]
      %v5630 = vld [vmem:[%s14 + $0x20] sm:$0xff]
      %v5631 = vld [vmem:[%s14 + $0x28] sm:$0xff]
      %v5632 = vld [vmem:[%s14 + $0x30] sm:$0xff]
      %v5633 = vld [vmem:[%s14 + $0x38] sm:$0xff]
      %v5634 = vld [vmem:[%s14 + $0x40] sm:$0xff]
      %v5635 = vld [vmem:[%s14 + $0x48] sm:$0xff]
      %v5636 = vld [vmem:[%s14 + $0x50] sm:$0xff]
      %v5637 = vld [vmem:[%s14 + $0x58] sm:$0xff]
      %v5638 = vld [vmem:[%s14 + $0x60] sm:$0xff]
      %v5639 = vld [vmem:[%s14 + $0x68] sm:$0xff]
      %v5640 = vld [vmem:[%s14 + $0x70] sm:$0xff]
      %v5641 = vld [vmem:[%s14 + $0x78] sm:$0xff]
      %v5642 = vld [vmem:[%s14 + $0x80] sm:$0xff]
      %v5643 = vld [vmem:[%s14 + $0x88] sm:$0xff]
      %v5644 = vld [vmem:[%s14 + $0x90] sm:$0xff]
      %v5645 = vld [vmem:[%s14 + $0x98] sm:$0xff]
      %v5646 = vld [vmem:[%s14 + $0xa0] sm:$0xff]
      %v5647 = vld [vmem:[%s14 + $0xa8] sm:$0xff]
      %v5648 = vld [vmem:[%s14 + $0xb0] sm:$0xff]
      %v5649 = vld [vmem:[%s14 + $0xb8] sm:$0xff]
      %v5650 = vld [vmem:[%s14 + $0xc0] sm:$0xff]
      %v5651 = vld [vmem:[%s14 + $0xc8] sm:$0xff]
      %v5652 = vld [vmem:[%s14 + $0xd0] sm:$0xff]
      %v5653 = vld [vmem:[%s14 + $0xd8] sm:$0xff]
      %v5654 = vld [vmem:[%s14 + $0xe0] sm:$0xff]
      %v5655 = vld [vmem:[%s14 + $0xe8] sm:$0xff]
      %v5656 = vld [vmem:[%s14 + $0xf0] sm:$0xff]
      %v5657 = vld [vmem:[%s14 + $0xf8] sm:$0xff]
      %v5658 = vld [vmem:[%s14 + $0x100] sm:$0xff]
      %v5659 = vld [vmem:[%s14 + $0x108] sm:$0xff]
      %v5660 = vld [vmem:[%s14 + $0x110] sm:$0xff]
      %v5661 = vld [vmem:[%s14 + $0x118] sm:$0xff]
      %v5662 = vld [vmem:[%s14 + $0x120] sm:$0xff]
      %v5663 = vld [vmem:[%s14 + $0x128] sm:$0xff]
      %v5664 = vld [vmem:[%s14 + $0x130] sm:$0xff]
      %v5665 = vld [vmem:[%s14 + $0x138] sm:$0xff]
      %v5666 = vld [vmem:[%s14 + $0x140] sm:$0xff]
      %v5667 = vld [vmem:[%s14 + $0x148] sm:$0xff]
      %v5668 = vld [vmem:[%s14 + $0x150] sm:$0xff]
      %v5669 = vld [vmem:[%s14 + $0x158] sm:$0xff]
      %v5670 = vld [vmem:[%s14 + $0x160] sm:$0xff]
      %v5671 = vld [vmem:[%s14 + $0x168] sm:$0xff]
      %v5672 = vld [vmem:[%s14 + $0x170] sm:$0xff]
      %v5673 = vld [vmem:[%s14 + $0x178] sm:$0xff]
      %v5674 = vld [vmem:[%s14 + $0x180] sm:$0xff]
      %v5675 = vld [vmem:[%s14 + $0x188] sm:$0xff]
      %v5676 = vld [vmem:[%s14 + $0x190] sm:$0xff]
      %v5677 = vld [vmem:[%s14 + $0x198] sm:$0xff]
      %v5678 = vld [vmem:[%s14 + $0x1a0] sm:$0xff]
      %v5679 = vld [vmem:[%s14 + $0x1a8] sm:$0xff]
      %v5680 = vld [vmem:[%s14 + $0x1b0] sm:$0xff]
      %v5681 = vld [vmem:[%s14 + $0x1b8] sm:$0xff]
      %v5682 = vld [vmem:[%s14 + $0x1c0] sm:$0xff]
      %v5683 = vld [vmem:[%s14 + $0x1c8] sm:$0xff]
      %v5684 = vld [vmem:[%s14 + $0x1d0] sm:$0xff]
      %v5685 = vld [vmem:[%s14 + $0x1d8] sm:$0xff]
      %v5686 = vld [vmem:[%s14 + $0x1e0] sm:$0xff]
      %v5687 = vld [vmem:[%s14 + $0x1e8] sm:$0xff]
      %v5688 = vld [vmem:[%s14 + $0x1f0] sm:$0xff]
      %v5689 = vld [vmem:[%s14 + $0x1f8] sm:$0xff]
      %v5690 = vld [vmem:[%s14 + $0x200] sm:$0xff]
      %v5691 = vld [vmem:[%s14 + $0x208] sm:$0xff]
      %v5692 = vld [vmem:[%s14 + $0x210] sm:$0xff]
      %v5693 = vld [vmem:[%s14 + $0x218] sm:$0xff]
      %v5694 = vld [vmem:[%s14 + $0x220] sm:$0xff]
      %v5695 = vld [vmem:[%s14 + $0x228] sm:$0xff]
      %v5696 = vld [vmem:[%s14 + $0x230] sm:$0xff]
      %v5697 = vld [vmem:[%s14 + $0x238] sm:$0xff]
      %v5698 = vld [vmem:[%s14 + $0x240] sm:$0xff]
      %v5699 = vld [vmem:[%s14 + $0x248] sm:$0xff]
      %v5700 = vld [vmem:[%s14 + $0x250] sm:$0xff]
      %v5701 = vld [vmem:[%s14 + $0x258] sm:$0xff]
      %v5702 = vld [vmem:[%s14 + $0x260] sm:$0xff]
      %v5703 = vld [vmem:[%s14 + $0x268] sm:$0xff]
      %v5704 = vld [vmem:[%s14 + $0x270] sm:$0xff]
      %v5705 = vld [vmem:[%s14 + $0x278] sm:$0xff]
      %v5706 = vld [vmem:[%s14 + $0x280] sm:$0xff]
      %v5707 = vld [vmem:[%s14 + $0x288] sm:$0xff]
      %v5708 = vld [vmem:[%s14 + $0x290] sm:$0xff]
      %v5709 = vld [vmem:[%s14 + $0x298] sm:$0xff]
      %v5710 = vld [vmem:[%s14 + $0x2a0] sm:$0xff]
      %v5711 = vld [vmem:[%s14 + $0x2a8] sm:$0xff]
      %v5712 = vld [vmem:[%s14 + $0x2b0] sm:$0xff]
      %v5713 = vld [vmem:[%s14 + $0x2b8] sm:$0xff]
      %v5714 = vld [vmem:[%s14 + $0x2c0] sm:$0xff]
      %v5715 = vld [vmem:[%s14 + $0x2c8] sm:$0xff]
      %v5716 = vld [vmem:[%s14 + $0x2d0] sm:$0xff]
      %v5717 = vld [vmem:[%s14 + $0x2d8] sm:$0xff]
      %v5718 = vld [vmem:[%s14 + $0x2e0] sm:$0xff]
      %v5719 = vld [vmem:[%s14 + $0x2e8] sm:$0xff]
      %v5720 = vld [vmem:[%s14 + $0x2f0] sm:$0xff]
      %v5721 = vld [vmem:[%s14 + $0x2f8] sm:$0xff]
      %v5722 = vld [vmem:[%s14 + $0x300] sm:$0xff]
      %v5723 = vld [vmem:[%s14 + $0x308] sm:$0xff]
      %v5724 = vld [vmem:[%s14 + $0x310] sm:$0xff]
      %v5725 = vld [vmem:[%s14 + $0x318] sm:$0xff]
      %v5726 = vld [vmem:[%s14 + $0x320] sm:$0xff]
      %v5727 = vld [vmem:[%s14 + $0x328] sm:$0xff]
      %v5728 = vld [vmem:[%s14 + $0x330] sm:$0xff]
      %v5729 = vld [vmem:[%s14 + $0x338] sm:$0xff]
      %v5730 = vld [vmem:[%s14 + $0x340] sm:$0xff]
      %v5731 = vld [vmem:[%s14 + $0x348] sm:$0xff]
      %v5732 = vld [vmem:[%s14 + $0x350] sm:$0xff]
      %v5733 = vld [vmem:[%s14 + $0x358] sm:$0xff]
      %v5734 = vld [vmem:[%s14 + $0x360] sm:$0xff]
      %v5735 = vld [vmem:[%s14 + $0x368] sm:$0xff]
      %v5736 = vld [vmem:[%s14 + $0x370] sm:$0xff]
      %v5737 = vld [vmem:[%s14 + $0x378] sm:$0xff]
      %v5738 = vld [vmem:[%s14 + $0x380] sm:$0xff]
      %v5739 = vld [vmem:[%s14 + $0x388] sm:$0xff]
      %v5740 = vld [vmem:[%s14 + $0x390] sm:$0xff]
      %v5741 = vld [vmem:[%s14 + $0x398] sm:$0xff]
      %v5742 = vld [vmem:[%s14 + $0x3a0] sm:$0xff]
      %v5743 = vld [vmem:[%s14 + $0x3a8] sm:$0xff]
      %v5744 = vld [vmem:[%s14 + $0x3b0] sm:$0xff]
      %v5745 = vld [vmem:[%s14 + $0x3b8] sm:$0xff]
      %v5746 = vld [vmem:[%s14 + $0x3c0] sm:$0xff]
      %v5747 = vld [vmem:[%s14 + $0x3c8] sm:$0xff]
      %v5748 = vld [vmem:[%s14 + $0x3d0] sm:$0xff]
      %v5749 = vld [vmem:[%s14 + $0x3d8] sm:$0xff]
      %v5750 = vld [vmem:[%s14 + $0x3e0] sm:$0xff]
      %v5751 = vld [vmem:[%s14 + $0x3e8] sm:$0xff]
      %v5752 = vld [vmem:[%s14 + $0x3f0] sm:$0xff]
      %v5753 = vld [vmem:[%s14 + $0x3f8] sm:$0xff]
      %v5754 = vld [vmem:[%s14 + $0x400] sm:$0xff]
      %v5755 = vld [vmem:[%s14 + $0x408] sm:$0xff]
      %v5756 = vld [vmem:[%s14 + $0x410] sm:$0xff]
      %v5757 = vld [vmem:[%s14 + $0x418] sm:$0xff]
      %v5758 = vld [vmem:[%s14 + $0x420] sm:$0xff]
      %v5759 = vld [vmem:[%s14 + $0x428] sm:$0xff]
      %v5760 = vld [vmem:[%s14 + $0x430] sm:$0xff]
      %v5761 = vld [vmem:[%s14 + $0x438] sm:$0xff]
      %v5762 = vld [vmem:[%s14 + $0x440] sm:$0xff]
      %v5763 = vld [vmem:[%s14 + $0x448] sm:$0xff]
      %v5764 = vld [vmem:[%s14 + $0x450] sm:$0xff]
      %v5765 = vld [vmem:[%s14 + $0x458] sm:$0xff]
      %v5766 = vld [vmem:[%s14 + $0x460] sm:$0xff]
      %v5767 = vld [vmem:[%s14 + $0x468] sm:$0xff]
      %v5768 = vld [vmem:[%s14 + $0x470] sm:$0xff]
      %v5769 = vld [vmem:[%s14 + $0x478] sm:$0xff]
      %v5770 = vld [vmem:[%s14 + $0x480] sm:$0xff]
      %v5771 = vld [vmem:[%s14 + $0x488] sm:$0xff]
      %v5772 = vld [vmem:[%s14 + $0x490] sm:$0xff]
      %v5773 = vld [vmem:[%s14 + $0x498] sm:$0xff]
      %v5774 = vld [vmem:[%s14 + $0x4a0] sm:$0xff]
      %v5775 = vld [vmem:[%s14 + $0x4a8] sm:$0xff]
      %v5776 = vld [vmem:[%s14 + $0x4b0] sm:$0xff]
      %v5777 = vld [vmem:[%s14 + $0x4b8] sm:$0xff]
      %v5778 = vld [vmem:[%s14 + $0x4c0] sm:$0xff]
      %v5779 = vld [vmem:[%s14 + $0x4c8] sm:$0xff]
      %v5780 = vld [vmem:[%s14 + $0x4d0] sm:$0xff]
      %v5781 = vld [vmem:[%s14 + $0x4d8] sm:$0xff]
      %v5782 = vld [vmem:[%s14 + $0x4e0] sm:$0xff]
      %v5783 = vld [vmem:[%s14 + $0x4e8] sm:$0xff]
      %v5784 = vld [vmem:[%s14 + $0x4f0] sm:$0xff]
      %v5785 = vld [vmem:[%s14 + $0x4f8] sm:$0xff]
      %v5786 = vld [vmem:[%s14 + $0x500] sm:$0xff]
      %v5787 = vld [vmem:[%s14 + $0x508] sm:$0xff]
      %v5788 = vld [vmem:[%s14 + $0x510] sm:$0xff]
      %v5789 = vld [vmem:[%s14 + $0x518] sm:$0xff]
      %v5790 = vld [vmem:[%s14 + $0x520] sm:$0xff]
      %v5791 = vld [vmem:[%s14 + $0x528] sm:$0xff]
      %v5792 = vld [vmem:[%s14 + $0x530] sm:$0xff]
      %v5793 = vld [vmem:[%s14 + $0x538] sm:$0xff]
      %v5794 = vld [vmem:[%s14 + $0x540] sm:$0xff]
      %v5795 = vld [vmem:[%s14 + $0x548] sm:$0xff]
      %v5796 = vld [vmem:[%s14 + $0x550] sm:$0xff]
      %v5797 = vld [vmem:[%s14 + $0x558] sm:$0xff]
      %v5798 = vld [vmem:[%s14 + $0x560] sm:$0xff]
      %v5799 = vld [vmem:[%s14 + $0x568] sm:$0xff]
      %v5800 = vld [vmem:[%s14 + $0x570] sm:$0xff]
      %v5801 = vld [vmem:[%s14 + $0x578] sm:$0xff]
      %v5802 = vld [vmem:[%s14 + $0x580] sm:$0xff]
      %v5803 = vld [vmem:[%s14 + $0x588] sm:$0xff]
      %v5804 = vld [vmem:[%s14 + $0x590] sm:$0xff]
      %v5805 = vld [vmem:[%s14 + $0x598] sm:$0xff]
      %v5806 = vld [vmem:[%s14 + $0x5a0] sm:$0xff]
      %v5807 = vld [vmem:[%s14 + $0x5a8] sm:$0xff]
      %v5808 = vld [vmem:[%s14 + $0x5b0] sm:$0xff]
      %v5809 = vld [vmem:[%s14 + $0x5b8] sm:$0xff]
      %v5810 = vld [vmem:[%s14 + $0x5c0] sm:$0xff]
      %v5811 = vld [vmem:[%s14 + $0x5c8] sm:$0xff]
      %v5812 = vld [vmem:[%s14 + $0x5d0] sm:$0xff]
      %v5813 = vld [vmem:[%s14 + $0x5d8] sm:$0xff]
      %v5814 = vld [vmem:[%s14 + $0x5e0] sm:$0xff]
      %v5815 = vld [vmem:[%s14 + $0x5e8] sm:$0xff]
      %v5816 = vld [vmem:[%s14 + $0x5f0] sm:$0xff]
      %v5817 = vld [vmem:[%s14 + $0x5f8] sm:$0xff]
      %v5818 = vld [vmem:[%s14 + $0x600] sm:$0xff]
      %v5819 = vld [vmem:[%s14 + $0x608] sm:$0xff]
      %v5820 = vld [vmem:[%s14 + $0x610] sm:$0xff]
      %v5821 = vld [vmem:[%s14 + $0x618] sm:$0xff]
      %v5822 = vld [vmem:[%s14 + $0x620] sm:$0xff]
      %v5823 = vld [vmem:[%s14 + $0x628] sm:$0xff]
      %v5824 = vld [vmem:[%s14 + $0x630] sm:$0xff]
      %v5825 = vld [vmem:[%s14 + $0x638] sm:$0xff]
      %v5826 = vld [vmem:[%s14 + $0x640] sm:$0xff]
      %v5827 = vld [vmem:[%s14 + $0x648] sm:$0xff]
      %v5828 = vld [vmem:[%s14 + $0x650] sm:$0xff]
      %v5829 = vld [vmem:[%s14 + $0x658] sm:$0xff]
      %v5830 = vld [vmem:[%s14 + $0x660] sm:$0xff]
      %v5831 = vld [vmem:[%s14 + $0x668] sm:$0xff]
      %v5832 = vld [vmem:[%s14 + $0x670] sm:$0xff]
      %v5833 = vld [vmem:[%s14 + $0x678] sm:$0xff]
      %v5834 = vld [vmem:[%s14 + $0x680] sm:$0xff]
      %v5835 = vld [vmem:[%s14 + $0x688] sm:$0xff]
      %v5836 = vld [vmem:[%s14 + $0x690] sm:$0xff]
      %v5837 = vld [vmem:[%s14 + $0x698] sm:$0xff]
      %v5838 = vld [vmem:[%s14 + $0x6a0] sm:$0xff]
      %v5839 = vld [vmem:[%s14 + $0x6a8] sm:$0xff]
      %v5840 = vld [vmem:[%s14 + $0x6b0] sm:$0xff]
      %v5841 = vld [vmem:[%s14 + $0x6b8] sm:$0xff]
      %v5842 = vld [vmem:[%s14 + $0x6c0] sm:$0xff]
      %v5843 = vld [vmem:[%s14 + $0x6c8] sm:$0xff]
      %v5844 = vld [vmem:[%s14 + $0x6d0] sm:$0xff]
      %v5845 = vld [vmem:[%s14 + $0x6d8] sm:$0xff]
      %v5846 = vld [vmem:[%s14 + $0x6e0] sm:$0xff]
      %v5847 = vld [vmem:[%s14 + $0x6e8] sm:$0xff]
      %v5848 = vld [vmem:[%s14 + $0x6f0] sm:$0xff]
      %v5849 = vld [vmem:[%s14 + $0x6f8] sm:$0xff]
      %v5850 = vld [vmem:[%s14 + $0x700] sm:$0xff]
      %v5851 = vld [vmem:[%s14 + $0x708] sm:$0xff]
      %v5852 = vld [vmem:[%s14 + $0x710] sm:$0xff]
      %v5853 = vld [vmem:[%s14 + $0x718] sm:$0xff]
      %v5854 = vld [vmem:[%s14 + $0x720] sm:$0xff]
      %v5855 = vld [vmem:[%s14 + $0x728] sm:$0xff]
      %v5856 = vld [vmem:[%s14 + $0x730] sm:$0xff]
      %v5857 = vld [vmem:[%s14 + $0x738] sm:$0xff]
      %v5858 = vld [vmem:[%s14 + $0x740] sm:$0xff]
      %v5859 = vld [vmem:[%s14 + $0x748] sm:$0xff]
      %v5860 = vld [vmem:[%s14 + $0x750] sm:$0xff]
      %v5861 = vld [vmem:[%s14 + $0x758] sm:$0xff]
      %v5862 = vld [vmem:[%s14 + $0x760] sm:$0xff]
      %v5863 = vld [vmem:[%s14 + $0x768] sm:$0xff]
      %v5864 = vld [vmem:[%s14 + $0x770] sm:$0xff]
      %v5865 = vld [vmem:[%s14 + $0x778] sm:$0xff]
      %v5866 = vld [vmem:[%s14 + $0x780] sm:$0xff]
      %v5867 = vld [vmem:[%s14 + $0x788] sm:$0xff]
      %v5868 = vld [vmem:[%s14 + $0x790] sm:$0xff]
      %v5869 = vld [vmem:[%s14 + $0x798] sm:$0xff]
      %v5870 = vld [vmem:[%s14 + $0x7a0] sm:$0xff]
      %v5871 = vld [vmem:[%s14 + $0x7a8] sm:$0xff]
      %v5872 = vld [vmem:[%s14 + $0x7b0] sm:$0xff]
      %v5873 = vld [vmem:[%s14 + $0x7b8] sm:$0xff]
      %v5874 = vld [vmem:[%s14 + $0x7c0] sm:$0xff]
      %v5875 = vld [vmem:[%s14 + $0x7c8] sm:$0xff]
      %v5876 = vld [vmem:[%s14 + $0x7d0] sm:$0xff]
      %v5877 = vld [vmem:[%s14 + $0x7d8] sm:$0xff]
      %v5878 = vld [vmem:[%s14 + $0x7e0] sm:$0xff]
      %v5879 = vld [vmem:[%s14 + $0x7e8] sm:$0xff]
      %v5880 = vld [vmem:[%s14 + $0x7f0] sm:$0xff]
      %v5881 = vld [vmem:[%s14 + $0x7f8] sm:$0xff]
      %5882 = vmatpush.msra.mxu0 %v5746
      %5883 = vmatpush.msra.mxu0 %v5738
      %5884 = vmatpush.msra.mxu0 %v5730
      %5885 = vmatpush.msra.mxu0 %v5722
      %5886 = vmatpush.msra.mxu0 %v5714
      %5887 = vmatpush.msra.mxu0 %v5706
      %5888 = vmatpush.msra.mxu0 %v5698
      %5889 = vmatpush.msra.mxu0 %v5690
      %5890 = vmatpush.msra.mxu0 %v5682
      %5891 = vmatpush.msra.mxu0 %v5674
      %5892 = vmatpush.msra.mxu0 %v5666
      %5893 = vmatpush.msra.mxu0 %v5658
      %5894 = vmatpush.msra.mxu0 %v5650
      %5895 = vmatpush.msra.mxu0 %v5642
      %5896 = vmatpush.msra.mxu0 %v5634
      %5897 = vmatpush.msra.mxu0 %v5626
      %5898 = vmatmul.f32.gmra.mxu0 %v5620
      %v5899 = vpop.f32.mrf.mxu0
      %v5900 = vadd.f32 0.0, %v5899
      %5901 = vmatmul.f32.gmra.mxu0 %v5622
      %v5902 = vpop.f32.mrf.mxu0
      %v5903 = vadd.f32 0.0, %v5902
      %5904 = vmatmul.f32.gmra.mxu0 %v5624
      %v5905 = vpop.f32.mrf.mxu0
      %v5906 = vadd.f32 0.0, %v5905
      %5907 = vdwg.mxu0
      %5908 = vmatpush.msra.mxu0 %v5874
      %5909 = vmatpush.msra.mxu0 %v5866
      %5910 = vmatpush.msra.mxu0 %v5858
      %5911 = vmatpush.msra.mxu0 %v5850
      %5912 = vmatpush.msra.mxu0 %v5842
      %5913 = vmatpush.msra.mxu0 %v5834
      %5914 = vmatpush.msra.mxu0 %v5826
      %5915 = vmatpush.msra.mxu0 %v5818
      %5916 = vmatpush.msra.mxu0 %v5810
      %5917 = vmatpush.msra.mxu0 %v5802
      %5918 = vmatpush.msra.mxu0 %v5794
      %5919 = vmatpush.msra.mxu0 %v5786
      %5920 = vmatpush.msra.mxu0 %v5778
      %5921 = vmatpush.msra.mxu0 %v5770
      %5922 = vmatpush.msra.mxu0 %v5762
      %5923 = vmatpush.msra.mxu0 %v5754
      %5924 = vmatmul.f32.gmra.mxu0 %v5621
      %v5925 = vpop.f32.mrf.mxu0
      %v5926 = vadd.f32 %v5900, %v5925
      %5927 = vmatmul.f32.gmra.mxu0 %v5623
      %v5928 = vpop.f32.mrf.mxu0
      %v5929 = vadd.f32 %v5903, %v5928
      %5930 = vmatmul.f32.gmra.mxu0 %v5625
      %v5931 = vpop.f32.mrf.mxu0
      %v5932 = vadd.f32 %v5906, %v5931
      %5933 = vdwg.mxu0
      %5934 = vmatpush.msra.mxu0 %v5747
      %5935 = vmatpush.msra.mxu0 %v5739
      %5936 = vmatpush.msra.mxu0 %v5731
      %5937 = vmatpush.msra.mxu0 %v5723
      %5938 = vmatpush.msra.mxu0 %v5715
      %5939 = vmatpush.msra.mxu0 %v5707
      %5940 = vmatpush.msra.mxu0 %v5699
      %5941 = vmatpush.msra.mxu0 %v5691
      %5942 = vmatpush.msra.mxu0 %v5683
      %5943 = vmatpush.msra.mxu0 %v5675
      %5944 = vmatpush.msra.mxu0 %v5667
      %5945 = vmatpush.msra.mxu0 %v5659
      %5946 = vmatpush.msra.mxu0 %v5651
      %5947 = vmatpush.msra.mxu0 %v5643
      %5948 = vmatpush.msra.mxu0 %v5635
      %5949 = vmatpush.msra.mxu0 %v5627
      %5950 = vmatmul.f32.gmra.mxu0 %v5620
      %v5951 = vpop.f32.mrf.mxu0
      %v5952 = vadd.f32 0.0, %v5951
      %5953 = vmatmul.f32.gmra.mxu0 %v5622
      %v5954 = vpop.f32.mrf.mxu0
      %v5955 = vadd.f32 0.0, %v5954
      %5956 = vmatmul.f32.gmra.mxu0 %v5624
      %v5957 = vpop.f32.mrf.mxu0
      %v5958 = vadd.f32 0.0, %v5957
      %5959 = vdwg.mxu0
      %5960 = vmatpush.msra.mxu0 %v5875
      %5961 = vmatpush.msra.mxu0 %v5867
      %5962 = vmatpush.msra.mxu0 %v5859
      %5963 = vmatpush.msra.mxu0 %v5851
      %5964 = vmatpush.msra.mxu0 %v5843
      %5965 = vmatpush.msra.mxu0 %v5835
      %5966 = vmatpush.msra.mxu0 %v5827
      %5967 = vmatpush.msra.mxu0 %v5819
      %5968 = vmatpush.msra.mxu0 %v5811
      %5969 = vmatpush.msra.mxu0 %v5803
      %5970 = vmatpush.msra.mxu0 %v5795
      %5971 = vmatpush.msra.mxu0 %v5787
      %5972 = vmatpush.msra.mxu0 %v5779
      %5973 = vmatpush.msra.mxu0 %v5771
      %5974 = vmatpush.msra.mxu0 %v5763
      %5975 = vmatpush.msra.mxu0 %v5755
      %5976 = vmatmul.f32.gmra.mxu0 %v5621
      %v5977 = vpop.f32.mrf.mxu0
      %v5978 = vadd.f32 %v5952, %v5977
      %5979 = vmatmul.f32.gmra.mxu0 %v5623
      %v5980 = vpop.f32.mrf.mxu0
      %v5981 = vadd.f32 %v5955, %v5980
      %5982 = vmatmul.f32.gmra.mxu0 %v5625
      %v5983 = vpop.f32.mrf.mxu0
      %v5984 = vadd.f32 %v5958, %v5983
      %5985 = vdwg.mxu0
      %5986 = vmatpush.msra.mxu0 %v5748
      %5987 = vmatpush.msra.mxu0 %v5740
      %5988 = vmatpush.msra.mxu0 %v5732
      %5989 = vmatpush.msra.mxu0 %v5724
      %5990 = vmatpush.msra.mxu0 %v5716
      %5991 = vmatpush.msra.mxu0 %v5708
      %5992 = vmatpush.msra.mxu0 %v5700
      %5993 = vmatpush.msra.mxu0 %v5692
      %5994 = vmatpush.msra.mxu0 %v5684
      %5995 = vmatpush.msra.mxu0 %v5676
      %5996 = vmatpush.msra.mxu0 %v5668
      %5997 = vmatpush.msra.mxu0 %v5660
      %5998 = vmatpush.msra.mxu0 %v5652
      %5999 = vmatpush.msra.mxu0 %v5644
      %6000 = vmatpush.msra.mxu0 %v5636
      %6001 = vmatpush.msra.mxu0 %v5628
      %6002 = vmatmul.f32.gmra.mxu0 %v5620
      %v6003 = vpop.f32.mrf.mxu0
      %v6004 = vadd.f32 0.0, %v6003
      %6005 = vmatmul.f32.gmra.mxu0 %v5622
      %v6006 = vpop.f32.mrf.mxu0
      %v6007 = vadd.f32 0.0, %v6006
      %6008 = vmatmul.f32.gmra.mxu0 %v5624
      %v6009 = vpop.f32.mrf.mxu0
      %v6010 = vadd.f32 0.0, %v6009
      %6011 = vdwg.mxu0
      %6012 = vmatpush.msra.mxu0 %v5876
      %6013 = vmatpush.msra.mxu0 %v5868
      %6014 = vmatpush.msra.mxu0 %v5860
      %6015 = vmatpush.msra.mxu0 %v5852
      %6016 = vmatpush.msra.mxu0 %v5844
      %6017 = vmatpush.msra.mxu0 %v5836
      %6018 = vmatpush.msra.mxu0 %v5828
      %6019 = vmatpush.msra.mxu0 %v5820
      %6020 = vmatpush.msra.mxu0 %v5812
      %6021 = vmatpush.msra.mxu0 %v5804
      %6022 = vmatpush.msra.mxu0 %v5796
      %6023 = vmatpush.msra.mxu0 %v5788
      %6024 = vmatpush.msra.mxu0 %v5780
      %6025 = vmatpush.msra.mxu0 %v5772
      %6026 = vmatpush.msra.mxu0 %v5764
      %6027 = vmatpush.msra.mxu0 %v5756
      %6028 = vmatmul.f32.gmra.mxu0 %v5621
      %v6029 = vpop.f32.mrf.mxu0
      %v6030 = vadd.f32 %v6004, %v6029
      %6031 = vmatmul.f32.gmra.mxu0 %v5623
      %v6032 = vpop.f32.mrf.mxu0
      %v6033 = vadd.f32 %v6007, %v6032
      %6034 = vmatmul.f32.gmra.mxu0 %v5625
      %v6035 = vpop.f32.mrf.mxu0
      %v6036 = vadd.f32 %v6010, %v6035
      %6037 = vdwg.mxu0
      %6038 = vmatpush.msra.mxu0 %v5749
      %6039 = vmatpush.msra.mxu0 %v5741
      %6040 = vmatpush.msra.mxu0 %v5733
      %6041 = vmatpush.msra.mxu0 %v5725
      %6042 = vmatpush.msra.mxu0 %v5717
      %6043 = vmatpush.msra.mxu0 %v5709
      %6044 = vmatpush.msra.mxu0 %v5701
      %6045 = vmatpush.msra.mxu0 %v5693
      %6046 = vmatpush.msra.mxu0 %v5685
      %6047 = vmatpush.msra.mxu0 %v5677
      %6048 = vmatpush.msra.mxu0 %v5669
      %6049 = vmatpush.msra.mxu0 %v5661
      %6050 = vmatpush.msra.mxu0 %v5653
      %6051 = vmatpush.msra.mxu0 %v5645
      %6052 = vmatpush.msra.mxu0 %v5637
      %6053 = vmatpush.msra.mxu0 %v5629
      %6054 = vmatmul.f32.gmra.mxu0 %v5620
      %v6055 = vpop.f32.mrf.mxu0
      %v6056 = vadd.f32 0.0, %v6055
      %6057 = vmatmul.f32.gmra.mxu0 %v5622
      %v6058 = vpop.f32.mrf.mxu0
      %v6059 = vadd.f32 0.0, %v6058
      %6060 = vmatmul.f32.gmra.mxu0 %v5624
      %v6061 = vpop.f32.mrf.mxu0
      %v6062 = vadd.f32 0.0, %v6061
      %6063 = vdwg.mxu0
      %6064 = vmatpush.msra.mxu0 %v5877
      %6065 = vmatpush.msra.mxu0 %v5869
      %6066 = vmatpush.msra.mxu0 %v5861
      %6067 = vmatpush.msra.mxu0 %v5853
      %6068 = vmatpush.msra.mxu0 %v5845
      %6069 = vmatpush.msra.mxu0 %v5837
      %6070 = vmatpush.msra.mxu0 %v5829
      %6071 = vmatpush.msra.mxu0 %v5821
      %6072 = vmatpush.msra.mxu0 %v5813
      %6073 = vmatpush.msra.mxu0 %v5805
      %6074 = vmatpush.msra.mxu0 %v5797
      %6075 = vmatpush.msra.mxu0 %v5789
      %6076 = vmatpush.msra.mxu0 %v5781
      %6077 = vmatpush.msra.mxu0 %v5773
      %6078 = vmatpush.msra.mxu0 %v5765
      %6079 = vmatpush.msra.mxu0 %v5757
      %6080 = vmatmul.f32.gmra.mxu0 %v5621
      %v6081 = vpop.f32.mrf.mxu0
      %v6082 = vadd.f32 %v6056, %v6081
      %6083 = vmatmul.f32.gmra.mxu0 %v5623
      %v6084 = vpop.f32.mrf.mxu0
      %v6085 = vadd.f32 %v6059, %v6084
      %6086 = vmatmul.f32.gmra.mxu0 %v5625
      %v6087 = vpop.f32.mrf.mxu0
      %v6088 = vadd.f32 %v6062, %v6087
      %6089 = vdwg.mxu0
      %6090 = vmatpush.msra.mxu0 %v5750
      %6091 = vmatpush.msra.mxu0 %v5742
      %6092 = vmatpush.msra.mxu0 %v5734
      %6093 = vmatpush.msra.mxu0 %v5726
      %6094 = vmatpush.msra.mxu0 %v5718
      %6095 = vmatpush.msra.mxu0 %v5710
      %6096 = vmatpush.msra.mxu0 %v5702
      %6097 = vmatpush.msra.mxu0 %v5694
      %6098 = vmatpush.msra.mxu0 %v5686
      %6099 = vmatpush.msra.mxu0 %v5678
      %6100 = vmatpush.msra.mxu0 %v5670
      %6101 = vmatpush.msra.mxu0 %v5662
      %6102 = vmatpush.msra.mxu0 %v5654
      %6103 = vmatpush.msra.mxu0 %v5646
      %6104 = vmatpush.msra.mxu0 %v5638
      %6105 = vmatpush.msra.mxu0 %v5630
      %6106 = vmatmul.f32.gmra.mxu0 %v5620
      %v6107 = vpop.f32.mrf.mxu0
      %v6108 = vadd.f32 0.0, %v6107
      %6109 = vmatmul.f32.gmra.mxu0 %v5622
      %v6110 = vpop.f32.mrf.mxu0
      %v6111 = vadd.f32 0.0, %v6110
      %6112 = vmatmul.f32.gmra.mxu0 %v5624
      %v6113 = vpop.f32.mrf.mxu0
      %v6114 = vadd.f32 0.0, %v6113
      %6115 = vdwg.mxu0
      %6116 = vmatpush.msra.mxu0 %v5878
      %6117 = vmatpush.msra.mxu0 %v5870
      %6118 = vmatpush.msra.mxu0 %v5862
      %6119 = vmatpush.msra.mxu0 %v5854
      %6120 = vmatpush.msra.mxu0 %v5846
      %6121 = vmatpush.msra.mxu0 %v5838
      %6122 = vmatpush.msra.mxu0 %v5830
      %6123 = vmatpush.msra.mxu0 %v5822
      %6124 = vmatpush.msra.mxu0 %v5814
      %6125 = vmatpush.msra.mxu0 %v5806
      %6126 = vmatpush.msra.mxu0 %v5798
      %6127 = vmatpush.msra.mxu0 %v5790
      %6128 = vmatpush.msra.mxu0 %v5782
      %6129 = vmatpush.msra.mxu0 %v5774
      %6130 = vmatpush.msra.mxu0 %v5766
      %6131 = vmatpush.msra.mxu0 %v5758
      %6132 = vmatmul.f32.gmra.mxu0 %v5621
      %v6133 = vpop.f32.mrf.mxu0
      %v6134 = vadd.f32 %v6108, %v6133
      %6135 = vmatmul.f32.gmra.mxu0 %v5623
      %v6136 = vpop.f32.mrf.mxu0
      %v6137 = vadd.f32 %v6111, %v6136
      %6138 = vmatmul.f32.gmra.mxu0 %v5625
      %v6139 = vpop.f32.mrf.mxu0
      %v6140 = vadd.f32 %v6114, %v6139
      %6141 = vdwg.mxu0
      %6142 = vmatpush.msra.mxu0 %v5751
      %6143 = vmatpush.msra.mxu0 %v5743
      %6144 = vmatpush.msra.mxu0 %v5735
      %6145 = vmatpush.msra.mxu0 %v5727
      %6146 = vmatpush.msra.mxu0 %v5719
      %6147 = vmatpush.msra.mxu0 %v5711
      %6148 = vmatpush.msra.mxu0 %v5703
      %6149 = vmatpush.msra.mxu0 %v5695
      %6150 = vmatpush.msra.mxu0 %v5687
      %6151 = vmatpush.msra.mxu0 %v5679
      %6152 = vmatpush.msra.mxu0 %v5671
      %6153 = vmatpush.msra.mxu0 %v5663
      %6154 = vmatpush.msra.mxu0 %v5655
      %6155 = vmatpush.msra.mxu0 %v5647
      %6156 = vmatpush.msra.mxu0 %v5639
      %6157 = vmatpush.msra.mxu0 %v5631
      %6158 = vmatmul.f32.gmra.mxu0 %v5620
      %v6159 = vpop.f32.mrf.mxu0
      %v6160 = vadd.f32 0.0, %v6159
      %6161 = vmatmul.f32.gmra.mxu0 %v5622
      %v6162 = vpop.f32.mrf.mxu0
      %v6163 = vadd.f32 0.0, %v6162
      %6164 = vmatmul.f32.gmra.mxu0 %v5624
      %v6165 = vpop.f32.mrf.mxu0
      %v6166 = vadd.f32 0.0, %v6165
      %6167 = vdwg.mxu0
      %6168 = vmatpush.msra.mxu0 %v5879
      %6169 = vmatpush.msra.mxu0 %v5871
      %6170 = vmatpush.msra.mxu0 %v5863
      %6171 = vmatpush.msra.mxu0 %v5855
      %6172 = vmatpush.msra.mxu0 %v5847
      %6173 = vmatpush.msra.mxu0 %v5839
      %6174 = vmatpush.msra.mxu0 %v5831
      %6175 = vmatpush.msra.mxu0 %v5823
      %6176 = vmatpush.msra.mxu0 %v5815
      %6177 = vmatpush.msra.mxu0 %v5807
      %6178 = vmatpush.msra.mxu0 %v5799
      %6179 = vmatpush.msra.mxu0 %v5791
      %6180 = vmatpush.msra.mxu0 %v5783
      %6181 = vmatpush.msra.mxu0 %v5775
      %6182 = vmatpush.msra.mxu0 %v5767
      %6183 = vmatpush.msra.mxu0 %v5759
      %6184 = vmatmul.f32.gmra.mxu0 %v5621
      %v6185 = vpop.f32.mrf.mxu0
      %v6186 = vadd.f32 %v6160, %v6185
      %6187 = vmatmul.f32.gmra.mxu0 %v5623
      %v6188 = vpop.f32.mrf.mxu0
      %v6189 = vadd.f32 %v6163, %v6188
      %6190 = vmatmul.f32.gmra.mxu0 %v5625
      %v6191 = vpop.f32.mrf.mxu0
      %v6192 = vadd.f32 %v6166, %v6191
      %6193 = vdwg.mxu0
      %6194 = vmatpush.msra.mxu0 %v5752
      %6195 = vmatpush.msra.mxu0 %v5744
      %6196 = vmatpush.msra.mxu0 %v5736
      %6197 = vmatpush.msra.mxu0 %v5728
      %6198 = vmatpush.msra.mxu0 %v5720
      %6199 = vmatpush.msra.mxu0 %v5712
      %6200 = vmatpush.msra.mxu0 %v5704
      %6201 = vmatpush.msra.mxu0 %v5696
      %6202 = vmatpush.msra.mxu0 %v5688
      %6203 = vmatpush.msra.mxu0 %v5680
      %6204 = vmatpush.msra.mxu0 %v5672
      %6205 = vmatpush.msra.mxu0 %v5664
      %6206 = vmatpush.msra.mxu0 %v5656
      %6207 = vmatpush.msra.mxu0 %v5648
      %6208 = vmatpush.msra.mxu0 %v5640
      %6209 = vmatpush.msra.mxu0 %v5632
      %6210 = vmatmul.f32.gmra.mxu0 %v5620
      %v6211 = vpop.f32.mrf.mxu0
      %v6212 = vadd.f32 0.0, %v6211
      %6213 = vmatmul.f32.gmra.mxu0 %v5622
      %v6214 = vpop.f32.mrf.mxu0
      %v6215 = vadd.f32 0.0, %v6214
      %6216 = vmatmul.f32.gmra.mxu0 %v5624
      %v6217 = vpop.f32.mrf.mxu0
      %v6218 = vadd.f32 0.0, %v6217
      %6219 = vdwg.mxu0
      %6220 = vmatpush.msra.mxu0 %v5880
      %6221 = vmatpush.msra.mxu0 %v5872
      %6222 = vmatpush.msra.mxu0 %v5864
      %6223 = vmatpush.msra.mxu0 %v5856
      %6224 = vmatpush.msra.mxu0 %v5848
      %6225 = vmatpush.msra.mxu0 %v5840
      %6226 = vmatpush.msra.mxu0 %v5832
      %6227 = vmatpush.msra.mxu0 %v5824
      %6228 = vmatpush.msra.mxu0 %v5816
      %6229 = vmatpush.msra.mxu0 %v5808
      %6230 = vmatpush.msra.mxu0 %v5800
      %6231 = vmatpush.msra.mxu0 %v5792
      %6232 = vmatpush.msra.mxu0 %v5784
      %6233 = vmatpush.msra.mxu0 %v5776
      %6234 = vmatpush.msra.mxu0 %v5768
      %6235 = vmatpush.msra.mxu0 %v5760
      %6236 = vmatmul.f32.gmra.mxu0 %v5621
      %v6237 = vpop.f32.mrf.mxu0
      %v6238 = vadd.f32 %v6212, %v6237
      %6239 = vmatmul.f32.gmra.mxu0 %v5623
      %v6240 = vpop.f32.mrf.mxu0
      %v6241 = vadd.f32 %v6215, %v6240
      %6242 = vmatmul.f32.gmra.mxu0 %v5625
      %v6243 = vpop.f32.mrf.mxu0
      %v6244 = vadd.f32 %v6218, %v6243
      %6245 = vdwg.mxu0
      %6246 = vmatpush.msra.mxu0 %v5753
      %6247 = vmatpush.msra.mxu0 %v5745
      %6248 = vmatpush.msra.mxu0 %v5737
      %6249 = vmatpush.msra.mxu0 %v5729
      %6250 = vmatpush.msra.mxu0 %v5721
      %6251 = vmatpush.msra.mxu0 %v5713
      %6252 = vmatpush.msra.mxu0 %v5705
      %6253 = vmatpush.msra.mxu0 %v5697
      %6254 = vmatpush.msra.mxu0 %v5689
      %6255 = vmatpush.msra.mxu0 %v5681
      %6256 = vmatpush.msra.mxu0 %v5673
      %6257 = vmatpush.msra.mxu0 %v5665
      %6258 = vmatpush.msra.mxu0 %v5657
      %6259 = vmatpush.msra.mxu0 %v5649
      %6260 = vmatpush.msra.mxu0 %v5641
      %6261 = vmatpush.msra.mxu0 %v5633
      %6262 = vmatmul.f32.gmra.mxu0 %v5620
      %v6263 = vpop.f32.mrf.mxu0
      %v6264 = vadd.f32 0.0, %v6263
      %6265 = vmatmul.f32.gmra.mxu0 %v5622
      %v6266 = vpop.f32.mrf.mxu0
      %v6267 = vadd.f32 0.0, %v6266
      %6268 = vmatmul.f32.gmra.mxu0 %v5624
      %v6269 = vpop.f32.mrf.mxu0
      %v6270 = vadd.f32 0.0, %v6269
      %6271 = vdwg.mxu0
      %6272 = vmatpush.msra.mxu0 %v5881
      %6273 = vmatpush.msra.mxu0 %v5873
      %6274 = vmatpush.msra.mxu0 %v5865
      %6275 = vmatpush.msra.mxu0 %v5857
      %6276 = vmatpush.msra.mxu0 %v5849
      %6277 = vmatpush.msra.mxu0 %v5841
      %6278 = vmatpush.msra.mxu0 %v5833
      %6279 = vmatpush.msra.mxu0 %v5825
      %6280 = vmatpush.msra.mxu0 %v5817
      %6281 = vmatpush.msra.mxu0 %v5809
      %6282 = vmatpush.msra.mxu0 %v5801
      %6283 = vmatpush.msra.mxu0 %v5793
      %6284 = vmatpush.msra.mxu0 %v5785
      %6285 = vmatpush.msra.mxu0 %v5777
      %6286 = vmatpush.msra.mxu0 %v5769
      %6287 = vmatpush.msra.mxu0 %v5761
      %6288 = vmatmul.f32.gmra.mxu0 %v5621
      %v6289 = vpop.f32.mrf.mxu0
      %v6290 = vadd.f32 %v6264, %v6289
      %6291 = vmatmul.f32.gmra.mxu0 %v5623
      %v6292 = vpop.f32.mrf.mxu0
      %v6293 = vadd.f32 %v6267, %v6292
      %6294 = vmatmul.f32.gmra.mxu0 %v5625
      %v6295 = vpop.f32.mrf.mxu0
      %v6296 = vadd.f32 %v6270, %v6295
      %6297 = vdwg.mxu0
      %6298 = vst [vmem:[%s514] sm:$0xff] %v5926
      %6299 = vst [vmem:[%s514 + $0x8] sm:$0xff] %v5978
      %6300 = vst [vmem:[%s514 + $0x10] sm:$0xff] %v6030
      %6301 = vst [vmem:[%s514 + $0x18] sm:$0xff] %v6082
      %6302 = vst [vmem:[%s514 + $0x20] sm:$0xff] %v6134
      %6303 = vst [vmem:[%s514 + $0x28] sm:$0xff] %v6186
      %6304 = vst [vmem:[%s514 + $0x30] sm:$0xff] %v6238
      %6305 = vst [vmem:[%s514 + $0x38] sm:$0xff] %v6290
      %6306 = vst [vmem:[%s514 + $0x40] sm:$0xff] %v5929
      %6307 = vst [vmem:[%s514 + $0x48] sm:$0xff] %v5981
      %6308 = vst [vmem:[%s514 + $0x50] sm:$0xff] %v6033
      %6309 = vst [vmem:[%s514 + $0x58] sm:$0xff] %v6085
      %6310 = vst [vmem:[%s514 + $0x60] sm:$0xff] %v6137
      %6311 = vst [vmem:[%s514 + $0x68] sm:$0xff] %v6189
      %6312 = vst [vmem:[%s514 + $0x70] sm:$0xff] %v6241
      %6313 = vst [vmem:[%s514 + $0x78] sm:$0xff] %v6293
      %6314 = vst [vmem:[%s514 + $0x80] sm:$0x7] %v5932
      %6315 = vst [vmem:[%s514 + $0x88] sm:$0x7] %v5984
      %6316 = vst [vmem:[%s514 + $0x90] sm:$0x7] %v6036
      %6317 = vst [vmem:[%s514 + $0x98] sm:$0x7] %v6088
      %6318 = vst [vmem:[%s514 + $0xa0] sm:$0x7] %v6140
      %6319 = vst [vmem:[%s514 + $0xa8] sm:$0x7] %v6192
      %6320 = vst [vmem:[%s514 + $0xb0] sm:$0x7] %v6244
      %6321 = vst [vmem:[%s514 + $0xb8] sm:$0x7] %v6296
      %p6322 = scmp.lt.s32.totalorder %s26, 1
      %s6323 = scalar_select %p6322, %s26, 1
      %s6324 = smul.addr %s6323, 24
      %s6325 = smul.addr %s6324, 8
      %s6326 = scalar_lea.vmem %s15, %s6325
      // Predicated region
      $region81: #{segmentation_head_forward.1} parent=79 // pred_check
        %p6327 = pneg %p369
      $region82: #{segmentation_head_forward.1} parent=79 // pred_check_branch
        %6329 = sbr.rel (%p6327) target = $region84
      $region83: #{segmentation_head_forward.1} parent=79 // pred_region
        _
      $region84: #{segmentation_head_forward.1} parent=79 // pred_fallthru
        _
    $region80: #{segmentation_head_forward.1} parent=5 // pred_fallthru
      _
    %p6330 = scmp.le.s32.totalorder 2, %s21
    // Predicated region
    $region85: #{segmentation_head_forward.1} parent=5 // pred_check
      %p6331 = pneg %p6330
    $region86: #{segmentation_head_forward.1} parent=5 // pred_check_branch
      %6333 = sbr.rel (%p6331) target = $region88
    $region87: #{segmentation_head_forward.1} parent=5 // pred_region
      %s6334 = ssub.s32 %s21, 2
      // Predicated region
      $region89: #{segmentation_head_forward.1} parent=87 // pred_check
        %p6335 = pneg %p375
      $region90: #{segmentation_head_forward.1} parent=87 // pred_check_branch
        %6337 = sbr.rel (%p6335) target = $region92
      $region91: #{segmentation_head_forward.1} parent=87 // pred_region
        %p6338 = scmp.lt.s32.totalorder %s27, 1
        %s6339 = scalar_select %p6338, %s27, 1
        %s6340 = smul.addr %s6339, 24
        %s6341 = smul.addr %s6340, 8
        %s6342 = scalar_lea.vmem %s15, %s6341
      $region92: #{segmentation_head_forward.1} parent=87 // pred_fallthru
        _
    $region88: #{segmentation_head_forward.1} parent=5 // pred_fallthru
      _
  $region6: #{segmentation_head_forward.1} parent=0 // loop_footer
    %s25 = sadd.s32 1, %s21
  $region7: #{segmentation_head_forward.1} parent=0 // loop_footer_branch
    %20 = sbr.rel target = $region3
  $region8: #{segmentation_head_forward.1} parent=0 // loop_exit
    _

</llo_original>
